<compile_context>
chip_gen: v5e
topology: v5e:2x2
jax: 0.10.0
libtpu: 0.0.40
codegen_flags: <defaults>
</compile_context>

<pallas_src>
import functools

import jax
import jax.numpy as jnp
from jax import lax
from jax.experimental import pallas as pl
from jax.experimental.pallas import tpu as pltpu

EPS = 1e-5
VMEM_LIMIT = 32 * 1024 * 1024  # safe scoped VMEM on v5e/v6e/v7x at tile<=4096


def _pick_tile(total, cap, align=8):
    """Largest multiple-of-`align` divisor of `total` that is <= cap (else total)."""
    if total <= cap:
        return total
    t = (cap // align) * align
    while t >= align:
        if total % t == 0:
            return t
        t -= align
    return total  # fallback: whole extent (always layout-legal)


# ---------------------------------------------------------------------------
# Per-point layer: y_pre = [relu(bn(x))] @ W, bf16 output, plus per-tile
# partial per-channel sum / sumsq for THIS layer's BatchNorm statistics.
# ---------------------------------------------------------------------------
def _layer_kernel_noact(x_ref, w_ref, y_ref, su_ref, sq_ref):
    y = jnp.dot(x_ref[...].astype(jnp.bfloat16), w_ref[...],
                preferred_element_type=jnp.float32)
    su_ref[...] = jnp.sum(y, axis=0).reshape(su_ref.shape)
    sq_ref[...] = jnp.sum(y * y, axis=0).reshape(sq_ref.shape)
    y_ref[...] = y.astype(y_ref.dtype)


def _layer_kernel_act(x_ref, s_ref, t_ref, w_ref, y_ref, su_ref, sq_ref):
    h = jnp.maximum(x_ref[...].astype(jnp.float32) * s_ref[...] + t_ref[...], 0.0)
    y = jnp.dot(h.astype(jnp.bfloat16), w_ref[...],
                preferred_element_type=jnp.float32)
    su_ref[...] = jnp.sum(y, axis=0).reshape(su_ref.shape)
    sq_ref[...] = jnp.sum(y * y, axis=0).reshape(sq_ref.shape)
    y_ref[...] = y.astype(y_ref.dtype)


def pointwise_layer(x, w, scale=None, shift=None, *, row_tile=2048):
    """One Conv1d(k=1)/Linear layer streamed over rows of x (shape (R, Cin)).

    If scale/shift are given, the PREVIOUS layer's BN+ReLU is fused in front of
    the matmul.  Returns bf16 pre-activations (R, Cout) and per-channel
    (sum, sum_of_squares) in f32 for this layer's own BatchNorm.
    """
    R, cin = x.shape
    cout = w.shape[1]
    tile = _pick_tile(R, row_tile)
    nt = R // tile
    apply_act = scale is not None

    in_specs = [pl.BlockSpec((tile, cin), lambda i: (i, 0))]
    args = [x]
    if apply_act:
        in_specs += [pl.BlockSpec((1, cin), lambda i: (0, 0)),
                     pl.BlockSpec((1, cin), lambda i: (0, 0))]
        args += [scale, shift]
    in_specs += [pl.BlockSpec((cin, cout), lambda i: (0, 0))]   # weights resident
    args += [w]

    flops = 2 * R * cin * cout
    bytes_accessed = (x.dtype.itemsize * R * cin + 2 * R * cout
                      + w.dtype.itemsize * cin * cout + 8 * cout * nt)

    y, su, sq = pl.pallas_call(
        _layer_kernel_act if apply_act else _layer_kernel_noact,
        grid=(nt,),
        in_specs=in_specs,
        out_specs=(pl.BlockSpec((tile, cout), lambda i: (i, 0)),
                   pl.BlockSpec((1, 1, cout), lambda i: (i, 0, 0)),
                   pl.BlockSpec((1, 1, cout), lambda i: (i, 0, 0))),
        out_shape=(jax.ShapeDtypeStruct((R, cout), jnp.bfloat16),
                   jax.ShapeDtypeStruct((nt, 1, cout), jnp.float32),
                   jax.ShapeDtypeStruct((nt, 1, cout), jnp.float32)),
        compiler_params=pltpu.CompilerParams(
            dimension_semantics=("parallel",),   # per-tile partial stats -> no revisit
            vmem_limit_bytes=VMEM_LIMIT),
        cost_estimate=pl.CostEstimate(flops=flops, transcendentals=0,
                                      bytes_accessed=bytes_accessed),
    )(*args)
    return y, su.sum(axis=(0, 1))[None, :], sq.sum(axis=(0, 1))[None, :]


def bn_scale_shift(su, sq, rows, gamma, beta):
    """Fold training-mode BatchNorm into per-channel scale/shift (tiny JAX math)."""
    mean = su / rows
    var = jnp.maximum(sq / rows - mean * mean, 0.0)   # biased variance
    scale = gamma * lax.rsqrt(var + EPS)
    shift = beta - mean * scale
    return scale, shift


# ---------------------------------------------------------------------------
# relu(bn(.)) + streamed max over the points axis (T-Net global feature).
# ---------------------------------------------------------------------------
def _maxpool_kernel(x_ref, s_ref, t_ref, g_ref):
    h = jnp.maximum(x_ref[0].astype(jnp.float32) * s_ref[...] + t_ref[...], 0.0)
    m = jnp.max(h, axis=0, keepdims=True)                       # (1, C)

    @pl.when(pl.program_id(1) == 0)
    def _():
        g_ref[...] = jnp.full(g_ref.shape, -jnp.inf, dtype=g_ref.dtype)

    g_ref[...] = jnp.maximum(g_ref[...], m[None])


def maxpool_bn_relu(y_pre, scale, shift, *, n_tile=2048):
    B, N, C = y_pre.shape
    tile = _pick_tile(N, n_tile)
    g = pl.pallas_call(
        _maxpool_kernel,
        grid=(B, N // tile),
        in_specs=[pl.BlockSpec((1, tile, C), lambda b, j: (b, j, 0)),
                  pl.BlockSpec((1, C), lambda b, j: (0, 0)),
                  pl.BlockSpec((1, C), lambda b, j: (0, 0))],
        out_specs=pl.BlockSpec((1, 1, C), lambda b, j: (b, 0, 0)),
        out_shape=jax.ShapeDtypeStruct((B, 1, C), jnp.float32),
        compiler_params=pltpu.CompilerParams(
            dimension_semantics=("parallel", "arbitrary"),
            vmem_limit_bytes=VMEM_LIMIT),
    )(y_pre, scale, shift)
    return g.reshape(B, C)


# ---------------------------------------------------------------------------
# T-Net fc head: fc1+bn+relu, fc2+bn+relu, fc3 (+bias) + identity.  Tiny (B rows).
# ---------------------------------------------------------------------------
def _bn_relu_rows(h, gamma, beta):
    mean = jnp.mean(h, axis=0, keepdims=True)
    var = jnp.mean(jnp.square(h - mean), axis=0, keepdims=True)
    return jnp.maximum((h - mean) * lax.rsqrt(var + EPS) * gamma + beta, 0.0)


def _fc_head_kernel(g_ref, w1_ref, g4_ref, b4_ref, w2_ref, g5_ref, b5_ref,
                    w3_ref, b3_ref, out_ref, *, output_dim):
    g = g_ref[...]
    h4 = _bn_relu_rows(
        jnp.dot(g.astype(jnp.bfloat16), w1_ref[...],
                preferred_element_type=jnp.float32),
        g4_ref[...], b4_ref[...])
    h5 = _bn_relu_rows(
        jnp.dot(h4.astype(jnp.bfloat16), w2_ref[...],
                preferred_element_type=jnp.float32),
        g5_ref[...], b5_ref[...])
    out = jnp.dot(h5.astype(jnp.bfloat16), w3_ref[...],
                  preferred_element_type=jnp.float32) + b3_ref[...]
    # + flattened identity: diagonal entries sit at multiples of (output_dim + 1).
    col = lax.broadcasted_iota(jnp.int32, out.shape, 1)
    eye = jnp.where(col % (output_dim + 1) == 0, 1.0, 0.0)
    out_ref[...] = out + eye


def fc_head(g, p, output_dim):
    B = g.shape[0]
    K = output_dim * output_dim
    vspec = pl.BlockSpec(memory_space=pltpu.MemorySpace.VMEM)
    out = pl.pallas_call(
        functools.partial(_fc_head_kernel, output_dim=output_dim),
        in_specs=[vspec] * 9,
        out_specs=vspec,
        out_shape=jax.ShapeDtypeStruct((B, K), jnp.float32),
        compiler_params=pltpu.CompilerParams(vmem_limit_bytes=VMEM_LIMIT),
    )(g, p['fw1'], p['g4'], p['be4'], p['fw2'], p['g5'], p['be5'],
      p['fw3'], p['fb3'])
    return out.reshape(B, output_dim, output_dim)


# ---------------------------------------------------------------------------
# Fused input-transform bmm + conv_1:  xt = x @ T1[b] ; y1_pre = xt @ W1.
# xt (f32) is also emitted (it is the module's tnet_out, pre-transpose).
# ---------------------------------------------------------------------------
def _input_bmm_conv1_kernel(x_ref, t_ref, w_ref, y_ref, xt_ref, su_ref, sq_ref):
    xt = jnp.dot(x_ref[0], t_ref[0], preferred_element_type=jnp.float32)
    xt_ref[0] = xt
    y = jnp.dot(xt.astype(jnp.bfloat16), w_ref[...],
                preferred_element_type=jnp.float32)
    su_ref[...] = jnp.sum(y, axis=0).reshape(su_ref.shape)
    sq_ref[...] = jnp.sum(y * y, axis=0).reshape(sq_ref.shape)
    y_ref[0] = y.astype(y_ref.dtype)


def input_bmm_conv1(x, t1, w1, *, n_tile=2048):
    B, N, D = x.shape
    cout = w1.shape[1]
    tile = _pick_tile(N, n_tile)
    nt = N // tile
    y, xt, su, sq = pl.pallas_call(
        _input_bmm_conv1_kernel,
        grid=(B, nt),
        in_specs=[pl.BlockSpec((1, tile, D), lambda b, j: (b, j, 0)),
                  pl.BlockSpec((1, D, D), lambda b, j: (b, 0, 0)),
                  pl.BlockSpec((D, cout), lambda b, j: (0, 0))],
        out_specs=(pl.BlockSpec((1, tile, cout), lambda b, j: (b, j, 0)),
                   pl.BlockSpec((1, tile, D), lambda b, j: (b, j, 0)),
                   pl.BlockSpec((1, 1, 1, cout), lambda b, j: (b, j, 0, 0)),
                   pl.BlockSpec((1, 1, 1, cout), lambda b, j: (b, j, 0, 0))),
        out_shape=(jax.ShapeDtypeStruct((B, N, cout), jnp.bfloat16),
                   jax.ShapeDtypeStruct((B, N, D), jnp.float32),
                   jax.ShapeDtypeStruct((B, nt, 1, cout), jnp.float32),
                   jax.ShapeDtypeStruct((B, nt, 1, cout), jnp.float32)),
        compiler_params=pltpu.CompilerParams(
            dimension_semantics=("parallel", "parallel"),
            vmem_limit_bytes=VMEM_LIMIT),
    )(x, t1, w1)
    return y, xt, su.sum(axis=(0, 1, 2))[None, :], sq.sum(axis=(0, 1, 2))[None, :]


# ---------------------------------------------------------------------------
# Fused feature-transform bmm + conv_3:
#   xf = relu(bn_2(y2)) @ FT[b] ; y3_pre = xf @ W3.   xf is never materialized.
# ---------------------------------------------------------------------------
def _feature_bmm_conv3_kernel(x_ref, s_ref, t_ref, m_ref, w_ref,
                              y_ref, su_ref, sq_ref):
    h = jnp.maximum(x_ref[0].astype(jnp.float32) * s_ref[...] + t_ref[...], 0.0)
    xf = jnp.dot(h.astype(jnp.bfloat16), m_ref[0],
                 preferred_element_type=jnp.float32)
    y = jnp.dot(xf.astype(jnp.bfloat16), w_ref[...],
                preferred_element_type=jnp.float32)
    su_ref[...] = jnp.sum(y, axis=0).reshape(su_ref.shape)
    sq_ref[...] = jnp.sum(y * y, axis=0).reshape(sq_ref.shape)
    y_ref[0] = y.astype(y_ref.dtype)


def feature_bmm_conv3(y2, scale, shift, ft, w3, *, n_tile=2048):
    B, N, C = y2.shape
    cout = w3.shape[1]
    tile = _pick_tile(N, n_tile)
    nt = N // tile
    y, su, sq = pl.pallas_call(
        _feature_bmm_conv3_kernel,
        grid=(B, nt),
        in_specs=[pl.BlockSpec((1, tile, C), lambda b, j: (b, j, 0)),
                  pl.BlockSpec((1, C), lambda b, j: (0, 0)),
                  pl.BlockSpec((1, C), lambda b, j: (0, 0)),
                  pl.BlockSpec((1, C, C), lambda b, j: (b, 0, 0)),
                  pl.BlockSpec((C, cout), lambda b, j: (0, 0))],
        out_specs=(pl.BlockSpec((1, tile, cout), lambda b, j: (b, j, 0)),
                   pl.BlockSpec((1, 1, 1, cout), lambda b, j: (b, j, 0, 0)),
                   pl.BlockSpec((1, 1, 1, cout), lambda b, j: (b, j, 0, 0))),
        out_shape=(jax.ShapeDtypeStruct((B, N, cout), jnp.bfloat16),
                   jax.ShapeDtypeStruct((B, nt, 1, cout), jnp.float32),
                   jax.ShapeDtypeStruct((B, nt, 1, cout), jnp.float32)),
        compiler_params=pltpu.CompilerParams(
            dimension_semantics=("parallel", "parallel"),
            vmem_limit_bytes=VMEM_LIMIT),
    )(y2, scale, shift, ft.astype(jnp.bfloat16), w3)
    return y, su.sum(axis=(0, 1, 2))[None, :], sq.sum(axis=(0, 1, 2))[None, :]


# ---------------------------------------------------------------------------
# Final relu(bn(.)) fused with the (B,N,C) -> (B,C,N) NCW transpose.
# ---------------------------------------------------------------------------
def _bn_relu_transpose_kernel(x_ref, s_ref, t_ref, o_ref):
    h = jnp.maximum(x_ref[0].astype(jnp.float32) * s_ref[...] + t_ref[...], 0.0)
    o_ref[0] = h.T                       # (tile, C) -> (C, tile), lane-dense store


def apply_bn_relu_transposed(y, scale, shift, *, n_tile=2048):
    B, N, C = y.shape
    tile = _pick_tile(N, n_tile, align=128)   # transposed last dim wants /128 or N
    return pl.pallas_call(
        _bn_relu_transpose_kernel,
        grid=(B, N // tile),
        in_specs=[pl.BlockSpec((1, tile, C), lambda b, j: (b, j, 0)),
                  pl.BlockSpec((1, C), lambda b, j: (0, 0)),
                  pl.BlockSpec((1, C), lambda b, j: (0, 0))],
        out_specs=pl.BlockSpec((1, C, tile), lambda b, j: (b, 0, j)),
        out_shape=jax.ShapeDtypeStruct((B, C, N), jnp.float32),
        compiler_params=pltpu.CompilerParams(
            dimension_semantics=("parallel", "parallel"),
            vmem_limit_bytes=VMEM_LIMIT),
    )(y, scale, shift)


# ---------------------------------------------------------------------------
# TransformationNet and BasePointNet forward.
# ---------------------------------------------------------------------------
def transformation_net_fwd(x_rows, B, N, p, output_dim, *, row_tile,
                           in_scale=None, in_shift=None):
    """x_rows: (B*N, Cin).  If in_scale/in_shift are given, the preceding
    layer's BN+ReLU is fused into conv_1 (keeps everything single-pass)."""
    R = B * N
    y1, su1, sq1 = pointwise_layer(x_rows, p['w1'], in_scale, in_shift, row_tile=row_tile)
    s1, t1 = bn_scale_shift(su1, sq1, R, p['g1'], p['be1'])
    y2, su2, sq2 = pointwise_layer(y1, p['w2'], s1, t1, row_tile=row_tile)
    s2, t2 = bn_scale_shift(su2, sq2, R, p['g2'], p['be2'])
    y3, su3, sq3 = pointwise_layer(y2, p['w3'], s2, t2, row_tile=row_tile)
    s3, t3 = bn_scale_shift(su3, sq3, R, p['g3'], p['be3'])
    g = maxpool_bn_relu(y3.reshape(B, N, y3.shape[-1]), s3, t3, n_tile=row_tile)
    return fc_head(g, p, output_dim)                      # (B, D, D)


def base_pointnet_fwd(x, params, *, row_tile=2048):
    B, N, D = x.shape
    R = B * N
    # input T-Net on the raw points
    t1 = transformation_net_fwd(x.reshape(R, D), B, N, params['tnet1'], D,
                                row_tile=row_tile)
    # fused: xt = x @ t1 ; conv_1 pre-acts + bn_1 stats (xt is the tnet_out tensor)
    y1, xt, su1, sq1 = input_bmm_conv1(x, t1, params['w_c1'], n_tile=row_tile)
    tnet_out = jnp.transpose(xt, (0, 2, 1))               # (B, D, N), tiny tensor
    s1, h1 = bn_scale_shift(su1, sq1, R, params['g_c1'], params['b_c1'])
    # conv_2 (bn_1 + relu fused in front)
    y2, su2, sq2 = pointwise_layer(y1.reshape(R, 64), params['w_c2'], s1, h1,
                                   row_tile=row_tile)
    s2, h2 = bn_scale_shift(su2, sq2, R, params['g_c2'], params['b_c2'])
    # feature T-Net (conv_2's BN+ReLU fused into its conv_1)
    ft = transformation_net_fwd(y2, B, N, params['tnet2'], 64, row_tile=row_tile,
                                in_scale=s2, in_shift=h2)
    # fused: xf = relu(bn_2(y2)) @ ft ; conv_3 pre-acts + bn_3 stats
    y3, su3, sq3 = feature_bmm_conv3(y2.reshape(B, N, 64), s2, h2, ft,
                                     params['w_c3'], n_tile=row_tile)
    s3, h3 = bn_scale_shift(su3, sq3, R, params['g_c3'], params['b_c3'])
    # conv_4 / conv_5
    y4, su4, sq4 = pointwise_layer(y3.reshape(R, 64), params['w_c4'], s3, h3,
                                   row_tile=row_tile)
    s4, h4 = bn_scale_shift(su4, sq4, R, params['g_c4'], params['b_c4'])
    y5, su5, sq5 = pointwise_layer(y4, params['w_c5'], s4, h4, row_tile=row_tile)
    s5, h5 = bn_scale_shift(su5, sq5, R, params['g_c5'], params['b_c5'])
    # final relu(bn_5(.)) fused with the NCW transpose -> (B, 256, N)
    out = apply_bn_relu_transposed(y5.reshape(B, N, 256), s5, h5, n_tile=row_tile)
    return out, ft, tnet_out


# ---------------------------------------------------------------------------
# Parameter initialization (PyTorch-like).  Conv/Linear biases that are
# immediately followed by training-mode BatchNorm are omitted: they cancel
# exactly ((h+b) - mean(h+b) == h - mean(h)).  Matmul weights stored in bf16
# once (f32 accumulation on the MXU); BN params and fc_3 bias stay f32.
# ---------------------------------------------------------------------------
def _uniform_w(key, cin, cout, dtype=jnp.bfloat16):
    s = 1.0 / float(cin) ** 0.5
    return jax.random.uniform(key, (cin, cout), jnp.float32, -s, s).astype(dtype)


def _bn_init(key, c):
    k1, k2 = jax.random.split(key)
    gamma = 1.0 + 0.1 * jax.random.normal(k1, (1, c), jnp.float32)
    beta = 0.1 * jax.random.normal(k2, (1, c), jnp.float32)
    return gamma, beta


def init_tnet_params(key, input_dim, output_dim):
    ks = jax.random.split(key, 16)
    p = {}
    for i, (cin, cout) in enumerate([(input_dim, 64), (64, 128), (128, 256)], start=1):
        p[f'w{i}'] = _uniform_w(ks[2 * i - 2], cin, cout)
        p[f'g{i}'], p[f'be{i}'] = _bn_init(ks[2 * i - 1], cout)
    p['fw1'] = _uniform_w(ks[6], 256, 256)
    p['g4'], p['be4'] = _bn_init(ks[7], 256)
    p['fw2'] = _uniform_w(ks[8], 256, 128)
    p['g5'], p['be5'] = _bn_init(ks[9], 128)
    k = output_dim * output_dim
    p['fw3'] = _uniform_w(ks[10], 128, k)
    s = 1.0 / 128.0 ** 0.5
    p['fb3'] = jax.random.uniform(ks[11], (1, k), jnp.float32, -s, s)
    return p


def init_base_params(key, point_dim):
    ks = jax.random.split(key, 12)
    params = {
        'tnet1': init_tnet_params(ks[0], point_dim, point_dim),
        'tnet2': init_tnet_params(ks[1], 64, 64),
    }
    for i, (cin, cout) in enumerate(
            [(point_dim, 64), (64, 64), (64, 64), (64, 128), (128, 256)], start=1):
        params[f'w_c{i}'] = _uniform_w(ks[2 * i], cin, cout)
        params[f'g_c{i}'], params[f'b_c{i}'] = _bn_init(ks[2 * i + 1], cout)
    return params


if __name__ == "__main__":
    # Small but multi-tile shapes: B=2, N=256 points, point_dim=4.
    B, N, POINT_DIM = 2, 256, 4
    # Small tile so the demo exercises the multi-tile grids + partial-stat
    # reductions + the in-kernel transpose; use 2048-4096 at real PointNet sizes.
    ROW_TILE = 128

    key = jax.random.PRNGKey(0)
    kx, kp = jax.random.split(key)
    x = jax.random.normal(kx, (B, N, POINT_DIM), jnp.float32)
    params = init_base_params(kp, POINT_DIM)

    fwd = jax.jit(functools.partial(base_pointnet_fwd, row_tile=ROW_TILE))
    out, feature_transform, tnet_out = fwd(x, params)
    out = jax.block_until_ready(out)

    assert out.shape == (B, 256, N)
    assert feature_transform.shape == (B, 64, 64)
    assert tnet_out.shape == (B, POINT_DIM, N)
    assert bool(jnp.all(jnp.isfinite(out)))
    assert bool(jnp.all(jnp.isfinite(feature_transform)))
    assert bool(jnp.all(jnp.isfinite(tnet_out)))
    print("KERNEL_OK")
</pallas_src>

<mosaic_0001>
module attributes {stable_mosaic.version = 11 : i64} {
  func.func @_layer_kernel_noact(%arg0: i32, %arg1: memref<128x4xf32, #tpu.memory_space<vmem>>, %arg2: memref<4x64xbf16, #tpu.memory_space<vmem>>, %arg3: memref<128x64xbf16, #tpu.memory_space<vmem>>, %arg4: memref<1x1x64xf32, #tpu.memory_space<vmem>>, %arg5: memref<1x1x64xf32, #tpu.memory_space<vmem>>) attributes {dimension_semantics = [#tpu.dimension_semantics<parallel>], iteration_bounds = array<i64: 4>, scalar_prefetch = 0 : i64, scratch_operands = 0 : i64, tpu.core_type = #tpu.core_type<tc>, window_params = [{transform_indices = @transform_0, window_bounds = array<i64: 128, 4>}, {pipeline_mode = #tpu.pipeline_mode<synchronous>, transform_indices = @transform_1, window_bounds = array<i64: 4, 64>}, {transform_indices = @transform_2, window_bounds = array<i64: 128, 64>}, {transform_indices = @transform_3, window_bounds = array<i64: 1, 1, 64>}, {transform_indices = @transform_4, window_bounds = array<i64: 1, 1, 64>}]} {
    %c0 = arith.constant 0 : index
    %c0_0 = arith.constant 0 : index
    %0 = vector.load %arg1[%c0, %c0_0] : memref<128x4xf32, #tpu.memory_space<vmem>>, vector<128x4xf32>
    %1 = arith.truncf %0 : vector<128x4xf32> to vector<128x4xbf16>
    %c0_1 = arith.constant 0 : index
    %c0_2 = arith.constant 0 : index
    %2 = vector.load %arg2[%c0_1, %c0_2] : memref<4x64xbf16, #tpu.memory_space<vmem>>, vector<4x64xbf16>
    %cst = arith.constant dense<0.000000e+00> : vector<128x64xf32>
    %3 = tpu.matmul %1, %2, %cst {dimension_numbers = #tpu.dot_dimension_numbers<[1], [0], [0], [1], [0, 0, 1, 1], [], []>} : vector<128x4xbf16>, vector<4x64xbf16>, vector<128x64xf32> -> vector<128x64xf32>
    %cst_3 = arith.constant dense<0.000000e+00> : vector<64xf32>
    %4 = vector.multi_reduction <add>, %3, %cst_3 [0] : vector<128x64xf32> to vector<64xf32>
    %5 = vector.shape_cast %4 : vector<64xf32> to vector<1x1x64xf32>
    %c0_4 = arith.constant 0 : index
    %c0_5 = arith.constant 0 : index
    %c0_6 = arith.constant 0 : index
    %6 = vector.load %arg4[%c0_4, %c0_5, %c0_6] : memref<1x1x64xf32, #tpu.memory_space<vmem>>, vector<1x1x64xf32>
    tpu.vector_store %arg4[%c0_4, %c0_5, %c0_6], %5 {strides = array<i32>} : memref<1x1x64xf32, #tpu.memory_space<vmem>>, vector<1x1x64xf32>,
    %7 = arith.mulf %3, %3 : vector<128x64xf32>
    %cst_7 = arith.constant dense<0.000000e+00> : vector<64xf32>
    %8 = vector.multi_reduction <add>, %7, %cst_7 [0] : vector<128x64xf32> to vector<64xf32>
    %9 = vector.shape_cast %8 : vector<64xf32> to vector<1x1x64xf32>
    %c0_8 = arith.constant 0 : index
    %c0_9 = arith.constant 0 : index
    %c0_10 = arith.constant 0 : index
    %10 = vector.load %arg5[%c0_8, %c0_9, %c0_10] : memref<1x1x64xf32, #tpu.memory_space<vmem>>, vector<1x1x64xf32>
    tpu.vector_store %arg5[%c0_8, %c0_9, %c0_10], %9 {strides = array<i32>} : memref<1x1x64xf32, #tpu.memory_space<vmem>>, vector<1x1x64xf32>,
    %11 = arith.truncf %3 : vector<128x64xf32> to vector<128x64xbf16>
    %c0_11 = arith.constant 0 : index
    %c0_12 = arith.constant 0 : index
    %12 = vector.load %arg3[%c0_11, %c0_12] : memref<128x64xbf16, #tpu.memory_space<vmem>>, vector<128x64xbf16>
    tpu.vector_store %arg3[%c0_11, %c0_12], %11 {strides = array<i32>} : memref<128x64xbf16, #tpu.memory_space<vmem>>, vector<128x64xbf16>,
    return
  }
  func.func @transform_0(%arg0: i32) -> (i32, i32) {
    %c0_i32 = arith.constant 0 : i32
    %c0_i32_0 = arith.constant 0 : i32
    return %arg0, %c0_i32 : i32, i32
  }
  func.func @transform_1(%arg0: i32) -> (i32, i32) {
    %c0_i32 = arith.constant 0 : i32
    %c0_i32_0 = arith.constant 0 : i32
    %c0_i32_1 = arith.constant 0 : i32
    return %c0_i32, %c0_i32_0 : i32, i32
  }
  func.func @transform_2(%arg0: i32) -> (i32, i32) {
    %c0_i32 = arith.constant 0 : i32
    %c0_i32_0 = arith.constant 0 : i32
    return %arg0, %c0_i32 : i32, i32
  }
  func.func @transform_3(%arg0: i32) -> (i32, i32, i32) {
    %c0_i32 = arith.constant 0 : i32
    %c0_i32_0 = arith.constant 0 : i32
    %c0_i32_1 = arith.constant 0 : i32
    return %arg0, %c0_i32, %c0_i32_0 : i32, i32, i32
  }
  func.func @transform_4(%arg0: i32) -> (i32, i32, i32) {
    %c0_i32 = arith.constant 0 : i32
    %c0_i32_0 = arith.constant 0 : i32
    %c0_i32_1 = arith.constant 0 : i32
    return %arg0, %c0_i32, %c0_i32_0 : i32, i32, i32
  }
}

module attributes {stable_mosaic.version = 11 : i64} {
  func.func @_layer_kernel_act(%arg0: i32, %arg1: memref<128x64xbf16, #tpu.memory_space<vmem>>, %arg2: memref<1x64xf32, #tpu.memory_space<vmem>>, %arg3: memref<1x64xf32, #tpu.memory_space<vmem>>, %arg4: memref<64x128xbf16, #tpu.memory_space<vmem>>, %arg5: memref<128x128xbf16, #tpu.memory_space<vmem>>, %arg6: memref<1x1x128xf32, #tpu.memory_space<vmem>>, %arg7: memref<1x1x128xf32, #tpu.memory_space<vmem>>) attributes {dimension_semantics = [#tpu.dimension_semantics<parallel>], iteration_bounds = array<i64: 4>, scalar_prefetch = 0 : i64, scratch_operands = 0 : i64, tpu.core_type = #tpu.core_type<tc>, window_params = [{transform_indices = @transform_0, window_bounds = array<i64: 128, 64>}, {pipeline_mode = #tpu.pipeline_mode<synchronous>, transform_indices = @transform_1, window_bounds = array<i64: 1, 64>}, {pipeline_mode = #tpu.pipeline_mode<synchronous>, transform_indices = @transform_2, window_bounds = array<i64: 1, 64>}, {pipeline_mode = #tpu.pipeline_mode<synchronous>, transform_indices = @transform_3, window_bounds = array<i64: 64, 128>}, {transform_indices = @transform_4, window_bounds = array<i64: 128, 128>}, {transform_indices = @transform_5, window_bounds = array<i64: 1, 1, 128>}, {transform_indices = @transform_6, window_bounds = array<i64: 1, 1, 128>}]} {
    %c0 = arith.constant 0 : index
    %c0_0 = arith.constant 0 : index
    %0 = vector.load %arg1[%c0, %c0_0] : memref<128x64xbf16, #tpu.memory_space<vmem>>, vector<128x64xbf16>
    %1 = arith.extf %0 : vector<128x64xbf16> to vector<128x64xf32>
    %c0_1 = arith.constant 0 : index
    %c0_2 = arith.constant 0 : index
    %2 = vector.load %arg2[%c0_1, %c0_2] : memref<1x64xf32, #tpu.memory_space<vmem>>, vector<1x64xf32>
    %3 = vector.broadcast %2 : vector<1x64xf32> to vector<128x64xf32>
    %4 = arith.mulf %1, %3 : vector<128x64xf32>
    %c0_3 = arith.constant 0 : index
    %c0_4 = arith.constant 0 : index
    %5 = vector.load %arg3[%c0_3, %c0_4] : memref<1x64xf32, #tpu.memory_space<vmem>>, vector<1x64xf32>
    %6 = vector.broadcast %5 : vector<1x64xf32> to vector<128x64xf32>
    %7 = arith.addf %4, %6 : vector<128x64xf32>
    %cst = arith.constant 0.000000e+00 : f32
    %8 = vector.broadcast %cst : f32 to vector<128x64xf32>
    %9 = arith.maximumf %7, %8 : vector<128x64xf32>
    %10 = arith.truncf %9 : vector<128x64xf32> to vector<128x64xbf16>
    %c0_5 = arith.constant 0 : index
    %c0_6 = arith.constant 0 : index
    %11 = vector.load %arg4[%c0_5, %c0_6] : memref<64x128xbf16, #tpu.memory_space<vmem>>, vector<64x128xbf16>
    %cst_7 = arith.constant dense<0.000000e+00> : vector<128x128xf32>
    %12 = tpu.matmul %10, %11, %cst_7 {dimension_numbers = #tpu.dot_dimension_numbers<[1], [0], [0], [1], [0, 0, 1, 1], [], []>} : vector<128x64xbf16>, vector<64x128xbf16>, vector<128x128xf32> -> vector<128x128xf32>
    %cst_8 = arith.constant dense<0.000000e+00> : vector<128xf32>
    %13 = vector.multi_reduction <add>, %12, %cst_8 [0] : vector<128x128xf32> to vector<128xf32>
    %14 = vector.shape_cast %13 : vector<128xf32> to vector<1x1x128xf32>
    %c0_9 = arith.constant 0 : index
    %c0_10 = arith.constant 0 : index
    %c0_11 = arith.constant 0 : index
    %15 = vector.load %arg6[%c0_9, %c0_10, %c0_11] : memref<1x1x128xf32, #tpu.memory_space<vmem>>, vector<1x1x128xf32>
    tpu.vector_store %arg6[%c0_9, %c0_10, %c0_11], %14 {strides = array<i32>} : memref<1x1x128xf32, #tpu.memory_space<vmem>>, vector<1x1x128xf32>,
    %16 = arith.mulf %12, %12 : vector<128x128xf32>
    %cst_12 = arith.constant dense<0.000000e+00> : vector<128xf32>
    %17 = vector.multi_reduction <add>, %16, %cst_12 [0] : vector<128x128xf32> to vector<128xf32>
    %18 = vector.shape_cast %17 : vector<128xf32> to vector<1x1x128xf32>
    %c0_13 = arith.constant 0 : index
    %c0_14 = arith.constant 0 : index
    %c0_15 = arith.constant 0 : index
    %19 = vector.load %arg7[%c0_13, %c0_14, %c0_15] : memref<1x1x128xf32, #tpu.memory_space<vmem>>, vector<1x1x128xf32>
    tpu.vector_store %arg7[%c0_13, %c0_14, %c0_15], %18 {strides = array<i32>} : memref<1x1x128xf32, #tpu.memory_space<vmem>>, vector<1x1x128xf32>,
    %20 = arith.truncf %12 : vector<128x128xf32> to vector<128x128xbf16>
    %c0_16 = arith.constant 0 : index
    %c0_17 = arith.constant 0 : index
    %21 = vector.load %arg5[%c0_16, %c0_17] : memref<128x128xbf16, #tpu.memory_space<vmem>>, vector<128x128xbf16>
    tpu.vector_store %arg5[%c0_16, %c0_17], %20 {strides = array<i32>} : memref<128x128xbf16, #tpu.memory_space<vmem>>, vector<128x128xbf16>,
    return
  }
  func.func @transform_0(%arg0: i32) -> (i32, i32) {
    %c0_i32 = arith.constant 0 : i32
    %c0_i32_0 = arith.constant 0 : i32
    return %arg0, %c0_i32 : i32, i32
  }
  func.func @transform_1(%arg0: i32) -> (i32, i32) {
    %c0_i32 = arith.constant 0 : i32
    %c0_i32_0 = arith.constant 0 : i32
    %c0_i32_1 = arith.constant 0 : i32
    return %c0_i32, %c0_i32_0 : i32, i32
  }
  func.func @transform_2(%arg0: i32) -> (i32, i32) {
    %c0_i32 = arith.constant 0 : i32
    %c0_i32_0 = arith.constant 0 : i32
    %c0_i32_1 = arith.constant 0 : i32
    return %c0_i32, %c0_i32_0 : i32, i32
  }
  func.func @transform_3(%arg0: i32) -> (i32, i32) {
    %c0_i32 = arith.constant 0 : i32
    %c0_i32_0 = arith.constant 0 : i32
    %c0_i32_1 = arith.constant 0 : i32
    return %c0_i32, %c0_i32_0 : i32, i32
  }
  func.func @transform_4(%arg0: i32) -> (i32, i32) {
    %c0_i32 = arith.constant 0 : i32
    %c0_i32_0 = arith.constant 0 : i32
    return %arg0, %c0_i32 : i32, i32
  }
  func.func @transform_5(%arg0: i32) -> (i32, i32, i32) {
    %c0_i32 = arith.constant 0 : i32
    %c0_i32_0 = arith.constant 0 : i32
    %c0_i32_1 = arith.constant 0 : i32
    return %arg0, %c0_i32, %c0_i32_0 : i32, i32, i32
  }
  func.func @transform_6(%arg0: i32) -> (i32, i32, i32) {
    %c0_i32 = arith.constant 0 : i32
    %c0_i32_0 = arith.constant 0 : i32
    %c0_i32_1 = arith.constant 0 : i32
    return %arg0, %c0_i32, %c0_i32_0 : i32, i32, i32
  }
}

module attributes {stable_mosaic.version = 11 : i64} {
  func.func @_layer_kernel_act(%arg0: i32, %arg1: memref<128x128xbf16, #tpu.memory_space<vmem>>, %arg2: memref<1x128xf32, #tpu.memory_space<vmem>>, %arg3: memref<1x128xf32, #tpu.memory_space<vmem>>, %arg4: memref<128x256xbf16, #tpu.memory_space<vmem>>, %arg5: memref<128x256xbf16, #tpu.memory_space<vmem>>, %arg6: memref<1x1x256xf32, #tpu.memory_space<vmem>>, %arg7: memref<1x1x256xf32, #tpu.memory_space<vmem>>) attributes {dimension_semantics = [#tpu.dimension_semantics<parallel>], iteration_bounds = array<i64: 4>, scalar_prefetch = 0 : i64, scratch_operands = 0 : i64, tpu.core_type = #tpu.core_type<tc>, window_params = [{transform_indices = @transform_0, window_bounds = array<i64: 128, 128>}, {pipeline_mode = #tpu.pipeline_mode<synchronous>, transform_indices = @transform_1, window_bounds = array<i64: 1, 128>}, {pipeline_mode = #tpu.pipeline_mode<synchronous>, transform_indices = @transform_2, window_bounds = array<i64: 1, 128>}, {pipeline_mode = #tpu.pipeline_mode<synchronous>, transform_indices = @transform_3, window_bounds = array<i64: 128, 256>}, {transform_indices = @transform_4, window_bounds = array<i64: 128, 256>}, {transform_indices = @transform_5, window_bounds = array<i64: 1, 1, 256>}, {transform_indices = @transform_6, window_bounds = array<i64: 1, 1, 256>}]} {
    %c0 = arith.constant 0 : index
    %c0_0 = arith.constant 0 : index
    %0 = vector.load %arg1[%c0, %c0_0] : memref<128x128xbf16, #tpu.memory_space<vmem>>, vector<128x128xbf16>
    %1 = arith.extf %0 : vector<128x128xbf16> to vector<128x128xf32>
    %c0_1 = arith.constant 0 : index
    %c0_2 = arith.constant 0 : index
    %2 = vector.load %arg2[%c0_1, %c0_2] : memref<1x128xf32, #tpu.memory_space<vmem>>, vector<1x128xf32>
    %3 = vector.broadcast %2 : vector<1x128xf32> to vector<128x128xf32>
    %4 = arith.mulf %1, %3 : vector<128x128xf32>
    %c0_3 = arith.constant 0 : index
    %c0_4 = arith.constant 0 : index
    %5 = vector.load %arg3[%c0_3, %c0_4] : memref<1x128xf32, #tpu.memory_space<vmem>>, vector<1x128xf32>
    %6 = vector.broadcast %5 : vector<1x128xf32> to vector<128x128xf32>
    %7 = arith.addf %4, %6 : vector<128x128xf32>
    %cst = arith.constant 0.000000e+00 : f32
    %8 = vector.broadcast %cst : f32 to vector<128x128xf32>
    %9 = arith.maximumf %7, %8 : vector<128x128xf32>
    %10 = arith.truncf %9 : vector<128x128xf32> to vector<128x128xbf16>
    %c0_5 = arith.constant 0 : index
    %c0_6 = arith.constant 0 : index
    %11 = vector.load %arg4[%c0_5, %c0_6] : memref<128x256xbf16, #tpu.memory_space<vmem>>, vector<128x256xbf16>
    %cst_7 = arith.constant dense<0.000000e+00> : vector<128x256xf32>
    %12 = tpu.matmul %10, %11, %cst_7 {dimension_numbers = #tpu.dot_dimension_numbers<[1], [0], [0], [1], [0, 0, 1, 1], [], []>} : vector<128x128xbf16>, vector<128x256xbf16>, vector<128x256xf32> -> vector<128x256xf32>
    %cst_8 = arith.constant dense<0.000000e+00> : vector<256xf32>
    %13 = vector.multi_reduction <add>, %12, %cst_8 [0] : vector<128x256xf32> to vector<256xf32>
    %14 = vector.shape_cast %13 : vector<256xf32> to vector<1x1x256xf32>
    %c0_9 = arith.constant 0 : index
    %c0_10 = arith.constant 0 : index
    %c0_11 = arith.constant 0 : index
    %15 = vector.load %arg6[%c0_9, %c0_10, %c0_11] : memref<1x1x256xf32, #tpu.memory_space<vmem>>, vector<1x1x256xf32>
    tpu.vector_store %arg6[%c0_9, %c0_10, %c0_11], %14 {strides = array<i32>} : memref<1x1x256xf32, #tpu.memory_space<vmem>>, vector<1x1x256xf32>,
    %16 = arith.mulf %12, %12 : vector<128x256xf32>
    %cst_12 = arith.constant dense<0.000000e+00> : vector<256xf32>
    %17 = vector.multi_reduction <add>, %16, %cst_12 [0] : vector<128x256xf32> to vector<256xf32>
    %18 = vector.shape_cast %17 : vector<256xf32> to vector<1x1x256xf32>
    %c0_13 = arith.constant 0 : index
    %c0_14 = arith.constant 0 : index
    %c0_15 = arith.constant 0 : index
    %19 = vector.load %arg7[%c0_13, %c0_14, %c0_15] : memref<1x1x256xf32, #tpu.memory_space<vmem>>, vector<1x1x256xf32>
    tpu.vector_store %arg7[%c0_13, %c0_14, %c0_15], %18 {strides = array<i32>} : memref<1x1x256xf32, #tpu.memory_space<vmem>>, vector<1x1x256xf32>,
    %20 = arith.truncf %12 : vector<128x256xf32> to vector<128x256xbf16>
    %c0_16 = arith.constant 0 : index
    %c0_17 = arith.constant 0 : index
    %21 = vector.load %arg5[%c0_16, %c0_17] : memref<128x256xbf16, #tpu.memory_space<vmem>>, vector<128x256xbf16>
    tpu.vector_store %arg5[%c0_16, %c0_17], %20 {strides = array<i32>} : memref<128x256xbf16, #tpu.memory_space<vmem>>, vector<128x256xbf16>,
    return
  }
  func.func @transform_0(%arg0: i32) -> (i32, i32) {
    %c0_i32 = arith.constant 0 : i32
    %c0_i32_0 = arith.constant 0 : i32
    return %arg0, %c0_i32 : i32, i32
  }
  func.func @transform_1(%arg0: i32) -> (i32, i32) {
    %c0_i32 = arith.constant 0 : i32
    %c0_i32_0 = arith.constant 0 : i32
    %c0_i32_1 = arith.constant 0 : i32
    return %c0_i32, %c0_i32_0 : i32, i32
  }
  func.func @transform_2(%arg0: i32) -> (i32, i32) {
    %c0_i32 = arith.constant 0 : i32
    %c0_i32_0 = arith.constant 0 : i32
    %c0_i32_1 = arith.constant 0 : i32
    return %c0_i32, %c0_i32_0 : i32, i32
  }
  func.func @transform_3(%arg0: i32) -> (i32, i32) {
    %c0_i32 = arith.constant 0 : i32
    %c0_i32_0 = arith.constant 0 : i32
    %c0_i32_1 = arith.constant 0 : i32
    return %c0_i32, %c0_i32_0 : i32, i32
  }
  func.func @transform_4(%arg0: i32) -> (i32, i32) {
    %c0_i32 = arith.constant 0 : i32
    %c0_i32_0 = arith.constant 0 : i32
    return %arg0, %c0_i32 : i32, i32
  }
  func.func @transform_5(%arg0: i32) -> (i32, i32, i32) {
    %c0_i32 = arith.constant 0 : i32
    %c0_i32_0 = arith.constant 0 : i32
    %c0_i32_1 = arith.constant 0 : i32
    return %arg0, %c0_i32, %c0_i32_0 : i32, i32, i32
  }
  func.func @transform_6(%arg0: i32) -> (i32, i32, i32) {
    %c0_i32 = arith.constant 0 : i32
    %c0_i32_0 = arith.constant 0 : i32
    %c0_i32_1 = arith.constant 0 : i32
    return %arg0, %c0_i32, %c0_i32_0 : i32, i32, i32
  }
}

module attributes {stable_mosaic.version = 11 : i64} {
  func.func @_maxpool_kernel(%arg0: i32, %arg1: i32, %arg2: memref<1x128x256xbf16, #tpu.memory_space<vmem>>, %arg3: memref<1x256xf32, #tpu.memory_space<vmem>>, %arg4: memref<1x256xf32, #tpu.memory_space<vmem>>, %arg5: memref<1x1x256xf32, #tpu.memory_space<vmem>>) attributes {dimension_semantics = [#tpu.dimension_semantics<parallel>, #tpu.dimension_semantics<arbitrary>], iteration_bounds = array<i64: 2, 2>, scalar_prefetch = 0 : i64, scratch_operands = 0 : i64, tpu.core_type = #tpu.core_type<tc>, window_params = [{transform_indices = @transform_0, window_bounds = array<i64: 1, 128, 256>}, {pipeline_mode = #tpu.pipeline_mode<synchronous>, transform_indices = @transform_1, window_bounds = array<i64: 1, 256>}, {pipeline_mode = #tpu.pipeline_mode<synchronous>, transform_indices = @transform_2, window_bounds = array<i64: 1, 256>}, {transform_indices = @transform_3, window_bounds = array<i64: 1, 1, 256>}]} {
    %c0 = arith.constant 0 : index
    %c0_0 = arith.constant 0 : index
    %c0_1 = arith.constant 0 : index
    %0 = vector.load %arg2[%c0, %c0_0, %c0_1] : memref<1x128x256xbf16, #tpu.memory_space<vmem>>, vector<1x128x256xbf16>
    %1 = vector.shape_cast %0 : vector<1x128x256xbf16> to vector<128x256xbf16>
    %2 = arith.extf %1 : vector<128x256xbf16> to vector<128x256xf32>
    %c0_2 = arith.constant 0 : index
    %c0_3 = arith.constant 0 : index
    %3 = vector.load %arg3[%c0_2, %c0_3] : memref<1x256xf32, #tpu.memory_space<vmem>>, vector<1x256xf32>
    %4 = vector.broadcast %3 : vector<1x256xf32> to vector<128x256xf32>
    %5 = arith.mulf %2, %4 : vector<128x256xf32>
    %c0_4 = arith.constant 0 : index
    %c0_5 = arith.constant 0 : index
    %6 = vector.load %arg4[%c0_4, %c0_5] : memref<1x256xf32, #tpu.memory_space<vmem>>, vector<1x256xf32>
    %7 = vector.broadcast %6 : vector<1x256xf32> to vector<128x256xf32>
    %8 = arith.addf %5, %7 : vector<128x256xf32>
    %cst = arith.constant 0.000000e+00 : f32
    %9 = vector.broadcast %cst : f32 to vector<128x256xf32>
    %10 = arith.maximumf %8, %9 : vector<128x256xf32>
    %cst_6 = arith.constant dense<0xFF800000> : vector<256xf32>
    %11 = vector.multi_reduction <maximumf>, %10, %cst_6 [0] : vector<128x256xf32> to vector<256xf32>
    %12 = vector.shape_cast %11 : vector<256xf32> to vector<1x256xf32>
    %c0_i32 = arith.constant 0 : i32
    %13 = arith.cmpi eq, %arg1, %c0_i32 : i32
    %14 = arith.extui %13 : i1 to i32
    %c0_i32_7 = arith.constant 0 : i32
    %15 = arith.cmpi ne, %14, %c0_i32_7 : i32
    scf.if %15 {
      %cst_14 = arith.constant 0xFF800000 : f32
      %20 = vector.broadcast %cst_14 : f32 to vector<1x1x256xf32>
      %c0_15 = arith.constant 0 : index
      %c0_16 = arith.constant 0 : index
      %c0_17 = arith.constant 0 : index
      %21 = vector.load %arg5[%c0_15, %c0_16, %c0_17] : memref<1x1x256xf32, #tpu.memory_space<vmem>>, vector<1x1x256xf32>
      tpu.vector_store %arg5[%c0_15, %c0_16, %c0_17], %20 {strides = array<i32>} : memref<1x1x256xf32, #tpu.memory_space<vmem>>, vector<1x1x256xf32>,
    } else {
    }
    %c0_8 = arith.constant 0 : index
    %c0_9 = arith.constant 0 : index
    %c0_10 = arith.constant 0 : index
    %16 = vector.load %arg5[%c0_8, %c0_9, %c0_10] : memref<1x1x256xf32, #tpu.memory_space<vmem>>, vector<1x1x256xf32>
    %17 = vector.shape_cast %12 : vector<1x256xf32> to vector<1x1x256xf32>
    %18 = arith.maximumf %16, %17 : vector<1x1x256xf32>
    %c0_11 = arith.constant 0 : index
    %c0_12 = arith.constant 0 : index
    %c0_13 = arith.constant 0 : index
    %19 = vector.load %arg5[%c0_11, %c0_12, %c0_13] : memref<1x1x256xf32, #tpu.memory_space<vmem>>, vector<1x1x256xf32>
    tpu.vector_store %arg5[%c0_11, %c0_12, %c0_13], %18 {strides = array<i32>} : memref<1x1x256xf32, #tpu.memory_space<vmem>>, vector<1x1x256xf32>,
    return
  }
  func.func @transform_0(%arg0: i32, %arg1: i32) -> (i32, i32, i32) {
    %c0_i32 = arith.constant 0 : i32
    %c0_i32_0 = arith.constant 0 : i32
    return %arg0, %arg1, %c0_i32 : i32, i32, i32
  }
  func.func @transform_1(%arg0: i32, %arg1: i32) -> (i32, i32) {
    %c0_i32 = arith.constant 0 : i32
    %c0_i32_0 = arith.constant 0 : i32
    %c0_i32_1 = arith.constant 0 : i32
    return %c0_i32, %c0_i32_0 : i32, i32
  }
  func.func @transform_2(%arg0: i32, %arg1: i32) -> (i32, i32) {
    %c0_i32 = arith.constant 0 : i32
    %c0_i32_0 = arith.constant 0 : i32
    %c0_i32_1 = arith.constant 0 : i32
    return %c0_i32, %c0_i32_0 : i32, i32
  }
  func.func @transform_3(%arg0: i32, %arg1: i32) -> (i32, i32, i32) {
    %c0_i32 = arith.constant 0 : i32
    %c0_i32_0 = arith.constant 0 : i32
    %c0_i32_1 = arith.constant 0 : i32
    return %arg0, %c0_i32, %c0_i32_0 : i32, i32, i32
  }
}

module attributes {stable_mosaic.version = 11 : i64} {
  func.func @_input_bmm_conv1_kernel(%arg0: i32, %arg1: i32, %arg2: memref<1x128x4xf32, #tpu.memory_space<vmem>>, %arg3: memref<1x4x4xf32, #tpu.memory_space<vmem>>, %arg4: memref<4x64xbf16, #tpu.memory_space<vmem>>, %arg5: memref<1x128x64xbf16, #tpu.memory_space<vmem>>, %arg6: memref<1x128x4xf32, #tpu.memory_space<vmem>>, %arg7: memref<1x1x1x64xf32, #tpu.memory_space<vmem>>, %arg8: memref<1x1x1x64xf32, #tpu.memory_space<vmem>>) attributes {dimension_semantics = [#tpu.dimension_semantics<parallel>, #tpu.dimension_semantics<parallel>], iteration_bounds = array<i64: 2, 2>, scalar_prefetch = 0 : i64, scratch_operands = 0 : i64, tpu.core_type = #tpu.core_type<tc>, window_params = [{transform_indices = @transform_0, window_bounds = array<i64: 1, 128, 4>}, {transform_indices = @transform_1, window_bounds = array<i64: 1, 4, 4>}, {pipeline_mode = #tpu.pipeline_mode<synchronous>, transform_indices = @transform_2, window_bounds = array<i64: 4, 64>}, {transform_indices = @transform_3, window_bounds = array<i64: 1, 128, 64>}, {transform_indices = @transform_4, window_bounds = array<i64: 1, 128, 4>}, {transform_indices = @transform_5, window_bounds = array<i64: 1, 1, 1, 64>}, {transform_indices = @transform_6, window_bounds = array<i64: 1, 1, 1, 64>}]} {
    %c0 = arith.constant 0 : index
    %c0_0 = arith.constant 0 : index
    %c0_1 = arith.constant 0 : index
    %0 = vector.load %arg2[%c0, %c0_0, %c0_1] : memref<1x128x4xf32, #tpu.memory_space<vmem>>, vector<1x128x4xf32>
    %1 = vector.shape_cast %0 : vector<1x128x4xf32> to vector<128x4xf32>
    %c0_2 = arith.constant 0 : index
    %c0_3 = arith.constant 0 : index
    %c0_4 = arith.constant 0 : index
    %2 = vector.load %arg3[%c0_2, %c0_3, %c0_4] : memref<1x4x4xf32, #tpu.memory_space<vmem>>, vector<1x4x4xf32>
    %3 = vector.shape_cast %2 : vector<1x4x4xf32> to vector<4x4xf32>
    %cst = arith.constant dense<0.000000e+00> : vector<128x4xf32>
    %4 = tpu.matmul %1, %3, %cst {dimension_numbers = #tpu.dot_dimension_numbers<[1], [0], [0], [1], [0, 0, 1, 1], [], []>} : vector<128x4xf32>, vector<4x4xf32>, vector<128x4xf32> -> vector<128x4xf32>
    %c0_5 = arith.constant 0 : index
    %c0_6 = arith.constant 0 : index
    %c0_7 = arith.constant 0 : index
    %5 = vector.load %arg6[%c0_5, %c0_6, %c0_7] : memref<1x128x4xf32, #tpu.memory_space<vmem>>, vector<1x128x4xf32>
    %6 = vector.shape_cast %5 : vector<1x128x4xf32> to vector<128x4xf32>
    %7 = vector.shape_cast %4 : vector<128x4xf32> to vector<1x128x4xf32>
    tpu.vector_store %arg6[%c0_5, %c0_6, %c0_7], %7 {strides = array<i32>} : memref<1x128x4xf32, #tpu.memory_space<vmem>>, vector<1x128x4xf32>,
    %8 = arith.truncf %4 : vector<128x4xf32> to vector<128x4xbf16>
    %c0_8 = arith.constant 0 : index
    %c0_9 = arith.constant 0 : index
    %9 = vector.load %arg4[%c0_8, %c0_9] : memref<4x64xbf16, #tpu.memory_space<vmem>>, vector<4x64xbf16>
    %cst_10 = arith.constant dense<0.000000e+00> : vector<128x64xf32>
    %10 = tpu.matmul %8, %9, %cst_10 {dimension_numbers = #tpu.dot_dimension_numbers<[1], [0], [0], [1], [0, 0, 1, 1], [], []>} : vector<128x4xbf16>, vector<4x64xbf16>, vector<128x64xf32> -> vector<128x64xf32>
    %cst_11 = arith.constant dense<0.000000e+00> : vector<64xf32>
    %11 = vector.multi_reduction <add>, %10, %cst_11 [0] : vector<128x64xf32> to vector<64xf32>
    %12 = vector.shape_cast %11 : vector<64xf32> to vector<1x1x1x64xf32>
    %c0_12 = arith.constant 0 : index
    %c0_13 = arith.constant 0 : index
    %c0_14 = arith.constant 0 : index
    %c0_15 = arith.constant 0 : index
    %13 = vector.load %arg7[%c0_12, %c0_13, %c0_14, %c0_15] : memref<1x1x1x64xf32, #tpu.memory_space<vmem>>, vector<1x1x1x64xf32>
    tpu.vector_store %arg7[%c0_12, %c0_13, %c0_14, %c0_15], %12 {strides = array<i32>} : memref<1x1x1x64xf32, #tpu.memory_space<vmem>>, vector<1x1x1x64xf32>,
    %14 = arith.mulf %10, %10 : vector<128x64xf32>
    %cst_16 = arith.constant dense<0.000000e+00> : vector<64xf32>
    %15 = vector.multi_reduction <add>, %14, %cst_16 [0] : vector<128x64xf32> to vector<64xf32>
    %16 = vector.shape_cast %15 : vector<64xf32> to vector<1x1x1x64xf32>
    %c0_17 = arith.constant 0 : index
    %c0_18 = arith.constant 0 : index
    %c0_19 = arith.constant 0 : index
    %c0_20 = arith.constant 0 : index
    %17 = vector.load %arg8[%c0_17, %c0_18, %c0_19, %c0_20] : memref<1x1x1x64xf32, #tpu.memory_space<vmem>>, vector<1x1x1x64xf32>
    tpu.vector_store %arg8[%c0_17, %c0_18, %c0_19, %c0_20], %16 {strides = array<i32>} : memref<1x1x1x64xf32, #tpu.memory_space<vmem>>, vector<1x1x1x64xf32>,
    %18 = arith.truncf %10 : vector<128x64xf32> to vector<128x64xbf16>
    %c0_21 = arith.constant 0 : index
    %c0_22 = arith.constant 0 : index
    %c0_23 = arith.constant 0 : index
    %19 = vector.load %arg5[%c0_21, %c0_22, %c0_23] : memref<1x128x64xbf16, #tpu.memory_space<vmem>>, vector<1x128x64xbf16>
    %20 = vector.shape_cast %19 : vector<1x128x64xbf16> to vector<128x64xbf16>
    %21 = vector.shape_cast %18 : vector<128x64xbf16> to vector<1x128x64xbf16>
    tpu.vector_store %arg5[%c0_21, %c0_22, %c0_23], %21 {strides = array<i32>} : memref<1x128x64xbf16, #tpu.memory_space<vmem>>, vector<1x128x64xbf16>,
    return
  }
  func.func @transform_0(%arg0: i32, %arg1: i32) -> (i32, i32, i32) {
    %c0_i32 = arith.constant 0 : i32
    %c0_i32_0 = arith.constant 0 : i32
    return %arg0, %arg1, %c0_i32 : i32, i32, i32
  }
  func.func @transform_1(%arg0: i32, %arg1: i32) -> (i32, i32, i32) {
    %c0_i32 = arith.constant 0 : i32
    %c0_i32_0 = arith.constant 0 : i32
    %c0_i32_1 = arith.constant 0 : i32
    return %arg0, %c0_i32, %c0_i32_0 : i32, i32, i32
  }
  func.func @transform_2(%arg0: i32, %arg1: i32) -> (i32, i32) {
    %c0_i32 = arith.constant 0 : i32
    %c0_i32_0 = arith.constant 0 : i32
    %c0_i32_1 = arith.constant 0 : i32
    return %c0_i32, %c0_i32_0 : i32, i32
  }
  func.func @transform_3(%arg0: i32, %arg1: i32) -> (i32, i32, i32) {
    %c0_i32 = arith.constant 0 : i32
    %c0_i32_0 = arith.constant 0 : i32
    return %arg0, %arg1, %c0_i32 : i32, i32, i32
  }
  func.func @transform_4(%arg0: i32, %arg1: i32) -> (i32, i32, i32) {
    %c0_i32 = arith.constant 0 : i32
    %c0_i32_0 = arith.constant 0 : i32
    return %arg0, %arg1, %c0_i32 : i32, i32, i32
  }
  func.func @transform_5(%arg0: i32, %arg1: i32) -> (i32, i32, i32, i32) {
    %c0_i32 = arith.constant 0 : i32
    %c0_i32_0 = arith.constant 0 : i32
    %c0_i32_1 = arith.constant 0 : i32
    return %arg0, %arg1, %c0_i32, %c0_i32_0 : i32, i32, i32, i32
  }
  func.func @transform_6(%arg0: i32, %arg1: i32) -> (i32, i32, i32, i32) {
    %c0_i32 = arith.constant 0 : i32
    %c0_i32_0 = arith.constant 0 : i32
    %c0_i32_1 = arith.constant 0 : i32
    return %arg0, %arg1, %c0_i32, %c0_i32_0 : i32, i32, i32, i32
  }
}

module attributes {stable_mosaic.version = 11 : i64} {
  func.func @_layer_kernel_act(%arg0: i32, %arg1: memref<128x64xbf16, #tpu.memory_space<vmem>>, %arg2: memref<1x64xf32, #tpu.memory_space<vmem>>, %arg3: memref<1x64xf32, #tpu.memory_space<vmem>>, %arg4: memref<64x64xbf16, #tpu.memory_space<vmem>>, %arg5: memref<128x64xbf16, #tpu.memory_space<vmem>>, %arg6: memref<1x1x64xf32, #tpu.memory_space<vmem>>, %arg7: memref<1x1x64xf32, #tpu.memory_space<vmem>>) attributes {dimension_semantics = [#tpu.dimension_semantics<parallel>], iteration_bounds = array<i64: 4>, scalar_prefetch = 0 : i64, scratch_operands = 0 : i64, tpu.core_type = #tpu.core_type<tc>, window_params = [{transform_indices = @transform_0, window_bounds = array<i64: 128, 64>}, {pipeline_mode = #tpu.pipeline_mode<synchronous>, transform_indices = @transform_1, window_bounds = array<i64: 1, 64>}, {pipeline_mode = #tpu.pipeline_mode<synchronous>, transform_indices = @transform_2, window_bounds = array<i64: 1, 64>}, {pipeline_mode = #tpu.pipeline_mode<synchronous>, transform_indices = @transform_3, window_bounds = array<i64: 64, 64>}, {transform_indices = @transform_4, window_bounds = array<i64: 128, 64>}, {transform_indices = @transform_5, window_bounds = array<i64: 1, 1, 64>}, {transform_indices = @transform_6, window_bounds = array<i64: 1, 1, 64>}]} {
    %c0 = arith.constant 0 : index
    %c0_0 = arith.constant 0 : index
    %0 = vector.load %arg1[%c0, %c0_0] : memref<128x64xbf16, #tpu.memory_space<vmem>>, vector<128x64xbf16>
    %1 = arith.extf %0 : vector<128x64xbf16> to vector<128x64xf32>
    %c0_1 = arith.constant 0 : index
    %c0_2 = arith.constant 0 : index
    %2 = vector.load %arg2[%c0_1, %c0_2] : memref<1x64xf32, #tpu.memory_space<vmem>>, vector<1x64xf32>
    %3 = vector.broadcast %2 : vector<1x64xf32> to vector<128x64xf32>
    %4 = arith.mulf %1, %3 : vector<128x64xf32>
    %c0_3 = arith.constant 0 : index
    %c0_4 = arith.constant 0 : index
    %5 = vector.load %arg3[%c0_3, %c0_4] : memref<1x64xf32, #tpu.memory_space<vmem>>, vector<1x64xf32>
    %6 = vector.broadcast %5 : vector<1x64xf32> to vector<128x64xf32>
    %7 = arith.addf %4, %6 : vector<128x64xf32>
    %cst = arith.constant 0.000000e+00 : f32
    %8 = vector.broadcast %cst : f32 to vector<128x64xf32>
    %9 = arith.maximumf %7, %8 : vector<128x64xf32>
    %10 = arith.truncf %9 : vector<128x64xf32> to vector<128x64xbf16>
    %c0_5 = arith.constant 0 : index
    %c0_6 = arith.constant 0 : index
    %11 = vector.load %arg4[%c0_5, %c0_6] : memref<64x64xbf16, #tpu.memory_space<vmem>>, vector<64x64xbf16>
    %cst_7 = arith.constant dense<0.000000e+00> : vector<128x64xf32>
    %12 = tpu.matmul %10, %11, %cst_7 {dimension_numbers = #tpu.dot_dimension_numbers<[1], [0], [0], [1], [0, 0, 1, 1], [], []>} : vector<128x64xbf16>, vector<64x64xbf16>, vector<128x64xf32> -> vector<128x64xf32>
    %cst_8 = arith.constant dense<0.000000e+00> : vector<64xf32>
    %13 = vector.multi_reduction <add>, %12, %cst_8 [0] : vector<128x64xf32> to vector<64xf32>
    %14 = vector.shape_cast %13 : vector<64xf32> to vector<1x1x64xf32>
    %c0_9 = arith.constant 0 : index
    %c0_10 = arith.constant 0 : index
    %c0_11 = arith.constant 0 : index
    %15 = vector.load %arg6[%c0_9, %c0_10, %c0_11] : memref<1x1x64xf32, #tpu.memory_space<vmem>>, vector<1x1x64xf32>
    tpu.vector_store %arg6[%c0_9, %c0_10, %c0_11], %14 {strides = array<i32>} : memref<1x1x64xf32, #tpu.memory_space<vmem>>, vector<1x1x64xf32>,
    %16 = arith.mulf %12, %12 : vector<128x64xf32>
    %cst_12 = arith.constant dense<0.000000e+00> : vector<64xf32>
    %17 = vector.multi_reduction <add>, %16, %cst_12 [0] : vector<128x64xf32> to vector<64xf32>
    %18 = vector.shape_cast %17 : vector<64xf32> to vector<1x1x64xf32>
    %c0_13 = arith.constant 0 : index
    %c0_14 = arith.constant 0 : index
    %c0_15 = arith.constant 0 : index
    %19 = vector.load %arg7[%c0_13, %c0_14, %c0_15] : memref<1x1x64xf32, #tpu.memory_space<vmem>>, vector<1x1x64xf32>
    tpu.vector_store %arg7[%c0_13, %c0_14, %c0_15], %18 {strides = array<i32>} : memref<1x1x64xf32, #tpu.memory_space<vmem>>, vector<1x1x64xf32>,
    %20 = arith.truncf %12 : vector<128x64xf32> to vector<128x64xbf16>
    %c0_16 = arith.constant 0 : index
    %c0_17 = arith.constant 0 : index
    %21 = vector.load %arg5[%c0_16, %c0_17] : memref<128x64xbf16, #tpu.memory_space<vmem>>, vector<128x64xbf16>
    tpu.vector_store %arg5[%c0_16, %c0_17], %20 {strides = array<i32>} : memref<128x64xbf16, #tpu.memory_space<vmem>>, vector<128x64xbf16>,
    return
  }
  func.func @transform_0(%arg0: i32) -> (i32, i32) {
    %c0_i32 = arith.constant 0 : i32
    %c0_i32_0 = arith.constant 0 : i32
    return %arg0, %c0_i32 : i32, i32
  }
  func.func @transform_1(%arg0: i32) -> (i32, i32) {
    %c0_i32 = arith.constant 0 : i32
    %c0_i32_0 = arith.constant 0 : i32
    %c0_i32_1 = arith.constant 0 : i32
    return %c0_i32, %c0_i32_0 : i32, i32
  }
  func.func @transform_2(%arg0: i32) -> (i32, i32) {
    %c0_i32 = arith.constant 0 : i32
    %c0_i32_0 = arith.constant 0 : i32
    %c0_i32_1 = arith.constant 0 : i32
    return %c0_i32, %c0_i32_0 : i32, i32
  }
  func.func @transform_3(%arg0: i32) -> (i32, i32) {
    %c0_i32 = arith.constant 0 : i32
    %c0_i32_0 = arith.constant 0 : i32
    %c0_i32_1 = arith.constant 0 : i32
    return %c0_i32, %c0_i32_0 : i32, i32
  }
  func.func @transform_4(%arg0: i32) -> (i32, i32) {
    %c0_i32 = arith.constant 0 : i32
    %c0_i32_0 = arith.constant 0 : i32
    return %arg0, %c0_i32 : i32, i32
  }
  func.func @transform_5(%arg0: i32) -> (i32, i32, i32) {
    %c0_i32 = arith.constant 0 : i32
    %c0_i32_0 = arith.constant 0 : i32
    %c0_i32_1 = arith.constant 0 : i32
    return %arg0, %c0_i32, %c0_i32_0 : i32, i32, i32
  }
  func.func @transform_6(%arg0: i32) -> (i32, i32, i32) {
    %c0_i32 = arith.constant 0 : i32
    %c0_i32_0 = arith.constant 0 : i32
    %c0_i32_1 = arith.constant 0 : i32
    return %arg0, %c0_i32, %c0_i32_0 : i32, i32, i32
  }
}

module attributes {stable_mosaic.version = 11 : i64} {
  func.func @_fc_head_kernel(%arg0: memref<2x256xf32, #tpu.memory_space<vmem>>, %arg1: memref<256x256xbf16, #tpu.memory_space<vmem>>, %arg2: memref<1x256xf32, #tpu.memory_space<vmem>>, %arg3: memref<1x256xf32, #tpu.memory_space<vmem>>, %arg4: memref<256x128xbf16, #tpu.memory_space<vmem>>, %arg5: memref<1x128xf32, #tpu.memory_space<vmem>>, %arg6: memref<1x128xf32, #tpu.memory_space<vmem>>, %arg7: memref<128x16xbf16, #tpu.memory_space<vmem>>, %arg8: memref<1x16xf32, #tpu.memory_space<vmem>>, %arg9: memref<2x16xf32, #tpu.memory_space<vmem>>) attributes {dimension_semantics = [], scalar_prefetch = 0 : i64, scratch_operands = 0 : i64, tpu.core_type = #tpu.core_type<tc>} {
    %c0 = arith.constant 0 : index
    %c0_0 = arith.constant 0 : index
    %0 = vector.load %arg0[%c0, %c0_0] : memref<2x256xf32, #tpu.memory_space<vmem>>, vector<2x256xf32>
    %1 = arith.truncf %0 : vector<2x256xf32> to vector<2x256xbf16>
    %c0_1 = arith.constant 0 : index
    %c0_2 = arith.constant 0 : index
    %2 = vector.load %arg1[%c0_1, %c0_2] : memref<256x256xbf16, #tpu.memory_space<vmem>>, vector<256x256xbf16>
    %cst = arith.constant dense<0.000000e+00> : vector<2x256xf32>
    %3 = tpu.matmul %1, %2, %cst {dimension_numbers = #tpu.dot_dimension_numbers<[1], [0], [0], [1], [0, 0, 1, 1], [], []>} : vector<2x256xbf16>, vector<256x256xbf16>, vector<2x256xf32> -> vector<2x256xf32>
    %c0_3 = arith.constant 0 : index
    %c0_4 = arith.constant 0 : index
    %4 = vector.load %arg2[%c0_3, %c0_4] : memref<1x256xf32, #tpu.memory_space<vmem>>, vector<1x256xf32>
    %c0_5 = arith.constant 0 : index
    %c0_6 = arith.constant 0 : index
    %5 = vector.load %arg3[%c0_5, %c0_6] : memref<1x256xf32, #tpu.memory_space<vmem>>, vector<1x256xf32>
    %cst_7 = arith.constant dense<0.000000e+00> : vector<256xf32>
    %6 = vector.multi_reduction <add>, %3, %cst_7 [0] : vector<2x256xf32> to vector<256xf32>
    %7 = vector.shape_cast %6 : vector<256xf32> to vector<1x256xf32>
    %cst_8 = arith.constant 2.000000e+00 : f32
    %8 = vector.broadcast %cst_8 : f32 to vector<1x256xf32>
    %9 = arith.divf %7, %8 : vector<1x256xf32>
    %10 = vector.broadcast %9 : vector<1x256xf32> to vector<2x256xf32>
    %11 = arith.subf %3, %10 : vector<2x256xf32>
    %12 = arith.mulf %11, %11 : vector<2x256xf32>
    %cst_9 = arith.constant dense<0.000000e+00> : vector<256xf32>
    %13 = vector.multi_reduction <add>, %12, %cst_9 [0] : vector<2x256xf32> to vector<256xf32>
    %14 = vector.shape_cast %13 : vector<256xf32> to vector<1x256xf32>
    %cst_10 = arith.constant 2.000000e+00 : f32
    %15 = vector.broadcast %cst_10 : f32 to vector<1x256xf32>
    %16 = arith.divf %14, %15 : vector<1x256xf32>
    %17 = vector.broadcast %9 : vector<1x256xf32> to vector<2x256xf32>
    %18 = arith.subf %3, %17 : vector<2x256xf32>
    %cst_11 = arith.constant 9.99999974E-6 : f32
    %19 = vector.broadcast %cst_11 : f32 to vector<1x256xf32>
    %20 = arith.addf %16, %19 : vector<1x256xf32>
    %21 = math.rsqrt %20 : vector<1x256xf32>
    %22 = vector.broadcast %21 : vector<1x256xf32> to vector<2x256xf32>
    %23 = arith.mulf %18, %22 : vector<2x256xf32>
    %24 = vector.broadcast %4 : vector<1x256xf32> to vector<2x256xf32>
    %25 = arith.mulf %23, %24 : vector<2x256xf32>
    %26 = vector.broadcast %5 : vector<1x256xf32> to vector<2x256xf32>
    %27 = arith.addf %25, %26 : vector<2x256xf32>
    %cst_12 = arith.constant 0.000000e+00 : f32
    %28 = vector.broadcast %cst_12 : f32 to vector<2x256xf32>
    %29 = arith.maximumf %27, %28 : vector<2x256xf32>
    %30 = arith.truncf %29 : vector<2x256xf32> to vector<2x256xbf16>
    %c0_13 = arith.constant 0 : index
    %c0_14 = arith.constant 0 : index
    %31 = vector.load %arg4[%c0_13, %c0_14] : memref<256x128xbf16, #tpu.memory_space<vmem>>, vector<256x128xbf16>
    %cst_15 = arith.constant dense<0.000000e+00> : vector<2x128xf32>
    %32 = tpu.matmul %30, %31, %cst_15 {dimension_numbers = #tpu.dot_dimension_numbers<[1], [0], [0], [1], [0, 0, 1, 1], [], []>} : vector<2x256xbf16>, vector<256x128xbf16>, vector<2x128xf32> -> vector<2x128xf32>
    %c0_16 = arith.constant 0 : index
    %c0_17 = arith.constant 0 : index
    %33 = vector.load %arg5[%c0_16, %c0_17] : memref<1x128xf32, #tpu.memory_space<vmem>>, vector<1x128xf32>
    %c0_18 = arith.constant 0 : index
    %c0_19 = arith.constant 0 : index
    %34 = vector.load %arg6[%c0_18, %c0_19] : memref<1x128xf32, #tpu.memory_space<vmem>>, vector<1x128xf32>
    %cst_20 = arith.constant dense<0.000000e+00> : vector<128xf32>
    %35 = vector.multi_reduction <add>, %32, %cst_20 [0] : vector<2x128xf32> to vector<128xf32>
    %36 = vector.shape_cast %35 : vector<128xf32> to vector<1x128xf32>
    %cst_21 = arith.constant 2.000000e+00 : f32
    %37 = vector.broadcast %cst_21 : f32 to vector<1x128xf32>
    %38 = arith.divf %36, %37 : vector<1x128xf32>
    %39 = vector.broadcast %38 : vector<1x128xf32> to vector<2x128xf32>
    %40 = arith.subf %32, %39 : vector<2x128xf32>
    %41 = arith.mulf %40, %40 : vector<2x128xf32>
    %cst_22 = arith.constant dense<0.000000e+00> : vector<128xf32>
    %42 = vector.multi_reduction <add>, %41, %cst_22 [0] : vector<2x128xf32> to vector<128xf32>
    %43 = vector.shape_cast %42 : vector<128xf32> to vector<1x128xf32>
    %cst_23 = arith.constant 2.000000e+00 : f32
    %44 = vector.broadcast %cst_23 : f32 to vector<1x128xf32>
    %45 = arith.divf %43, %44 : vector<1x128xf32>
    %46 = vector.broadcast %38 : vector<1x128xf32> to vector<2x128xf32>
    %47 = arith.subf %32, %46 : vector<2x128xf32>
    %cst_24 = arith.constant 9.99999974E-6 : f32
    %48 = vector.broadcast %cst_24 : f32 to vector<1x128xf32>
    %49 = arith.addf %45, %48 : vector<1x128xf32>
    %50 = math.rsqrt %49 : vector<1x128xf32>
    %51 = vector.broadcast %50 : vector<1x128xf32> to vector<2x128xf32>
    %52 = arith.mulf %47, %51 : vector<2x128xf32>
    %53 = vector.broadcast %33 : vector<1x128xf32> to vector<2x128xf32>
    %54 = arith.mulf %52, %53 : vector<2x128xf32>
    %55 = vector.broadcast %34 : vector<1x128xf32> to vector<2x128xf32>
    %56 = arith.addf %54, %55 : vector<2x128xf32>
    %cst_25 = arith.constant 0.000000e+00 : f32
    %57 = vector.broadcast %cst_25 : f32 to vector<2x128xf32>
    %58 = arith.maximumf %56, %57 : vector<2x128xf32>
    %59 = arith.truncf %58 : vector<2x128xf32> to vector<2x128xbf16>
    %c0_26 = arith.constant 0 : index
    %c0_27 = arith.constant 0 : index
    %60 = vector.load %arg7[%c0_26, %c0_27] : memref<128x16xbf16, #tpu.memory_space<vmem>>, vector<128x16xbf16>
    %cst_28 = arith.constant dense<0.000000e+00> : vector<2x16xf32>
    %61 = tpu.matmul %59, %60, %cst_28 {dimension_numbers = #tpu.dot_dimension_numbers<[1], [0], [0], [1], [0, 0, 1, 1], [], []>} : vector<2x128xbf16>, vector<128x16xbf16>, vector<2x16xf32> -> vector<2x16xf32>
    %c0_29 = arith.constant 0 : index
    %c0_30 = arith.constant 0 : index
    %62 = vector.load %arg8[%c0_29, %c0_30] : memref<1x16xf32, #tpu.memory_space<vmem>>, vector<1x16xf32>
    %63 = vector.broadcast %62 : vector<1x16xf32> to vector<2x16xf32>
    %64 = arith.addf %61, %63 : vector<2x16xf32>
    %65 = tpu.iota {dimensions = array<i32: 1>} : vector<2x16xi32>
    %c5_i32 = arith.constant 5 : i32
    %c0_i32 = arith.constant 0 : i32
    %66 = arith.cmpi eq, %c5_i32, %c0_i32 : i32
    %c1_i32 = arith.constant 1 : i32
    %67 = arith.select %66, %c1_i32, %c5_i32 : i32
    %68 = vector.broadcast %67 : i32 to vector<2x16xi32>
    %69 = arith.remsi %65, %68 : vector<2x16xi32>
    %c0_i32_31 = arith.constant 0 : i32
    %70 = vector.broadcast %c0_i32_31 : i32 to vector<2x16xi32>
    %71 = arith.cmpi ne, %69, %70 : vector<2x16xi32>
    %c0_i32_32 = arith.constant 0 : i32
    %72 = vector.broadcast %c0_i32_32 : i32 to vector<2x16xi32>
    %73 = arith.cmpi slt, %69, %72 : vector<2x16xi32>
    %c0_i32_33 = arith.constant 0 : i32
    %74 = arith.cmpi slt, %67, %c0_i32_33 : i32
    %75 = vector.broadcast %74 : i1 to vector<2x16xi1>
    %76 = vector.broadcast %75 : vector<2x16xi1> to vector<2x16xi1>
    %77 = arith.xori %73, %76 : vector<2x16xi1>
    %78 = arith.andi %77, %71 : vector<2x16xi1>
    %79 = vector.broadcast %67 : i32 to vector<2x16xi32>
    %80 = arith.addi %69, %79 : vector<2x16xi32>
    %81 = arith.select %78, %80, %69 : vector<2x16xi1>, vector<2x16xi32>
    %c0_i32_34 = arith.constant 0 : i32
    %82 = vector.broadcast %c0_i32_34 : i32 to vector<2x16xi32>
    %83 = arith.cmpi eq, %81, %82 : vector<2x16xi32>
    %cst_35 = arith.constant 1.000000e+00 : f32
    %cst_36 = arith.constant 0.000000e+00 : f32
    %84 = vector.broadcast %cst_35 : f32 to vector<2x16xf32>
    %85 = vector.broadcast %cst_36 : f32 to vector<2x16xf32>
    %86 = arith.select %83, %84, %85 : vector<2x16xi1>, vector<2x16xf32>
    %87 = arith.addf %64, %86 : vector<2x16xf32>
    %c0_37 = arith.constant 0 : index
    %c0_38 = arith.constant 0 : index
    %88 = vector.load %arg9[%c0_37, %c0_38] : memref<2x16xf32, #tpu.memory_space<vmem>>, vector<2x16xf32>
    tpu.vector_store %arg9[%c0_37, %c0_38], %87 {strides = array<i32>} : memref<2x16xf32, #tpu.memory_space<vmem>>, vector<2x16xf32>,
    return
  }
}

module attributes {stable_mosaic.version = 11 : i64} {
  func.func @_fc_head_kernel(%arg0: memref<2x256xf32, #tpu.memory_space<vmem>>, %arg1: memref<256x256xbf16, #tpu.memory_space<vmem>>, %arg2: memref<1x256xf32, #tpu.memory_space<vmem>>, %arg3: memref<1x256xf32, #tpu.memory_space<vmem>>, %arg4: memref<256x128xbf16, #tpu.memory_space<vmem>>, %arg5: memref<1x128xf32, #tpu.memory_space<vmem>>, %arg6: memref<1x128xf32, #tpu.memory_space<vmem>>, %arg7: memref<128x4096xbf16, #tpu.memory_space<vmem>>, %arg8: memref<1x4096xf32, #tpu.memory_space<vmem>>, %arg9: memref<2x4096xf32, #tpu.memory_space<vmem>>) attributes {dimension_semantics = [], scalar_prefetch = 0 : i64, scratch_operands = 0 : i64, tpu.core_type = #tpu.core_type<tc>} {
    %c0 = arith.constant 0 : index
    %c0_0 = arith.constant 0 : index
    %0 = vector.load %arg0[%c0, %c0_0] : memref<2x256xf32, #tpu.memory_space<vmem>>, vector<2x256xf32>
    %1 = arith.truncf %0 : vector<2x256xf32> to vector<2x256xbf16>
    %c0_1 = arith.constant 0 : index
    %c0_2 = arith.constant 0 : index
    %2 = vector.load %arg1[%c0_1, %c0_2] : memref<256x256xbf16, #tpu.memory_space<vmem>>, vector<256x256xbf16>
    %cst = arith.constant dense<0.000000e+00> : vector<2x256xf32>
    %3 = tpu.matmul %1, %2, %cst {dimension_numbers = #tpu.dot_dimension_numbers<[1], [0], [0], [1], [0, 0, 1, 1], [], []>} : vector<2x256xbf16>, vector<256x256xbf16>, vector<2x256xf32> -> vector<2x256xf32>
    %c0_3 = arith.constant 0 : index
    %c0_4 = arith.constant 0 : index
    %4 = vector.load %arg2[%c0_3, %c0_4] : memref<1x256xf32, #tpu.memory_space<vmem>>, vector<1x256xf32>
    %c0_5 = arith.constant 0 : index
    %c0_6 = arith.constant 0 : index
    %5 = vector.load %arg3[%c0_5, %c0_6] : memref<1x256xf32, #tpu.memory_space<vmem>>, vector<1x256xf32>
    %cst_7 = arith.constant dense<0.000000e+00> : vector<256xf32>
    %6 = vector.multi_reduction <add>, %3, %cst_7 [0] : vector<2x256xf32> to vector<256xf32>
    %7 = vector.shape_cast %6 : vector<256xf32> to vector<1x256xf32>
    %cst_8 = arith.constant 2.000000e+00 : f32
    %8 = vector.broadcast %cst_8 : f32 to vector<1x256xf32>
    %9 = arith.divf %7, %8 : vector<1x256xf32>
    %10 = vector.broadcast %9 : vector<1x256xf32> to vector<2x256xf32>
    %11 = arith.subf %3, %10 : vector<2x256xf32>
    %12 = arith.mulf %11, %11 : vector<2x256xf32>
    %cst_9 = arith.constant dense<0.000000e+00> : vector<256xf32>
    %13 = vector.multi_reduction <add>, %12, %cst_9 [0] : vector<2x256xf32> to vector<256xf32>
    %14 = vector.shape_cast %13 : vector<256xf32> to vector<1x256xf32>
    %cst_10 = arith.constant 2.000000e+00 : f32
    %15 = vector.broadcast %cst_10 : f32 to vector<1x256xf32>
    %16 = arith.divf %14, %15 : vector<1x256xf32>
    %17 = vector.broadcast %9 : vector<1x256xf32> to vector<2x256xf32>
    %18 = arith.subf %3, %17 : vector<2x256xf32>
    %cst_11 = arith.constant 9.99999974E-6 : f32
    %19 = vector.broadcast %cst_11 : f32 to vector<1x256xf32>
    %20 = arith.addf %16, %19 : vector<1x256xf32>
    %21 = math.rsqrt %20 : vector<1x256xf32>
    %22 = vector.broadcast %21 : vector<1x256xf32> to vector<2x256xf32>
    %23 = arith.mulf %18, %22 : vector<2x256xf32>
    %24 = vector.broadcast %4 : vector<1x256xf32> to vector<2x256xf32>
    %25 = arith.mulf %23, %24 : vector<2x256xf32>
    %26 = vector.broadcast %5 : vector<1x256xf32> to vector<2x256xf32>
    %27 = arith.addf %25, %26 : vector<2x256xf32>
    %cst_12 = arith.constant 0.000000e+00 : f32
    %28 = vector.broadcast %cst_12 : f32 to vector<2x256xf32>
    %29 = arith.maximumf %27, %28 : vector<2x256xf32>
    %30 = arith.truncf %29 : vector<2x256xf32> to vector<2x256xbf16>
    %c0_13 = arith.constant 0 : index
    %c0_14 = arith.constant 0 : index
    %31 = vector.load %arg4[%c0_13, %c0_14] : memref<256x128xbf16, #tpu.memory_space<vmem>>, vector<256x128xbf16>
    %cst_15 = arith.constant dense<0.000000e+00> : vector<2x128xf32>
    %32 = tpu.matmul %30, %31, %cst_15 {dimension_numbers = #tpu.dot_dimension_numbers<[1], [0], [0], [1], [0, 0, 1, 1], [], []>} : vector<2x256xbf16>, vector<256x128xbf16>, vector<2x128xf32> -> vector<2x128xf32>
    %c0_16 = arith.constant 0 : index
    %c0_17 = arith.constant 0 : index
    %33 = vector.load %arg5[%c0_16, %c0_17] : memref<1x128xf32, #tpu.memory_space<vmem>>, vector<1x128xf32>
    %c0_18 = arith.constant 0 : index
    %c0_19 = arith.constant 0 : index
    %34 = vector.load %arg6[%c0_18, %c0_19] : memref<1x128xf32, #tpu.memory_space<vmem>>, vector<1x128xf32>
    %cst_20 = arith.constant dense<0.000000e+00> : vector<128xf32>
    %35 = vector.multi_reduction <add>, %32, %cst_20 [0] : vector<2x128xf32> to vector<128xf32>
    %36 = vector.shape_cast %35 : vector<128xf32> to vector<1x128xf32>
    %cst_21 = arith.constant 2.000000e+00 : f32
    %37 = vector.broadcast %cst_21 : f32 to vector<1x128xf32>
    %38 = arith.divf %36, %37 : vector<1x128xf32>
    %39 = vector.broadcast %38 : vector<1x128xf32> to vector<2x128xf32>
    %40 = arith.subf %32, %39 : vector<2x128xf32>
    %41 = arith.mulf %40, %40 : vector<2x128xf32>
    %cst_22 = arith.constant dense<0.000000e+00> : vector<128xf32>
    %42 = vector.multi_reduction <add>, %41, %cst_22 [0] : vector<2x128xf32> to vector<128xf32>
    %43 = vector.shape_cast %42 : vector<128xf32> to vector<1x128xf32>
    %cst_23 = arith.constant 2.000000e+00 : f32
    %44 = vector.broadcast %cst_23 : f32 to vector<1x128xf32>
    %45 = arith.divf %43, %44 : vector<1x128xf32>
    %46 = vector.broadcast %38 : vector<1x128xf32> to vector<2x128xf32>
    %47 = arith.subf %32, %46 : vector<2x128xf32>
    %cst_24 = arith.constant 9.99999974E-6 : f32
    %48 = vector.broadcast %cst_24 : f32 to vector<1x128xf32>
    %49 = arith.addf %45, %48 : vector<1x128xf32>
    %50 = math.rsqrt %49 : vector<1x128xf32>
    %51 = vector.broadcast %50 : vector<1x128xf32> to vector<2x128xf32>
    %52 = arith.mulf %47, %51 : vector<2x128xf32>
    %53 = vector.broadcast %33 : vector<1x128xf32> to vector<2x128xf32>
    %54 = arith.mulf %52, %53 : vector<2x128xf32>
    %55 = vector.broadcast %34 : vector<1x128xf32> to vector<2x128xf32>
    %56 = arith.addf %54, %55 : vector<2x128xf32>
    %cst_25 = arith.constant 0.000000e+00 : f32
    %57 = vector.broadcast %cst_25 : f32 to vector<2x128xf32>
    %58 = arith.maximumf %56, %57 : vector<2x128xf32>
    %59 = arith.truncf %58 : vector<2x128xf32> to vector<2x128xbf16>
    %c0_26 = arith.constant 0 : index
    %c0_27 = arith.constant 0 : index
    %60 = vector.load %arg7[%c0_26, %c0_27] : memref<128x4096xbf16, #tpu.memory_space<vmem>>, vector<128x4096xbf16>
    %cst_28 = arith.constant dense<0.000000e+00> : vector<2x4096xf32>
    %61 = tpu.matmul %59, %60, %cst_28 {dimension_numbers = #tpu.dot_dimension_numbers<[1], [0], [0], [1], [0, 0, 1, 1], [], []>} : vector<2x128xbf16>, vector<128x4096xbf16>, vector<2x4096xf32> -> vector<2x4096xf32>
    %c0_29 = arith.constant 0 : index
    %c0_30 = arith.constant 0 : index
    %62 = vector.load %arg8[%c0_29, %c0_30] : memref<1x4096xf32, #tpu.memory_space<vmem>>, vector<1x4096xf32>
    %63 = vector.broadcast %62 : vector<1x4096xf32> to vector<2x4096xf32>
    %64 = arith.addf %61, %63 : vector<2x4096xf32>
    %65 = tpu.iota {dimensions = array<i32: 1>} : vector<2x4096xi32>
    %c65_i32 = arith.constant 65 : i32
    %c0_i32 = arith.constant 0 : i32
    %66 = arith.cmpi eq, %c65_i32, %c0_i32 : i32
    %c1_i32 = arith.constant 1 : i32
    %67 = arith.select %66, %c1_i32, %c65_i32 : i32
    %68 = vector.broadcast %67 : i32 to vector<2x4096xi32>
    %69 = arith.remsi %65, %68 : vector<2x4096xi32>
    %c0_i32_31 = arith.constant 0 : i32
    %70 = vector.broadcast %c0_i32_31 : i32 to vector<2x4096xi32>
    %71 = arith.cmpi ne, %69, %70 : vector<2x4096xi32>
    %c0_i32_32 = arith.constant 0 : i32
    %72 = vector.broadcast %c0_i32_32 : i32 to vector<2x4096xi32>
    %73 = arith.cmpi slt, %69, %72 : vector<2x4096xi32>
    %c0_i32_33 = arith.constant 0 : i32
    %74 = arith.cmpi slt, %67, %c0_i32_33 : i32
    %75 = vector.broadcast %74 : i1 to vector<2x4096xi1>
    %76 = vector.broadcast %75 : vector<2x4096xi1> to vector<2x4096xi1>
    %77 = arith.xori %73, %76 : vector<2x4096xi1>
    %78 = arith.andi %77, %71 : vector<2x4096xi1>
    %79 = vector.broadcast %67 : i32 to vector<2x4096xi32>
    %80 = arith.addi %69, %79 : vector<2x4096xi32>
    %81 = arith.select %78, %80, %69 : vector<2x4096xi1>, vector<2x4096xi32>
    %c0_i32_34 = arith.constant 0 : i32
    %82 = vector.broadcast %c0_i32_34 : i32 to vector<2x4096xi32>
    %83 = arith.cmpi eq, %81, %82 : vector<2x4096xi32>
    %cst_35 = arith.constant 1.000000e+00 : f32
    %cst_36 = arith.constant 0.000000e+00 : f32
    %84 = vector.broadcast %cst_35 : f32 to vector<2x4096xf32>
    %85 = vector.broadcast %cst_36 : f32 to vector<2x4096xf32>
    %86 = arith.select %83, %84, %85 : vector<2x4096xi1>, vector<2x4096xf32>
    %87 = arith.addf %64, %86 : vector<2x4096xf32>
    %c0_37 = arith.constant 0 : index
    %c0_38 = arith.constant 0 : index
    %88 = vector.load %arg9[%c0_37, %c0_38] : memref<2x4096xf32, #tpu.memory_space<vmem>>, vector<2x4096xf32>
    tpu.vector_store %arg9[%c0_37, %c0_38], %87 {strides = array<i32>} : memref<2x4096xf32, #tpu.memory_space<vmem>>, vector<2x4096xf32>,
    return
  }
}

module attributes {stable_mosaic.version = 11 : i64} {
  func.func @_feature_bmm_conv3_kernel(%arg0: i32, %arg1: i32, %arg2: memref<1x128x64xbf16, #tpu.memory_space<vmem>>, %arg3: memref<1x64xf32, #tpu.memory_space<vmem>>, %arg4: memref<1x64xf32, #tpu.memory_space<vmem>>, %arg5: memref<1x64x64xbf16, #tpu.memory_space<vmem>>, %arg6: memref<64x64xbf16, #tpu.memory_space<vmem>>, %arg7: memref<1x128x64xbf16, #tpu.memory_space<vmem>>, %arg8: memref<1x1x1x64xf32, #tpu.memory_space<vmem>>, %arg9: memref<1x1x1x64xf32, #tpu.memory_space<vmem>>) attributes {dimension_semantics = [#tpu.dimension_semantics<parallel>, #tpu.dimension_semantics<parallel>], iteration_bounds = array<i64: 2, 2>, scalar_prefetch = 0 : i64, scratch_operands = 0 : i64, tpu.core_type = #tpu.core_type<tc>, window_params = [{transform_indices = @transform_0, window_bounds = array<i64: 1, 128, 64>}, {pipeline_mode = #tpu.pipeline_mode<synchronous>, transform_indices = @transform_1, window_bounds = array<i64: 1, 64>}, {pipeline_mode = #tpu.pipeline_mode<synchronous>, transform_indices = @transform_2, window_bounds = array<i64: 1, 64>}, {transform_indices = @transform_3, window_bounds = array<i64: 1, 64, 64>}, {pipeline_mode = #tpu.pipeline_mode<synchronous>, transform_indices = @transform_4, window_bounds = array<i64: 64, 64>}, {transform_indices = @transform_5, window_bounds = array<i64: 1, 128, 64>}, {transform_indices = @transform_6, window_bounds = array<i64: 1, 1, 1, 64>}, {transform_indices = @transform_7, window_bounds = array<i64: 1, 1, 1, 64>}]} {
    %c0 = arith.constant 0 : index
    %c0_0 = arith.constant 0 : index
    %c0_1 = arith.constant 0 : index
    %0 = vector.load %arg2[%c0, %c0_0, %c0_1] : memref<1x128x64xbf16, #tpu.memory_space<vmem>>, vector<1x128x64xbf16>
    %1 = vector.shape_cast %0 : vector<1x128x64xbf16> to vector<128x64xbf16>
    %2 = arith.extf %1 : vector<128x64xbf16> to vector<128x64xf32>
    %c0_2 = arith.constant 0 : index
    %c0_3 = arith.constant 0 : index
    %3 = vector.load %arg3[%c0_2, %c0_3] : memref<1x64xf32, #tpu.memory_space<vmem>>, vector<1x64xf32>
    %4 = vector.broadcast %3 : vector<1x64xf32> to vector<128x64xf32>
    %5 = arith.mulf %2, %4 : vector<128x64xf32>
    %c0_4 = arith.constant 0 : index
    %c0_5 = arith.constant 0 : index
    %6 = vector.load %arg4[%c0_4, %c0_5] : memref<1x64xf32, #tpu.memory_space<vmem>>, vector<1x64xf32>
    %7 = vector.broadcast %6 : vector<1x64xf32> to vector<128x64xf32>
    %8 = arith.addf %5, %7 : vector<128x64xf32>
    %cst = arith.constant 0.000000e+00 : f32
    %9 = vector.broadcast %cst : f32 to vector<128x64xf32>
    %10 = arith.maximumf %8, %9 : vector<128x64xf32>
    %11 = arith.truncf %10 : vector<128x64xf32> to vector<128x64xbf16>
    %c0_6 = arith.constant 0 : index
    %c0_7 = arith.constant 0 : index
    %c0_8 = arith.constant 0 : index
    %12 = vector.load %arg5[%c0_6, %c0_7, %c0_8] : memref<1x64x64xbf16, #tpu.memory_space<vmem>>, vector<1x64x64xbf16>
    %13 = vector.shape_cast %12 : vector<1x64x64xbf16> to vector<64x64xbf16>
    %cst_9 = arith.constant dense<0.000000e+00> : vector<128x64xf32>
    %14 = tpu.matmul %11, %13, %cst_9 {dimension_numbers = #tpu.dot_dimension_numbers<[1], [0], [0], [1], [0, 0, 1, 1], [], []>} : vector<128x64xbf16>, vector<64x64xbf16>, vector<128x64xf32> -> vector<128x64xf32>
    %15 = arith.truncf %14 : vector<128x64xf32> to vector<128x64xbf16>
    %c0_10 = arith.constant 0 : index
    %c0_11 = arith.constant 0 : index
    %16 = vector.load %arg6[%c0_10, %c0_11] : memref<64x64xbf16, #tpu.memory_space<vmem>>, vector<64x64xbf16>
    %cst_12 = arith.constant dense<0.000000e+00> : vector<128x64xf32>
    %17 = tpu.matmul %15, %16, %cst_12 {dimension_numbers = #tpu.dot_dimension_numbers<[1], [0], [0], [1], [0, 0, 1, 1], [], []>} : vector<128x64xbf16>, vector<64x64xbf16>, vector<128x64xf32> -> vector<128x64xf32>
    %cst_13 = arith.constant dense<0.000000e+00> : vector<64xf32>
    %18 = vector.multi_reduction <add>, %17, %cst_13 [0] : vector<128x64xf32> to vector<64xf32>
    %19 = vector.shape_cast %18 : vector<64xf32> to vector<1x1x1x64xf32>
    %c0_14 = arith.constant 0 : index
    %c0_15 = arith.constant 0 : index
    %c0_16 = arith.constant 0 : index
    %c0_17 = arith.constant 0 : index
    %20 = vector.load %arg8[%c0_14, %c0_15, %c0_16, %c0_17] : memref<1x1x1x64xf32, #tpu.memory_space<vmem>>, vector<1x1x1x64xf32>
    tpu.vector_store %arg8[%c0_14, %c0_15, %c0_16, %c0_17], %19 {strides = array<i32>} : memref<1x1x1x64xf32, #tpu.memory_space<vmem>>, vector<1x1x1x64xf32>,
    %21 = arith.mulf %17, %17 : vector<128x64xf32>
    %cst_18 = arith.constant dense<0.000000e+00> : vector<64xf32>
    %22 = vector.multi_reduction <add>, %21, %cst_18 [0] : vector<128x64xf32> to vector<64xf32>
    %23 = vector.shape_cast %22 : vector<64xf32> to vector<1x1x1x64xf32>
    %c0_19 = arith.constant 0 : index
    %c0_20 = arith.constant 0 : index
    %c0_21 = arith.constant 0 : index
    %c0_22 = arith.constant 0 : index
    %24 = vector.load %arg9[%c0_19, %c0_20, %c0_21, %c0_22] : memref<1x1x1x64xf32, #tpu.memory_space<vmem>>, vector<1x1x1x64xf32>
    tpu.vector_store %arg9[%c0_19, %c0_20, %c0_21, %c0_22], %23 {strides = array<i32>} : memref<1x1x1x64xf32, #tpu.memory_space<vmem>>, vector<1x1x1x64xf32>,
    %25 = arith.truncf %17 : vector<128x64xf32> to vector<128x64xbf16>
    %c0_23 = arith.constant 0 : index
    %c0_24 = arith.constant 0 : index
    %c0_25 = arith.constant 0 : index
    %26 = vector.load %arg7[%c0_23, %c0_24, %c0_25] : memref<1x128x64xbf16, #tpu.memory_space<vmem>>, vector<1x128x64xbf16>
    %27 = vector.shape_cast %26 : vector<1x128x64xbf16> to vector<128x64xbf16>
    %28 = vector.shape_cast %25 : vector<128x64xbf16> to vector<1x128x64xbf16>
    tpu.vector_store %arg7[%c0_23, %c0_24, %c0_25], %28 {strides = array<i32>} : memref<1x128x64xbf16, #tpu.memory_space<vmem>>, vector<1x128x64xbf16>,
    return
  }
  func.func @transform_0(%arg0: i32, %arg1: i32) -> (i32, i32, i32) {
    %c0_i32 = arith.constant 0 : i32
    %c0_i32_0 = arith.constant 0 : i32
    return %arg0, %arg1, %c0_i32 : i32, i32, i32
  }
  func.func @transform_1(%arg0: i32, %arg1: i32) -> (i32, i32) {
    %c0_i32 = arith.constant 0 : i32
    %c0_i32_0 = arith.constant 0 : i32
    %c0_i32_1 = arith.constant 0 : i32
    return %c0_i32, %c0_i32_0 : i32, i32
  }
  func.func @transform_2(%arg0: i32, %arg1: i32) -> (i32, i32) {
    %c0_i32 = arith.constant 0 : i32
    %c0_i32_0 = arith.constant 0 : i32
    %c0_i32_1 = arith.constant 0 : i32
    return %c0_i32, %c0_i32_0 : i32, i32
  }
  func.func @transform_3(%arg0: i32, %arg1: i32) -> (i32, i32, i32) {
    %c0_i32 = arith.constant 0 : i32
    %c0_i32_0 = arith.constant 0 : i32
    %c0_i32_1 = arith.constant 0 : i32
    return %arg0, %c0_i32, %c0_i32_0 : i32, i32, i32
  }
  func.func @transform_4(%arg0: i32, %arg1: i32) -> (i32, i32) {
    %c0_i32 = arith.constant 0 : i32
    %c0_i32_0 = arith.constant 0 : i32
    %c0_i32_1 = arith.constant 0 : i32
    return %c0_i32, %c0_i32_0 : i32, i32
  }
  func.func @transform_5(%arg0: i32, %arg1: i32) -> (i32, i32, i32) {
    %c0_i32 = arith.constant 0 : i32
    %c0_i32_0 = arith.constant 0 : i32
    return %arg0, %arg1, %c0_i32 : i32, i32, i32
  }
  func.func @transform_6(%arg0: i32, %arg1: i32) -> (i32, i32, i32, i32) {
    %c0_i32 = arith.constant 0 : i32
    %c0_i32_0 = arith.constant 0 : i32
    %c0_i32_1 = arith.constant 0 : i32
    return %arg0, %arg1, %c0_i32, %c0_i32_0 : i32, i32, i32, i32
  }
  func.func @transform_7(%arg0: i32, %arg1: i32) -> (i32, i32, i32, i32) {
    %c0_i32 = arith.constant 0 : i32
    %c0_i32_0 = arith.constant 0 : i32
    %c0_i32_1 = arith.constant 0 : i32
    return %arg0, %arg1, %c0_i32, %c0_i32_0 : i32, i32, i32, i32
  }
}

module attributes {stable_mosaic.version = 11 : i64} {
  func.func @_bn_relu_transpose_kernel(%arg0: i32, %arg1: i32, %arg2: memref<1x128x256xbf16, #tpu.memory_space<vmem>>, %arg3: memref<1x256xf32, #tpu.memory_space<vmem>>, %arg4: memref<1x256xf32, #tpu.memory_space<vmem>>, %arg5: memref<1x256x128xf32, #tpu.memory_space<vmem>>) attributes {dimension_semantics = [#tpu.dimension_semantics<parallel>, #tpu.dimension_semantics<parallel>], iteration_bounds = array<i64: 2, 2>, scalar_prefetch = 0 : i64, scratch_operands = 0 : i64, tpu.core_type = #tpu.core_type<tc>, window_params = [{transform_indices = @transform_0, window_bounds = array<i64: 1, 128, 256>}, {pipeline_mode = #tpu.pipeline_mode<synchronous>, transform_indices = @transform_1, window_bounds = array<i64: 1, 256>}, {pipeline_mode = #tpu.pipeline_mode<synchronous>, transform_indices = @transform_2, window_bounds = array<i64: 1, 256>}, {transform_indices = @transform_3, window_bounds = array<i64: 1, 256, 128>}]} {
    %c0 = arith.constant 0 : index
    %c0_0 = arith.constant 0 : index
    %c0_1 = arith.constant 0 : index
    %0 = vector.load %arg2[%c0, %c0_0, %c0_1] : memref<1x128x256xbf16, #tpu.memory_space<vmem>>, vector<1x128x256xbf16>
    %1 = vector.shape_cast %0 : vector<1x128x256xbf16> to vector<128x256xbf16>
    %2 = arith.extf %1 : vector<128x256xbf16> to vector<128x256xf32>
    %c0_2 = arith.constant 0 : index
    %c0_3 = arith.constant 0 : index
    %3 = vector.load %arg3[%c0_2, %c0_3] : memref<1x256xf32, #tpu.memory_space<vmem>>, vector<1x256xf32>
    %4 = vector.broadcast %3 : vector<1x256xf32> to vector<128x256xf32>
    %5 = arith.mulf %2, %4 : vector<128x256xf32>
    %c0_4 = arith.constant 0 : index
    %c0_5 = arith.constant 0 : index
    %6 = vector.load %arg4[%c0_4, %c0_5] : memref<1x256xf32, #tpu.memory_space<vmem>>, vector<1x256xf32>
    %7 = vector.broadcast %6 : vector<1x256xf32> to vector<128x256xf32>
    %8 = arith.addf %5, %7 : vector<128x256xf32>
    %cst = arith.constant 0.000000e+00 : f32
    %9 = vector.broadcast %cst : f32 to vector<128x256xf32>
    %10 = arith.maximumf %8, %9 : vector<128x256xf32>
    %11 = tpu.transpose %10, [1, 0] : vector<128x256xf32> -> vector<256x128xf32>
    %c0_6 = arith.constant 0 : index
    %c0_7 = arith.constant 0 : index
    %c0_8 = arith.constant 0 : index
    %12 = vector.load %arg5[%c0_6, %c0_7, %c0_8] : memref<1x256x128xf32, #tpu.memory_space<vmem>>, vector<1x256x128xf32>
    %13 = vector.shape_cast %12 : vector<1x256x128xf32> to vector<256x128xf32>
    %14 = vector.shape_cast %11 : vector<256x128xf32> to vector<1x256x128xf32>
    tpu.vector_store %arg5[%c0_6, %c0_7, %c0_8], %14 {strides = array<i32>} : memref<1x256x128xf32, #tpu.memory_space<vmem>>, vector<1x256x128xf32>,
    return
  }
  func.func @transform_0(%arg0: i32, %arg1: i32) -> (i32, i32, i32) {
    %c0_i32 = arith.constant 0 : i32
    %c0_i32_0 = arith.constant 0 : i32
    return %arg0, %arg1, %c0_i32 : i32, i32, i32
  }
  func.func @transform_1(%arg0: i32, %arg1: i32) -> (i32, i32) {
    %c0_i32 = arith.constant 0 : i32
    %c0_i32_0 = arith.constant 0 : i32
    %c0_i32_1 = arith.constant 0 : i32
    return %c0_i32, %c0_i32_0 : i32, i32
  }
  func.func @transform_2(%arg0: i32, %arg1: i32) -> (i32, i32) {
    %c0_i32 = arith.constant 0 : i32
    %c0_i32_0 = arith.constant 0 : i32
    %c0_i32_1 = arith.constant 0 : i32
    return %c0_i32, %c0_i32_0 : i32, i32
  }
  func.func @transform_3(%arg0: i32, %arg1: i32) -> (i32, i32, i32) {
    %c0_i32 = arith.constant 0 : i32
    %c0_i32_0 = arith.constant 0 : i32
    return %arg0, %c0_i32, %arg1 : i32, i32, i32
  }
}

</mosaic_0001>

<llo_original>
// kernel: base_pointnet_fwd.16
$region0: #{base_pointnet_fwd.16}
  #allocation0 [shape = 'u32[]', space=smem, size = 0x4, offset = 0x4, fixed_abs, tag = 'smem constant byte address 0x4 - core index']
  #allocation1 [shape = 'u32[72,128]{1,0:T(1,128)}', space=vmem, size = 0x9000, scoped, tag = 'internal scratch']
  %s0 = inlined_call_operand.vmem [shape: f32[512,4], index: 0, kind: input, shape index: {}]
  %s1 = inlined_call_operand.vmem [shape: bf16[4,64], index: 1, kind: input, shape index: {}]
  %s2 = inlined_call_operand.vmem [shape: bf16[512,64], index: 2, kind: output, shape index: {0}]
  %s3 = inlined_call_operand.vmem [shape: f32[4,1,64], index: 3, kind: output, shape index: {1}]
  %s4 = inlined_call_operand.vmem [shape: f32[4,1,64], index: 4, kind: output, shape index: {2}]
  %5 = xla_tuple %s2, %s3, %s4
  %s6 = sld [smem:[#allocation0]]
  $region57: #{base_pointnet_fwd.16} parent=0
    _
  %s8 = ssub.s32 1, %s6
  %s9 = scalar_select 0, %s8, %s6
  loop: start=0, step=1, limit=6
  $region2: #{base_pointnet_fwd.16} parent=0 // loop_pre_header
    _
  $region3: #{base_pointnet_fwd.16} parent=0 // loop_header
    %s11 = sphi 0, %s15
    %p12 = scmp.ge.s32.totalorder %s11, 6
    %s21 = sphi 0, %s23
    %s24 = sphi 0, %s21
    %s25 = sphi 0, %s24
    %s41 = sphi 0, %s25
    %s45 = sphi 0, %s45
    %s47 = sphi 0, %s45
    %s48 = sphi 0, %s47
    %s62 = sphi 0, %s48
    %s68 = sphi 0, %s70
    %s71 = sphi 0, %s68
    %s72 = sphi 0, %s71
    %s88 = sphi 0, %s72
    %s94 = sphi 0, %s96
    %s97 = sphi 0, %s94
    %s98 = sphi 0, %s97
    %s114 = sphi 0, %s98
    %s120 = sphi 0, %s122
    %s123 = sphi 0, %s120
    %s124 = sphi 0, %s123
    %s140 = sphi 0, %s124
  $region4: #{base_pointnet_fwd.16} parent=0 // loop_header_branch
    %14 = sbr.rel (%p12) target = $region8
  $region5: #{base_pointnet_fwd.16} parent=0 // loop_body
    %s16 = ssub.s32 %s11, 1
    %s17 = ssub.s32 %s11, 2
    %s18 = sadd.s32 %s11, 1
    %s19 = ssub.s32 %s11, %s18
    %p20 = scmp.eq.s32.totalorder %s19, 0
    %s22 = sadd.s32 %s21, 1
    %s23 = scalar_select %p20, %s21, %s22
    %p26 = pneg %p20
    %p27 = scmp.eq.s32.totalorder %s11, 3
    %p28 = por %p26, %p27
    %p29 = scmp.ne.s32.totalorder %s21, %s24
    %p30 = scmp.eq.s32.totalorder %s11, 0
    %p31 = por %p29, %p30
    %p32 = scmp.ne.s32.totalorder %s21, %s24
    %p33 = scmp.eq.s32.totalorder %s16, 3
    %p34 = por %p32, %p33
    %p35 = scmp.ne.s32.totalorder %s24, %s25
    %p36 = scmp.eq.s32.totalorder %s16, 0
    %p37 = por %p35, %p36
    %p38 = scmp.ne.s32.totalorder %s24, %s25
    %p39 = scmp.eq.s32.totalorder %s17, 3
    %p40 = por %p38, %p39
    %p42 = scmp.ne.s32.totalorder %s25, %s41
    %p43 = scmp.eq.s32.totalorder %s17, 0
    %p44 = por %p42, %p43
    %s46 = sadd.s32 %s45, 1
    %p49 = scmp.eq.s32.totalorder %s11, 3
    %p50 = scmp.ne.s32.totalorder %s45, %s47
    %p51 = scmp.eq.s32.totalorder %s11, 0
    %p52 = por %p50, %p51
    %p53 = scmp.ne.s32.totalorder %s45, %s47
    %p54 = scmp.eq.s32.totalorder %s16, 3
    %p55 = por %p53, %p54
    %p56 = scmp.ne.s32.totalorder %s47, %s48
    %p57 = scmp.eq.s32.totalorder %s16, 0
    %p58 = por %p56, %p57
    %p59 = scmp.ne.s32.totalorder %s47, %s48
    %p60 = scmp.eq.s32.totalorder %s17, 3
    %p61 = por %p59, %p60
    %p63 = scmp.ne.s32.totalorder %s48, %s62
    %p64 = scmp.eq.s32.totalorder %s17, 0
    %p65 = por %p63, %p64
    %s66 = ssub.s32 %s11, %s18
    %p67 = scmp.eq.s32.totalorder %s66, 0
    %s69 = sadd.s32 %s68, 1
    %s70 = scalar_select %p67, %s68, %s69
    %p73 = pneg %p67
    %p74 = scmp.eq.s32.totalorder %s11, 3
    %p75 = por %p73, %p74
    %p76 = scmp.ne.s32.totalorder %s68, %s71
    %p77 = scmp.eq.s32.totalorder %s11, 0
    %p78 = por %p76, %p77
    %p79 = scmp.ne.s32.totalorder %s68, %s71
    %p80 = scmp.eq.s32.totalorder %s16, 3
    %p81 = por %p79, %p80
    %p82 = scmp.ne.s32.totalorder %s71, %s72
    %p83 = scmp.eq.s32.totalorder %s16, 0
    %p84 = por %p82, %p83
    %p85 = scmp.ne.s32.totalorder %s71, %s72
    %p86 = scmp.eq.s32.totalorder %s17, 3
    %p87 = por %p85, %p86
    %p89 = scmp.ne.s32.totalorder %s72, %s88
    %p90 = scmp.eq.s32.totalorder %s17, 0
    %p91 = por %p89, %p90
    %s92 = ssub.s32 %s11, %s18
    %p93 = scmp.eq.s32.totalorder %s92, 0
    %s95 = sadd.s32 %s94, 1
    %s96 = scalar_select %p93, %s94, %s95
    %p99 = pneg %p93
    %p100 = scmp.eq.s32.totalorder %s11, 3
    %p101 = por %p99, %p100
    %p102 = scmp.ne.s32.totalorder %s94, %s97
    %p103 = scmp.eq.s32.totalorder %s11, 0
    %p104 = por %p102, %p103
    %p105 = scmp.ne.s32.totalorder %s94, %s97
    %p106 = scmp.eq.s32.totalorder %s16, 3
    %p107 = por %p105, %p106
    %p108 = scmp.ne.s32.totalorder %s97, %s98
    %p109 = scmp.eq.s32.totalorder %s16, 0
    %p110 = por %p108, %p109
    %p111 = scmp.ne.s32.totalorder %s97, %s98
    %p112 = scmp.eq.s32.totalorder %s17, 3
    %p113 = por %p111, %p112
    %p115 = scmp.ne.s32.totalorder %s98, %s114
    %p116 = scmp.eq.s32.totalorder %s17, 0
    %p117 = por %p115, %p116
    %s118 = ssub.s32 %s11, %s18
    %p119 = scmp.eq.s32.totalorder %s118, 0
    %s121 = sadd.s32 %s120, 1
    %s122 = scalar_select %p119, %s120, %s121
    %p125 = pneg %p119
    %p126 = scmp.eq.s32.totalorder %s11, 3
    %p127 = por %p125, %p126
    %p128 = scmp.ne.s32.totalorder %s120, %s123
    %p129 = scmp.eq.s32.totalorder %s11, 0
    %p130 = por %p128, %p129
    %p131 = scmp.ne.s32.totalorder %s120, %s123
    %p132 = scmp.eq.s32.totalorder %s16, 3
    %p133 = por %p131, %p132
    %p134 = scmp.ne.s32.totalorder %s123, %s124
    %p135 = scmp.eq.s32.totalorder %s16, 0
    %p136 = por %p134, %p135
    %p137 = scmp.ne.s32.totalorder %s123, %s124
    %p138 = scmp.eq.s32.totalorder %s17, 3
    %p139 = por %p137, %p138
    %p141 = scmp.ne.s32.totalorder %s124, %s140
    %p142 = scmp.eq.s32.totalorder %s17, 0
    %p143 = por %p141, %p142
    %p144 = scmp.le.s32.totalorder 1, %s11
    %p145 = scmp.lt.s32.totalorder %s11, 5
    %p146 = pnand %p144, %p145
    %p147 = pneg %p146
    // Predicated region
    $region9: #{base_pointnet_fwd.16} parent=5 // pred_check
      _
    $region10: #{base_pointnet_fwd.16} parent=5 // pred_check_branch
      %149 = sbr.rel (%p146) target = $region12
    $region11: #{base_pointnet_fwd.16} parent=5 // pred_region
      %s150 = ssub.s32 %s11, 1
      // Predicated region
      $region13: #{base_pointnet_fwd.16} parent=11 // pred_check
        %p151 = pneg %p58
      $region14: #{base_pointnet_fwd.16} parent=11 // pred_check_branch
        %153 = sbr.rel (%p151) target = $region16
      $region15: #{base_pointnet_fwd.16} parent=11 // pred_region
        _
      $region16: #{base_pointnet_fwd.16} parent=11 // pred_fallthru
        _
    $region12: #{base_pointnet_fwd.16} parent=5 // pred_fallthru
      _
    %p154 = scmp.lt.s32.totalorder %s11, 4
    // Predicated region
    $region17: #{base_pointnet_fwd.16} parent=5 // pred_check
      %p155 = pneg %p154
    $region18: #{base_pointnet_fwd.16} parent=5 // pred_check_branch
      %157 = sbr.rel (%p155) target = $region20
    $region19: #{base_pointnet_fwd.16} parent=5 // pred_region
      // Predicated region
      $region21: #{base_pointnet_fwd.16} parent=19 // pred_check
        %p158 = pneg %p31
      $region22: #{base_pointnet_fwd.16} parent=19 // pred_check_branch
        %160 = sbr.rel (%p158) target = $region24
      $region23: #{base_pointnet_fwd.16} parent=19 // pred_region
        %s161 = smul.u32 16, %s11
        %p162 = scmp.lt.s32.totalorder %s161, 63
        %s163 = scalar_select %p162, %s161, 63
        %s164 = smul.addr %s163, 8
        %s165 = scalar_lea.vmem %s0, %s164
        %s166 = smul.u32 16, %s11
      $region24: #{base_pointnet_fwd.16} parent=19 // pred_fallthru
        _
    $region20: #{base_pointnet_fwd.16} parent=5 // pred_fallthru
      _
    %p167 = scmp.le.s32.totalorder 1, %s11
    %p168 = scmp.lt.s32.totalorder %s11, 5
    %p169 = pnand %p167, %p168
    %p170 = pneg %p169
    // Predicated region
    $region25: #{base_pointnet_fwd.16} parent=5 // pred_check
      _
    $region26: #{base_pointnet_fwd.16} parent=5 // pred_check_branch
      %172 = sbr.rel (%p169) target = $region28
    $region27: #{base_pointnet_fwd.16} parent=5 // pred_region
      %s173 = ssub.s32 %s11, 1
      %s174 = smul.u32 16, %s16
      %p175 = scmp.lt.s32.totalorder %s174, 63
      %s176 = scalar_select %p175, %s174, 63
      %s177 = smul.addr %s176, 8
      %s178 = scalar_lea.vmem %s0, %s177
      %p179 = pneg %p37
      %p180 = pneg %p34
      %p181 = pneg %p58
      %p182 = pneg %p55
      %p183 = pneg %p84
      %p184 = pneg %p81
      %s185 = smul.u32 16, %s16
      %p186 = scmp.lt.s32.totalorder %s185, 63
      %s187 = scalar_select %p186, %s185, 63
      %s188 = smul.addr %s187, 4
      %s189 = scalar_lea.vmem %s2, %s188
      %p190 = pneg %p110
      %p191 = pneg %p107
      %p192 = scmp.lt.s32.totalorder %s16, 3
      %s193 = scalar_select %p192, %s16, 3
      %s194 = scalar_lea.vmem %s3, %s193
      %p195 = pneg %p136
      %p196 = pneg %p133
      %p197 = scmp.lt.s32.totalorder %s16, 3
      %s198 = scalar_select %p197, %s16, 3
      %s199 = scalar_lea.vmem %s4, %s198
      %s200 = smul.u32 16, %s16
      %p201 = scmp.lt.s32.totalorder %s200, 63
      %s202 = scalar_select %p201, %s200, 63
      %s203 = smul.addr %s202, 8
      %s204 = scalar_lea.vmem %s0, %s203
      %s205 = smul.u32 16, %s16
      %s206 = smul.u32 16, %s16
      %p207 = scmp.lt.s32.totalorder %s206, 63
      %s208 = scalar_select %p207, %s206, 63
      %s209 = smul.addr %s208, 4
      %s210 = scalar_lea.vmem %s2, %s209
      %s211 = smul.u32 16, %s16
      %p212 = scmp.lt.s32.totalorder %s16, 3
      %s213 = scalar_select %p212, %s16, 3
      %s214 = scalar_lea.vmem %s3, %s213
      %p215 = scmp.lt.s32.totalorder %s16, 3
      %s216 = scalar_select %p215, %s16, 3
      %s217 = scalar_lea.vmem %s4, %s216
      %v219 = vld [vmem:[%s204] sm:$0xff]
      %v220 = vld [vmem:[%s204 + $0x8] sm:$0xff]
      %v221 = vld [vmem:[%s204 + $0x10] sm:$0xff]
      %v222 = vld [vmem:[%s204 + $0x18] sm:$0xff]
      %v223 = vld [vmem:[%s204 + $0x20] sm:$0xff]
      %v224 = vld [vmem:[%s204 + $0x28] sm:$0xff]
      %v225 = vld [vmem:[%s204 + $0x30] sm:$0xff]
      %v226 = vld [vmem:[%s204 + $0x38] sm:$0xff]
      %v227 = vld [vmem:[%s204 + $0x40] sm:$0xff]
      %v228 = vld [vmem:[%s204 + $0x48] sm:$0xff]
      %v229 = vld [vmem:[%s204 + $0x50] sm:$0xff]
      %v230 = vld [vmem:[%s204 + $0x58] sm:$0xff]
      %v231 = vld [vmem:[%s204 + $0x60] sm:$0xff]
      %v232 = vld [vmem:[%s204 + $0x68] sm:$0xff]
      %v233 = vld [vmem:[%s204 + $0x70] sm:$0xff]
      %v234 = vld [vmem:[%s204 + $0x78] sm:$0xff]
      %v235 = vpack.c.bf16 %v220, %v219
      %v236 = vpack.c.bf16 %v222, %v221
      %v237 = vpack.c.bf16 %v224, %v223
      %v238 = vpack.c.bf16 %v226, %v225
      %v239 = vpack.c.bf16 %v228, %v227
      %v240 = vpack.c.bf16 %v230, %v229
      %v241 = vpack.c.bf16 %v232, %v231
      %v242 = vpack.c.bf16 %v234, %v233
      %v243 = vld [vmem:[%s1] sm:$0x3]
      %vm244 = vcmask 31744
      %v246 = vsel %vm244, %v235, 0
      %v249 = vsel %vm244, %v236, 0
      %v252 = vsel %vm244, %v237, 0
      %v255 = vsel %vm244, %v238, 0
      %v258 = vsel %vm244, %v239, 0
      %v261 = vsel %vm244, %v240, 0
      %v264 = vsel %vm244, %v241, 0
      %v267 = vsel %vm244, %v242, 0
      %vm269 = vcmask 1041408
      %v271 = vsel %vm269, %v243, 0
      %273 = vmatpush.bf16.msra.mxu0 0
      %274 = vmatpush.bf16.msra.mxu0 0
      %275 = vmatpush.bf16.msra.mxu0 0
      %276 = vmatpush.bf16.msra.mxu0 0
      %277 = vmatpush.bf16.msra.mxu0 0
      %278 = vmatpush.bf16.msra.mxu0 0
      %279 = vmatpush.bf16.msra.mxu0 0
      %280 = vmatpush.bf16.msra.mxu0 %v271
      %281 = vmatmul.bf16.gmra.mxu0 %v246
      %v282 = vpop.f32.mrf.mxu0
      %v283 = vadd.f32 0.0, %v282
      %v284 = vpop.f32.mrf.mxu0
      %v285 = vadd.f32 0.0, %v284
      %286 = vmatmul.bf16.gmra.mxu0 %v249
      %v287 = vpop.f32.mrf.mxu0
      %v288 = vadd.f32 0.0, %v287
      %v289 = vpop.f32.mrf.mxu0
      %v290 = vadd.f32 0.0, %v289
      %291 = vmatmul.bf16.gmra.mxu0 %v252
      %v292 = vpop.f32.mrf.mxu0
      %v293 = vadd.f32 0.0, %v292
      %v294 = vpop.f32.mrf.mxu0
      %v295 = vadd.f32 0.0, %v294
      %296 = vmatmul.bf16.gmra.mxu0 %v255
      %v297 = vpop.f32.mrf.mxu0
      %v298 = vadd.f32 0.0, %v297
      %v299 = vpop.f32.mrf.mxu0
      %v300 = vadd.f32 0.0, %v299
      %301 = vmatmul.bf16.gmra.mxu0 %v258
      %v302 = vpop.f32.mrf.mxu0
      %v303 = vadd.f32 0.0, %v302
      %v304 = vpop.f32.mrf.mxu0
      %v305 = vadd.f32 0.0, %v304
      %306 = vmatmul.bf16.gmra.mxu0 %v261
      %v307 = vpop.f32.mrf.mxu0
      %v308 = vadd.f32 0.0, %v307
      %v309 = vpop.f32.mrf.mxu0
      %v310 = vadd.f32 0.0, %v309
      %311 = vmatmul.bf16.gmra.mxu0 %v264
      %v312 = vpop.f32.mrf.mxu0
      %v313 = vadd.f32 0.0, %v312
      %v314 = vpop.f32.mrf.mxu0
      %v315 = vadd.f32 0.0, %v314
      %316 = vmatmul.bf16.gmra.mxu0 %v267
      %v317 = vpop.f32.mrf.mxu0
      %v318 = vadd.f32 0.0, %v317
      %v319 = vpop.f32.mrf.mxu0
      %v320 = vadd.f32 0.0, %v319
      %321 = vdwg.mxu0
      %vm322 = vcmask 523264
      %v323 = vsel %vm322, %v283, 0.0
      %v324 = vsel %vm322, %v285, 0.0
      %v325 = vadd.f32 %v323, %v324
      %v326 = vsel %vm322, %v288, 0.0
      %v327 = vadd.f32 %v325, %v326
      %v328 = vsel %vm322, %v290, 0.0
      %v329 = vadd.f32 %v327, %v328
      %v330 = vsel %vm322, %v293, 0.0
      %v331 = vadd.f32 %v329, %v330
      %v332 = vsel %vm322, %v295, 0.0
      %v333 = vadd.f32 %v331, %v332
      %v334 = vsel %vm322, %v298, 0.0
      %v335 = vadd.f32 %v333, %v334
      %v336 = vsel %vm322, %v300, 0.0
      %v337 = vadd.f32 %v335, %v336
      %v338 = vsel %vm322, %v303, 0.0
      %v339 = vadd.f32 %v337, %v338
      %v340 = vsel %vm322, %v305, 0.0
      %v341 = vadd.f32 %v339, %v340
      %v342 = vsel %vm322, %v308, 0.0
      %v343 = vadd.f32 %v341, %v342
      %v344 = vsel %vm322, %v310, 0.0
      %v345 = vadd.f32 %v343, %v344
      %v346 = vsel %vm322, %v313, 0.0
      %v347 = vadd.f32 %v345, %v346
      %v348 = vsel %vm322, %v315, 0.0
      %v349 = vadd.f32 %v347, %v348
      %v350 = vsel %vm322, %v318, 0.0
      %v351 = vadd.f32 %v349, %v350
      %v352 = vsel %vm322, %v320, 0.0
      %v353 = vadd.f32 %v351, %v352
      %v354 = vrot.slane %v353, 4
      %v355 = vadd.f32 %v353, %v354
      %v356 = vrot.slane %v355, 2
      %v357 = vadd.f32 %v355, %v356
      %v358 = vrot.slane %v357, 1
      %v359 = vadd.f32 %v357, %v358
      %vm360 = vcmask 516096
      %361 = vst.msk [vmem:[%s214] sm:$0x1] %vm360, %v359
      %v362 = vmul.f32 %v283, %v283
      %v363 = vmul.f32 %v285, %v285
      %v364 = vmul.f32 %v288, %v288
      %v365 = vmul.f32 %v290, %v290
      %v366 = vmul.f32 %v293, %v293
      %v367 = vmul.f32 %v295, %v295
      %v368 = vmul.f32 %v298, %v298
      %v369 = vmul.f32 %v300, %v300
      %v370 = vmul.f32 %v303, %v303
      %v371 = vmul.f32 %v305, %v305
      %v372 = vmul.f32 %v308, %v308
      %v373 = vmul.f32 %v310, %v310
      %v374 = vmul.f32 %v313, %v313
      %v375 = vmul.f32 %v315, %v315
      %v376 = vmul.f32 %v318, %v318
      %v377 = vmul.f32 %v320, %v320
      %v378 = vsel %vm322, %v362, 0.0
      %v379 = vsel %vm322, %v363, 0.0
      %v380 = vadd.f32 %v378, %v379
      %v381 = vsel %vm322, %v364, 0.0
      %v382 = vadd.f32 %v380, %v381
      %v383 = vsel %vm322, %v365, 0.0
      %v384 = vadd.f32 %v382, %v383
      %v385 = vsel %vm322, %v366, 0.0
      %v386 = vadd.f32 %v384, %v385
      %v387 = vsel %vm322, %v367, 0.0
      %v388 = vadd.f32 %v386, %v387
      %v389 = vsel %vm322, %v368, 0.0
      %v390 = vadd.f32 %v388, %v389
      %v391 = vsel %vm322, %v369, 0.0
      %v392 = vadd.f32 %v390, %v391
      %v393 = vsel %vm322, %v370, 0.0
      %v394 = vadd.f32 %v392, %v393
      %v395 = vsel %vm322, %v371, 0.0
      %v396 = vadd.f32 %v394, %v395
      %v397 = vsel %vm322, %v372, 0.0
      %v398 = vadd.f32 %v396, %v397
      %v399 = vsel %vm322, %v373, 0.0
      %v400 = vadd.f32 %v398, %v399
      %v401 = vsel %vm322, %v374, 0.0
      %v402 = vadd.f32 %v400, %v401
      %v403 = vsel %vm322, %v375, 0.0
      %v404 = vadd.f32 %v402, %v403
      %v405 = vsel %vm322, %v376, 0.0
      %v406 = vadd.f32 %v404, %v405
      %v407 = vsel %vm322, %v377, 0.0
      %v408 = vadd.f32 %v406, %v407
      %v409 = vrot.slane %v408, 4
      %v410 = vadd.f32 %v408, %v409
      %v411 = vrot.slane %v410, 2
      %v412 = vadd.f32 %v410, %v411
      %v413 = vrot.slane %v412, 1
      %v414 = vadd.f32 %v412, %v413
      %415 = vst.msk [vmem:[%s217] sm:$0x1] %vm360, %v414
      %v416 = vpack.c.bf16 %v283, %v283
      %v417 = vpack.c.bf16 %v285, %v285
      %v418 = vpack.c.bf16 %v288, %v288
      %v419 = vpack.c.bf16 %v290, %v290
      %v420 = vpack.c.bf16 %v293, %v293
      %v421 = vpack.c.bf16 %v295, %v295
      %v422 = vpack.c.bf16 %v298, %v298
      %v423 = vpack.c.bf16 %v300, %v300
      %v424 = vpack.c.bf16 %v303, %v303
      %v425 = vpack.c.bf16 %v305, %v305
      %v426 = vpack.c.bf16 %v308, %v308
      %v427 = vpack.c.bf16 %v310, %v310
      %v428 = vpack.c.bf16 %v313, %v313
      %v429 = vpack.c.bf16 %v315, %v315
      %v430 = vpack.c.bf16 %v318, %v318
      %v431 = vpack.c.bf16 %v320, %v320
      %vm432 = vcmask 519168
      %433 = vst.msk [vmem:[%s210] sm:$0xf] %vm432, %v416
      %434 = vst.msk [vmem:[%s210 + $0x4] sm:$0xf] %vm432, %v417
      %435 = vst.msk [vmem:[%s210 + $0x8] sm:$0xf] %vm432, %v418
      %436 = vst.msk [vmem:[%s210 + $0xc] sm:$0xf] %vm432, %v419
      %437 = vst.msk [vmem:[%s210 + $0x10] sm:$0xf] %vm432, %v420
      %438 = vst.msk [vmem:[%s210 + $0x14] sm:$0xf] %vm432, %v421
      %439 = vst.msk [vmem:[%s210 + $0x18] sm:$0xf] %vm432, %v422
      %440 = vst.msk [vmem:[%s210 + $0x1c] sm:$0xf] %vm432, %v423
      %441 = vst.msk [vmem:[%s210 + $0x20] sm:$0xf] %vm432, %v424
      %442 = vst.msk [vmem:[%s210 + $0x24] sm:$0xf] %vm432, %v425
      %443 = vst.msk [vmem:[%s210 + $0x28] sm:$0xf] %vm432, %v426
      %444 = vst.msk [vmem:[%s210 + $0x2c] sm:$0xf] %vm432, %v427
      %445 = vst.msk [vmem:[%s210 + $0x30] sm:$0xf] %vm432, %v428
      %446 = vst.msk [vmem:[%s210 + $0x34] sm:$0xf] %vm432, %v429
      %447 = vst.msk [vmem:[%s210 + $0x38] sm:$0xf] %vm432, %v430
      %448 = vst.msk [vmem:[%s210 + $0x3c] sm:$0xf] %vm432, %v431
      %s449 = smul.u32 16, %s16
      %p450 = scmp.lt.s32.totalorder %s449, 63
      %s451 = scalar_select %p450, %s449, 63
      %s452 = smul.addr %s451, 4
      %s453 = scalar_lea.vmem %s2, %s452
      %p454 = scmp.lt.s32.totalorder %s16, 3
      %s455 = scalar_select %p454, %s16, 3
      %s456 = scalar_lea.vmem %s3, %s455
      %p457 = scmp.lt.s32.totalorder %s16, 3
      %s458 = scalar_select %p457, %s16, 3
      %s459 = scalar_lea.vmem %s4, %s458
      // Predicated region
      $region29: #{base_pointnet_fwd.16} parent=27 // pred_check
        %p460 = pneg %p81
      $region30: #{base_pointnet_fwd.16} parent=27 // pred_check_branch
        %462 = sbr.rel (%p460) target = $region32
      $region31: #{base_pointnet_fwd.16} parent=27 // pred_region
        %s463 = smul.u32 16, %s16
      $region32: #{base_pointnet_fwd.16} parent=27 // pred_fallthru
        _
      // Predicated region
      $region33: #{base_pointnet_fwd.16} parent=27 // pred_check
        %p464 = pneg %p107
      $region34: #{base_pointnet_fwd.16} parent=27 // pred_check_branch
        %466 = sbr.rel (%p464) target = $region36
      $region35: #{base_pointnet_fwd.16} parent=27 // pred_region
        _
      $region36: #{base_pointnet_fwd.16} parent=27 // pred_fallthru
        _
      // Predicated region
      $region37: #{base_pointnet_fwd.16} parent=27 // pred_check
        %p467 = pneg %p133
      $region38: #{base_pointnet_fwd.16} parent=27 // pred_check_branch
        %469 = sbr.rel (%p467) target = $region40
      $region39: #{base_pointnet_fwd.16} parent=27 // pred_region
        _
      $region40: #{base_pointnet_fwd.16} parent=27 // pred_fallthru
        _
    $region28: #{base_pointnet_fwd.16} parent=5 // pred_fallthru
      _
    %p470 = scmp.le.s32.totalorder 2, %s11
    // Predicated region
    $region41: #{base_pointnet_fwd.16} parent=5 // pred_check
      %p471 = pneg %p470
    $region42: #{base_pointnet_fwd.16} parent=5 // pred_check_branch
      %473 = sbr.rel (%p471) target = $region44
    $region43: #{base_pointnet_fwd.16} parent=5 // pred_region
      %s474 = ssub.s32 %s11, 2
      // Predicated region
      $region45: #{base_pointnet_fwd.16} parent=43 // pred_check
        %p475 = pneg %p87
      $region46: #{base_pointnet_fwd.16} parent=43 // pred_check_branch
        %477 = sbr.rel (%p475) target = $region48
      $region47: #{base_pointnet_fwd.16} parent=43 // pred_region
        %s478 = smul.u32 16, %s17
        %p479 = scmp.lt.s32.totalorder %s478, 63
        %s480 = scalar_select %p479, %s478, 63
        %s481 = smul.addr %s480, 4
        %s482 = scalar_lea.vmem %s2, %s481
      $region48: #{base_pointnet_fwd.16} parent=43 // pred_fallthru
        _
      // Predicated region
      $region49: #{base_pointnet_fwd.16} parent=43 // pred_check
        %p483 = pneg %p113
      $region50: #{base_pointnet_fwd.16} parent=43 // pred_check_branch
        %485 = sbr.rel (%p483) target = $region52
      $region51: #{base_pointnet_fwd.16} parent=43 // pred_region
        %p486 = scmp.lt.s32.totalorder %s17, 3
        %s487 = scalar_select %p486, %s17, 3
        %s488 = scalar_lea.vmem %s3, %s487
      $region52: #{base_pointnet_fwd.16} parent=43 // pred_fallthru
        _
      // Predicated region
      $region53: #{base_pointnet_fwd.16} parent=43 // pred_check
        %p489 = pneg %p139
      $region54: #{base_pointnet_fwd.16} parent=43 // pred_check_branch
        %491 = sbr.rel (%p489) target = $region56
      $region55: #{base_pointnet_fwd.16} parent=43 // pred_region
        %p492 = scmp.lt.s32.totalorder %s17, 3
        %s493 = scalar_select %p492, %s17, 3
        %s494 = scalar_lea.vmem %s4, %s493
      $region56: #{base_pointnet_fwd.16} parent=43 // pred_fallthru
        _
    $region44: #{base_pointnet_fwd.16} parent=5 // pred_fallthru
      _
  $region6: #{base_pointnet_fwd.16} parent=0 // loop_footer
    %s15 = sadd.s32 1, %s11
  $region7: #{base_pointnet_fwd.16} parent=0 // loop_footer_branch
    %10 = sbr.rel target = $region3
  $region8: #{base_pointnet_fwd.16} parent=0 // loop_exit
    _

// kernel: base_pointnet_fwd.17
$region0: #{base_pointnet_fwd.17}
  #allocation0 [shape = 'u32[]', space=smem, size = 0x4, offset = 0x4, fixed_abs, tag = 'smem constant byte address 0x4 - core index']
  #allocation1 [shape = 'u32[72,128]{1,0:T(1,128)}', space=vmem, size = 0x9000, scoped, tag = 'internal scratch']
  %s0 = inlined_call_operand.vmem [shape: bf16[512,64], index: 0, kind: input, shape index: {}]
  %s1 = inlined_call_operand.vmem [shape: f32[1,64], index: 1, kind: input, shape index: {}]
  %s2 = inlined_call_operand.vmem [shape: f32[1,64], index: 2, kind: input, shape index: {}]
  %s3 = inlined_call_operand.vmem [shape: bf16[64,128], index: 3, kind: input, shape index: {}]
  %s4 = inlined_call_operand.vmem [shape: bf16[512,128], index: 4, kind: output, shape index: {0}]
  %s5 = inlined_call_operand.vmem [shape: f32[4,1,128], index: 5, kind: output, shape index: {1}]
  %s6 = inlined_call_operand.vmem [shape: f32[4,1,128], index: 6, kind: output, shape index: {2}]
  %7 = xla_tuple %s4, %s5, %s6
  %s8 = sld [smem:[#allocation0]]
  $region65: #{base_pointnet_fwd.17} parent=0
    _
  %s10 = ssub.s32 1, %s8
  %s11 = scalar_select 0, %s10, %s8
  loop: start=0, step=1, limit=6
  $region2: #{base_pointnet_fwd.17} parent=0 // loop_pre_header
    _
  $region3: #{base_pointnet_fwd.17} parent=0 // loop_header
    %s13 = sphi 0, %s17
    %p14 = scmp.ge.s32.totalorder %s13, 6
    %s23 = sphi 0, %s25
    %s26 = sphi 0, %s23
    %s27 = sphi 0, %s26
    %s43 = sphi 0, %s27
    %s47 = sphi 0, %s47
    %s49 = sphi 0, %s47
    %s50 = sphi 0, %s49
    %s64 = sphi 0, %s50
    %s68 = sphi 0, %s68
    %s70 = sphi 0, %s68
    %s71 = sphi 0, %s70
    %s85 = sphi 0, %s71
    %s89 = sphi 0, %s89
    %s91 = sphi 0, %s89
    %s92 = sphi 0, %s91
    %s106 = sphi 0, %s92
    %s112 = sphi 0, %s114
    %s115 = sphi 0, %s112
    %s116 = sphi 0, %s115
    %s132 = sphi 0, %s116
    %s138 = sphi 0, %s140
    %s141 = sphi 0, %s138
    %s142 = sphi 0, %s141
    %s158 = sphi 0, %s142
    %s164 = sphi 0, %s166
    %s167 = sphi 0, %s164
    %s168 = sphi 0, %s167
    %s184 = sphi 0, %s168
  $region4: #{base_pointnet_fwd.17} parent=0 // loop_header_branch
    %16 = sbr.rel (%p14) target = $region8
  $region5: #{base_pointnet_fwd.17} parent=0 // loop_body
    %s18 = ssub.s32 %s13, 1
    %s19 = ssub.s32 %s13, 2
    %s20 = sadd.s32 %s13, 1
    %s21 = ssub.s32 %s13, %s20
    %p22 = scmp.eq.s32.totalorder %s21, 0
    %s24 = sadd.s32 %s23, 1
    %s25 = scalar_select %p22, %s23, %s24
    %p28 = pneg %p22
    %p29 = scmp.eq.s32.totalorder %s13, 3
    %p30 = por %p28, %p29
    %p31 = scmp.ne.s32.totalorder %s23, %s26
    %p32 = scmp.eq.s32.totalorder %s13, 0
    %p33 = por %p31, %p32
    %p34 = scmp.ne.s32.totalorder %s23, %s26
    %p35 = scmp.eq.s32.totalorder %s18, 3
    %p36 = por %p34, %p35
    %p37 = scmp.ne.s32.totalorder %s26, %s27
    %p38 = scmp.eq.s32.totalorder %s18, 0
    %p39 = por %p37, %p38
    %p40 = scmp.ne.s32.totalorder %s26, %s27
    %p41 = scmp.eq.s32.totalorder %s19, 3
    %p42 = por %p40, %p41
    %p44 = scmp.ne.s32.totalorder %s27, %s43
    %p45 = scmp.eq.s32.totalorder %s19, 0
    %p46 = por %p44, %p45
    %s48 = sadd.s32 %s47, 1
    %p51 = scmp.eq.s32.totalorder %s13, 3
    %p52 = scmp.ne.s32.totalorder %s47, %s49
    %p53 = scmp.eq.s32.totalorder %s13, 0
    %p54 = por %p52, %p53
    %p55 = scmp.ne.s32.totalorder %s47, %s49
    %p56 = scmp.eq.s32.totalorder %s18, 3
    %p57 = por %p55, %p56
    %p58 = scmp.ne.s32.totalorder %s49, %s50
    %p59 = scmp.eq.s32.totalorder %s18, 0
    %p60 = por %p58, %p59
    %p61 = scmp.ne.s32.totalorder %s49, %s50
    %p62 = scmp.eq.s32.totalorder %s19, 3
    %p63 = por %p61, %p62
    %p65 = scmp.ne.s32.totalorder %s50, %s64
    %p66 = scmp.eq.s32.totalorder %s19, 0
    %p67 = por %p65, %p66
    %s69 = sadd.s32 %s68, 1
    %p72 = scmp.eq.s32.totalorder %s13, 3
    %p73 = scmp.ne.s32.totalorder %s68, %s70
    %p74 = scmp.eq.s32.totalorder %s13, 0
    %p75 = por %p73, %p74
    %p76 = scmp.ne.s32.totalorder %s68, %s70
    %p77 = scmp.eq.s32.totalorder %s18, 3
    %p78 = por %p76, %p77
    %p79 = scmp.ne.s32.totalorder %s70, %s71
    %p80 = scmp.eq.s32.totalorder %s18, 0
    %p81 = por %p79, %p80
    %p82 = scmp.ne.s32.totalorder %s70, %s71
    %p83 = scmp.eq.s32.totalorder %s19, 3
    %p84 = por %p82, %p83
    %p86 = scmp.ne.s32.totalorder %s71, %s85
    %p87 = scmp.eq.s32.totalorder %s19, 0
    %p88 = por %p86, %p87
    %s90 = sadd.s32 %s89, 1
    %p93 = scmp.eq.s32.totalorder %s13, 3
    %p94 = scmp.ne.s32.totalorder %s89, %s91
    %p95 = scmp.eq.s32.totalorder %s13, 0
    %p96 = por %p94, %p95
    %p97 = scmp.ne.s32.totalorder %s89, %s91
    %p98 = scmp.eq.s32.totalorder %s18, 3
    %p99 = por %p97, %p98
    %p100 = scmp.ne.s32.totalorder %s91, %s92
    %p101 = scmp.eq.s32.totalorder %s18, 0
    %p102 = por %p100, %p101
    %p103 = scmp.ne.s32.totalorder %s91, %s92
    %p104 = scmp.eq.s32.totalorder %s19, 3
    %p105 = por %p103, %p104
    %p107 = scmp.ne.s32.totalorder %s92, %s106
    %p108 = scmp.eq.s32.totalorder %s19, 0
    %p109 = por %p107, %p108
    %s110 = ssub.s32 %s13, %s20
    %p111 = scmp.eq.s32.totalorder %s110, 0
    %s113 = sadd.s32 %s112, 1
    %s114 = scalar_select %p111, %s112, %s113
    %p117 = pneg %p111
    %p118 = scmp.eq.s32.totalorder %s13, 3
    %p119 = por %p117, %p118
    %p120 = scmp.ne.s32.totalorder %s112, %s115
    %p121 = scmp.eq.s32.totalorder %s13, 0
    %p122 = por %p120, %p121
    %p123 = scmp.ne.s32.totalorder %s112, %s115
    %p124 = scmp.eq.s32.totalorder %s18, 3
    %p125 = por %p123, %p124
    %p126 = scmp.ne.s32.totalorder %s115, %s116
    %p127 = scmp.eq.s32.totalorder %s18, 0
    %p128 = por %p126, %p127
    %p129 = scmp.ne.s32.totalorder %s115, %s116
    %p130 = scmp.eq.s32.totalorder %s19, 3
    %p131 = por %p129, %p130
    %p133 = scmp.ne.s32.totalorder %s116, %s132
    %p134 = scmp.eq.s32.totalorder %s19, 0
    %p135 = por %p133, %p134
    %s136 = ssub.s32 %s13, %s20
    %p137 = scmp.eq.s32.totalorder %s136, 0
    %s139 = sadd.s32 %s138, 1
    %s140 = scalar_select %p137, %s138, %s139
    %p143 = pneg %p137
    %p144 = scmp.eq.s32.totalorder %s13, 3
    %p145 = por %p143, %p144
    %p146 = scmp.ne.s32.totalorder %s138, %s141
    %p147 = scmp.eq.s32.totalorder %s13, 0
    %p148 = por %p146, %p147
    %p149 = scmp.ne.s32.totalorder %s138, %s141
    %p150 = scmp.eq.s32.totalorder %s18, 3
    %p151 = por %p149, %p150
    %p152 = scmp.ne.s32.totalorder %s141, %s142
    %p153 = scmp.eq.s32.totalorder %s18, 0
    %p154 = por %p152, %p153
    %p155 = scmp.ne.s32.totalorder %s141, %s142
    %p156 = scmp.eq.s32.totalorder %s19, 3
    %p157 = por %p155, %p156
    %p159 = scmp.ne.s32.totalorder %s142, %s158
    %p160 = scmp.eq.s32.totalorder %s19, 0
    %p161 = por %p159, %p160
    %s162 = ssub.s32 %s13, %s20
    %p163 = scmp.eq.s32.totalorder %s162, 0
    %s165 = sadd.s32 %s164, 1
    %s166 = scalar_select %p163, %s164, %s165
    %p169 = pneg %p163
    %p170 = scmp.eq.s32.totalorder %s13, 3
    %p171 = por %p169, %p170
    %p172 = scmp.ne.s32.totalorder %s164, %s167
    %p173 = scmp.eq.s32.totalorder %s13, 0
    %p174 = por %p172, %p173
    %p175 = scmp.ne.s32.totalorder %s164, %s167
    %p176 = scmp.eq.s32.totalorder %s18, 3
    %p177 = por %p175, %p176
    %p178 = scmp.ne.s32.totalorder %s167, %s168
    %p179 = scmp.eq.s32.totalorder %s18, 0
    %p180 = por %p178, %p179
    %p181 = scmp.ne.s32.totalorder %s167, %s168
    %p182 = scmp.eq.s32.totalorder %s19, 3
    %p183 = por %p181, %p182
    %p185 = scmp.ne.s32.totalorder %s168, %s184
    %p186 = scmp.eq.s32.totalorder %s19, 0
    %p187 = por %p185, %p186
    %p188 = scmp.le.s32.totalorder 1, %s13
    %p189 = scmp.lt.s32.totalorder %s13, 5
    %p190 = pnand %p188, %p189
    %p191 = pneg %p190
    // Predicated region
    $region9: #{base_pointnet_fwd.17} parent=5 // pred_check
      _
    $region10: #{base_pointnet_fwd.17} parent=5 // pred_check_branch
      %193 = sbr.rel (%p190) target = $region12
    $region11: #{base_pointnet_fwd.17} parent=5 // pred_region
      %s194 = ssub.s32 %s13, 1
      // Predicated region
      $region13: #{base_pointnet_fwd.17} parent=11 // pred_check
        %p195 = pneg %p60
      $region14: #{base_pointnet_fwd.17} parent=11 // pred_check_branch
        %197 = sbr.rel (%p195) target = $region16
      $region15: #{base_pointnet_fwd.17} parent=11 // pred_region
        _
      $region16: #{base_pointnet_fwd.17} parent=11 // pred_fallthru
        _
      // Predicated region
      $region17: #{base_pointnet_fwd.17} parent=11 // pred_check
        %p198 = pneg %p81
      $region18: #{base_pointnet_fwd.17} parent=11 // pred_check_branch
        %200 = sbr.rel (%p198) target = $region20
      $region19: #{base_pointnet_fwd.17} parent=11 // pred_region
        _
      $region20: #{base_pointnet_fwd.17} parent=11 // pred_fallthru
        _
      // Predicated region
      $region21: #{base_pointnet_fwd.17} parent=11 // pred_check
        %p201 = pneg %p102
      $region22: #{base_pointnet_fwd.17} parent=11 // pred_check_branch
        %203 = sbr.rel (%p201) target = $region24
      $region23: #{base_pointnet_fwd.17} parent=11 // pred_region
        _
      $region24: #{base_pointnet_fwd.17} parent=11 // pred_fallthru
        _
    $region12: #{base_pointnet_fwd.17} parent=5 // pred_fallthru
      _
    %p204 = scmp.lt.s32.totalorder %s13, 4
    // Predicated region
    $region25: #{base_pointnet_fwd.17} parent=5 // pred_check
      %p205 = pneg %p204
    $region26: #{base_pointnet_fwd.17} parent=5 // pred_check_branch
      %207 = sbr.rel (%p205) target = $region28
    $region27: #{base_pointnet_fwd.17} parent=5 // pred_region
      // Predicated region
      $region29: #{base_pointnet_fwd.17} parent=27 // pred_check
        %p208 = pneg %p33
      $region30: #{base_pointnet_fwd.17} parent=27 // pred_check_branch
        %210 = sbr.rel (%p208) target = $region32
      $region31: #{base_pointnet_fwd.17} parent=27 // pred_region
        %s211 = smul.u32 16, %s13
        %p212 = scmp.lt.s32.totalorder %s211, 63
        %s213 = scalar_select %p212, %s211, 63
        %s214 = smul.addr %s213, 4
        %s215 = scalar_lea.vmem %s0, %s214
        %s216 = smul.u32 16, %s13
      $region32: #{base_pointnet_fwd.17} parent=27 // pred_fallthru
        _
    $region28: #{base_pointnet_fwd.17} parent=5 // pred_fallthru
      _
    %p217 = scmp.le.s32.totalorder 1, %s13
    %p218 = scmp.lt.s32.totalorder %s13, 5
    %p219 = pnand %p217, %p218
    %p220 = pneg %p219
    // Predicated region
    $region33: #{base_pointnet_fwd.17} parent=5 // pred_check
      _
    $region34: #{base_pointnet_fwd.17} parent=5 // pred_check_branch
      %222 = sbr.rel (%p219) target = $region36
    $region35: #{base_pointnet_fwd.17} parent=5 // pred_region
      %s223 = ssub.s32 %s13, 1
      %s224 = smul.u32 16, %s18
      %p225 = scmp.lt.s32.totalorder %s224, 63
      %s226 = scalar_select %p225, %s224, 63
      %s227 = smul.addr %s226, 4
      %s228 = scalar_lea.vmem %s0, %s227
      %p229 = pneg %p39
      %p230 = pneg %p36
      %p231 = pneg %p60
      %p232 = pneg %p57
      %p233 = pneg %p81
      %p234 = pneg %p78
      %p235 = pneg %p102
      %p236 = pneg %p99
      %p237 = pneg %p128
      %p238 = pneg %p125
      %s239 = smul.u32 16, %s18
      %p240 = scmp.lt.s32.totalorder %s239, 63
      %s241 = scalar_select %p240, %s239, 63
      %s242 = smul.addr %s241, 4
      %s243 = scalar_lea.vmem %s4, %s242
      %p244 = pneg %p154
      %p245 = pneg %p151
      %p246 = scmp.lt.s32.totalorder %s18, 3
      %s247 = scalar_select %p246, %s18, 3
      %s248 = scalar_lea.vmem %s5, %s247
      %p249 = pneg %p180
      %p250 = pneg %p177
      %p251 = scmp.lt.s32.totalorder %s18, 3
      %s252 = scalar_select %p251, %s18, 3
      %s253 = scalar_lea.vmem %s6, %s252
      %s254 = smul.u32 16, %s18
      %p255 = scmp.lt.s32.totalorder %s254, 63
      %s256 = scalar_select %p255, %s254, 63
      %s257 = smul.addr %s256, 4
      %s258 = scalar_lea.vmem %s0, %s257
      %s259 = smul.u32 16, %s18
      %s260 = smul.u32 16, %s18
      %p261 = scmp.lt.s32.totalorder %s260, 63
      %s262 = scalar_select %p261, %s260, 63
      %s263 = smul.addr %s262, 4
      %s264 = scalar_lea.vmem %s4, %s263
      %s265 = smul.u32 16, %s18
      %p266 = scmp.lt.s32.totalorder %s18, 3
      %s267 = scalar_select %p266, %s18, 3
      %s268 = scalar_lea.vmem %s5, %s267
      %p269 = scmp.lt.s32.totalorder %s18, 3
      %s270 = scalar_select %p269, %s18, 3
      %s271 = scalar_lea.vmem %s6, %s270
      %v273 = vld [vmem:[%s258] sm:$0xf]
      %v274 = vld [vmem:[%s258 + $0x4] sm:$0xf]
      %v275 = vld [vmem:[%s258 + $0x8] sm:$0xf]
      %v276 = vld [vmem:[%s258 + $0xc] sm:$0xf]
      %v277 = vld [vmem:[%s258 + $0x10] sm:$0xf]
      %v278 = vld [vmem:[%s258 + $0x14] sm:$0xf]
      %v279 = vld [vmem:[%s258 + $0x18] sm:$0xf]
      %v280 = vld [vmem:[%s258 + $0x1c] sm:$0xf]
      %v281 = vld [vmem:[%s258 + $0x20] sm:$0xf]
      %v282 = vld [vmem:[%s258 + $0x24] sm:$0xf]
      %v283 = vld [vmem:[%s258 + $0x28] sm:$0xf]
      %v284 = vld [vmem:[%s258 + $0x2c] sm:$0xf]
      %v285 = vld [vmem:[%s258 + $0x30] sm:$0xf]
      %v286 = vld [vmem:[%s258 + $0x34] sm:$0xf]
      %v287 = vld [vmem:[%s258 + $0x38] sm:$0xf]
      %v288 = vld [vmem:[%s258 + $0x3c] sm:$0xf]
      %v289 = vunpack.c.l.bf16 %v273
      %v290 = vunpack.c.l.bf16 %v274
      %v291 = vunpack.c.l.bf16 %v275
      %v292 = vunpack.c.l.bf16 %v276
      %v293 = vunpack.c.l.bf16 %v277
      %v294 = vunpack.c.l.bf16 %v278
      %v295 = vunpack.c.l.bf16 %v279
      %v296 = vunpack.c.l.bf16 %v280
      %v297 = vunpack.c.l.bf16 %v281
      %v298 = vunpack.c.l.bf16 %v282
      %v299 = vunpack.c.l.bf16 %v283
      %v300 = vunpack.c.l.bf16 %v284
      %v301 = vunpack.c.l.bf16 %v285
      %v302 = vunpack.c.l.bf16 %v286
      %v303 = vunpack.c.l.bf16 %v287
      %v304 = vunpack.c.l.bf16 %v288
      %v305 = vld [vmem:[%s1] sm:$0x1]
      %v307 = vperm.slane %v305, 0
      %v309 = vmul.f32 %v289, %v307
      %v310 = vmul.f32 %v290, %v307
      %v311 = vmul.f32 %v291, %v307
      %v312 = vmul.f32 %v292, %v307
      %v313 = vmul.f32 %v293, %v307
      %v314 = vmul.f32 %v294, %v307
      %v315 = vmul.f32 %v295, %v307
      %v316 = vmul.f32 %v296, %v307
      %v317 = vmul.f32 %v297, %v307
      %v318 = vmul.f32 %v298, %v307
      %v319 = vmul.f32 %v299, %v307
      %v320 = vmul.f32 %v300, %v307
      %v321 = vmul.f32 %v301, %v307
      %v322 = vmul.f32 %v302, %v307
      %v323 = vmul.f32 %v303, %v307
      %v324 = vmul.f32 %v304, %v307
      %v325 = vld [vmem:[%s2] sm:$0x1]
      %v327 = vperm.slane %v325, 0
      %v329 = vadd.f32 %v309, %v327
      %v330 = vadd.f32 %v310, %v327
      %v331 = vadd.f32 %v311, %v327
      %v332 = vadd.f32 %v312, %v327
      %v333 = vadd.f32 %v313, %v327
      %v334 = vadd.f32 %v314, %v327
      %v335 = vadd.f32 %v315, %v327
      %v336 = vadd.f32 %v316, %v327
      %v337 = vadd.f32 %v317, %v327
      %v338 = vadd.f32 %v318, %v327
      %v339 = vadd.f32 %v319, %v327
      %v340 = vadd.f32 %v320, %v327
      %v341 = vadd.f32 %v321, %v327
      %v342 = vadd.f32 %v322, %v327
      %v343 = vadd.f32 %v323, %v327
      %v344 = vadd.f32 %v324, %v327
      %v345 = vmax.f32 %v329, 0.0
      %v346 = vmax.f32 %v330, 0.0
      %v347 = vmax.f32 %v331, 0.0
      %v348 = vmax.f32 %v332, 0.0
      %v349 = vmax.f32 %v333, 0.0
      %v350 = vmax.f32 %v334, 0.0
      %v351 = vmax.f32 %v335, 0.0
      %v352 = vmax.f32 %v336, 0.0
      %v353 = vmax.f32 %v337, 0.0
      %v354 = vmax.f32 %v338, 0.0
      %v355 = vmax.f32 %v339, 0.0
      %v356 = vmax.f32 %v340, 0.0
      %v357 = vmax.f32 %v341, 0.0
      %v358 = vmax.f32 %v342, 0.0
      %v359 = vmax.f32 %v343, 0.0
      %v360 = vmax.f32 %v344, 0.0
      %v361 = vpack.c.bf16 %v346, %v345
      %v362 = vpack.c.bf16 %v348, %v347
      %v363 = vpack.c.bf16 %v350, %v349
      %v364 = vpack.c.bf16 %v352, %v351
      %v365 = vpack.c.bf16 %v354, %v353
      %v366 = vpack.c.bf16 %v356, %v355
      %v367 = vpack.c.bf16 %v358, %v357
      %v368 = vpack.c.bf16 %v360, %v359
      %v369 = vld [vmem:[%s3] sm:$0xf]
      %v370 = vld [vmem:[%s3 + $0x4] sm:$0xf]
      %v371 = vld [vmem:[%s3 + $0x8] sm:$0xf]
      %v372 = vld [vmem:[%s3 + $0xc] sm:$0xf]
      %v373 = vld [vmem:[%s3 + $0x10] sm:$0xf]
      %v374 = vld [vmem:[%s3 + $0x14] sm:$0xf]
      %v375 = vld [vmem:[%s3 + $0x18] sm:$0xf]
      %v376 = vld [vmem:[%s3 + $0x1c] sm:$0xf]
      %v385 = vunpack.c.l.b16 %v369
      %v386 = vunpack.c.l.b16 %v370
      %v387 = vunpack.c.l.b16 %v371
      %v388 = vunpack.c.l.b16 %v372
      %v389 = vunpack.c.l.b16 %v373
      %v390 = vunpack.c.l.b16 %v374
      %v391 = vunpack.c.l.b16 %v375
      %v392 = vunpack.c.l.b16 %v376
      %v393 = vpack.c.b16 %v386, %v385
      %v394 = vpack.c.b16 %v388, %v387
      %v395 = vpack.c.b16 %v390, %v389
      %v396 = vpack.c.b16 %v392, %v391
      %vm401 = vcmask 523264
      %v403 = vsel %vm401, %v361, 0
      %v406 = vsel %vm401, %v362, 0
      %v409 = vsel %vm401, %v363, 0
      %v412 = vsel %vm401, %v364, 0
      %v415 = vsel %vm401, %v365, 0
      %v418 = vsel %vm401, %v366, 0
      %v421 = vsel %vm401, %v367, 0
      %v424 = vsel %vm401, %v368, 0
      %426 = vmatpush.bf16.msra.mxu0 0
      %427 = vmatpush.bf16.msra.mxu0 0
      %428 = vmatpush.bf16.msra.mxu0 0
      %429 = vmatpush.bf16.msra.mxu0 0
      %430 = vmatpush.bf16.msra.mxu0 %v396
      %431 = vmatpush.bf16.msra.mxu0 %v395
      %432 = vmatpush.bf16.msra.mxu0 %v394
      %433 = vmatpush.bf16.msra.mxu0 %v393
      %434 = vmatmul.bf16.gmra.mxu0 %v403
      %v435 = vpop.f32.mrf.mxu0
      %v436 = vadd.f32 0.0, %v435
      %v437 = vpop.f32.mrf.mxu0
      %v438 = vadd.f32 0.0, %v437
      %439 = vmatmul.bf16.gmra.mxu0 %v406
      %v440 = vpop.f32.mrf.mxu0
      %v441 = vadd.f32 0.0, %v440
      %v442 = vpop.f32.mrf.mxu0
      %v443 = vadd.f32 0.0, %v442
      %444 = vmatmul.bf16.gmra.mxu0 %v409
      %v445 = vpop.f32.mrf.mxu0
      %v446 = vadd.f32 0.0, %v445
      %v447 = vpop.f32.mrf.mxu0
      %v448 = vadd.f32 0.0, %v447
      %449 = vmatmul.bf16.gmra.mxu0 %v412
      %v450 = vpop.f32.mrf.mxu0
      %v451 = vadd.f32 0.0, %v450
      %v452 = vpop.f32.mrf.mxu0
      %v453 = vadd.f32 0.0, %v452
      %454 = vmatmul.bf16.gmra.mxu0 %v415
      %v455 = vpop.f32.mrf.mxu0
      %v456 = vadd.f32 0.0, %v455
      %v457 = vpop.f32.mrf.mxu0
      %v458 = vadd.f32 0.0, %v457
      %459 = vmatmul.bf16.gmra.mxu0 %v418
      %v460 = vpop.f32.mrf.mxu0
      %v461 = vadd.f32 0.0, %v460
      %v462 = vpop.f32.mrf.mxu0
      %v463 = vadd.f32 0.0, %v462
      %464 = vmatmul.bf16.gmra.mxu0 %v421
      %v465 = vpop.f32.mrf.mxu0
      %v466 = vadd.f32 0.0, %v465
      %v467 = vpop.f32.mrf.mxu0
      %v468 = vadd.f32 0.0, %v467
      %469 = vmatmul.bf16.gmra.mxu0 %v424
      %v470 = vpop.f32.mrf.mxu0
      %v471 = vadd.f32 0.0, %v470
      %v472 = vpop.f32.mrf.mxu0
      %v473 = vadd.f32 0.0, %v472
      %474 = vdwg.mxu0
      %v475 = vadd.f32 %v436, %v438
      %v476 = vadd.f32 %v475, %v441
      %v477 = vadd.f32 %v476, %v443
      %v478 = vadd.f32 %v477, %v446
      %v479 = vadd.f32 %v478, %v448
      %v480 = vadd.f32 %v479, %v451
      %v481 = vadd.f32 %v480, %v453
      %v482 = vadd.f32 %v481, %v456
      %v483 = vadd.f32 %v482, %v458
      %v484 = vadd.f32 %v483, %v461
      %v485 = vadd.f32 %v484, %v463
      %v486 = vadd.f32 %v485, %v466
      %v487 = vadd.f32 %v486, %v468
      %v488 = vadd.f32 %v487, %v471
      %v489 = vadd.f32 %v488, %v473
      %v490 = vrot.slane %v489, 4
      %v491 = vadd.f32 %v489, %v490
      %v492 = vrot.slane %v491, 2
      %v493 = vadd.f32 %v491, %v492
      %v494 = vrot.slane %v493, 1
      %v495 = vadd.f32 %v493, %v494
      %496 = vst [vmem:[%s268] sm:$0x1] %v495
      %v497 = vmul.f32 %v436, %v436
      %v498 = vmul.f32 %v438, %v438
      %v499 = vmul.f32 %v441, %v441
      %v500 = vmul.f32 %v443, %v443
      %v501 = vmul.f32 %v446, %v446
      %v502 = vmul.f32 %v448, %v448
      %v503 = vmul.f32 %v451, %v451
      %v504 = vmul.f32 %v453, %v453
      %v505 = vmul.f32 %v456, %v456
      %v506 = vmul.f32 %v458, %v458
      %v507 = vmul.f32 %v461, %v461
      %v508 = vmul.f32 %v463, %v463
      %v509 = vmul.f32 %v466, %v466
      %v510 = vmul.f32 %v468, %v468
      %v511 = vmul.f32 %v471, %v471
      %v512 = vmul.f32 %v473, %v473
      %v513 = vadd.f32 %v497, %v498
      %v514 = vadd.f32 %v513, %v499
      %v515 = vadd.f32 %v514, %v500
      %v516 = vadd.f32 %v515, %v501
      %v517 = vadd.f32 %v516, %v502
      %v518 = vadd.f32 %v517, %v503
      %v519 = vadd.f32 %v518, %v504
      %v520 = vadd.f32 %v519, %v505
      %v521 = vadd.f32 %v520, %v506
      %v522 = vadd.f32 %v521, %v507
      %v523 = vadd.f32 %v522, %v508
      %v524 = vadd.f32 %v523, %v509
      %v525 = vadd.f32 %v524, %v510
      %v526 = vadd.f32 %v525, %v511
      %v527 = vadd.f32 %v526, %v512
      %v528 = vrot.slane %v527, 4
      %v529 = vadd.f32 %v527, %v528
      %v530 = vrot.slane %v529, 2
      %v531 = vadd.f32 %v529, %v530
      %v532 = vrot.slane %v531, 1
      %v533 = vadd.f32 %v531, %v532
      %534 = vst [vmem:[%s271] sm:$0x1] %v533
      %v535 = vpack.c.bf16 %v436, %v436
      %v536 = vpack.c.bf16 %v438, %v438
      %v537 = vpack.c.bf16 %v441, %v441
      %v538 = vpack.c.bf16 %v443, %v443
      %v539 = vpack.c.bf16 %v446, %v446
      %v540 = vpack.c.bf16 %v448, %v448
      %v541 = vpack.c.bf16 %v451, %v451
      %v542 = vpack.c.bf16 %v453, %v453
      %v543 = vpack.c.bf16 %v456, %v456
      %v544 = vpack.c.bf16 %v458, %v458
      %v545 = vpack.c.bf16 %v461, %v461
      %v546 = vpack.c.bf16 %v463, %v463
      %v547 = vpack.c.bf16 %v466, %v466
      %v548 = vpack.c.bf16 %v468, %v468
      %v549 = vpack.c.bf16 %v471, %v471
      %v550 = vpack.c.bf16 %v473, %v473
      %551 = vst [vmem:[%s264] sm:$0xf] %v535
      %552 = vst [vmem:[%s264 + $0x4] sm:$0xf] %v536
      %553 = vst [vmem:[%s264 + $0x8] sm:$0xf] %v537
      %554 = vst [vmem:[%s264 + $0xc] sm:$0xf] %v538
      %555 = vst [vmem:[%s264 + $0x10] sm:$0xf] %v539
      %556 = vst [vmem:[%s264 + $0x14] sm:$0xf] %v540
      %557 = vst [vmem:[%s264 + $0x18] sm:$0xf] %v541
      %558 = vst [vmem:[%s264 + $0x1c] sm:$0xf] %v542
      %559 = vst [vmem:[%s264 + $0x20] sm:$0xf] %v543
      %560 = vst [vmem:[%s264 + $0x24] sm:$0xf] %v544
      %561 = vst [vmem:[%s264 + $0x28] sm:$0xf] %v545
      %562 = vst [vmem:[%s264 + $0x2c] sm:$0xf] %v546
      %563 = vst [vmem:[%s264 + $0x30] sm:$0xf] %v547
      %564 = vst [vmem:[%s264 + $0x34] sm:$0xf] %v548
      %565 = vst [vmem:[%s264 + $0x38] sm:$0xf] %v549
      %566 = vst [vmem:[%s264 + $0x3c] sm:$0xf] %v550
      %s567 = smul.u32 16, %s18
      %p568 = scmp.lt.s32.totalorder %s567, 63
      %s569 = scalar_select %p568, %s567, 63
      %s570 = smul.addr %s569, 4
      %s571 = scalar_lea.vmem %s4, %s570
      %p572 = scmp.lt.s32.totalorder %s18, 3
      %s573 = scalar_select %p572, %s18, 3
      %s574 = scalar_lea.vmem %s5, %s573
      %p575 = scmp.lt.s32.totalorder %s18, 3
      %s576 = scalar_select %p575, %s18, 3
      %s577 = scalar_lea.vmem %s6, %s576
      // Predicated region
      $region37: #{base_pointnet_fwd.17} parent=35 // pred_check
        %p578 = pneg %p125
      $region38: #{base_pointnet_fwd.17} parent=35 // pred_check_branch
        %580 = sbr.rel (%p578) target = $region40
      $region39: #{base_pointnet_fwd.17} parent=35 // pred_region
        %s581 = smul.u32 16, %s18
      $region40: #{base_pointnet_fwd.17} parent=35 // pred_fallthru
        _
      // Predicated region
      $region41: #{base_pointnet_fwd.17} parent=35 // pred_check
        %p582 = pneg %p151
      $region42: #{base_pointnet_fwd.17} parent=35 // pred_check_branch
        %584 = sbr.rel (%p582) target = $region44
      $region43: #{base_pointnet_fwd.17} parent=35 // pred_region
        _
      $region44: #{base_pointnet_fwd.17} parent=35 // pred_fallthru
        _
      // Predicated region
      $region45: #{base_pointnet_fwd.17} parent=35 // pred_check
        %p585 = pneg %p177
      $region46: #{base_pointnet_fwd.17} parent=35 // pred_check_branch
        %587 = sbr.rel (%p585) target = $region48
      $region47: #{base_pointnet_fwd.17} parent=35 // pred_region
        _
      $region48: #{base_pointnet_fwd.17} parent=35 // pred_fallthru
        _
    $region36: #{base_pointnet_fwd.17} parent=5 // pred_fallthru
      _
    %p588 = scmp.le.s32.totalorder 2, %s13
    // Predicated region
    $region49: #{base_pointnet_fwd.17} parent=5 // pred_check
      %p589 = pneg %p588
    $region50: #{base_pointnet_fwd.17} parent=5 // pred_check_branch
      %591 = sbr.rel (%p589) target = $region52
    $region51: #{base_pointnet_fwd.17} parent=5 // pred_region
      %s592 = ssub.s32 %s13, 2
      // Predicated region
      $region53: #{base_pointnet_fwd.17} parent=51 // pred_check
        %p593 = pneg %p131
      $region54: #{base_pointnet_fwd.17} parent=51 // pred_check_branch
        %595 = sbr.rel (%p593) target = $region56
      $region55: #{base_pointnet_fwd.17} parent=51 // pred_region
        %s596 = smul.u32 16, %s19
        %p597 = scmp.lt.s32.totalorder %s596, 63
        %s598 = scalar_select %p597, %s596, 63
        %s599 = smul.addr %s598, 4
        %s600 = scalar_lea.vmem %s4, %s599
      $region56: #{base_pointnet_fwd.17} parent=51 // pred_fallthru
        _
      // Predicated region
      $region57: #{base_pointnet_fwd.17} parent=51 // pred_check
        %p601 = pneg %p157
      $region58: #{base_pointnet_fwd.17} parent=51 // pred_check_branch
        %603 = sbr.rel (%p601) target = $region60
      $region59: #{base_pointnet_fwd.17} parent=51 // pred_region
        %p604 = scmp.lt.s32.totalorder %s19, 3
        %s605 = scalar_select %p604, %s19, 3
        %s606 = scalar_lea.vmem %s5, %s605
      $region60: #{base_pointnet_fwd.17} parent=51 // pred_fallthru
        _
      // Predicated region
      $region61: #{base_pointnet_fwd.17} parent=51 // pred_check
        %p607 = pneg %p183
      $region62: #{base_pointnet_fwd.17} parent=51 // pred_check_branch
        %609 = sbr.rel (%p607) target = $region64
      $region63: #{base_pointnet_fwd.17} parent=51 // pred_region
        %p610 = scmp.lt.s32.totalorder %s19, 3
        %s611 = scalar_select %p610, %s19, 3
        %s612 = scalar_lea.vmem %s6, %s611
      $region64: #{base_pointnet_fwd.17} parent=51 // pred_fallthru
        _
    $region52: #{base_pointnet_fwd.17} parent=5 // pred_fallthru
      _
  $region6: #{base_pointnet_fwd.17} parent=0 // loop_footer
    %s17 = sadd.s32 1, %s13
  $region7: #{base_pointnet_fwd.17} parent=0 // loop_footer_branch
    %12 = sbr.rel target = $region3
  $region8: #{base_pointnet_fwd.17} parent=0 // loop_exit
    _

// kernel: base_pointnet_fwd.18
$region0: #{base_pointnet_fwd.18}
  #allocation0 [shape = 'u32[]', space=smem, size = 0x4, offset = 0x4, fixed_abs, tag = 'smem constant byte address 0x4 - core index']
  #allocation1 [shape = 'u32[72,128]{1,0:T(1,128)}', space=vmem, size = 0x9000, scoped, tag = 'internal scratch']
  %s0 = inlined_call_operand.vmem [shape: bf16[512,128], index: 0, kind: input, shape index: {}]
  %s1 = inlined_call_operand.vmem [shape: f32[1,128], index: 1, kind: input, shape index: {}]
  %s2 = inlined_call_operand.vmem [shape: f32[1,128], index: 2, kind: input, shape index: {}]
  %s3 = inlined_call_operand.vmem [shape: bf16[128,256], index: 3, kind: input, shape index: {}]
  %s4 = inlined_call_operand.vmem [shape: bf16[512,256], index: 4, kind: output, shape index: {0}]
  %s5 = inlined_call_operand.vmem [shape: f32[4,1,256], index: 5, kind: output, shape index: {1}]
  %s6 = inlined_call_operand.vmem [shape: f32[4,1,256], index: 6, kind: output, shape index: {2}]
  %7 = xla_tuple %s4, %s5, %s6
  %s8 = sld [smem:[#allocation0]]
  $region65: #{base_pointnet_fwd.18} parent=0
    _
  %s10 = ssub.s32 1, %s8
  %s11 = scalar_select 0, %s10, %s8
  loop: start=0, step=1, limit=6
  $region2: #{base_pointnet_fwd.18} parent=0 // loop_pre_header
    _
  $region3: #{base_pointnet_fwd.18} parent=0 // loop_header
    %s13 = sphi 0, %s17
    %p14 = scmp.ge.s32.totalorder %s13, 6
    %s23 = sphi 0, %s25
    %s26 = sphi 0, %s23
    %s27 = sphi 0, %s26
    %s43 = sphi 0, %s27
    %s47 = sphi 0, %s47
    %s49 = sphi 0, %s47
    %s50 = sphi 0, %s49
    %s64 = sphi 0, %s50
    %s68 = sphi 0, %s68
    %s70 = sphi 0, %s68
    %s71 = sphi 0, %s70
    %s85 = sphi 0, %s71
    %s89 = sphi 0, %s89
    %s91 = sphi 0, %s89
    %s92 = sphi 0, %s91
    %s106 = sphi 0, %s92
    %s112 = sphi 0, %s114
    %s115 = sphi 0, %s112
    %s116 = sphi 0, %s115
    %s132 = sphi 0, %s116
    %s138 = sphi 0, %s140
    %s141 = sphi 0, %s138
    %s142 = sphi 0, %s141
    %s158 = sphi 0, %s142
    %s164 = sphi 0, %s166
    %s167 = sphi 0, %s164
    %s168 = sphi 0, %s167
    %s184 = sphi 0, %s168
  $region4: #{base_pointnet_fwd.18} parent=0 // loop_header_branch
    %16 = sbr.rel (%p14) target = $region8
  $region5: #{base_pointnet_fwd.18} parent=0 // loop_body
    %s18 = ssub.s32 %s13, 1
    %s19 = ssub.s32 %s13, 2
    %s20 = sadd.s32 %s13, 1
    %s21 = ssub.s32 %s13, %s20
    %p22 = scmp.eq.s32.totalorder %s21, 0
    %s24 = sadd.s32 %s23, 1
    %s25 = scalar_select %p22, %s23, %s24
    %p28 = pneg %p22
    %p29 = scmp.eq.s32.totalorder %s13, 3
    %p30 = por %p28, %p29
    %p31 = scmp.ne.s32.totalorder %s23, %s26
    %p32 = scmp.eq.s32.totalorder %s13, 0
    %p33 = por %p31, %p32
    %p34 = scmp.ne.s32.totalorder %s23, %s26
    %p35 = scmp.eq.s32.totalorder %s18, 3
    %p36 = por %p34, %p35
    %p37 = scmp.ne.s32.totalorder %s26, %s27
    %p38 = scmp.eq.s32.totalorder %s18, 0
    %p39 = por %p37, %p38
    %p40 = scmp.ne.s32.totalorder %s26, %s27
    %p41 = scmp.eq.s32.totalorder %s19, 3
    %p42 = por %p40, %p41
    %p44 = scmp.ne.s32.totalorder %s27, %s43
    %p45 = scmp.eq.s32.totalorder %s19, 0
    %p46 = por %p44, %p45
    %s48 = sadd.s32 %s47, 1
    %p51 = scmp.eq.s32.totalorder %s13, 3
    %p52 = scmp.ne.s32.totalorder %s47, %s49
    %p53 = scmp.eq.s32.totalorder %s13, 0
    %p54 = por %p52, %p53
    %p55 = scmp.ne.s32.totalorder %s47, %s49
    %p56 = scmp.eq.s32.totalorder %s18, 3
    %p57 = por %p55, %p56
    %p58 = scmp.ne.s32.totalorder %s49, %s50
    %p59 = scmp.eq.s32.totalorder %s18, 0
    %p60 = por %p58, %p59
    %p61 = scmp.ne.s32.totalorder %s49, %s50
    %p62 = scmp.eq.s32.totalorder %s19, 3
    %p63 = por %p61, %p62
    %p65 = scmp.ne.s32.totalorder %s50, %s64
    %p66 = scmp.eq.s32.totalorder %s19, 0
    %p67 = por %p65, %p66
    %s69 = sadd.s32 %s68, 1
    %p72 = scmp.eq.s32.totalorder %s13, 3
    %p73 = scmp.ne.s32.totalorder %s68, %s70
    %p74 = scmp.eq.s32.totalorder %s13, 0
    %p75 = por %p73, %p74
    %p76 = scmp.ne.s32.totalorder %s68, %s70
    %p77 = scmp.eq.s32.totalorder %s18, 3
    %p78 = por %p76, %p77
    %p79 = scmp.ne.s32.totalorder %s70, %s71
    %p80 = scmp.eq.s32.totalorder %s18, 0
    %p81 = por %p79, %p80
    %p82 = scmp.ne.s32.totalorder %s70, %s71
    %p83 = scmp.eq.s32.totalorder %s19, 3
    %p84 = por %p82, %p83
    %p86 = scmp.ne.s32.totalorder %s71, %s85
    %p87 = scmp.eq.s32.totalorder %s19, 0
    %p88 = por %p86, %p87
    %s90 = sadd.s32 %s89, 1
    %p93 = scmp.eq.s32.totalorder %s13, 3
    %p94 = scmp.ne.s32.totalorder %s89, %s91
    %p95 = scmp.eq.s32.totalorder %s13, 0
    %p96 = por %p94, %p95
    %p97 = scmp.ne.s32.totalorder %s89, %s91
    %p98 = scmp.eq.s32.totalorder %s18, 3
    %p99 = por %p97, %p98
    %p100 = scmp.ne.s32.totalorder %s91, %s92
    %p101 = scmp.eq.s32.totalorder %s18, 0
    %p102 = por %p100, %p101
    %p103 = scmp.ne.s32.totalorder %s91, %s92
    %p104 = scmp.eq.s32.totalorder %s19, 3
    %p105 = por %p103, %p104
    %p107 = scmp.ne.s32.totalorder %s92, %s106
    %p108 = scmp.eq.s32.totalorder %s19, 0
    %p109 = por %p107, %p108
    %s110 = ssub.s32 %s13, %s20
    %p111 = scmp.eq.s32.totalorder %s110, 0
    %s113 = sadd.s32 %s112, 1
    %s114 = scalar_select %p111, %s112, %s113
    %p117 = pneg %p111
    %p118 = scmp.eq.s32.totalorder %s13, 3
    %p119 = por %p117, %p118
    %p120 = scmp.ne.s32.totalorder %s112, %s115
    %p121 = scmp.eq.s32.totalorder %s13, 0
    %p122 = por %p120, %p121
    %p123 = scmp.ne.s32.totalorder %s112, %s115
    %p124 = scmp.eq.s32.totalorder %s18, 3
    %p125 = por %p123, %p124
    %p126 = scmp.ne.s32.totalorder %s115, %s116
    %p127 = scmp.eq.s32.totalorder %s18, 0
    %p128 = por %p126, %p127
    %p129 = scmp.ne.s32.totalorder %s115, %s116
    %p130 = scmp.eq.s32.totalorder %s19, 3
    %p131 = por %p129, %p130
    %p133 = scmp.ne.s32.totalorder %s116, %s132
    %p134 = scmp.eq.s32.totalorder %s19, 0
    %p135 = por %p133, %p134
    %s136 = ssub.s32 %s13, %s20
    %p137 = scmp.eq.s32.totalorder %s136, 0
    %s139 = sadd.s32 %s138, 1
    %s140 = scalar_select %p137, %s138, %s139
    %p143 = pneg %p137
    %p144 = scmp.eq.s32.totalorder %s13, 3
    %p145 = por %p143, %p144
    %p146 = scmp.ne.s32.totalorder %s138, %s141
    %p147 = scmp.eq.s32.totalorder %s13, 0
    %p148 = por %p146, %p147
    %p149 = scmp.ne.s32.totalorder %s138, %s141
    %p150 = scmp.eq.s32.totalorder %s18, 3
    %p151 = por %p149, %p150
    %p152 = scmp.ne.s32.totalorder %s141, %s142
    %p153 = scmp.eq.s32.totalorder %s18, 0
    %p154 = por %p152, %p153
    %p155 = scmp.ne.s32.totalorder %s141, %s142
    %p156 = scmp.eq.s32.totalorder %s19, 3
    %p157 = por %p155, %p156
    %p159 = scmp.ne.s32.totalorder %s142, %s158
    %p160 = scmp.eq.s32.totalorder %s19, 0
    %p161 = por %p159, %p160
    %s162 = ssub.s32 %s13, %s20
    %p163 = scmp.eq.s32.totalorder %s162, 0
    %s165 = sadd.s32 %s164, 1
    %s166 = scalar_select %p163, %s164, %s165
    %p169 = pneg %p163
    %p170 = scmp.eq.s32.totalorder %s13, 3
    %p171 = por %p169, %p170
    %p172 = scmp.ne.s32.totalorder %s164, %s167
    %p173 = scmp.eq.s32.totalorder %s13, 0
    %p174 = por %p172, %p173
    %p175 = scmp.ne.s32.totalorder %s164, %s167
    %p176 = scmp.eq.s32.totalorder %s18, 3
    %p177 = por %p175, %p176
    %p178 = scmp.ne.s32.totalorder %s167, %s168
    %p179 = scmp.eq.s32.totalorder %s18, 0
    %p180 = por %p178, %p179
    %p181 = scmp.ne.s32.totalorder %s167, %s168
    %p182 = scmp.eq.s32.totalorder %s19, 3
    %p183 = por %p181, %p182
    %p185 = scmp.ne.s32.totalorder %s168, %s184
    %p186 = scmp.eq.s32.totalorder %s19, 0
    %p187 = por %p185, %p186
    %p188 = scmp.le.s32.totalorder 1, %s13
    %p189 = scmp.lt.s32.totalorder %s13, 5
    %p190 = pnand %p188, %p189
    %p191 = pneg %p190
    // Predicated region
    $region9: #{base_pointnet_fwd.18} parent=5 // pred_check
      _
    $region10: #{base_pointnet_fwd.18} parent=5 // pred_check_branch
      %193 = sbr.rel (%p190) target = $region12
    $region11: #{base_pointnet_fwd.18} parent=5 // pred_region
      %s194 = ssub.s32 %s13, 1
      // Predicated region
      $region13: #{base_pointnet_fwd.18} parent=11 // pred_check
        %p195 = pneg %p60
      $region14: #{base_pointnet_fwd.18} parent=11 // pred_check_branch
        %197 = sbr.rel (%p195) target = $region16
      $region15: #{base_pointnet_fwd.18} parent=11 // pred_region
        _
      $region16: #{base_pointnet_fwd.18} parent=11 // pred_fallthru
        _
      // Predicated region
      $region17: #{base_pointnet_fwd.18} parent=11 // pred_check
        %p198 = pneg %p81
      $region18: #{base_pointnet_fwd.18} parent=11 // pred_check_branch
        %200 = sbr.rel (%p198) target = $region20
      $region19: #{base_pointnet_fwd.18} parent=11 // pred_region
        _
      $region20: #{base_pointnet_fwd.18} parent=11 // pred_fallthru
        _
      // Predicated region
      $region21: #{base_pointnet_fwd.18} parent=11 // pred_check
        %p201 = pneg %p102
      $region22: #{base_pointnet_fwd.18} parent=11 // pred_check_branch
        %203 = sbr.rel (%p201) target = $region24
      $region23: #{base_pointnet_fwd.18} parent=11 // pred_region
        _
      $region24: #{base_pointnet_fwd.18} parent=11 // pred_fallthru
        _
    $region12: #{base_pointnet_fwd.18} parent=5 // pred_fallthru
      _
    %p204 = scmp.lt.s32.totalorder %s13, 4
    // Predicated region
    $region25: #{base_pointnet_fwd.18} parent=5 // pred_check
      %p205 = pneg %p204
    $region26: #{base_pointnet_fwd.18} parent=5 // pred_check_branch
      %207 = sbr.rel (%p205) target = $region28
    $region27: #{base_pointnet_fwd.18} parent=5 // pred_region
      // Predicated region
      $region29: #{base_pointnet_fwd.18} parent=27 // pred_check
        %p208 = pneg %p33
      $region30: #{base_pointnet_fwd.18} parent=27 // pred_check_branch
        %210 = sbr.rel (%p208) target = $region32
      $region31: #{base_pointnet_fwd.18} parent=27 // pred_region
        %s211 = smul.u32 16, %s13
        %p212 = scmp.lt.s32.totalorder %s211, 63
        %s213 = scalar_select %p212, %s211, 63
        %s214 = smul.addr %s213, 4
        %s215 = scalar_lea.vmem %s0, %s214
        %s216 = smul.u32 16, %s13
      $region32: #{base_pointnet_fwd.18} parent=27 // pred_fallthru
        _
    $region28: #{base_pointnet_fwd.18} parent=5 // pred_fallthru
      _
    %p217 = scmp.le.s32.totalorder 1, %s13
    %p218 = scmp.lt.s32.totalorder %s13, 5
    %p219 = pnand %p217, %p218
    %p220 = pneg %p219
    // Predicated region
    $region33: #{base_pointnet_fwd.18} parent=5 // pred_check
      _
    $region34: #{base_pointnet_fwd.18} parent=5 // pred_check_branch
      %222 = sbr.rel (%p219) target = $region36
    $region35: #{base_pointnet_fwd.18} parent=5 // pred_region
      %s223 = ssub.s32 %s13, 1
      %s224 = smul.u32 16, %s18
      %p225 = scmp.lt.s32.totalorder %s224, 63
      %s226 = scalar_select %p225, %s224, 63
      %s227 = smul.addr %s226, 4
      %s228 = scalar_lea.vmem %s0, %s227
      %p229 = pneg %p39
      %p230 = pneg %p36
      %p231 = pneg %p60
      %p232 = pneg %p57
      %p233 = pneg %p81
      %p234 = pneg %p78
      %p235 = pneg %p102
      %p236 = pneg %p99
      %p237 = pneg %p128
      %p238 = pneg %p125
      %s239 = smul.u32 16, %s18
      %p240 = scmp.lt.s32.totalorder %s239, 63
      %s241 = scalar_select %p240, %s239, 63
      %s242 = smul.addr %s241, 2
      %s243 = smul.addr %s242, 4
      %s244 = scalar_lea.vmem %s4, %s243
      %p245 = pneg %p154
      %p246 = pneg %p151
      %p247 = scmp.lt.s32.totalorder %s18, 3
      %s248 = scalar_select %p247, %s18, 3
      %s249 = smul.addr %s248, 2
      %s250 = scalar_lea.vmem %s5, %s249
      %p251 = pneg %p180
      %p252 = pneg %p177
      %p253 = scmp.lt.s32.totalorder %s18, 3
      %s254 = scalar_select %p253, %s18, 3
      %s255 = smul.addr %s254, 2
      %s256 = scalar_lea.vmem %s6, %s255
      %s257 = smul.u32 16, %s18
      %p258 = scmp.lt.s32.totalorder %s257, 63
      %s259 = scalar_select %p258, %s257, 63
      %s260 = smul.addr %s259, 4
      %s261 = scalar_lea.vmem %s0, %s260
      %s262 = smul.u32 16, %s18
      %s263 = smul.u32 16, %s18
      %p264 = scmp.lt.s32.totalorder %s263, 63
      %s265 = scalar_select %p264, %s263, 63
      %s266 = smul.addr %s265, 2
      %s267 = smul.addr %s266, 4
      %s268 = scalar_lea.vmem %s4, %s267
      %s269 = smul.u32 16, %s18
      %p270 = scmp.lt.s32.totalorder %s18, 3
      %s271 = scalar_select %p270, %s18, 3
      %s272 = smul.addr %s271, 2
      %s273 = scalar_lea.vmem %s5, %s272
      %p274 = scmp.lt.s32.totalorder %s18, 3
      %s275 = scalar_select %p274, %s18, 3
      %s276 = smul.addr %s275, 2
      %s277 = scalar_lea.vmem %s6, %s276
      %v278 = vld [vmem:[%s261] sm:$0xf]
      %v279 = vld [vmem:[%s261 + $0x4] sm:$0xf]
      %v280 = vld [vmem:[%s261 + $0x8] sm:$0xf]
      %v281 = vld [vmem:[%s261 + $0xc] sm:$0xf]
      %v282 = vld [vmem:[%s261 + $0x10] sm:$0xf]
      %v283 = vld [vmem:[%s261 + $0x14] sm:$0xf]
      %v284 = vld [vmem:[%s261 + $0x18] sm:$0xf]
      %v285 = vld [vmem:[%s261 + $0x1c] sm:$0xf]
      %v286 = vld [vmem:[%s261 + $0x20] sm:$0xf]
      %v287 = vld [vmem:[%s261 + $0x24] sm:$0xf]
      %v288 = vld [vmem:[%s261 + $0x28] sm:$0xf]
      %v289 = vld [vmem:[%s261 + $0x2c] sm:$0xf]
      %v290 = vld [vmem:[%s261 + $0x30] sm:$0xf]
      %v291 = vld [vmem:[%s261 + $0x34] sm:$0xf]
      %v292 = vld [vmem:[%s261 + $0x38] sm:$0xf]
      %v293 = vld [vmem:[%s261 + $0x3c] sm:$0xf]
      %v294 = vunpack.c.l.bf16 %v278
      %v295 = vunpack.c.l.bf16 %v279
      %v296 = vunpack.c.l.bf16 %v280
      %v297 = vunpack.c.l.bf16 %v281
      %v298 = vunpack.c.l.bf16 %v282
      %v299 = vunpack.c.l.bf16 %v283
      %v300 = vunpack.c.l.bf16 %v284
      %v301 = vunpack.c.l.bf16 %v285
      %v302 = vunpack.c.l.bf16 %v286
      %v303 = vunpack.c.l.bf16 %v287
      %v304 = vunpack.c.l.bf16 %v288
      %v305 = vunpack.c.l.bf16 %v289
      %v306 = vunpack.c.l.bf16 %v290
      %v307 = vunpack.c.l.bf16 %v291
      %v308 = vunpack.c.l.bf16 %v292
      %v309 = vunpack.c.l.bf16 %v293
      %v310 = vld [vmem:[%s1] sm:$0x1]
      %v312 = vperm.slane %v310, 0
      %v314 = vmul.f32 %v294, %v312
      %v315 = vmul.f32 %v295, %v312
      %v316 = vmul.f32 %v296, %v312
      %v317 = vmul.f32 %v297, %v312
      %v318 = vmul.f32 %v298, %v312
      %v319 = vmul.f32 %v299, %v312
      %v320 = vmul.f32 %v300, %v312
      %v321 = vmul.f32 %v301, %v312
      %v322 = vmul.f32 %v302, %v312
      %v323 = vmul.f32 %v303, %v312
      %v324 = vmul.f32 %v304, %v312
      %v325 = vmul.f32 %v305, %v312
      %v326 = vmul.f32 %v306, %v312
      %v327 = vmul.f32 %v307, %v312
      %v328 = vmul.f32 %v308, %v312
      %v329 = vmul.f32 %v309, %v312
      %v330 = vld [vmem:[%s2] sm:$0x1]
      %v332 = vperm.slane %v330, 0
      %v334 = vadd.f32 %v314, %v332
      %v335 = vadd.f32 %v315, %v332
      %v336 = vadd.f32 %v316, %v332
      %v337 = vadd.f32 %v317, %v332
      %v338 = vadd.f32 %v318, %v332
      %v339 = vadd.f32 %v319, %v332
      %v340 = vadd.f32 %v320, %v332
      %v341 = vadd.f32 %v321, %v332
      %v342 = vadd.f32 %v322, %v332
      %v343 = vadd.f32 %v323, %v332
      %v344 = vadd.f32 %v324, %v332
      %v345 = vadd.f32 %v325, %v332
      %v346 = vadd.f32 %v326, %v332
      %v347 = vadd.f32 %v327, %v332
      %v348 = vadd.f32 %v328, %v332
      %v349 = vadd.f32 %v329, %v332
      %v350 = vmax.f32 %v334, 0.0
      %v351 = vmax.f32 %v335, 0.0
      %v352 = vmax.f32 %v336, 0.0
      %v353 = vmax.f32 %v337, 0.0
      %v354 = vmax.f32 %v338, 0.0
      %v355 = vmax.f32 %v339, 0.0
      %v356 = vmax.f32 %v340, 0.0
      %v357 = vmax.f32 %v341, 0.0
      %v358 = vmax.f32 %v342, 0.0
      %v359 = vmax.f32 %v343, 0.0
      %v360 = vmax.f32 %v344, 0.0
      %v361 = vmax.f32 %v345, 0.0
      %v362 = vmax.f32 %v346, 0.0
      %v363 = vmax.f32 %v347, 0.0
      %v364 = vmax.f32 %v348, 0.0
      %v365 = vmax.f32 %v349, 0.0
      %v366 = vpack.c.bf16 %v351, %v350
      %v367 = vpack.c.bf16 %v353, %v352
      %v368 = vpack.c.bf16 %v355, %v354
      %v369 = vpack.c.bf16 %v357, %v356
      %v370 = vpack.c.bf16 %v359, %v358
      %v371 = vpack.c.bf16 %v361, %v360
      %v372 = vpack.c.bf16 %v363, %v362
      %v373 = vpack.c.bf16 %v365, %v364
      %v374 = vld [vmem:[%s3] sm:$0xff]
      %v375 = vld [vmem:[%s3 + $0x8] sm:$0xff]
      %v376 = vld [vmem:[%s3 + $0x10] sm:$0xff]
      %v377 = vld [vmem:[%s3 + $0x18] sm:$0xff]
      %v378 = vld [vmem:[%s3 + $0x20] sm:$0xff]
      %v379 = vld [vmem:[%s3 + $0x28] sm:$0xff]
      %v380 = vld [vmem:[%s3 + $0x30] sm:$0xff]
      %v381 = vld [vmem:[%s3 + $0x38] sm:$0xff]
      %v382 = vld [vmem:[%s3 + $0x40] sm:$0xff]
      %v383 = vld [vmem:[%s3 + $0x48] sm:$0xff]
      %v384 = vld [vmem:[%s3 + $0x50] sm:$0xff]
      %v385 = vld [vmem:[%s3 + $0x58] sm:$0xff]
      %v386 = vld [vmem:[%s3 + $0x60] sm:$0xff]
      %v387 = vld [vmem:[%s3 + $0x68] sm:$0xff]
      %v388 = vld [vmem:[%s3 + $0x70] sm:$0xff]
      %v389 = vld [vmem:[%s3 + $0x78] sm:$0xff]
      %v406 = vunpack.c.l.b16 %v374
      %v407 = vunpack.c.h.b16 %v374
      %v408 = vunpack.c.l.b16 %v375
      %v409 = vunpack.c.h.b16 %v375
      %v410 = vunpack.c.l.b16 %v376
      %v411 = vunpack.c.h.b16 %v376
      %v412 = vunpack.c.l.b16 %v377
      %v413 = vunpack.c.h.b16 %v377
      %v414 = vunpack.c.l.b16 %v378
      %v415 = vunpack.c.h.b16 %v378
      %v416 = vunpack.c.l.b16 %v379
      %v417 = vunpack.c.h.b16 %v379
      %v418 = vunpack.c.l.b16 %v380
      %v419 = vunpack.c.h.b16 %v380
      %v420 = vunpack.c.l.b16 %v381
      %v421 = vunpack.c.h.b16 %v381
      %v422 = vunpack.c.l.b16 %v382
      %v423 = vunpack.c.h.b16 %v382
      %v424 = vunpack.c.l.b16 %v383
      %v425 = vunpack.c.h.b16 %v383
      %v426 = vunpack.c.l.b16 %v384
      %v427 = vunpack.c.h.b16 %v384
      %v428 = vunpack.c.l.b16 %v385
      %v429 = vunpack.c.h.b16 %v385
      %v430 = vunpack.c.l.b16 %v386
      %v431 = vunpack.c.h.b16 %v386
      %v432 = vunpack.c.l.b16 %v387
      %v433 = vunpack.c.h.b16 %v387
      %v434 = vunpack.c.l.b16 %v388
      %v435 = vunpack.c.h.b16 %v388
      %v436 = vunpack.c.l.b16 %v389
      %v437 = vunpack.c.h.b16 %v389
      %v438 = vpack.c.b16 %v408, %v406
      %v439 = vpack.c.b16 %v409, %v407
      %v440 = vpack.c.b16 %v412, %v410
      %v441 = vpack.c.b16 %v413, %v411
      %v442 = vpack.c.b16 %v416, %v414
      %v443 = vpack.c.b16 %v417, %v415
      %v444 = vpack.c.b16 %v420, %v418
      %v445 = vpack.c.b16 %v421, %v419
      %v446 = vpack.c.b16 %v424, %v422
      %v447 = vpack.c.b16 %v425, %v423
      %v448 = vpack.c.b16 %v428, %v426
      %v449 = vpack.c.b16 %v429, %v427
      %v450 = vpack.c.b16 %v432, %v430
      %v451 = vpack.c.b16 %v433, %v431
      %v452 = vpack.c.b16 %v436, %v434
      %v453 = vpack.c.b16 %v437, %v435
      %470 = vmatpush.bf16.msra.mxu0 %v452
      %471 = vmatpush.bf16.msra.mxu0 %v450
      %472 = vmatpush.bf16.msra.mxu0 %v448
      %473 = vmatpush.bf16.msra.mxu0 %v446
      %474 = vmatpush.bf16.msra.mxu0 %v444
      %475 = vmatpush.bf16.msra.mxu0 %v442
      %476 = vmatpush.bf16.msra.mxu0 %v440
      %477 = vmatpush.bf16.msra.mxu0 %v438
      %478 = vmatmul.bf16.gmra.mxu0 %v366
      %v479 = vpop.f32.mrf.mxu0
      %v480 = vadd.f32 0.0, %v479
      %v481 = vpop.f32.mrf.mxu0
      %v482 = vadd.f32 0.0, %v481
      %483 = vmatmul.bf16.gmra.mxu0 %v367
      %v484 = vpop.f32.mrf.mxu0
      %v485 = vadd.f32 0.0, %v484
      %v486 = vpop.f32.mrf.mxu0
      %v487 = vadd.f32 0.0, %v486
      %488 = vmatmul.bf16.gmra.mxu0 %v368
      %v489 = vpop.f32.mrf.mxu0
      %v490 = vadd.f32 0.0, %v489
      %v491 = vpop.f32.mrf.mxu0
      %v492 = vadd.f32 0.0, %v491
      %493 = vmatmul.bf16.gmra.mxu0 %v369
      %v494 = vpop.f32.mrf.mxu0
      %v495 = vadd.f32 0.0, %v494
      %v496 = vpop.f32.mrf.mxu0
      %v497 = vadd.f32 0.0, %v496
      %498 = vmatmul.bf16.gmra.mxu0 %v370
      %v499 = vpop.f32.mrf.mxu0
      %v500 = vadd.f32 0.0, %v499
      %v501 = vpop.f32.mrf.mxu0
      %v502 = vadd.f32 0.0, %v501
      %503 = vmatmul.bf16.gmra.mxu0 %v371
      %v504 = vpop.f32.mrf.mxu0
      %v505 = vadd.f32 0.0, %v504
      %v506 = vpop.f32.mrf.mxu0
      %v507 = vadd.f32 0.0, %v506
      %508 = vmatmul.bf16.gmra.mxu0 %v372
      %v509 = vpop.f32.mrf.mxu0
      %v510 = vadd.f32 0.0, %v509
      %v511 = vpop.f32.mrf.mxu0
      %v512 = vadd.f32 0.0, %v511
      %513 = vmatmul.bf16.gmra.mxu0 %v373
      %v514 = vpop.f32.mrf.mxu0
      %v515 = vadd.f32 0.0, %v514
      %v516 = vpop.f32.mrf.mxu0
      %v517 = vadd.f32 0.0, %v516
      %518 = vdwg.mxu0
      %519 = vmatpush.bf16.msra.mxu0 %v453
      %520 = vmatpush.bf16.msra.mxu0 %v451
      %521 = vmatpush.bf16.msra.mxu0 %v449
      %522 = vmatpush.bf16.msra.mxu0 %v447
      %523 = vmatpush.bf16.msra.mxu0 %v445
      %524 = vmatpush.bf16.msra.mxu0 %v443
      %525 = vmatpush.bf16.msra.mxu0 %v441
      %526 = vmatpush.bf16.msra.mxu0 %v439
      %527 = vmatmul.bf16.gmra.mxu0 %v366
      %v528 = vpop.f32.mrf.mxu0
      %v529 = vadd.f32 0.0, %v528
      %v530 = vpop.f32.mrf.mxu0
      %v531 = vadd.f32 0.0, %v530
      %532 = vmatmul.bf16.gmra.mxu0 %v367
      %v533 = vpop.f32.mrf.mxu0
      %v534 = vadd.f32 0.0, %v533
      %v535 = vpop.f32.mrf.mxu0
      %v536 = vadd.f32 0.0, %v535
      %537 = vmatmul.bf16.gmra.mxu0 %v368
      %v538 = vpop.f32.mrf.mxu0
      %v539 = vadd.f32 0.0, %v538
      %v540 = vpop.f32.mrf.mxu0
      %v541 = vadd.f32 0.0, %v540
      %542 = vmatmul.bf16.gmra.mxu0 %v369
      %v543 = vpop.f32.mrf.mxu0
      %v544 = vadd.f32 0.0, %v543
      %v545 = vpop.f32.mrf.mxu0
      %v546 = vadd.f32 0.0, %v545
      %547 = vmatmul.bf16.gmra.mxu0 %v370
      %v548 = vpop.f32.mrf.mxu0
      %v549 = vadd.f32 0.0, %v548
      %v550 = vpop.f32.mrf.mxu0
      %v551 = vadd.f32 0.0, %v550
      %552 = vmatmul.bf16.gmra.mxu0 %v371
      %v553 = vpop.f32.mrf.mxu0
      %v554 = vadd.f32 0.0, %v553
      %v555 = vpop.f32.mrf.mxu0
      %v556 = vadd.f32 0.0, %v555
      %557 = vmatmul.bf16.gmra.mxu0 %v372
      %v558 = vpop.f32.mrf.mxu0
      %v559 = vadd.f32 0.0, %v558
      %v560 = vpop.f32.mrf.mxu0
      %v561 = vadd.f32 0.0, %v560
      %562 = vmatmul.bf16.gmra.mxu0 %v373
      %v563 = vpop.f32.mrf.mxu0
      %v564 = vadd.f32 0.0, %v563
      %v565 = vpop.f32.mrf.mxu0
      %v566 = vadd.f32 0.0, %v565
      %567 = vdwg.mxu0
      %v568 = vadd.f32 %v480, %v482
      %v569 = vadd.f32 %v568, %v485
      %v570 = vadd.f32 %v569, %v487
      %v571 = vadd.f32 %v570, %v490
      %v572 = vadd.f32 %v571, %v492
      %v573 = vadd.f32 %v572, %v495
      %v574 = vadd.f32 %v573, %v497
      %v575 = vadd.f32 %v574, %v500
      %v576 = vadd.f32 %v575, %v502
      %v577 = vadd.f32 %v576, %v505
      %v578 = vadd.f32 %v577, %v507
      %v579 = vadd.f32 %v578, %v510
      %v580 = vadd.f32 %v579, %v512
      %v581 = vadd.f32 %v580, %v515
      %v582 = vadd.f32 %v581, %v517
      %v583 = vrot.slane %v582, 4
      %v584 = vadd.f32 %v582, %v583
      %v585 = vrot.slane %v584, 2
      %v586 = vadd.f32 %v584, %v585
      %v587 = vrot.slane %v586, 1
      %v588 = vadd.f32 %v586, %v587
      %v589 = vadd.f32 %v529, %v531
      %v590 = vadd.f32 %v589, %v534
      %v591 = vadd.f32 %v590, %v536
      %v592 = vadd.f32 %v591, %v539
      %v593 = vadd.f32 %v592, %v541
      %v594 = vadd.f32 %v593, %v544
      %v595 = vadd.f32 %v594, %v546
      %v596 = vadd.f32 %v595, %v549
      %v597 = vadd.f32 %v596, %v551
      %v598 = vadd.f32 %v597, %v554
      %v599 = vadd.f32 %v598, %v556
      %v600 = vadd.f32 %v599, %v559
      %v601 = vadd.f32 %v600, %v561
      %v602 = vadd.f32 %v601, %v564
      %v603 = vadd.f32 %v602, %v566
      %v604 = vrot.slane %v603, 4
      %v605 = vadd.f32 %v603, %v604
      %v606 = vrot.slane %v605, 2
      %v607 = vadd.f32 %v605, %v606
      %v608 = vrot.slane %v607, 1
      %v609 = vadd.f32 %v607, %v608
      %v612 = vrot.slane %v609, 7
      %vm613 = vcmask 1040384
      %v614 = vsel %vm613, %v588, %v612
      %v616 = vlaneseq
      %vm617 = vcmp.ge.s32.totalorder %v616, 0
      %vm618 = vcmp.lt.s32.totalorder %v616, 256
      %vm619 = vmand %vm617, %vm618
      %620 = vst.msk [vmem:[%s273] sm:$0x3] %vm619, %v614
      %v621 = vmul.f32 %v480, %v480
      %v622 = vmul.f32 %v529, %v529
      %v623 = vmul.f32 %v482, %v482
      %v624 = vmul.f32 %v531, %v531
      %v625 = vmul.f32 %v485, %v485
      %v626 = vmul.f32 %v534, %v534
      %v627 = vmul.f32 %v487, %v487
      %v628 = vmul.f32 %v536, %v536
      %v629 = vmul.f32 %v490, %v490
      %v630 = vmul.f32 %v539, %v539
      %v631 = vmul.f32 %v492, %v492
      %v632 = vmul.f32 %v541, %v541
      %v633 = vmul.f32 %v495, %v495
      %v634 = vmul.f32 %v544, %v544
      %v635 = vmul.f32 %v497, %v497
      %v636 = vmul.f32 %v546, %v546
      %v637 = vmul.f32 %v500, %v500
      %v638 = vmul.f32 %v549, %v549
      %v639 = vmul.f32 %v502, %v502
      %v640 = vmul.f32 %v551, %v551
      %v641 = vmul.f32 %v505, %v505
      %v642 = vmul.f32 %v554, %v554
      %v643 = vmul.f32 %v507, %v507
      %v644 = vmul.f32 %v556, %v556
      %v645 = vmul.f32 %v510, %v510
      %v646 = vmul.f32 %v559, %v559
      %v647 = vmul.f32 %v512, %v512
      %v648 = vmul.f32 %v561, %v561
      %v649 = vmul.f32 %v515, %v515
      %v650 = vmul.f32 %v564, %v564
      %v651 = vmul.f32 %v517, %v517
      %v652 = vmul.f32 %v566, %v566
      %v653 = vadd.f32 %v621, %v623
      %v654 = vadd.f32 %v653, %v625
      %v655 = vadd.f32 %v654, %v627
      %v656 = vadd.f32 %v655, %v629
      %v657 = vadd.f32 %v656, %v631
      %v658 = vadd.f32 %v657, %v633
      %v659 = vadd.f32 %v658, %v635
      %v660 = vadd.f32 %v659, %v637
      %v661 = vadd.f32 %v660, %v639
      %v662 = vadd.f32 %v661, %v641
      %v663 = vadd.f32 %v662, %v643
      %v664 = vadd.f32 %v663, %v645
      %v665 = vadd.f32 %v664, %v647
      %v666 = vadd.f32 %v665, %v649
      %v667 = vadd.f32 %v666, %v651
      %v668 = vrot.slane %v667, 4
      %v669 = vadd.f32 %v667, %v668
      %v670 = vrot.slane %v669, 2
      %v671 = vadd.f32 %v669, %v670
      %v672 = vrot.slane %v671, 1
      %v673 = vadd.f32 %v671, %v672
      %v674 = vadd.f32 %v622, %v624
      %v675 = vadd.f32 %v674, %v626
      %v676 = vadd.f32 %v675, %v628
      %v677 = vadd.f32 %v676, %v630
      %v678 = vadd.f32 %v677, %v632
      %v679 = vadd.f32 %v678, %v634
      %v680 = vadd.f32 %v679, %v636
      %v681 = vadd.f32 %v680, %v638
      %v682 = vadd.f32 %v681, %v640
      %v683 = vadd.f32 %v682, %v642
      %v684 = vadd.f32 %v683, %v644
      %v685 = vadd.f32 %v684, %v646
      %v686 = vadd.f32 %v685, %v648
      %v687 = vadd.f32 %v686, %v650
      %v688 = vadd.f32 %v687, %v652
      %v689 = vrot.slane %v688, 4
      %v690 = vadd.f32 %v688, %v689
      %v691 = vrot.slane %v690, 2
      %v692 = vadd.f32 %v690, %v691
      %v693 = vrot.slane %v692, 1
      %v694 = vadd.f32 %v692, %v693
      %v697 = vrot.slane %v694, 7
      %v698 = vsel %vm613, %v673, %v697
      %700 = vst.msk [vmem:[%s277] sm:$0x3] %vm619, %v698
      %v701 = vpack.c.bf16 %v529, %v480
      %v702 = vpack.c.bf16 %v531, %v482
      %v703 = vpack.c.bf16 %v534, %v485
      %v704 = vpack.c.bf16 %v536, %v487
      %v705 = vpack.c.bf16 %v539, %v490
      %v706 = vpack.c.bf16 %v541, %v492
      %v707 = vpack.c.bf16 %v544, %v495
      %v708 = vpack.c.bf16 %v546, %v497
      %v709 = vpack.c.bf16 %v549, %v500
      %v710 = vpack.c.bf16 %v551, %v502
      %v711 = vpack.c.bf16 %v554, %v505
      %v712 = vpack.c.bf16 %v556, %v507
      %v713 = vpack.c.bf16 %v559, %v510
      %v714 = vpack.c.bf16 %v561, %v512
      %v715 = vpack.c.bf16 %v564, %v515
      %v716 = vpack.c.bf16 %v566, %v517
      %717 = vst [vmem:[%s268] sm:$0xff] %v701
      %718 = vst [vmem:[%s268 + $0x8] sm:$0xff] %v702
      %719 = vst [vmem:[%s268 + $0x10] sm:$0xff] %v703
      %720 = vst [vmem:[%s268 + $0x18] sm:$0xff] %v704
      %721 = vst [vmem:[%s268 + $0x20] sm:$0xff] %v705
      %722 = vst [vmem:[%s268 + $0x28] sm:$0xff] %v706
      %723 = vst [vmem:[%s268 + $0x30] sm:$0xff] %v707
      %724 = vst [vmem:[%s268 + $0x38] sm:$0xff] %v708
      %725 = vst [vmem:[%s268 + $0x40] sm:$0xff] %v709
      %726 = vst [vmem:[%s268 + $0x48] sm:$0xff] %v710
      %727 = vst [vmem:[%s268 + $0x50] sm:$0xff] %v711
      %728 = vst [vmem:[%s268 + $0x58] sm:$0xff] %v712
      %729 = vst [vmem:[%s268 + $0x60] sm:$0xff] %v713
      %730 = vst [vmem:[%s268 + $0x68] sm:$0xff] %v714
      %731 = vst [vmem:[%s268 + $0x70] sm:$0xff] %v715
      %732 = vst [vmem:[%s268 + $0x78] sm:$0xff] %v716
      %s733 = smul.u32 16, %s18
      %p734 = scmp.lt.s32.totalorder %s733, 63
      %s735 = scalar_select %p734, %s733, 63
      %s736 = smul.addr %s735, 2
      %s737 = smul.addr %s736, 4
      %s738 = scalar_lea.vmem %s4, %s737
      %p739 = scmp.lt.s32.totalorder %s18, 3
      %s740 = scalar_select %p739, %s18, 3
      %s741 = smul.addr %s740, 2
      %s742 = scalar_lea.vmem %s5, %s741
      %p743 = scmp.lt.s32.totalorder %s18, 3
      %s744 = scalar_select %p743, %s18, 3
      %s745 = smul.addr %s744, 2
      %s746 = scalar_lea.vmem %s6, %s745
      // Predicated region
      $region37: #{base_pointnet_fwd.18} parent=35 // pred_check
        %p747 = pneg %p125
      $region38: #{base_pointnet_fwd.18} parent=35 // pred_check_branch
        %749 = sbr.rel (%p747) target = $region40
      $region39: #{base_pointnet_fwd.18} parent=35 // pred_region
        %s750 = smul.u32 16, %s18
      $region40: #{base_pointnet_fwd.18} parent=35 // pred_fallthru
        _
      // Predicated region
      $region41: #{base_pointnet_fwd.18} parent=35 // pred_check
        %p751 = pneg %p151
      $region42: #{base_pointnet_fwd.18} parent=35 // pred_check_branch
        %753 = sbr.rel (%p751) target = $region44
      $region43: #{base_pointnet_fwd.18} parent=35 // pred_region
        _
      $region44: #{base_pointnet_fwd.18} parent=35 // pred_fallthru
        _
      // Predicated region
      $region45: #{base_pointnet_fwd.18} parent=35 // pred_check
        %p754 = pneg %p177
      $region46: #{base_pointnet_fwd.18} parent=35 // pred_check_branch
        %756 = sbr.rel (%p754) target = $region48
      $region47: #{base_pointnet_fwd.18} parent=35 // pred_region
        _
      $region48: #{base_pointnet_fwd.18} parent=35 // pred_fallthru
        _
    $region36: #{base_pointnet_fwd.18} parent=5 // pred_fallthru
      _
    %p757 = scmp.le.s32.totalorder 2, %s13
    // Predicated region
    $region49: #{base_pointnet_fwd.18} parent=5 // pred_check
      %p758 = pneg %p757
    $region50: #{base_pointnet_fwd.18} parent=5 // pred_check_branch
      %760 = sbr.rel (%p758) target = $region52
    $region51: #{base_pointnet_fwd.18} parent=5 // pred_region
      %s761 = ssub.s32 %s13, 2
      // Predicated region
      $region53: #{base_pointnet_fwd.18} parent=51 // pred_check
        %p762 = pneg %p131
      $region54: #{base_pointnet_fwd.18} parent=51 // pred_check_branch
        %764 = sbr.rel (%p762) target = $region56
      $region55: #{base_pointnet_fwd.18} parent=51 // pred_region
        %s765 = smul.u32 16, %s19
        %p766 = scmp.lt.s32.totalorder %s765, 63
        %s767 = scalar_select %p766, %s765, 63
        %s768 = smul.addr %s767, 2
        %s769 = smul.addr %s768, 4
        %s770 = scalar_lea.vmem %s4, %s769
      $region56: #{base_pointnet_fwd.18} parent=51 // pred_fallthru
        _
      // Predicated region
      $region57: #{base_pointnet_fwd.18} parent=51 // pred_check
        %p771 = pneg %p157
      $region58: #{base_pointnet_fwd.18} parent=51 // pred_check_branch
        %773 = sbr.rel (%p771) target = $region60
      $region59: #{base_pointnet_fwd.18} parent=51 // pred_region
        %p774 = scmp.lt.s32.totalorder %s19, 3
        %s775 = scalar_select %p774, %s19, 3
        %s776 = smul.addr %s775, 2
        %s777 = scalar_lea.vmem %s5, %s776
      $region60: #{base_pointnet_fwd.18} parent=51 // pred_fallthru
        _
      // Predicated region
      $region61: #{base_pointnet_fwd.18} parent=51 // pred_check
        %p778 = pneg %p183
      $region62: #{base_pointnet_fwd.18} parent=51 // pred_check_branch
        %780 = sbr.rel (%p778) target = $region64
      $region63: #{base_pointnet_fwd.18} parent=51 // pred_region
        %p781 = scmp.lt.s32.totalorder %s19, 3
        %s782 = scalar_select %p781, %s19, 3
        %s783 = smul.addr %s782, 2
        %s784 = scalar_lea.vmem %s6, %s783
      $region64: #{base_pointnet_fwd.18} parent=51 // pred_fallthru
        _
    $region52: #{base_pointnet_fwd.18} parent=5 // pred_fallthru
      _
  $region6: #{base_pointnet_fwd.18} parent=0 // loop_footer
    %s17 = sadd.s32 1, %s13
  $region7: #{base_pointnet_fwd.18} parent=0 // loop_footer_branch
    %12 = sbr.rel target = $region3
  $region8: #{base_pointnet_fwd.18} parent=0 // loop_exit
    _

// kernel: base_pointnet_fwd.19
$region0: #{base_pointnet_fwd.19}
  #allocation0 [shape = 'u32[]', space=smem, size = 0x4, offset = 0x4, fixed_abs, tag = 'smem constant byte address 0x4 - core index']
  #allocation1 [shape = 'u32[72,128]{1,0:T(1,128)}', space=vmem, size = 0x9000, scoped, tag = 'internal scratch']
  %s0 = inlined_call_operand.vmem [shape: bf16[2,256,256], index: 0, kind: input, shape index: {}]
  %s1 = inlined_call_operand.vmem [shape: f32[1,256], index: 1, kind: input, shape index: {}]
  %s2 = inlined_call_operand.vmem [shape: f32[1,256], index: 2, kind: input, shape index: {}]
  %s3 = inlined_call_operand.vmem [shape: f32[2,1,256], index: 3, kind: output, shape index: {}]
  %s4 = sld [smem:[#allocation0]]
  $region49: #{base_pointnet_fwd.19} parent=0
    _
  %s6 = ssub.s32 1, %s4
  %s7 = scalar_select 0, %s6, %s4
  loop: start=0, step=1, limit=6
  $region2: #{base_pointnet_fwd.19} parent=0 // loop_pre_header
    _
  $region3: #{base_pointnet_fwd.19} parent=0 // loop_header
    %s9 = sphi 0, %s13
    %p10 = scmp.ge.s32.totalorder %s9, 6
    %s16 = sphi 0, %s28
    %s17 = sphi 0, %s24
    %s18 = sphi 0, %s16
    %s19 = sphi 0, %s17
    %s20 = sphi 0, %s18
    %s21 = sphi 0, %s19
    %s33 = sphi 0, %s35
    %s36 = sphi 0, %s33
    %s37 = sphi 0, %s36
    %s53 = sphi 0, %s37
    %s57 = sphi 0, %s57
    %s59 = sphi 0, %s57
    %s60 = sphi 0, %s59
    %s74 = sphi 0, %s60
    %s78 = sphi 0, %s78
    %s80 = sphi 0, %s78
    %s81 = sphi 0, %s80
    %s95 = sphi 0, %s81
    %s101 = sphi 0, %s103
    %s104 = sphi 0, %s101
    %s105 = sphi 0, %s104
    %s121 = sphi 0, %s105
  $region4: #{base_pointnet_fwd.19} parent=0 // loop_header_branch
    %12 = sbr.rel (%p10) target = $region8
  $region5: #{base_pointnet_fwd.19} parent=0 // loop_body
    %s14 = ssub.s32 %s9, 1
    %s15 = ssub.s32 %s9, 2
    %s22 = sadd.s32 1, %s17
    %p23 = scmp.ge.s32.totalorder %s22, 2
    %s24 = scalar_select %p23, 0, %s22
    %s25 = sadd.s32 1, %s16
    %s26 = scalar_select %p23, %s25, %s16
    %p27 = scmp.ge.s32.totalorder %s26, 2
    %s28 = scalar_select %p27, 0, %s26
    %s29 = ssub.s32 %s16, %s28
    %s30 = ssub.s32 %s17, %s24
    %s31 = sor.u32 %s29, %s30
    %p32 = scmp.eq.s32.totalorder %s31, 0
    %s34 = sadd.s32 %s33, 1
    %s35 = scalar_select %p32, %s33, %s34
    %p38 = pneg %p32
    %p39 = scmp.eq.s32.totalorder %s9, 3
    %p40 = por %p38, %p39
    %p41 = scmp.ne.s32.totalorder %s33, %s36
    %p42 = scmp.eq.s32.totalorder %s9, 0
    %p43 = por %p41, %p42
    %p44 = scmp.ne.s32.totalorder %s33, %s36
    %p45 = scmp.eq.s32.totalorder %s14, 3
    %p46 = por %p44, %p45
    %p47 = scmp.ne.s32.totalorder %s36, %s37
    %p48 = scmp.eq.s32.totalorder %s14, 0
    %p49 = por %p47, %p48
    %p50 = scmp.ne.s32.totalorder %s36, %s37
    %p51 = scmp.eq.s32.totalorder %s15, 3
    %p52 = por %p50, %p51
    %p54 = scmp.ne.s32.totalorder %s37, %s53
    %p55 = scmp.eq.s32.totalorder %s15, 0
    %p56 = por %p54, %p55
    %s58 = sadd.s32 %s57, 1
    %p61 = scmp.eq.s32.totalorder %s9, 3
    %p62 = scmp.ne.s32.totalorder %s57, %s59
    %p63 = scmp.eq.s32.totalorder %s9, 0
    %p64 = por %p62, %p63
    %p65 = scmp.ne.s32.totalorder %s57, %s59
    %p66 = scmp.eq.s32.totalorder %s14, 3
    %p67 = por %p65, %p66
    %p68 = scmp.ne.s32.totalorder %s59, %s60
    %p69 = scmp.eq.s32.totalorder %s14, 0
    %p70 = por %p68, %p69
    %p71 = scmp.ne.s32.totalorder %s59, %s60
    %p72 = scmp.eq.s32.totalorder %s15, 3
    %p73 = por %p71, %p72
    %p75 = scmp.ne.s32.totalorder %s60, %s74
    %p76 = scmp.eq.s32.totalorder %s15, 0
    %p77 = por %p75, %p76
    %s79 = sadd.s32 %s78, 1
    %p82 = scmp.eq.s32.totalorder %s9, 3
    %p83 = scmp.ne.s32.totalorder %s78, %s80
    %p84 = scmp.eq.s32.totalorder %s9, 0
    %p85 = por %p83, %p84
    %p86 = scmp.ne.s32.totalorder %s78, %s80
    %p87 = scmp.eq.s32.totalorder %s14, 3
    %p88 = por %p86, %p87
    %p89 = scmp.ne.s32.totalorder %s80, %s81
    %p90 = scmp.eq.s32.totalorder %s14, 0
    %p91 = por %p89, %p90
    %p92 = scmp.ne.s32.totalorder %s80, %s81
    %p93 = scmp.eq.s32.totalorder %s15, 3
    %p94 = por %p92, %p93
    %p96 = scmp.ne.s32.totalorder %s81, %s95
    %p97 = scmp.eq.s32.totalorder %s15, 0
    %p98 = por %p96, %p97
    %s99 = ssub.s32 %s16, %s28
    %p100 = scmp.eq.s32.totalorder %s99, 0
    %s102 = sadd.s32 %s101, 1
    %s103 = scalar_select %p100, %s101, %s102
    %p106 = pneg %p100
    %p107 = scmp.eq.s32.totalorder %s9, 3
    %p108 = por %p106, %p107
    %p109 = scmp.ne.s32.totalorder %s101, %s104
    %p110 = scmp.eq.s32.totalorder %s9, 0
    %p111 = por %p109, %p110
    %p112 = scmp.ne.s32.totalorder %s101, %s104
    %p113 = scmp.eq.s32.totalorder %s14, 3
    %p114 = por %p112, %p113
    %p115 = scmp.ne.s32.totalorder %s104, %s105
    %p116 = scmp.eq.s32.totalorder %s14, 0
    %p117 = por %p115, %p116
    %p118 = scmp.ne.s32.totalorder %s104, %s105
    %p119 = scmp.eq.s32.totalorder %s15, 3
    %p120 = por %p118, %p119
    %p122 = scmp.ne.s32.totalorder %s105, %s121
    %p123 = scmp.eq.s32.totalorder %s15, 0
    %p124 = por %p122, %p123
    %p125 = scmp.le.s32.totalorder 1, %s9
    %p126 = scmp.lt.s32.totalorder %s9, 5
    %p127 = pnand %p125, %p126
    %p128 = pneg %p127
    // Predicated region
    $region9: #{base_pointnet_fwd.19} parent=5 // pred_check
      _
    $region10: #{base_pointnet_fwd.19} parent=5 // pred_check_branch
      %130 = sbr.rel (%p127) target = $region12
    $region11: #{base_pointnet_fwd.19} parent=5 // pred_region
      %s131 = ssub.s32 %s9, 1
      // Predicated region
      $region13: #{base_pointnet_fwd.19} parent=11 // pred_check
        %p132 = pneg %p70
      $region14: #{base_pointnet_fwd.19} parent=11 // pred_check_branch
        %134 = sbr.rel (%p132) target = $region16
      $region15: #{base_pointnet_fwd.19} parent=11 // pred_region
        _
      $region16: #{base_pointnet_fwd.19} parent=11 // pred_fallthru
        _
      // Predicated region
      $region17: #{base_pointnet_fwd.19} parent=11 // pred_check
        %p135 = pneg %p91
      $region18: #{base_pointnet_fwd.19} parent=11 // pred_check_branch
        %137 = sbr.rel (%p135) target = $region20
      $region19: #{base_pointnet_fwd.19} parent=11 // pred_region
        _
      $region20: #{base_pointnet_fwd.19} parent=11 // pred_fallthru
        _
    $region12: #{base_pointnet_fwd.19} parent=5 // pred_fallthru
      _
    %p138 = scmp.lt.s32.totalorder %s9, 4
    // Predicated region
    $region21: #{base_pointnet_fwd.19} parent=5 // pred_check
      %p139 = pneg %p138
    $region22: #{base_pointnet_fwd.19} parent=5 // pred_check_branch
      %141 = sbr.rel (%p139) target = $region24
    $region23: #{base_pointnet_fwd.19} parent=5 // pred_region
      // Predicated region
      $region25: #{base_pointnet_fwd.19} parent=23 // pred_check
        %p142 = pneg %p43
      $region26: #{base_pointnet_fwd.19} parent=23 // pred_check_branch
        %144 = sbr.rel (%p142) target = $region28
      $region27: #{base_pointnet_fwd.19} parent=23 // pred_region
        %s145 = smul.u32 16, %s17
        %p146 = scmp.lt.s32.totalorder %s16, 1
        %s147 = scalar_select %p146, %s16, 1
        %p148 = scmp.lt.s32.totalorder %s145, 31
        %s149 = scalar_select %p148, %s145, 31
        %s150 = smul.addr %s149, 2
        %s151 = smul.addr %s147, 64
        %s152 = sadd.s32 %s150, %s151
        %s153 = smul.addr %s152, 4
        %s154 = scalar_lea.vmem %s0, %s153
        %s155 = smul.u32 16, %s17
      $region28: #{base_pointnet_fwd.19} parent=23 // pred_fallthru
        _
    $region24: #{base_pointnet_fwd.19} parent=5 // pred_fallthru
      _
    %p156 = scmp.le.s32.totalorder 1, %s9
    %p157 = scmp.lt.s32.totalorder %s9, 5
    %p158 = pnand %p156, %p157
    %p159 = pneg %p158
    // Predicated region
    $region29: #{base_pointnet_fwd.19} parent=5 // pred_check
      _
    $region30: #{base_pointnet_fwd.19} parent=5 // pred_check_branch
      %161 = sbr.rel (%p158) target = $region32
    $region31: #{base_pointnet_fwd.19} parent=5 // pred_region
      %s162 = ssub.s32 %s9, 1
      %s163 = smul.u32 16, %s19
      %p164 = scmp.lt.s32.totalorder %s18, 1
      %s165 = scalar_select %p164, %s18, 1
      %p166 = scmp.lt.s32.totalorder %s163, 31
      %s167 = scalar_select %p166, %s163, 31
      %s168 = smul.addr %s167, 2
      %s169 = smul.addr %s165, 64
      %s170 = sadd.s32 %s168, %s169
      %s171 = smul.addr %s170, 4
      %s172 = scalar_lea.vmem %s0, %s171
      %p173 = pneg %p49
      %p174 = pneg %p46
      %p175 = pneg %p70
      %p176 = pneg %p67
      %p177 = pneg %p91
      %p178 = pneg %p88
      %p179 = pneg %p117
      %p180 = pneg %p114
      %p181 = scmp.lt.s32.totalorder %s18, 1
      %s182 = scalar_select %p181, %s18, 1
      %s183 = smul.addr %s182, 2
      %s184 = scalar_lea.vmem %s3, %s183
      %s185 = smul.u32 16, %s19
      %p186 = scmp.lt.s32.totalorder %s18, 1
      %s187 = scalar_select %p186, %s18, 1
      %p188 = scmp.lt.s32.totalorder %s185, 31
      %s189 = scalar_select %p188, %s185, 31
      %s190 = smul.addr %s189, 2
      %s191 = smul.addr %s187, 64
      %s192 = sadd.s32 %s190, %s191
      %s193 = smul.addr %s192, 4
      %s194 = scalar_lea.vmem %s0, %s193
      %s195 = smul.u32 16, %s19
      %p196 = scmp.lt.s32.totalorder %s18, 1
      %s197 = scalar_select %p196, %s18, 1
      %s198 = smul.addr %s197, 2
      %s199 = scalar_lea.vmem %s3, %s198
      %v200 = vld [vmem:[%s194] sm:$0xff]
      %v201 = vld [vmem:[%s194 + $0x8] sm:$0xff]
      %v202 = vld [vmem:[%s194 + $0x10] sm:$0xff]
      %v203 = vld [vmem:[%s194 + $0x18] sm:$0xff]
      %v204 = vld [vmem:[%s194 + $0x20] sm:$0xff]
      %v205 = vld [vmem:[%s194 + $0x28] sm:$0xff]
      %v206 = vld [vmem:[%s194 + $0x30] sm:$0xff]
      %v207 = vld [vmem:[%s194 + $0x38] sm:$0xff]
      %v208 = vld [vmem:[%s194 + $0x40] sm:$0xff]
      %v209 = vld [vmem:[%s194 + $0x48] sm:$0xff]
      %v210 = vld [vmem:[%s194 + $0x50] sm:$0xff]
      %v211 = vld [vmem:[%s194 + $0x58] sm:$0xff]
      %v212 = vld [vmem:[%s194 + $0x60] sm:$0xff]
      %v213 = vld [vmem:[%s194 + $0x68] sm:$0xff]
      %v214 = vld [vmem:[%s194 + $0x70] sm:$0xff]
      %v215 = vld [vmem:[%s194 + $0x78] sm:$0xff]
      %v216 = vunpack.c.l.bf16 %v200
      %v217 = vunpack.c.h.bf16 %v200
      %v218 = vunpack.c.l.bf16 %v201
      %v219 = vunpack.c.h.bf16 %v201
      %v220 = vunpack.c.l.bf16 %v202
      %v221 = vunpack.c.h.bf16 %v202
      %v222 = vunpack.c.l.bf16 %v203
      %v223 = vunpack.c.h.bf16 %v203
      %v224 = vunpack.c.l.bf16 %v204
      %v225 = vunpack.c.h.bf16 %v204
      %v226 = vunpack.c.l.bf16 %v205
      %v227 = vunpack.c.h.bf16 %v205
      %v228 = vunpack.c.l.bf16 %v206
      %v229 = vunpack.c.h.bf16 %v206
      %v230 = vunpack.c.l.bf16 %v207
      %v231 = vunpack.c.h.bf16 %v207
      %v232 = vunpack.c.l.bf16 %v208
      %v233 = vunpack.c.h.bf16 %v208
      %v234 = vunpack.c.l.bf16 %v209
      %v235 = vunpack.c.h.bf16 %v209
      %v236 = vunpack.c.l.bf16 %v210
      %v237 = vunpack.c.h.bf16 %v210
      %v238 = vunpack.c.l.bf16 %v211
      %v239 = vunpack.c.h.bf16 %v211
      %v240 = vunpack.c.l.bf16 %v212
      %v241 = vunpack.c.h.bf16 %v212
      %v242 = vunpack.c.l.bf16 %v213
      %v243 = vunpack.c.h.bf16 %v213
      %v244 = vunpack.c.l.bf16 %v214
      %v245 = vunpack.c.h.bf16 %v214
      %v246 = vunpack.c.l.bf16 %v215
      %v247 = vunpack.c.h.bf16 %v215
      %v248 = vld [vmem:[%s1] sm:$0x3]
      %v250 = vperm.slane %v248, 0
      %v251 = vperm.slane %v248, 1
      %v254 = vmul.f32 %v216, %v250
      %v255 = vmul.f32 %v217, %v251
      %v256 = vmul.f32 %v218, %v250
      %v257 = vmul.f32 %v219, %v251
      %v258 = vmul.f32 %v220, %v250
      %v259 = vmul.f32 %v221, %v251
      %v260 = vmul.f32 %v222, %v250
      %v261 = vmul.f32 %v223, %v251
      %v262 = vmul.f32 %v224, %v250
      %v263 = vmul.f32 %v225, %v251
      %v264 = vmul.f32 %v226, %v250
      %v265 = vmul.f32 %v227, %v251
      %v266 = vmul.f32 %v228, %v250
      %v267 = vmul.f32 %v229, %v251
      %v268 = vmul.f32 %v230, %v250
      %v269 = vmul.f32 %v231, %v251
      %v270 = vmul.f32 %v232, %v250
      %v271 = vmul.f32 %v233, %v251
      %v272 = vmul.f32 %v234, %v250
      %v273 = vmul.f32 %v235, %v251
      %v274 = vmul.f32 %v236, %v250
      %v275 = vmul.f32 %v237, %v251
      %v276 = vmul.f32 %v238, %v250
      %v277 = vmul.f32 %v239, %v251
      %v278 = vmul.f32 %v240, %v250
      %v279 = vmul.f32 %v241, %v251
      %v280 = vmul.f32 %v242, %v250
      %v281 = vmul.f32 %v243, %v251
      %v282 = vmul.f32 %v244, %v250
      %v283 = vmul.f32 %v245, %v251
      %v284 = vmul.f32 %v246, %v250
      %v285 = vmul.f32 %v247, %v251
      %v286 = vld [vmem:[%s2] sm:$0x3]
      %v288 = vperm.slane %v286, 0
      %v289 = vperm.slane %v286, 1
      %v292 = vadd.f32 %v254, %v288
      %v293 = vadd.f32 %v255, %v289
      %v294 = vadd.f32 %v256, %v288
      %v295 = vadd.f32 %v257, %v289
      %v296 = vadd.f32 %v258, %v288
      %v297 = vadd.f32 %v259, %v289
      %v298 = vadd.f32 %v260, %v288
      %v299 = vadd.f32 %v261, %v289
      %v300 = vadd.f32 %v262, %v288
      %v301 = vadd.f32 %v263, %v289
      %v302 = vadd.f32 %v264, %v288
      %v303 = vadd.f32 %v265, %v289
      %v304 = vadd.f32 %v266, %v288
      %v305 = vadd.f32 %v267, %v289
      %v306 = vadd.f32 %v268, %v288
      %v307 = vadd.f32 %v269, %v289
      %v308 = vadd.f32 %v270, %v288
      %v309 = vadd.f32 %v271, %v289
      %v310 = vadd.f32 %v272, %v288
      %v311 = vadd.f32 %v273, %v289
      %v312 = vadd.f32 %v274, %v288
      %v313 = vadd.f32 %v275, %v289
      %v314 = vadd.f32 %v276, %v288
      %v315 = vadd.f32 %v277, %v289
      %v316 = vadd.f32 %v278, %v288
      %v317 = vadd.f32 %v279, %v289
      %v318 = vadd.f32 %v280, %v288
      %v319 = vadd.f32 %v281, %v289
      %v320 = vadd.f32 %v282, %v288
      %v321 = vadd.f32 %v283, %v289
      %v322 = vadd.f32 %v284, %v288
      %v323 = vadd.f32 %v285, %v289
      %v324 = vmax.f32 %v292, 0.0
      %v325 = vmax.f32 %v293, 0.0
      %v326 = vmax.f32 %v294, 0.0
      %v327 = vmax.f32 %v295, 0.0
      %v328 = vmax.f32 %v296, 0.0
      %v329 = vmax.f32 %v297, 0.0
      %v330 = vmax.f32 %v298, 0.0
      %v331 = vmax.f32 %v299, 0.0
      %v332 = vmax.f32 %v300, 0.0
      %v333 = vmax.f32 %v301, 0.0
      %v334 = vmax.f32 %v302, 0.0
      %v335 = vmax.f32 %v303, 0.0
      %v336 = vmax.f32 %v304, 0.0
      %v337 = vmax.f32 %v305, 0.0
      %v338 = vmax.f32 %v306, 0.0
      %v339 = vmax.f32 %v307, 0.0
      %v340 = vmax.f32 %v308, 0.0
      %v341 = vmax.f32 %v309, 0.0
      %v342 = vmax.f32 %v310, 0.0
      %v343 = vmax.f32 %v311, 0.0
      %v344 = vmax.f32 %v312, 0.0
      %v345 = vmax.f32 %v313, 0.0
      %v346 = vmax.f32 %v314, 0.0
      %v347 = vmax.f32 %v315, 0.0
      %v348 = vmax.f32 %v316, 0.0
      %v349 = vmax.f32 %v317, 0.0
      %v350 = vmax.f32 %v318, 0.0
      %v351 = vmax.f32 %v319, 0.0
      %v352 = vmax.f32 %v320, 0.0
      %v353 = vmax.f32 %v321, 0.0
      %v354 = vmax.f32 %v322, 0.0
      %v355 = vmax.f32 %v323, 0.0
      %v356 = vmax.f32 %v324, %v328
      %v357 = vmax.f32 %v326, %v330
      %v358 = vmax.f32 %v356, %v332
      %v359 = vmax.f32 %v357, %v334
      %v360 = vmax.f32 %v358, %v336
      %v361 = vmax.f32 %v359, %v338
      %v362 = vmax.f32 %v360, %v340
      %v363 = vmax.f32 %v361, %v342
      %v364 = vmax.f32 %v362, %v344
      %v365 = vmax.f32 %v363, %v346
      %v366 = vmax.f32 %v364, %v348
      %v367 = vmax.f32 %v365, %v350
      %v368 = vmax.f32 %v366, %v352
      %v369 = vmax.f32 %v367, %v354
      %v370 = vmax.f32 %v368, %v369
      %v371 = vrot.slane %v370, 4
      %v372 = vmax.f32 %v370, %v371
      %v373 = vrot.slane %v372, 2
      %v374 = vmax.f32 %v372, %v373
      %v375 = vrot.slane %v374, 1
      %v376 = vmax.f32 %v374, %v375
      %v377 = vmax.f32 %v325, %v329
      %v378 = vmax.f32 %v327, %v331
      %v379 = vmax.f32 %v377, %v333
      %v380 = vmax.f32 %v378, %v335
      %v381 = vmax.f32 %v379, %v337
      %v382 = vmax.f32 %v380, %v339
      %v383 = vmax.f32 %v381, %v341
      %v384 = vmax.f32 %v382, %v343
      %v385 = vmax.f32 %v383, %v345
      %v386 = vmax.f32 %v384, %v347
      %v387 = vmax.f32 %v385, %v349
      %v388 = vmax.f32 %v386, %v351
      %v389 = vmax.f32 %v387, %v353
      %v390 = vmax.f32 %v388, %v355
      %v391 = vmax.f32 %v389, %v390
      %v392 = vrot.slane %v391, 4
      %v393 = vmax.f32 %v391, %v392
      %v394 = vrot.slane %v393, 2
      %v395 = vmax.f32 %v393, %v394
      %v396 = vrot.slane %v395, 1
      %v397 = vmax.f32 %v395, %v396
      %p398 = scmp.eq.s32.totalorder %s19, 0
      // Predicated region
      $region33: #{base_pointnet_fwd.19} parent=31 // pred_check
        %p399 = pneg %p398
      $region34: #{base_pointnet_fwd.19} parent=31 // pred_check_branch
        %401 = sbr.rel (%p399) target = $region36
      $region35: #{base_pointnet_fwd.19} parent=31 // pred_region
        %v402 = vlaneseq
        %vm403 = vcmp.ge.s32.totalorder %v402, 0
        %vm404 = vcmp.lt.s32.totalorder %v402, 256
        %vm405 = vmand %vm403, %vm404
        %406 = vst.msk [vmem:[%s199] sm:$0x3] %vm405, -inf
      $region36: #{base_pointnet_fwd.19} parent=31 // pred_fallthru
        _
      %v407 = vld [vmem:[%s199] sm:$0x3]
      %v410 = vrot.slane %v397, 7
      %vm411 = vcmask 1040384
      %v412 = vsel %vm411, %v376, %v410
      %v414 = vmax.f32 %v407, %v412
      %v415 = vlaneseq
      %vm416 = vcmp.ge.s32.totalorder %v415, 0
      %vm417 = vcmp.lt.s32.totalorder %v415, 256
      %vm418 = vmand %vm416, %vm417
      %419 = vst.msk [vmem:[%s199] sm:$0x3] %vm418, %v414
      %p420 = scmp.lt.s32.totalorder %s18, 1
      %s421 = scalar_select %p420, %s18, 1
      %s422 = smul.addr %s421, 2
      %s423 = scalar_lea.vmem %s3, %s422
      // Predicated region
      $region37: #{base_pointnet_fwd.19} parent=31 // pred_check
        %p424 = pneg %p114
      $region38: #{base_pointnet_fwd.19} parent=31 // pred_check_branch
        %426 = sbr.rel (%p424) target = $region40
      $region39: #{base_pointnet_fwd.19} parent=31 // pred_region
        _
      $region40: #{base_pointnet_fwd.19} parent=31 // pred_fallthru
        _
    $region32: #{base_pointnet_fwd.19} parent=5 // pred_fallthru
      _
    %p427 = scmp.le.s32.totalorder 2, %s9
    // Predicated region
    $region41: #{base_pointnet_fwd.19} parent=5 // pred_check
      %p428 = pneg %p427
    $region42: #{base_pointnet_fwd.19} parent=5 // pred_check_branch
      %430 = sbr.rel (%p428) target = $region44
    $region43: #{base_pointnet_fwd.19} parent=5 // pred_region
      %s431 = ssub.s32 %s9, 2
      // Predicated region
      $region45: #{base_pointnet_fwd.19} parent=43 // pred_check
        %p432 = pneg %p120
      $region46: #{base_pointnet_fwd.19} parent=43 // pred_check_branch
        %434 = sbr.rel (%p432) target = $region48
      $region47: #{base_pointnet_fwd.19} parent=43 // pred_region
        %p435 = scmp.lt.s32.totalorder %s20, 1
        %s436 = scalar_select %p435, %s20, 1
        %s437 = smul.addr %s436, 2
        %s438 = scalar_lea.vmem %s3, %s437
      $region48: #{base_pointnet_fwd.19} parent=43 // pred_fallthru
        _
    $region44: #{base_pointnet_fwd.19} parent=5 // pred_fallthru
      _
  $region6: #{base_pointnet_fwd.19} parent=0 // loop_footer
    %s13 = sadd.s32 1, %s9
  $region7: #{base_pointnet_fwd.19} parent=0 // loop_footer_branch
    %8 = sbr.rel target = $region3
  $region8: #{base_pointnet_fwd.19} parent=0 // loop_exit
    _

// kernel: base_pointnet_fwd.21
$region0: #{base_pointnet_fwd.21}
  #allocation0 [shape = 'u32[]', space=smem, size = 0x4, offset = 0x4, fixed_abs, tag = 'smem constant byte address 0x4 - core index']
  #allocation1 [shape = 'u32[72,128]{1,0:T(1,128)}', space=vmem, size = 0x9000, scoped, tag = 'internal scratch']
  %s0 = inlined_call_operand.vmem [shape: f32[2,256,4], index: 0, kind: input, shape index: {}]
  %s1 = inlined_call_operand.vmem [shape: f32[2,4,4], index: 1, kind: input, shape index: {}]
  %s2 = inlined_call_operand.vmem [shape: bf16[4,64], index: 2, kind: input, shape index: {}]
  %s3 = inlined_call_operand.vmem [shape: bf16[2,256,64], index: 3, kind: output, shape index: {0}]
  %s4 = inlined_call_operand.vmem [shape: f32[2,256,4], index: 4, kind: output, shape index: {1}]
  %s5 = inlined_call_operand.vmem [shape: f32[2,2,1,64], index: 5, kind: output, shape index: {2}]
  %s6 = inlined_call_operand.vmem [shape: f32[2,2,1,64], index: 6, kind: output, shape index: {3}]
  %7 = xla_tuple %s3, %s4, %s5, %s6
  %s8 = sld [smem:[#allocation0]]
  $region69: #{base_pointnet_fwd.21} parent=0
    _
  %s10 = ssub.s32 1, %s8
  %s11 = scalar_select 0, %s10, %s8
  loop: start=0, step=1, limit=6
  $region2: #{base_pointnet_fwd.21} parent=0 // loop_pre_header
    _
  $region3: #{base_pointnet_fwd.21} parent=0 // loop_header
    %s13 = sphi 0, %s17
    %p14 = scmp.ge.s32.totalorder %s13, 6
    %s20 = sphi 0, %s32
    %s21 = sphi 0, %s28
    %s22 = sphi 0, %s20
    %s23 = sphi 0, %s21
    %s24 = sphi 0, %s22
    %s25 = sphi 0, %s23
    %s37 = sphi 0, %s39
    %s40 = sphi 0, %s37
    %s41 = sphi 0, %s40
    %s57 = sphi 0, %s41
    %s63 = sphi 0, %s65
    %s66 = sphi 0, %s63
    %s67 = sphi 0, %s66
    %s83 = sphi 0, %s67
    %s87 = sphi 0, %s87
    %s89 = sphi 0, %s87
    %s90 = sphi 0, %s89
    %s104 = sphi 0, %s90
    %s112 = sphi 0, %s114
    %s115 = sphi 0, %s112
    %s116 = sphi 0, %s115
    %s132 = sphi 0, %s116
    %s140 = sphi 0, %s142
    %s143 = sphi 0, %s140
    %s144 = sphi 0, %s143
    %s160 = sphi 0, %s144
    %s168 = sphi 0, %s170
    %s171 = sphi 0, %s168
    %s172 = sphi 0, %s171
    %s188 = sphi 0, %s172
    %s196 = sphi 0, %s198
    %s199 = sphi 0, %s196
    %s200 = sphi 0, %s199
    %s216 = sphi 0, %s200
  $region4: #{base_pointnet_fwd.21} parent=0 // loop_header_branch
    %16 = sbr.rel (%p14) target = $region8
  $region5: #{base_pointnet_fwd.21} parent=0 // loop_body
    %s18 = ssub.s32 %s13, 1
    %s19 = ssub.s32 %s13, 2
    %s26 = sadd.s32 1, %s21
    %p27 = scmp.ge.s32.totalorder %s26, 2
    %s28 = scalar_select %p27, 0, %s26
    %s29 = sadd.s32 1, %s20
    %s30 = scalar_select %p27, %s29, %s20
    %p31 = scmp.ge.s32.totalorder %s30, 2
    %s32 = scalar_select %p31, 0, %s30
    %s33 = ssub.s32 %s20, %s32
    %s34 = ssub.s32 %s21, %s28
    %s35 = sor.u32 %s33, %s34
    %p36 = scmp.eq.s32.totalorder %s35, 0
    %s38 = sadd.s32 %s37, 1
    %s39 = scalar_select %p36, %s37, %s38
    %p42 = pneg %p36
    %p43 = scmp.eq.s32.totalorder %s13, 3
    %p44 = por %p42, %p43
    %p45 = scmp.ne.s32.totalorder %s37, %s40
    %p46 = scmp.eq.s32.totalorder %s13, 0
    %p47 = por %p45, %p46
    %p48 = scmp.ne.s32.totalorder %s37, %s40
    %p49 = scmp.eq.s32.totalorder %s18, 3
    %p50 = por %p48, %p49
    %p51 = scmp.ne.s32.totalorder %s40, %s41
    %p52 = scmp.eq.s32.totalorder %s18, 0
    %p53 = por %p51, %p52
    %p54 = scmp.ne.s32.totalorder %s40, %s41
    %p55 = scmp.eq.s32.totalorder %s19, 3
    %p56 = por %p54, %p55
    %p58 = scmp.ne.s32.totalorder %s41, %s57
    %p59 = scmp.eq.s32.totalorder %s19, 0
    %p60 = por %p58, %p59
    %s61 = ssub.s32 %s20, %s32
    %p62 = scmp.eq.s32.totalorder %s61, 0
    %s64 = sadd.s32 %s63, 1
    %s65 = scalar_select %p62, %s63, %s64
    %p68 = pneg %p62
    %p69 = scmp.eq.s32.totalorder %s13, 3
    %p70 = por %p68, %p69
    %p71 = scmp.ne.s32.totalorder %s63, %s66
    %p72 = scmp.eq.s32.totalorder %s13, 0
    %p73 = por %p71, %p72
    %p74 = scmp.ne.s32.totalorder %s63, %s66
    %p75 = scmp.eq.s32.totalorder %s18, 3
    %p76 = por %p74, %p75
    %p77 = scmp.ne.s32.totalorder %s66, %s67
    %p78 = scmp.eq.s32.totalorder %s18, 0
    %p79 = por %p77, %p78
    %p80 = scmp.ne.s32.totalorder %s66, %s67
    %p81 = scmp.eq.s32.totalorder %s19, 3
    %p82 = por %p80, %p81
    %p84 = scmp.ne.s32.totalorder %s67, %s83
    %p85 = scmp.eq.s32.totalorder %s19, 0
    %p86 = por %p84, %p85
    %s88 = sadd.s32 %s87, 1
    %p91 = scmp.eq.s32.totalorder %s13, 3
    %p92 = scmp.ne.s32.totalorder %s87, %s89
    %p93 = scmp.eq.s32.totalorder %s13, 0
    %p94 = por %p92, %p93
    %p95 = scmp.ne.s32.totalorder %s87, %s89
    %p96 = scmp.eq.s32.totalorder %s18, 3
    %p97 = por %p95, %p96
    %p98 = scmp.ne.s32.totalorder %s89, %s90
    %p99 = scmp.eq.s32.totalorder %s18, 0
    %p100 = por %p98, %p99
    %p101 = scmp.ne.s32.totalorder %s89, %s90
    %p102 = scmp.eq.s32.totalorder %s19, 3
    %p103 = por %p101, %p102
    %p105 = scmp.ne.s32.totalorder %s90, %s104
    %p106 = scmp.eq.s32.totalorder %s19, 0
    %p107 = por %p105, %p106
    %s108 = ssub.s32 %s20, %s32
    %s109 = ssub.s32 %s21, %s28
    %s110 = sor.u32 %s108, %s109
    %p111 = scmp.eq.s32.totalorder %s110, 0
    %s113 = sadd.s32 %s112, 1
    %s114 = scalar_select %p111, %s112, %s113
    %p117 = pneg %p111
    %p118 = scmp.eq.s32.totalorder %s13, 3
    %p119 = por %p117, %p118
    %p120 = scmp.ne.s32.totalorder %s112, %s115
    %p121 = scmp.eq.s32.totalorder %s13, 0
    %p122 = por %p120, %p121
    %p123 = scmp.ne.s32.totalorder %s112, %s115
    %p124 = scmp.eq.s32.totalorder %s18, 3
    %p125 = por %p123, %p124
    %p126 = scmp.ne.s32.totalorder %s115, %s116
    %p127 = scmp.eq.s32.totalorder %s18, 0
    %p128 = por %p126, %p127
    %p129 = scmp.ne.s32.totalorder %s115, %s116
    %p130 = scmp.eq.s32.totalorder %s19, 3
    %p131 = por %p129, %p130
    %p133 = scmp.ne.s32.totalorder %s116, %s132
    %p134 = scmp.eq.s32.totalorder %s19, 0
    %p135 = por %p133, %p134
    %s136 = ssub.s32 %s20, %s32
    %s137 = ssub.s32 %s21, %s28
    %s138 = sor.u32 %s136, %s137
    %p139 = scmp.eq.s32.totalorder %s138, 0
    %s141 = sadd.s32 %s140, 1
    %s142 = scalar_select %p139, %s140, %s141
    %p145 = pneg %p139
    %p146 = scmp.eq.s32.totalorder %s13, 3
    %p147 = por %p145, %p146
    %p148 = scmp.ne.s32.totalorder %s140, %s143
    %p149 = scmp.eq.s32.totalorder %s13, 0
    %p150 = por %p148, %p149
    %p151 = scmp.ne.s32.totalorder %s140, %s143
    %p152 = scmp.eq.s32.totalorder %s18, 3
    %p153 = por %p151, %p152
    %p154 = scmp.ne.s32.totalorder %s143, %s144
    %p155 = scmp.eq.s32.totalorder %s18, 0
    %p156 = por %p154, %p155
    %p157 = scmp.ne.s32.totalorder %s143, %s144
    %p158 = scmp.eq.s32.totalorder %s19, 3
    %p159 = por %p157, %p158
    %p161 = scmp.ne.s32.totalorder %s144, %s160
    %p162 = scmp.eq.s32.totalorder %s19, 0
    %p163 = por %p161, %p162
    %s164 = ssub.s32 %s20, %s32
    %s165 = ssub.s32 %s21, %s28
    %s166 = sor.u32 %s164, %s165
    %p167 = scmp.eq.s32.totalorder %s166, 0
    %s169 = sadd.s32 %s168, 1
    %s170 = scalar_select %p167, %s168, %s169
    %p173 = pneg %p167
    %p174 = scmp.eq.s32.totalorder %s13, 3
    %p175 = por %p173, %p174
    %p176 = scmp.ne.s32.totalorder %s168, %s171
    %p177 = scmp.eq.s32.totalorder %s13, 0
    %p178 = por %p176, %p177
    %p179 = scmp.ne.s32.totalorder %s168, %s171
    %p180 = scmp.eq.s32.totalorder %s18, 3
    %p181 = por %p179, %p180
    %p182 = scmp.ne.s32.totalorder %s171, %s172
    %p183 = scmp.eq.s32.totalorder %s18, 0
    %p184 = por %p182, %p183
    %p185 = scmp.ne.s32.totalorder %s171, %s172
    %p186 = scmp.eq.s32.totalorder %s19, 3
    %p187 = por %p185, %p186
    %p189 = scmp.ne.s32.totalorder %s172, %s188
    %p190 = scmp.eq.s32.totalorder %s19, 0
    %p191 = por %p189, %p190
    %s192 = ssub.s32 %s20, %s32
    %s193 = ssub.s32 %s21, %s28
    %s194 = sor.u32 %s192, %s193
    %p195 = scmp.eq.s32.totalorder %s194, 0
    %s197 = sadd.s32 %s196, 1
    %s198 = scalar_select %p195, %s196, %s197
    %p201 = pneg %p195
    %p202 = scmp.eq.s32.totalorder %s13, 3
    %p203 = por %p201, %p202
    %p204 = scmp.ne.s32.totalorder %s196, %s199
    %p205 = scmp.eq.s32.totalorder %s13, 0
    %p206 = por %p204, %p205
    %p207 = scmp.ne.s32.totalorder %s196, %s199
    %p208 = scmp.eq.s32.totalorder %s18, 3
    %p209 = por %p207, %p208
    %p210 = scmp.ne.s32.totalorder %s199, %s200
    %p211 = scmp.eq.s32.totalorder %s18, 0
    %p212 = por %p210, %p211
    %p213 = scmp.ne.s32.totalorder %s199, %s200
    %p214 = scmp.eq.s32.totalorder %s19, 3
    %p215 = por %p213, %p214
    %p217 = scmp.ne.s32.totalorder %s200, %s216
    %p218 = scmp.eq.s32.totalorder %s19, 0
    %p219 = por %p217, %p218
    %p220 = scmp.le.s32.totalorder 1, %s13
    %p221 = scmp.lt.s32.totalorder %s13, 5
    %p222 = pnand %p220, %p221
    %p223 = pneg %p222
    // Predicated region
    $region9: #{base_pointnet_fwd.21} parent=5 // pred_check
      _
    $region10: #{base_pointnet_fwd.21} parent=5 // pred_check_branch
      %225 = sbr.rel (%p222) target = $region12
    $region11: #{base_pointnet_fwd.21} parent=5 // pred_region
      %s226 = ssub.s32 %s13, 1
      // Predicated region
      $region13: #{base_pointnet_fwd.21} parent=11 // pred_check
        %p227 = pneg %p100
      $region14: #{base_pointnet_fwd.21} parent=11 // pred_check_branch
        %229 = sbr.rel (%p227) target = $region16
      $region15: #{base_pointnet_fwd.21} parent=11 // pred_region
        _
      $region16: #{base_pointnet_fwd.21} parent=11 // pred_fallthru
        _
    $region12: #{base_pointnet_fwd.21} parent=5 // pred_fallthru
      _
    %p230 = scmp.lt.s32.totalorder %s13, 4
    // Predicated region
    $region17: #{base_pointnet_fwd.21} parent=5 // pred_check
      %p231 = pneg %p230
    $region18: #{base_pointnet_fwd.21} parent=5 // pred_check_branch
      %233 = sbr.rel (%p231) target = $region20
    $region19: #{base_pointnet_fwd.21} parent=5 // pred_region
      // Predicated region
      $region21: #{base_pointnet_fwd.21} parent=19 // pred_check
        %p234 = pneg %p47
      $region22: #{base_pointnet_fwd.21} parent=19 // pred_check_branch
        %236 = sbr.rel (%p234) target = $region24
      $region23: #{base_pointnet_fwd.21} parent=19 // pred_region
        %s237 = smul.u32 16, %s21
        %p238 = scmp.lt.s32.totalorder %s20, 1
        %s239 = scalar_select %p238, %s20, 1
        %p240 = scmp.lt.s32.totalorder %s237, 31
        %s241 = scalar_select %p240, %s237, 31
        %s242 = smul.addr %s239, 32
        %s243 = sadd.s32 %s241, %s242
        %s244 = smul.addr %s243, 8
        %s245 = scalar_lea.vmem %s0, %s244
        %s246 = smul.u32 16, %s21
      $region24: #{base_pointnet_fwd.21} parent=19 // pred_fallthru
        _
      // Predicated region
      $region25: #{base_pointnet_fwd.21} parent=19 // pred_check
        %p247 = pneg %p73
      $region26: #{base_pointnet_fwd.21} parent=19 // pred_check_branch
        %249 = sbr.rel (%p247) target = $region28
      $region27: #{base_pointnet_fwd.21} parent=19 // pred_region
        %p250 = scmp.lt.s32.totalorder %s20, 1
        %s251 = scalar_select %p250, %s20, 1
        %s252 = smul.addr %s251, 4
        %s253 = scalar_lea.vmem %s1, %s252
      $region28: #{base_pointnet_fwd.21} parent=19 // pred_fallthru
        _
    $region20: #{base_pointnet_fwd.21} parent=5 // pred_fallthru
      _
    %p254 = scmp.le.s32.totalorder 1, %s13
    %p255 = scmp.lt.s32.totalorder %s13, 5
    %p256 = pnand %p254, %p255
    %p257 = pneg %p256
    // Predicated region
    $region29: #{base_pointnet_fwd.21} parent=5 // pred_check
      _
    $region30: #{base_pointnet_fwd.21} parent=5 // pred_check_branch
      %259 = sbr.rel (%p256) target = $region32
    $region31: #{base_pointnet_fwd.21} parent=5 // pred_region
      %s260 = ssub.s32 %s13, 1
      %s261 = smul.u32 16, %s23
      %p262 = scmp.lt.s32.totalorder %s22, 1
      %s263 = scalar_select %p262, %s22, 1
      %p264 = scmp.lt.s32.totalorder %s261, 31
      %s265 = scalar_select %p264, %s261, 31
      %s266 = smul.addr %s263, 32
      %s267 = sadd.s32 %s265, %s266
      %s268 = smul.addr %s267, 8
      %s269 = scalar_lea.vmem %s0, %s268
      %p270 = pneg %p53
      %p271 = pneg %p50
      %p272 = scmp.lt.s32.totalorder %s22, 1
      %s273 = scalar_select %p272, %s22, 1
      %s274 = smul.addr %s273, 4
      %s275 = scalar_lea.vmem %s1, %s274
      %p276 = pneg %p79
      %p277 = pneg %p76
      %p278 = pneg %p100
      %p279 = pneg %p97
      %p280 = pneg %p128
      %p281 = pneg %p125
      %s282 = smul.u32 16, %s23
      %p283 = scmp.lt.s32.totalorder %s22, 1
      %s284 = scalar_select %p283, %s22, 1
      %p285 = scmp.lt.s32.totalorder %s282, 31
      %s286 = scalar_select %p285, %s282, 31
      %s287 = smul.addr %s284, 32
      %s288 = sadd.s32 %s286, %s287
      %s289 = smul.addr %s288, 4
      %s290 = scalar_lea.vmem %s3, %s289
      %p291 = pneg %p156
      %p292 = pneg %p153
      %s293 = smul.u32 16, %s23
      %p294 = scmp.lt.s32.totalorder %s22, 1
      %s295 = scalar_select %p294, %s22, 1
      %p296 = scmp.lt.s32.totalorder %s293, 31
      %s297 = scalar_select %p296, %s293, 31
      %s298 = smul.addr %s295, 32
      %s299 = sadd.s32 %s297, %s298
      %s300 = smul.addr %s299, 8
      %s301 = scalar_lea.vmem %s4, %s300
      %p302 = pneg %p184
      %p303 = pneg %p181
      %p304 = scmp.lt.s32.totalorder %s22, 1
      %s305 = scalar_select %p304, %s22, 1
      %p306 = scmp.lt.s32.totalorder %s23, 1
      %s307 = scalar_select %p306, %s23, 1
      %s308 = smul.addr %s305, 2
      %s309 = sadd.s32 %s307, %s308
      %s310 = scalar_lea.vmem %s5, %s309
      %p311 = pneg %p212
      %p312 = pneg %p209
      %p313 = scmp.lt.s32.totalorder %s22, 1
      %s314 = scalar_select %p313, %s22, 1
      %p315 = scmp.lt.s32.totalorder %s23, 1
      %s316 = scalar_select %p315, %s23, 1
      %s317 = smul.addr %s314, 2
      %s318 = sadd.s32 %s316, %s317
      %s319 = scalar_lea.vmem %s6, %s318
      %s320 = smul.u32 16, %s23
      %p321 = scmp.lt.s32.totalorder %s22, 1
      %s322 = scalar_select %p321, %s22, 1
      %p323 = scmp.lt.s32.totalorder %s320, 31
      %s324 = scalar_select %p323, %s320, 31
      %s325 = smul.addr %s322, 32
      %s326 = sadd.s32 %s324, %s325
      %s327 = smul.addr %s326, 8
      %s328 = scalar_lea.vmem %s0, %s327
      %s329 = smul.u32 16, %s23
      %p330 = scmp.lt.s32.totalorder %s22, 1
      %s331 = scalar_select %p330, %s22, 1
      %s332 = smul.addr %s331, 4
      %s333 = scalar_lea.vmem %s1, %s332
      %s334 = smul.u32 16, %s23
      %p335 = scmp.lt.s32.totalorder %s22, 1
      %s336 = scalar_select %p335, %s22, 1
      %p337 = scmp.lt.s32.totalorder %s334, 31
      %s338 = scalar_select %p337, %s334, 31
      %s339 = smul.addr %s336, 32
      %s340 = sadd.s32 %s338, %s339
      %s341 = smul.addr %s340, 4
      %s342 = scalar_lea.vmem %s3, %s341
      %s343 = smul.u32 16, %s23
      %s344 = smul.u32 16, %s23
      %p345 = scmp.lt.s32.totalorder %s22, 1
      %s346 = scalar_select %p345, %s22, 1
      %p347 = scmp.lt.s32.totalorder %s344, 31
      %s348 = scalar_select %p347, %s344, 31
      %s349 = smul.addr %s346, 32
      %s350 = sadd.s32 %s348, %s349
      %s351 = smul.addr %s350, 8
      %s352 = scalar_lea.vmem %s4, %s351
      %s353 = smul.u32 16, %s23
      %p354 = scmp.lt.s32.totalorder %s22, 1
      %s355 = scalar_select %p354, %s22, 1
      %p356 = scmp.lt.s32.totalorder %s23, 1
      %s357 = scalar_select %p356, %s23, 1
      %s358 = smul.addr %s355, 2
      %s359 = sadd.s32 %s357, %s358
      %s360 = scalar_lea.vmem %s5, %s359
      %p361 = scmp.lt.s32.totalorder %s22, 1
      %s362 = scalar_select %p361, %s22, 1
      %p363 = scmp.lt.s32.totalorder %s23, 1
      %s364 = scalar_select %p363, %s23, 1
      %s365 = smul.addr %s362, 2
      %s366 = sadd.s32 %s364, %s365
      %s367 = scalar_lea.vmem %s6, %s366
      %v369 = vld [vmem:[%s328] sm:$0xff]
      %v370 = vld [vmem:[%s328 + $0x8] sm:$0xff]
      %v371 = vld [vmem:[%s328 + $0x10] sm:$0xff]
      %v372 = vld [vmem:[%s328 + $0x18] sm:$0xff]
      %v373 = vld [vmem:[%s328 + $0x20] sm:$0xff]
      %v374 = vld [vmem:[%s328 + $0x28] sm:$0xff]
      %v375 = vld [vmem:[%s328 + $0x30] sm:$0xff]
      %v376 = vld [vmem:[%s328 + $0x38] sm:$0xff]
      %v377 = vld [vmem:[%s328 + $0x40] sm:$0xff]
      %v378 = vld [vmem:[%s328 + $0x48] sm:$0xff]
      %v379 = vld [vmem:[%s328 + $0x50] sm:$0xff]
      %v380 = vld [vmem:[%s328 + $0x58] sm:$0xff]
      %v381 = vld [vmem:[%s328 + $0x60] sm:$0xff]
      %v382 = vld [vmem:[%s328 + $0x68] sm:$0xff]
      %v383 = vld [vmem:[%s328 + $0x70] sm:$0xff]
      %v384 = vld [vmem:[%s328 + $0x78] sm:$0xff]
      %v385 = vld [vmem:[%s333] sm:$0xf]
      %vm386 = vcmask 31744
      %v388 = vsel %vm386, %v369, 0
      %v391 = vsel %vm386, %v370, 0
      %v394 = vsel %vm386, %v371, 0
      %v397 = vsel %vm386, %v372, 0
      %v400 = vsel %vm386, %v373, 0
      %v403 = vsel %vm386, %v374, 0
      %v406 = vsel %vm386, %v375, 0
      %v409 = vsel %vm386, %v376, 0
      %v412 = vsel %vm386, %v377, 0
      %v415 = vsel %vm386, %v378, 0
      %v418 = vsel %vm386, %v379, 0
      %v421 = vsel %vm386, %v380, 0
      %v424 = vsel %vm386, %v381, 0
      %v427 = vsel %vm386, %v382, 0
      %v430 = vsel %vm386, %v383, 0
      %v433 = vsel %vm386, %v384, 0
      %vm435 = vcmask 1043456
      %v437 = vsel %vm435, %v385, 0
      %439 = vmatpush.msra.mxu0 0.0
      %440 = vmatpush.msra.mxu0 0.0
      %441 = vmatpush.msra.mxu0 0.0
      %442 = vmatpush.msra.mxu0 0.0
      %443 = vmatpush.msra.mxu0 0.0
      %444 = vmatpush.msra.mxu0 0.0
      %445 = vmatpush.msra.mxu0 0.0
      %446 = vmatpush.msra.mxu0 0.0
      %447 = vmatpush.msra.mxu0 0.0
      %448 = vmatpush.msra.mxu0 0.0
      %449 = vmatpush.msra.mxu0 0.0
      %450 = vmatpush.msra.mxu0 0.0
      %451 = vmatpush.msra.mxu0 0.0
      %452 = vmatpush.msra.mxu0 0.0
      %453 = vmatpush.msra.mxu0 0.0
      %454 = vmatpush.msra.mxu0 %v437
      %455 = vmatmul.f32.gmra.mxu0 %v388
      %v456 = vpop.f32.mrf.mxu0
      %v457 = vadd.f32 0.0, %v456
      %458 = vmatmul.f32.gmra.mxu0 %v391
      %v459 = vpop.f32.mrf.mxu0
      %v460 = vadd.f32 0.0, %v459
      %461 = vmatmul.f32.gmra.mxu0 %v394
      %v462 = vpop.f32.mrf.mxu0
      %v463 = vadd.f32 0.0, %v462
      %464 = vmatmul.f32.gmra.mxu0 %v397
      %v465 = vpop.f32.mrf.mxu0
      %v466 = vadd.f32 0.0, %v465
      %467 = vmatmul.f32.gmra.mxu0 %v400
      %v468 = vpop.f32.mrf.mxu0
      %v469 = vadd.f32 0.0, %v468
      %470 = vmatmul.f32.gmra.mxu0 %v403
      %v471 = vpop.f32.mrf.mxu0
      %v472 = vadd.f32 0.0, %v471
      %473 = vmatmul.f32.gmra.mxu0 %v406
      %v474 = vpop.f32.mrf.mxu0
      %v475 = vadd.f32 0.0, %v474
      %476 = vmatmul.f32.gmra.mxu0 %v409
      %v477 = vpop.f32.mrf.mxu0
      %v478 = vadd.f32 0.0, %v477
      %479 = vmatmul.f32.gmra.mxu0 %v412
      %v480 = vpop.f32.mrf.mxu0
      %v481 = vadd.f32 0.0, %v480
      %482 = vmatmul.f32.gmra.mxu0 %v415
      %v483 = vpop.f32.mrf.mxu0
      %v484 = vadd.f32 0.0, %v483
      %485 = vmatmul.f32.gmra.mxu0 %v418
      %v486 = vpop.f32.mrf.mxu0
      %v487 = vadd.f32 0.0, %v486
      %488 = vmatmul.f32.gmra.mxu0 %v421
      %v489 = vpop.f32.mrf.mxu0
      %v490 = vadd.f32 0.0, %v489
      %491 = vmatmul.f32.gmra.mxu0 %v424
      %v492 = vpop.f32.mrf.mxu0
      %v493 = vadd.f32 0.0, %v492
      %494 = vmatmul.f32.gmra.mxu0 %v427
      %v495 = vpop.f32.mrf.mxu0
      %v496 = vadd.f32 0.0, %v495
      %497 = vmatmul.f32.gmra.mxu0 %v430
      %v498 = vpop.f32.mrf.mxu0
      %v499 = vadd.f32 0.0, %v498
      %500 = vmatmul.f32.gmra.mxu0 %v433
      %v501 = vpop.f32.mrf.mxu0
      %v502 = vadd.f32 0.0, %v501
      %503 = vdwg.mxu0
      %504 = vst.msk [vmem:[%s352] sm:$0xff] %vm386, %v457
      %505 = vst.msk [vmem:[%s352 + $0x8] sm:$0xff] %vm386, %v460
      %506 = vst.msk [vmem:[%s352 + $0x10] sm:$0xff] %vm386, %v463
      %507 = vst.msk [vmem:[%s352 + $0x18] sm:$0xff] %vm386, %v466
      %508 = vst.msk [vmem:[%s352 + $0x20] sm:$0xff] %vm386, %v469
      %509 = vst.msk [vmem:[%s352 + $0x28] sm:$0xff] %vm386, %v472
      %510 = vst.msk [vmem:[%s352 + $0x30] sm:$0xff] %vm386, %v475
      %511 = vst.msk [vmem:[%s352 + $0x38] sm:$0xff] %vm386, %v478
      %512 = vst.msk [vmem:[%s352 + $0x40] sm:$0xff] %vm386, %v481
      %513 = vst.msk [vmem:[%s352 + $0x48] sm:$0xff] %vm386, %v484
      %514 = vst.msk [vmem:[%s352 + $0x50] sm:$0xff] %vm386, %v487
      %515 = vst.msk [vmem:[%s352 + $0x58] sm:$0xff] %vm386, %v490
      %516 = vst.msk [vmem:[%s352 + $0x60] sm:$0xff] %vm386, %v493
      %517 = vst.msk [vmem:[%s352 + $0x68] sm:$0xff] %vm386, %v496
      %518 = vst.msk [vmem:[%s352 + $0x70] sm:$0xff] %vm386, %v499
      %519 = vst.msk [vmem:[%s352 + $0x78] sm:$0xff] %vm386, %v502
      %v520 = vpack.c.bf16 %v460, %v457
      %v521 = vpack.c.bf16 %v466, %v463
      %v522 = vpack.c.bf16 %v472, %v469
      %v523 = vpack.c.bf16 %v478, %v475
      %v524 = vpack.c.bf16 %v484, %v481
      %v525 = vpack.c.bf16 %v490, %v487
      %v526 = vpack.c.bf16 %v496, %v493
      %v527 = vpack.c.bf16 %v502, %v499
      %v528 = vld [vmem:[%s2] sm:$0x3]
      %v530 = vsel %vm386, %v520, 0
      %v533 = vsel %vm386, %v521, 0
      %v536 = vsel %vm386, %v522, 0
      %v539 = vsel %vm386, %v523, 0
      %v542 = vsel %vm386, %v524, 0
      %v545 = vsel %vm386, %v525, 0
      %v548 = vsel %vm386, %v526, 0
      %v551 = vsel %vm386, %v527, 0
      %vm553 = vcmask 1041408
      %v555 = vsel %vm553, %v528, 0
      %557 = vmatpush.bf16.msra.mxu0 0
      %558 = vmatpush.bf16.msra.mxu0 0
      %559 = vmatpush.bf16.msra.mxu0 0
      %560 = vmatpush.bf16.msra.mxu0 0
      %561 = vmatpush.bf16.msra.mxu0 0
      %562 = vmatpush.bf16.msra.mxu0 0
      %563 = vmatpush.bf16.msra.mxu0 0
      %564 = vmatpush.bf16.msra.mxu0 %v555
      %565 = vmatmul.bf16.gmra.mxu0 %v530
      %v566 = vpop.f32.mrf.mxu0
      %v567 = vadd.f32 0.0, %v566
      %v568 = vpop.f32.mrf.mxu0
      %v569 = vadd.f32 0.0, %v568
      %570 = vmatmul.bf16.gmra.mxu0 %v533
      %v571 = vpop.f32.mrf.mxu0
      %v572 = vadd.f32 0.0, %v571
      %v573 = vpop.f32.mrf.mxu0
      %v574 = vadd.f32 0.0, %v573
      %575 = vmatmul.bf16.gmra.mxu0 %v536
      %v576 = vpop.f32.mrf.mxu0
      %v577 = vadd.f32 0.0, %v576
      %v578 = vpop.f32.mrf.mxu0
      %v579 = vadd.f32 0.0, %v578
      %580 = vmatmul.bf16.gmra.mxu0 %v539
      %v581 = vpop.f32.mrf.mxu0
      %v582 = vadd.f32 0.0, %v581
      %v583 = vpop.f32.mrf.mxu0
      %v584 = vadd.f32 0.0, %v583
      %585 = vmatmul.bf16.gmra.mxu0 %v542
      %v586 = vpop.f32.mrf.mxu0
      %v587 = vadd.f32 0.0, %v586
      %v588 = vpop.f32.mrf.mxu0
      %v589 = vadd.f32 0.0, %v588
      %590 = vmatmul.bf16.gmra.mxu0 %v545
      %v591 = vpop.f32.mrf.mxu0
      %v592 = vadd.f32 0.0, %v591
      %v593 = vpop.f32.mrf.mxu0
      %v594 = vadd.f32 0.0, %v593
      %595 = vmatmul.bf16.gmra.mxu0 %v548
      %v596 = vpop.f32.mrf.mxu0
      %v597 = vadd.f32 0.0, %v596
      %v598 = vpop.f32.mrf.mxu0
      %v599 = vadd.f32 0.0, %v598
      %600 = vmatmul.bf16.gmra.mxu0 %v551
      %v601 = vpop.f32.mrf.mxu0
      %v602 = vadd.f32 0.0, %v601
      %v603 = vpop.f32.mrf.mxu0
      %v604 = vadd.f32 0.0, %v603
      %605 = vdwg.mxu0
      %vm606 = vcmask 523264
      %v607 = vsel %vm606, %v567, 0.0
      %v608 = vsel %vm606, %v569, 0.0
      %v609 = vadd.f32 %v607, %v608
      %v610 = vsel %vm606, %v572, 0.0
      %v611 = vadd.f32 %v609, %v610
      %v612 = vsel %vm606, %v574, 0.0
      %v613 = vadd.f32 %v611, %v612
      %v614 = vsel %vm606, %v577, 0.0
      %v615 = vadd.f32 %v613, %v614
      %v616 = vsel %vm606, %v579, 0.0
      %v617 = vadd.f32 %v615, %v616
      %v618 = vsel %vm606, %v582, 0.0
      %v619 = vadd.f32 %v617, %v618
      %v620 = vsel %vm606, %v584, 0.0
      %v621 = vadd.f32 %v619, %v620
      %v622 = vsel %vm606, %v587, 0.0
      %v623 = vadd.f32 %v621, %v622
      %v624 = vsel %vm606, %v589, 0.0
      %v625 = vadd.f32 %v623, %v624
      %v626 = vsel %vm606, %v592, 0.0
      %v627 = vadd.f32 %v625, %v626
      %v628 = vsel %vm606, %v594, 0.0
      %v629 = vadd.f32 %v627, %v628
      %v630 = vsel %vm606, %v597, 0.0
      %v631 = vadd.f32 %v629, %v630
      %v632 = vsel %vm606, %v599, 0.0
      %v633 = vadd.f32 %v631, %v632
      %v634 = vsel %vm606, %v602, 0.0
      %v635 = vadd.f32 %v633, %v634
      %v636 = vsel %vm606, %v604, 0.0
      %v637 = vadd.f32 %v635, %v636
      %v638 = vrot.slane %v637, 4
      %v639 = vadd.f32 %v637, %v638
      %v640 = vrot.slane %v639, 2
      %v641 = vadd.f32 %v639, %v640
      %v642 = vrot.slane %v641, 1
      %v643 = vadd.f32 %v641, %v642
      %vm644 = vcmask 516096
      %645 = vst.msk [vmem:[%s360] sm:$0x1] %vm644, %v643
      %v646 = vmul.f32 %v567, %v567
      %v647 = vmul.f32 %v569, %v569
      %v648 = vmul.f32 %v572, %v572
      %v649 = vmul.f32 %v574, %v574
      %v650 = vmul.f32 %v577, %v577
      %v651 = vmul.f32 %v579, %v579
      %v652 = vmul.f32 %v582, %v582
      %v653 = vmul.f32 %v584, %v584
      %v654 = vmul.f32 %v587, %v587
      %v655 = vmul.f32 %v589, %v589
      %v656 = vmul.f32 %v592, %v592
      %v657 = vmul.f32 %v594, %v594
      %v658 = vmul.f32 %v597, %v597
      %v659 = vmul.f32 %v599, %v599
      %v660 = vmul.f32 %v602, %v602
      %v661 = vmul.f32 %v604, %v604
      %v662 = vsel %vm606, %v646, 0.0
      %v663 = vsel %vm606, %v647, 0.0
      %v664 = vadd.f32 %v662, %v663
      %v665 = vsel %vm606, %v648, 0.0
      %v666 = vadd.f32 %v664, %v665
      %v667 = vsel %vm606, %v649, 0.0
      %v668 = vadd.f32 %v666, %v667
      %v669 = vsel %vm606, %v650, 0.0
      %v670 = vadd.f32 %v668, %v669
      %v671 = vsel %vm606, %v651, 0.0
      %v672 = vadd.f32 %v670, %v671
      %v673 = vsel %vm606, %v652, 0.0
      %v674 = vadd.f32 %v672, %v673
      %v675 = vsel %vm606, %v653, 0.0
      %v676 = vadd.f32 %v674, %v675
      %v677 = vsel %vm606, %v654, 0.0
      %v678 = vadd.f32 %v676, %v677
      %v679 = vsel %vm606, %v655, 0.0
      %v680 = vadd.f32 %v678, %v679
      %v681 = vsel %vm606, %v656, 0.0
      %v682 = vadd.f32 %v680, %v681
      %v683 = vsel %vm606, %v657, 0.0
      %v684 = vadd.f32 %v682, %v683
      %v685 = vsel %vm606, %v658, 0.0
      %v686 = vadd.f32 %v684, %v685
      %v687 = vsel %vm606, %v659, 0.0
      %v688 = vadd.f32 %v686, %v687
      %v689 = vsel %vm606, %v660, 0.0
      %v690 = vadd.f32 %v688, %v689
      %v691 = vsel %vm606, %v661, 0.0
      %v692 = vadd.f32 %v690, %v691
      %v693 = vrot.slane %v692, 4
      %v694 = vadd.f32 %v692, %v693
      %v695 = vrot.slane %v694, 2
      %v696 = vadd.f32 %v694, %v695
      %v697 = vrot.slane %v696, 1
      %v698 = vadd.f32 %v696, %v697
      %699 = vst.msk [vmem:[%s367] sm:$0x1] %vm644, %v698
      %v700 = vpack.c.bf16 %v567, %v567
      %v701 = vpack.c.bf16 %v569, %v569
      %v702 = vpack.c.bf16 %v572, %v572
      %v703 = vpack.c.bf16 %v574, %v574
      %v704 = vpack.c.bf16 %v577, %v577
      %v705 = vpack.c.bf16 %v579, %v579
      %v706 = vpack.c.bf16 %v582, %v582
      %v707 = vpack.c.bf16 %v584, %v584
      %v708 = vpack.c.bf16 %v587, %v587
      %v709 = vpack.c.bf16 %v589, %v589
      %v710 = vpack.c.bf16 %v592, %v592
      %v711 = vpack.c.bf16 %v594, %v594
      %v712 = vpack.c.bf16 %v597, %v597
      %v713 = vpack.c.bf16 %v599, %v599
      %v714 = vpack.c.bf16 %v602, %v602
      %v715 = vpack.c.bf16 %v604, %v604
      %vm716 = vcmask 519168
      %717 = vst.msk [vmem:[%s342] sm:$0xf] %vm716, %v700
      %718 = vst.msk [vmem:[%s342 + $0x4] sm:$0xf] %vm716, %v701
      %719 = vst.msk [vmem:[%s342 + $0x8] sm:$0xf] %vm716, %v702
      %720 = vst.msk [vmem:[%s342 + $0xc] sm:$0xf] %vm716, %v703
      %721 = vst.msk [vmem:[%s342 + $0x10] sm:$0xf] %vm716, %v704
      %722 = vst.msk [vmem:[%s342 + $0x14] sm:$0xf] %vm716, %v705
      %723 = vst.msk [vmem:[%s342 + $0x18] sm:$0xf] %vm716, %v706
      %724 = vst.msk [vmem:[%s342 + $0x1c] sm:$0xf] %vm716, %v707
      %725 = vst.msk [vmem:[%s342 + $0x20] sm:$0xf] %vm716, %v708
      %726 = vst.msk [vmem:[%s342 + $0x24] sm:$0xf] %vm716, %v709
      %727 = vst.msk [vmem:[%s342 + $0x28] sm:$0xf] %vm716, %v710
      %728 = vst.msk [vmem:[%s342 + $0x2c] sm:$0xf] %vm716, %v711
      %729 = vst.msk [vmem:[%s342 + $0x30] sm:$0xf] %vm716, %v712
      %730 = vst.msk [vmem:[%s342 + $0x34] sm:$0xf] %vm716, %v713
      %731 = vst.msk [vmem:[%s342 + $0x38] sm:$0xf] %vm716, %v714
      %732 = vst.msk [vmem:[%s342 + $0x3c] sm:$0xf] %vm716, %v715
      %s733 = smul.u32 16, %s23
      %p734 = scmp.lt.s32.totalorder %s22, 1
      %s735 = scalar_select %p734, %s22, 1
      %p736 = scmp.lt.s32.totalorder %s733, 31
      %s737 = scalar_select %p736, %s733, 31
      %s738 = smul.addr %s735, 32
      %s739 = sadd.s32 %s737, %s738
      %s740 = smul.addr %s739, 4
      %s741 = scalar_lea.vmem %s3, %s740
      %s742 = smul.u32 16, %s23
      %p743 = scmp.lt.s32.totalorder %s22, 1
      %s744 = scalar_select %p743, %s22, 1
      %p745 = scmp.lt.s32.totalorder %s742, 31
      %s746 = scalar_select %p745, %s742, 31
      %s747 = smul.addr %s744, 32
      %s748 = sadd.s32 %s746, %s747
      %s749 = smul.addr %s748, 8
      %s750 = scalar_lea.vmem %s4, %s749
      %p751 = scmp.lt.s32.totalorder %s22, 1
      %s752 = scalar_select %p751, %s22, 1
      %p753 = scmp.lt.s32.totalorder %s23, 1
      %s754 = scalar_select %p753, %s23, 1
      %s755 = smul.addr %s752, 2
      %s756 = sadd.s32 %s754, %s755
      %s757 = scalar_lea.vmem %s5, %s756
      %p758 = scmp.lt.s32.totalorder %s22, 1
      %s759 = scalar_select %p758, %s22, 1
      %p760 = scmp.lt.s32.totalorder %s23, 1
      %s761 = scalar_select %p760, %s23, 1
      %s762 = smul.addr %s759, 2
      %s763 = sadd.s32 %s761, %s762
      %s764 = scalar_lea.vmem %s6, %s763
      // Predicated region
      $region33: #{base_pointnet_fwd.21} parent=31 // pred_check
        %p765 = pneg %p125
      $region34: #{base_pointnet_fwd.21} parent=31 // pred_check_branch
        %767 = sbr.rel (%p765) target = $region36
      $region35: #{base_pointnet_fwd.21} parent=31 // pred_region
        %s768 = smul.u32 16, %s23
      $region36: #{base_pointnet_fwd.21} parent=31 // pred_fallthru
        _
      // Predicated region
      $region37: #{base_pointnet_fwd.21} parent=31 // pred_check
        %p769 = pneg %p153
      $region38: #{base_pointnet_fwd.21} parent=31 // pred_check_branch
        %771 = sbr.rel (%p769) target = $region40
      $region39: #{base_pointnet_fwd.21} parent=31 // pred_region
        %s772 = smul.u32 16, %s23
      $region40: #{base_pointnet_fwd.21} parent=31 // pred_fallthru
        _
      // Predicated region
      $region41: #{base_pointnet_fwd.21} parent=31 // pred_check
        %p773 = pneg %p181
      $region42: #{base_pointnet_fwd.21} parent=31 // pred_check_branch
        %775 = sbr.rel (%p773) target = $region44
      $region43: #{base_pointnet_fwd.21} parent=31 // pred_region
        _
      $region44: #{base_pointnet_fwd.21} parent=31 // pred_fallthru
        _
      // Predicated region
      $region45: #{base_pointnet_fwd.21} parent=31 // pred_check
        %p776 = pneg %p209
      $region46: #{base_pointnet_fwd.21} parent=31 // pred_check_branch
        %778 = sbr.rel (%p776) target = $region48
      $region47: #{base_pointnet_fwd.21} parent=31 // pred_region
        _
      $region48: #{base_pointnet_fwd.21} parent=31 // pred_fallthru
        _
    $region32: #{base_pointnet_fwd.21} parent=5 // pred_fallthru
      _
    %p779 = scmp.le.s32.totalorder 2, %s13
    // Predicated region
    $region49: #{base_pointnet_fwd.21} parent=5 // pred_check
      %p780 = pneg %p779
    $region50: #{base_pointnet_fwd.21} parent=5 // pred_check_branch
      %782 = sbr.rel (%p780) target = $region52
    $region51: #{base_pointnet_fwd.21} parent=5 // pred_region
      %s783 = ssub.s32 %s13, 2
      // Predicated region
      $region53: #{base_pointnet_fwd.21} parent=51 // pred_check
        %p784 = pneg %p131
      $region54: #{base_pointnet_fwd.21} parent=51 // pred_check_branch
        %786 = sbr.rel (%p784) target = $region56
      $region55: #{base_pointnet_fwd.21} parent=51 // pred_region
        %s787 = smul.u32 16, %s25
        %p788 = scmp.lt.s32.totalorder %s24, 1
        %s789 = scalar_select %p788, %s24, 1
        %p790 = scmp.lt.s32.totalorder %s787, 31
        %s791 = scalar_select %p790, %s787, 31
        %s792 = smul.addr %s789, 32
        %s793 = sadd.s32 %s791, %s792
        %s794 = smul.addr %s793, 4
        %s795 = scalar_lea.vmem %s3, %s794
      $region56: #{base_pointnet_fwd.21} parent=51 // pred_fallthru
        _
      // Predicated region
      $region57: #{base_pointnet_fwd.21} parent=51 // pred_check
        %p796 = pneg %p159
      $region58: #{base_pointnet_fwd.21} parent=51 // pred_check_branch
        %798 = sbr.rel (%p796) target = $region60
      $region59: #{base_pointnet_fwd.21} parent=51 // pred_region
        %s799 = smul.u32 16, %s25
        %p800 = scmp.lt.s32.totalorder %s24, 1
        %s801 = scalar_select %p800, %s24, 1
        %p802 = scmp.lt.s32.totalorder %s799, 31
        %s803 = scalar_select %p802, %s799, 31
        %s804 = smul.addr %s801, 32
        %s805 = sadd.s32 %s803, %s804
        %s806 = smul.addr %s805, 8
        %s807 = scalar_lea.vmem %s4, %s806
      $region60: #{base_pointnet_fwd.21} parent=51 // pred_fallthru
        _
      // Predicated region
      $region61: #{base_pointnet_fwd.21} parent=51 // pred_check
        %p808 = pneg %p187
      $region62: #{base_pointnet_fwd.21} parent=51 // pred_check_branch
        %810 = sbr.rel (%p808) target = $region64
      $region63: #{base_pointnet_fwd.21} parent=51 // pred_region
        %p811 = scmp.lt.s32.totalorder %s24, 1
        %s812 = scalar_select %p811, %s24, 1
        %p813 = scmp.lt.s32.totalorder %s25, 1
        %s814 = scalar_select %p813, %s25, 1
        %s815 = smul.addr %s812, 2
        %s816 = sadd.s32 %s814, %s815
        %s817 = scalar_lea.vmem %s5, %s816
      $region64: #{base_pointnet_fwd.21} parent=51 // pred_fallthru
        _
      // Predicated region
      $region65: #{base_pointnet_fwd.21} parent=51 // pred_check
        %p818 = pneg %p215
      $region66: #{base_pointnet_fwd.21} parent=51 // pred_check_branch
        %820 = sbr.rel (%p818) target = $region68
      $region67: #{base_pointnet_fwd.21} parent=51 // pred_region
        %p821 = scmp.lt.s32.totalorder %s24, 1
        %s822 = scalar_select %p821, %s24, 1
        %p823 = scmp.lt.s32.totalorder %s25, 1
        %s824 = scalar_select %p823, %s25, 1
        %s825 = smul.addr %s822, 2
        %s826 = sadd.s32 %s824, %s825
        %s827 = scalar_lea.vmem %s6, %s826
      $region68: #{base_pointnet_fwd.21} parent=51 // pred_fallthru
        _
    $region52: #{base_pointnet_fwd.21} parent=5 // pred_fallthru
      _
  $region6: #{base_pointnet_fwd.21} parent=0 // loop_footer
    %s17 = sadd.s32 1, %s13
  $region7: #{base_pointnet_fwd.21} parent=0 // loop_footer_branch
    %12 = sbr.rel target = $region3
  $region8: #{base_pointnet_fwd.21} parent=0 // loop_exit
    _

// kernel: base_pointnet_fwd.22
$region0: #{base_pointnet_fwd.22}
  #allocation0 [shape = 'u32[]', space=smem, size = 0x4, offset = 0x4, fixed_abs, tag = 'smem constant byte address 0x4 - core index']
  #allocation1 [shape = 'u32[72,128]{1,0:T(1,128)}', space=vmem, size = 0x9000, scoped, tag = 'internal scratch']
  %s0 = inlined_call_operand.vmem [shape: bf16[512,64], index: 0, kind: input, shape index: {}]
  %s1 = inlined_call_operand.vmem [shape: f32[1,64], index: 1, kind: input, shape index: {}]
  %s2 = inlined_call_operand.vmem [shape: f32[1,64], index: 2, kind: input, shape index: {}]
  %s3 = inlined_call_operand.vmem [shape: bf16[64,64], index: 3, kind: input, shape index: {}]
  %s4 = inlined_call_operand.vmem [shape: bf16[512,64], index: 4, kind: output, shape index: {0}]
  %s5 = inlined_call_operand.vmem [shape: f32[4,1,64], index: 5, kind: output, shape index: {1}]
  %s6 = inlined_call_operand.vmem [shape: f32[4,1,64], index: 6, kind: output, shape index: {2}]
  %7 = xla_tuple %s4, %s5, %s6
  %s8 = sld [smem:[#allocation0]]
  $region65: #{base_pointnet_fwd.22} parent=0
    _
  %s10 = ssub.s32 1, %s8
  %s11 = scalar_select 0, %s10, %s8
  loop: start=0, step=1, limit=6
  $region2: #{base_pointnet_fwd.22} parent=0 // loop_pre_header
    _
  $region3: #{base_pointnet_fwd.22} parent=0 // loop_header
    %s13 = sphi 0, %s17
    %p14 = scmp.ge.s32.totalorder %s13, 6
    %s23 = sphi 0, %s25
    %s26 = sphi 0, %s23
    %s27 = sphi 0, %s26
    %s43 = sphi 0, %s27
    %s47 = sphi 0, %s47
    %s49 = sphi 0, %s47
    %s50 = sphi 0, %s49
    %s64 = sphi 0, %s50
    %s68 = sphi 0, %s68
    %s70 = sphi 0, %s68
    %s71 = sphi 0, %s70
    %s85 = sphi 0, %s71
    %s89 = sphi 0, %s89
    %s91 = sphi 0, %s89
    %s92 = sphi 0, %s91
    %s106 = sphi 0, %s92
    %s112 = sphi 0, %s114
    %s115 = sphi 0, %s112
    %s116 = sphi 0, %s115
    %s132 = sphi 0, %s116
    %s138 = sphi 0, %s140
    %s141 = sphi 0, %s138
    %s142 = sphi 0, %s141
    %s158 = sphi 0, %s142
    %s164 = sphi 0, %s166
    %s167 = sphi 0, %s164
    %s168 = sphi 0, %s167
    %s184 = sphi 0, %s168
  $region4: #{base_pointnet_fwd.22} parent=0 // loop_header_branch
    %16 = sbr.rel (%p14) target = $region8
  $region5: #{base_pointnet_fwd.22} parent=0 // loop_body
    %s18 = ssub.s32 %s13, 1
    %s19 = ssub.s32 %s13, 2
    %s20 = sadd.s32 %s13, 1
    %s21 = ssub.s32 %s13, %s20
    %p22 = scmp.eq.s32.totalorder %s21, 0
    %s24 = sadd.s32 %s23, 1
    %s25 = scalar_select %p22, %s23, %s24
    %p28 = pneg %p22
    %p29 = scmp.eq.s32.totalorder %s13, 3
    %p30 = por %p28, %p29
    %p31 = scmp.ne.s32.totalorder %s23, %s26
    %p32 = scmp.eq.s32.totalorder %s13, 0
    %p33 = por %p31, %p32
    %p34 = scmp.ne.s32.totalorder %s23, %s26
    %p35 = scmp.eq.s32.totalorder %s18, 3
    %p36 = por %p34, %p35
    %p37 = scmp.ne.s32.totalorder %s26, %s27
    %p38 = scmp.eq.s32.totalorder %s18, 0
    %p39 = por %p37, %p38
    %p40 = scmp.ne.s32.totalorder %s26, %s27
    %p41 = scmp.eq.s32.totalorder %s19, 3
    %p42 = por %p40, %p41
    %p44 = scmp.ne.s32.totalorder %s27, %s43
    %p45 = scmp.eq.s32.totalorder %s19, 0
    %p46 = por %p44, %p45
    %s48 = sadd.s32 %s47, 1
    %p51 = scmp.eq.s32.totalorder %s13, 3
    %p52 = scmp.ne.s32.totalorder %s47, %s49
    %p53 = scmp.eq.s32.totalorder %s13, 0
    %p54 = por %p52, %p53
    %p55 = scmp.ne.s32.totalorder %s47, %s49
    %p56 = scmp.eq.s32.totalorder %s18, 3
    %p57 = por %p55, %p56
    %p58 = scmp.ne.s32.totalorder %s49, %s50
    %p59 = scmp.eq.s32.totalorder %s18, 0
    %p60 = por %p58, %p59
    %p61 = scmp.ne.s32.totalorder %s49, %s50
    %p62 = scmp.eq.s32.totalorder %s19, 3
    %p63 = por %p61, %p62
    %p65 = scmp.ne.s32.totalorder %s50, %s64
    %p66 = scmp.eq.s32.totalorder %s19, 0
    %p67 = por %p65, %p66
    %s69 = sadd.s32 %s68, 1
    %p72 = scmp.eq.s32.totalorder %s13, 3
    %p73 = scmp.ne.s32.totalorder %s68, %s70
    %p74 = scmp.eq.s32.totalorder %s13, 0
    %p75 = por %p73, %p74
    %p76 = scmp.ne.s32.totalorder %s68, %s70
    %p77 = scmp.eq.s32.totalorder %s18, 3
    %p78 = por %p76, %p77
    %p79 = scmp.ne.s32.totalorder %s70, %s71
    %p80 = scmp.eq.s32.totalorder %s18, 0
    %p81 = por %p79, %p80
    %p82 = scmp.ne.s32.totalorder %s70, %s71
    %p83 = scmp.eq.s32.totalorder %s19, 3
    %p84 = por %p82, %p83
    %p86 = scmp.ne.s32.totalorder %s71, %s85
    %p87 = scmp.eq.s32.totalorder %s19, 0
    %p88 = por %p86, %p87
    %s90 = sadd.s32 %s89, 1
    %p93 = scmp.eq.s32.totalorder %s13, 3
    %p94 = scmp.ne.s32.totalorder %s89, %s91
    %p95 = scmp.eq.s32.totalorder %s13, 0
    %p96 = por %p94, %p95
    %p97 = scmp.ne.s32.totalorder %s89, %s91
    %p98 = scmp.eq.s32.totalorder %s18, 3
    %p99 = por %p97, %p98
    %p100 = scmp.ne.s32.totalorder %s91, %s92
    %p101 = scmp.eq.s32.totalorder %s18, 0
    %p102 = por %p100, %p101
    %p103 = scmp.ne.s32.totalorder %s91, %s92
    %p104 = scmp.eq.s32.totalorder %s19, 3
    %p105 = por %p103, %p104
    %p107 = scmp.ne.s32.totalorder %s92, %s106
    %p108 = scmp.eq.s32.totalorder %s19, 0
    %p109 = por %p107, %p108
    %s110 = ssub.s32 %s13, %s20
    %p111 = scmp.eq.s32.totalorder %s110, 0
    %s113 = sadd.s32 %s112, 1
    %s114 = scalar_select %p111, %s112, %s113
    %p117 = pneg %p111
    %p118 = scmp.eq.s32.totalorder %s13, 3
    %p119 = por %p117, %p118
    %p120 = scmp.ne.s32.totalorder %s112, %s115
    %p121 = scmp.eq.s32.totalorder %s13, 0
    %p122 = por %p120, %p121
    %p123 = scmp.ne.s32.totalorder %s112, %s115
    %p124 = scmp.eq.s32.totalorder %s18, 3
    %p125 = por %p123, %p124
    %p126 = scmp.ne.s32.totalorder %s115, %s116
    %p127 = scmp.eq.s32.totalorder %s18, 0
    %p128 = por %p126, %p127
    %p129 = scmp.ne.s32.totalorder %s115, %s116
    %p130 = scmp.eq.s32.totalorder %s19, 3
    %p131 = por %p129, %p130
    %p133 = scmp.ne.s32.totalorder %s116, %s132
    %p134 = scmp.eq.s32.totalorder %s19, 0
    %p135 = por %p133, %p134
    %s136 = ssub.s32 %s13, %s20
    %p137 = scmp.eq.s32.totalorder %s136, 0
    %s139 = sadd.s32 %s138, 1
    %s140 = scalar_select %p137, %s138, %s139
    %p143 = pneg %p137
    %p144 = scmp.eq.s32.totalorder %s13, 3
    %p145 = por %p143, %p144
    %p146 = scmp.ne.s32.totalorder %s138, %s141
    %p147 = scmp.eq.s32.totalorder %s13, 0
    %p148 = por %p146, %p147
    %p149 = scmp.ne.s32.totalorder %s138, %s141
    %p150 = scmp.eq.s32.totalorder %s18, 3
    %p151 = por %p149, %p150
    %p152 = scmp.ne.s32.totalorder %s141, %s142
    %p153 = scmp.eq.s32.totalorder %s18, 0
    %p154 = por %p152, %p153
    %p155 = scmp.ne.s32.totalorder %s141, %s142
    %p156 = scmp.eq.s32.totalorder %s19, 3
    %p157 = por %p155, %p156
    %p159 = scmp.ne.s32.totalorder %s142, %s158
    %p160 = scmp.eq.s32.totalorder %s19, 0
    %p161 = por %p159, %p160
    %s162 = ssub.s32 %s13, %s20
    %p163 = scmp.eq.s32.totalorder %s162, 0
    %s165 = sadd.s32 %s164, 1
    %s166 = scalar_select %p163, %s164, %s165
    %p169 = pneg %p163
    %p170 = scmp.eq.s32.totalorder %s13, 3
    %p171 = por %p169, %p170
    %p172 = scmp.ne.s32.totalorder %s164, %s167
    %p173 = scmp.eq.s32.totalorder %s13, 0
    %p174 = por %p172, %p173
    %p175 = scmp.ne.s32.totalorder %s164, %s167
    %p176 = scmp.eq.s32.totalorder %s18, 3
    %p177 = por %p175, %p176
    %p178 = scmp.ne.s32.totalorder %s167, %s168
    %p179 = scmp.eq.s32.totalorder %s18, 0
    %p180 = por %p178, %p179
    %p181 = scmp.ne.s32.totalorder %s167, %s168
    %p182 = scmp.eq.s32.totalorder %s19, 3
    %p183 = por %p181, %p182
    %p185 = scmp.ne.s32.totalorder %s168, %s184
    %p186 = scmp.eq.s32.totalorder %s19, 0
    %p187 = por %p185, %p186
    %p188 = scmp.le.s32.totalorder 1, %s13
    %p189 = scmp.lt.s32.totalorder %s13, 5
    %p190 = pnand %p188, %p189
    %p191 = pneg %p190
    // Predicated region
    $region9: #{base_pointnet_fwd.22} parent=5 // pred_check
      _
    $region10: #{base_pointnet_fwd.22} parent=5 // pred_check_branch
      %193 = sbr.rel (%p190) target = $region12
    $region11: #{base_pointnet_fwd.22} parent=5 // pred_region
      %s194 = ssub.s32 %s13, 1
      // Predicated region
      $region13: #{base_pointnet_fwd.22} parent=11 // pred_check
        %p195 = pneg %p60
      $region14: #{base_pointnet_fwd.22} parent=11 // pred_check_branch
        %197 = sbr.rel (%p195) target = $region16
      $region15: #{base_pointnet_fwd.22} parent=11 // pred_region
        _
      $region16: #{base_pointnet_fwd.22} parent=11 // pred_fallthru
        _
      // Predicated region
      $region17: #{base_pointnet_fwd.22} parent=11 // pred_check
        %p198 = pneg %p81
      $region18: #{base_pointnet_fwd.22} parent=11 // pred_check_branch
        %200 = sbr.rel (%p198) target = $region20
      $region19: #{base_pointnet_fwd.22} parent=11 // pred_region
        _
      $region20: #{base_pointnet_fwd.22} parent=11 // pred_fallthru
        _
      // Predicated region
      $region21: #{base_pointnet_fwd.22} parent=11 // pred_check
        %p201 = pneg %p102
      $region22: #{base_pointnet_fwd.22} parent=11 // pred_check_branch
        %203 = sbr.rel (%p201) target = $region24
      $region23: #{base_pointnet_fwd.22} parent=11 // pred_region
        _
      $region24: #{base_pointnet_fwd.22} parent=11 // pred_fallthru
        _
    $region12: #{base_pointnet_fwd.22} parent=5 // pred_fallthru
      _
    %p204 = scmp.lt.s32.totalorder %s13, 4
    // Predicated region
    $region25: #{base_pointnet_fwd.22} parent=5 // pred_check
      %p205 = pneg %p204
    $region26: #{base_pointnet_fwd.22} parent=5 // pred_check_branch
      %207 = sbr.rel (%p205) target = $region28
    $region27: #{base_pointnet_fwd.22} parent=5 // pred_region
      // Predicated region
      $region29: #{base_pointnet_fwd.22} parent=27 // pred_check
        %p208 = pneg %p33
      $region30: #{base_pointnet_fwd.22} parent=27 // pred_check_branch
        %210 = sbr.rel (%p208) target = $region32
      $region31: #{base_pointnet_fwd.22} parent=27 // pred_region
        %s211 = smul.u32 16, %s13
        %p212 = scmp.lt.s32.totalorder %s211, 63
        %s213 = scalar_select %p212, %s211, 63
        %s214 = smul.addr %s213, 4
        %s215 = scalar_lea.vmem %s0, %s214
        %s216 = smul.u32 16, %s13
      $region32: #{base_pointnet_fwd.22} parent=27 // pred_fallthru
        _
    $region28: #{base_pointnet_fwd.22} parent=5 // pred_fallthru
      _
    %p217 = scmp.le.s32.totalorder 1, %s13
    %p218 = scmp.lt.s32.totalorder %s13, 5
    %p219 = pnand %p217, %p218
    %p220 = pneg %p219
    // Predicated region
    $region33: #{base_pointnet_fwd.22} parent=5 // pred_check
      _
    $region34: #{base_pointnet_fwd.22} parent=5 // pred_check_branch
      %222 = sbr.rel (%p219) target = $region36
    $region35: #{base_pointnet_fwd.22} parent=5 // pred_region
      %s223 = ssub.s32 %s13, 1
      %s224 = smul.u32 16, %s18
      %p225 = scmp.lt.s32.totalorder %s224, 63
      %s226 = scalar_select %p225, %s224, 63
      %s227 = smul.addr %s226, 4
      %s228 = scalar_lea.vmem %s0, %s227
      %p229 = pneg %p39
      %p230 = pneg %p36
      %p231 = pneg %p60
      %p232 = pneg %p57
      %p233 = pneg %p81
      %p234 = pneg %p78
      %p235 = pneg %p102
      %p236 = pneg %p99
      %p237 = pneg %p128
      %p238 = pneg %p125
      %s239 = smul.u32 16, %s18
      %p240 = scmp.lt.s32.totalorder %s239, 63
      %s241 = scalar_select %p240, %s239, 63
      %s242 = smul.addr %s241, 4
      %s243 = scalar_lea.vmem %s4, %s242
      %p244 = pneg %p154
      %p245 = pneg %p151
      %p246 = scmp.lt.s32.totalorder %s18, 3
      %s247 = scalar_select %p246, %s18, 3
      %s248 = scalar_lea.vmem %s5, %s247
      %p249 = pneg %p180
      %p250 = pneg %p177
      %p251 = scmp.lt.s32.totalorder %s18, 3
      %s252 = scalar_select %p251, %s18, 3
      %s253 = scalar_lea.vmem %s6, %s252
      %s254 = smul.u32 16, %s18
      %p255 = scmp.lt.s32.totalorder %s254, 63
      %s256 = scalar_select %p255, %s254, 63
      %s257 = smul.addr %s256, 4
      %s258 = scalar_lea.vmem %s0, %s257
      %s259 = smul.u32 16, %s18
      %s260 = smul.u32 16, %s18
      %p261 = scmp.lt.s32.totalorder %s260, 63
      %s262 = scalar_select %p261, %s260, 63
      %s263 = smul.addr %s262, 4
      %s264 = scalar_lea.vmem %s4, %s263
      %s265 = smul.u32 16, %s18
      %p266 = scmp.lt.s32.totalorder %s18, 3
      %s267 = scalar_select %p266, %s18, 3
      %s268 = scalar_lea.vmem %s5, %s267
      %p269 = scmp.lt.s32.totalorder %s18, 3
      %s270 = scalar_select %p269, %s18, 3
      %s271 = scalar_lea.vmem %s6, %s270
      %v273 = vld [vmem:[%s258] sm:$0xf]
      %v274 = vld [vmem:[%s258 + $0x4] sm:$0xf]
      %v275 = vld [vmem:[%s258 + $0x8] sm:$0xf]
      %v276 = vld [vmem:[%s258 + $0xc] sm:$0xf]
      %v277 = vld [vmem:[%s258 + $0x10] sm:$0xf]
      %v278 = vld [vmem:[%s258 + $0x14] sm:$0xf]
      %v279 = vld [vmem:[%s258 + $0x18] sm:$0xf]
      %v280 = vld [vmem:[%s258 + $0x1c] sm:$0xf]
      %v281 = vld [vmem:[%s258 + $0x20] sm:$0xf]
      %v282 = vld [vmem:[%s258 + $0x24] sm:$0xf]
      %v283 = vld [vmem:[%s258 + $0x28] sm:$0xf]
      %v284 = vld [vmem:[%s258 + $0x2c] sm:$0xf]
      %v285 = vld [vmem:[%s258 + $0x30] sm:$0xf]
      %v286 = vld [vmem:[%s258 + $0x34] sm:$0xf]
      %v287 = vld [vmem:[%s258 + $0x38] sm:$0xf]
      %v288 = vld [vmem:[%s258 + $0x3c] sm:$0xf]
      %v289 = vunpack.c.l.bf16 %v273
      %v290 = vunpack.c.l.bf16 %v274
      %v291 = vunpack.c.l.bf16 %v275
      %v292 = vunpack.c.l.bf16 %v276
      %v293 = vunpack.c.l.bf16 %v277
      %v294 = vunpack.c.l.bf16 %v278
      %v295 = vunpack.c.l.bf16 %v279
      %v296 = vunpack.c.l.bf16 %v280
      %v297 = vunpack.c.l.bf16 %v281
      %v298 = vunpack.c.l.bf16 %v282
      %v299 = vunpack.c.l.bf16 %v283
      %v300 = vunpack.c.l.bf16 %v284
      %v301 = vunpack.c.l.bf16 %v285
      %v302 = vunpack.c.l.bf16 %v286
      %v303 = vunpack.c.l.bf16 %v287
      %v304 = vunpack.c.l.bf16 %v288
      %v305 = vld [vmem:[%s1] sm:$0x1]
      %v307 = vperm.slane %v305, 0
      %v309 = vmul.f32 %v289, %v307
      %v310 = vmul.f32 %v290, %v307
      %v311 = vmul.f32 %v291, %v307
      %v312 = vmul.f32 %v292, %v307
      %v313 = vmul.f32 %v293, %v307
      %v314 = vmul.f32 %v294, %v307
      %v315 = vmul.f32 %v295, %v307
      %v316 = vmul.f32 %v296, %v307
      %v317 = vmul.f32 %v297, %v307
      %v318 = vmul.f32 %v298, %v307
      %v319 = vmul.f32 %v299, %v307
      %v320 = vmul.f32 %v300, %v307
      %v321 = vmul.f32 %v301, %v307
      %v322 = vmul.f32 %v302, %v307
      %v323 = vmul.f32 %v303, %v307
      %v324 = vmul.f32 %v304, %v307
      %v325 = vld [vmem:[%s2] sm:$0x1]
      %v327 = vperm.slane %v325, 0
      %v329 = vadd.f32 %v309, %v327
      %v330 = vadd.f32 %v310, %v327
      %v331 = vadd.f32 %v311, %v327
      %v332 = vadd.f32 %v312, %v327
      %v333 = vadd.f32 %v313, %v327
      %v334 = vadd.f32 %v314, %v327
      %v335 = vadd.f32 %v315, %v327
      %v336 = vadd.f32 %v316, %v327
      %v337 = vadd.f32 %v317, %v327
      %v338 = vadd.f32 %v318, %v327
      %v339 = vadd.f32 %v319, %v327
      %v340 = vadd.f32 %v320, %v327
      %v341 = vadd.f32 %v321, %v327
      %v342 = vadd.f32 %v322, %v327
      %v343 = vadd.f32 %v323, %v327
      %v344 = vadd.f32 %v324, %v327
      %v345 = vmax.f32 %v329, 0.0
      %v346 = vmax.f32 %v330, 0.0
      %v347 = vmax.f32 %v331, 0.0
      %v348 = vmax.f32 %v332, 0.0
      %v349 = vmax.f32 %v333, 0.0
      %v350 = vmax.f32 %v334, 0.0
      %v351 = vmax.f32 %v335, 0.0
      %v352 = vmax.f32 %v336, 0.0
      %v353 = vmax.f32 %v337, 0.0
      %v354 = vmax.f32 %v338, 0.0
      %v355 = vmax.f32 %v339, 0.0
      %v356 = vmax.f32 %v340, 0.0
      %v357 = vmax.f32 %v341, 0.0
      %v358 = vmax.f32 %v342, 0.0
      %v359 = vmax.f32 %v343, 0.0
      %v360 = vmax.f32 %v344, 0.0
      %v361 = vpack.c.bf16 %v346, %v345
      %v362 = vpack.c.bf16 %v348, %v347
      %v363 = vpack.c.bf16 %v350, %v349
      %v364 = vpack.c.bf16 %v352, %v351
      %v365 = vpack.c.bf16 %v354, %v353
      %v366 = vpack.c.bf16 %v356, %v355
      %v367 = vpack.c.bf16 %v358, %v357
      %v368 = vpack.c.bf16 %v360, %v359
      %v369 = vld [vmem:[%s3] sm:$0xf]
      %v370 = vld [vmem:[%s3 + $0x4] sm:$0xf]
      %v371 = vld [vmem:[%s3 + $0x8] sm:$0xf]
      %v372 = vld [vmem:[%s3 + $0xc] sm:$0xf]
      %v373 = vld [vmem:[%s3 + $0x10] sm:$0xf]
      %v374 = vld [vmem:[%s3 + $0x14] sm:$0xf]
      %v375 = vld [vmem:[%s3 + $0x18] sm:$0xf]
      %v376 = vld [vmem:[%s3 + $0x1c] sm:$0xf]
      %v385 = vunpack.c.l.b16 %v369
      %v386 = vunpack.c.l.b16 %v370
      %v387 = vunpack.c.l.b16 %v371
      %v388 = vunpack.c.l.b16 %v372
      %v389 = vunpack.c.l.b16 %v373
      %v390 = vunpack.c.l.b16 %v374
      %v391 = vunpack.c.l.b16 %v375
      %v392 = vunpack.c.l.b16 %v376
      %v393 = vpack.c.b16 %v386, %v385
      %v394 = vpack.c.b16 %v388, %v387
      %v395 = vpack.c.b16 %v390, %v389
      %v396 = vpack.c.b16 %v392, %v391
      %vm401 = vcmask 523264
      %v403 = vsel %vm401, %v361, 0
      %v406 = vsel %vm401, %v362, 0
      %v409 = vsel %vm401, %v363, 0
      %v412 = vsel %vm401, %v364, 0
      %v415 = vsel %vm401, %v365, 0
      %v418 = vsel %vm401, %v366, 0
      %v421 = vsel %vm401, %v367, 0
      %v424 = vsel %vm401, %v368, 0
      %426 = vmatpush.bf16.msra.mxu0 0
      %427 = vmatpush.bf16.msra.mxu0 0
      %428 = vmatpush.bf16.msra.mxu0 0
      %429 = vmatpush.bf16.msra.mxu0 0
      %430 = vmatpush.bf16.msra.mxu0 %v396
      %431 = vmatpush.bf16.msra.mxu0 %v395
      %432 = vmatpush.bf16.msra.mxu0 %v394
      %433 = vmatpush.bf16.msra.mxu0 %v393
      %434 = vmatmul.bf16.gmra.mxu0 %v403
      %v435 = vpop.f32.mrf.mxu0
      %v436 = vadd.f32 0.0, %v435
      %v437 = vpop.f32.mrf.mxu0
      %v438 = vadd.f32 0.0, %v437
      %439 = vmatmul.bf16.gmra.mxu0 %v406
      %v440 = vpop.f32.mrf.mxu0
      %v441 = vadd.f32 0.0, %v440
      %v442 = vpop.f32.mrf.mxu0
      %v443 = vadd.f32 0.0, %v442
      %444 = vmatmul.bf16.gmra.mxu0 %v409
      %v445 = vpop.f32.mrf.mxu0
      %v446 = vadd.f32 0.0, %v445
      %v447 = vpop.f32.mrf.mxu0
      %v448 = vadd.f32 0.0, %v447
      %449 = vmatmul.bf16.gmra.mxu0 %v412
      %v450 = vpop.f32.mrf.mxu0
      %v451 = vadd.f32 0.0, %v450
      %v452 = vpop.f32.mrf.mxu0
      %v453 = vadd.f32 0.0, %v452
      %454 = vmatmul.bf16.gmra.mxu0 %v415
      %v455 = vpop.f32.mrf.mxu0
      %v456 = vadd.f32 0.0, %v455
      %v457 = vpop.f32.mrf.mxu0
      %v458 = vadd.f32 0.0, %v457
      %459 = vmatmul.bf16.gmra.mxu0 %v418
      %v460 = vpop.f32.mrf.mxu0
      %v461 = vadd.f32 0.0, %v460
      %v462 = vpop.f32.mrf.mxu0
      %v463 = vadd.f32 0.0, %v462
      %464 = vmatmul.bf16.gmra.mxu0 %v421
      %v465 = vpop.f32.mrf.mxu0
      %v466 = vadd.f32 0.0, %v465
      %v467 = vpop.f32.mrf.mxu0
      %v468 = vadd.f32 0.0, %v467
      %469 = vmatmul.bf16.gmra.mxu0 %v424
      %v470 = vpop.f32.mrf.mxu0
      %v471 = vadd.f32 0.0, %v470
      %v472 = vpop.f32.mrf.mxu0
      %v473 = vadd.f32 0.0, %v472
      %474 = vdwg.mxu0
      %v475 = vsel %vm401, %v436, 0.0
      %v476 = vsel %vm401, %v438, 0.0
      %v477 = vadd.f32 %v475, %v476
      %v478 = vsel %vm401, %v441, 0.0
      %v479 = vadd.f32 %v477, %v478
      %v480 = vsel %vm401, %v443, 0.0
      %v481 = vadd.f32 %v479, %v480
      %v482 = vsel %vm401, %v446, 0.0
      %v483 = vadd.f32 %v481, %v482
      %v484 = vsel %vm401, %v448, 0.0
      %v485 = vadd.f32 %v483, %v484
      %v486 = vsel %vm401, %v451, 0.0
      %v487 = vadd.f32 %v485, %v486
      %v488 = vsel %vm401, %v453, 0.0
      %v489 = vadd.f32 %v487, %v488
      %v490 = vsel %vm401, %v456, 0.0
      %v491 = vadd.f32 %v489, %v490
      %v492 = vsel %vm401, %v458, 0.0
      %v493 = vadd.f32 %v491, %v492
      %v494 = vsel %vm401, %v461, 0.0
      %v495 = vadd.f32 %v493, %v494
      %v496 = vsel %vm401, %v463, 0.0
      %v497 = vadd.f32 %v495, %v496
      %v498 = vsel %vm401, %v466, 0.0
      %v499 = vadd.f32 %v497, %v498
      %v500 = vsel %vm401, %v468, 0.0
      %v501 = vadd.f32 %v499, %v500
      %v502 = vsel %vm401, %v471, 0.0
      %v503 = vadd.f32 %v501, %v502
      %v504 = vsel %vm401, %v473, 0.0
      %v505 = vadd.f32 %v503, %v504
      %v506 = vrot.slane %v505, 4
      %v507 = vadd.f32 %v505, %v506
      %v508 = vrot.slane %v507, 2
      %v509 = vadd.f32 %v507, %v508
      %v510 = vrot.slane %v509, 1
      %v511 = vadd.f32 %v509, %v510
      %vm512 = vcmask 516096
      %513 = vst.msk [vmem:[%s268] sm:$0x1] %vm512, %v511
      %v514 = vmul.f32 %v436, %v436
      %v515 = vmul.f32 %v438, %v438
      %v516 = vmul.f32 %v441, %v441
      %v517 = vmul.f32 %v443, %v443
      %v518 = vmul.f32 %v446, %v446
      %v519 = vmul.f32 %v448, %v448
      %v520 = vmul.f32 %v451, %v451
      %v521 = vmul.f32 %v453, %v453
      %v522 = vmul.f32 %v456, %v456
      %v523 = vmul.f32 %v458, %v458
      %v524 = vmul.f32 %v461, %v461
      %v525 = vmul.f32 %v463, %v463
      %v526 = vmul.f32 %v466, %v466
      %v527 = vmul.f32 %v468, %v468
      %v528 = vmul.f32 %v471, %v471
      %v529 = vmul.f32 %v473, %v473
      %v530 = vsel %vm401, %v514, 0.0
      %v531 = vsel %vm401, %v515, 0.0
      %v532 = vadd.f32 %v530, %v531
      %v533 = vsel %vm401, %v516, 0.0
      %v534 = vadd.f32 %v532, %v533
      %v535 = vsel %vm401, %v517, 0.0
      %v536 = vadd.f32 %v534, %v535
      %v537 = vsel %vm401, %v518, 0.0
      %v538 = vadd.f32 %v536, %v537
      %v539 = vsel %vm401, %v519, 0.0
      %v540 = vadd.f32 %v538, %v539
      %v541 = vsel %vm401, %v520, 0.0
      %v542 = vadd.f32 %v540, %v541
      %v543 = vsel %vm401, %v521, 0.0
      %v544 = vadd.f32 %v542, %v543
      %v545 = vsel %vm401, %v522, 0.0
      %v546 = vadd.f32 %v544, %v545
      %v547 = vsel %vm401, %v523, 0.0
      %v548 = vadd.f32 %v546, %v547
      %v549 = vsel %vm401, %v524, 0.0
      %v550 = vadd.f32 %v548, %v549
      %v551 = vsel %vm401, %v525, 0.0
      %v552 = vadd.f32 %v550, %v551
      %v553 = vsel %vm401, %v526, 0.0
      %v554 = vadd.f32 %v552, %v553
      %v555 = vsel %vm401, %v527, 0.0
      %v556 = vadd.f32 %v554, %v555
      %v557 = vsel %vm401, %v528, 0.0
      %v558 = vadd.f32 %v556, %v557
      %v559 = vsel %vm401, %v529, 0.0
      %v560 = vadd.f32 %v558, %v559
      %v561 = vrot.slane %v560, 4
      %v562 = vadd.f32 %v560, %v561
      %v563 = vrot.slane %v562, 2
      %v564 = vadd.f32 %v562, %v563
      %v565 = vrot.slane %v564, 1
      %v566 = vadd.f32 %v564, %v565
      %567 = vst.msk [vmem:[%s271] sm:$0x1] %vm512, %v566
      %v568 = vpack.c.bf16 %v436, %v436
      %v569 = vpack.c.bf16 %v438, %v438
      %v570 = vpack.c.bf16 %v441, %v441
      %v571 = vpack.c.bf16 %v443, %v443
      %v572 = vpack.c.bf16 %v446, %v446
      %v573 = vpack.c.bf16 %v448, %v448
      %v574 = vpack.c.bf16 %v451, %v451
      %v575 = vpack.c.bf16 %v453, %v453
      %v576 = vpack.c.bf16 %v456, %v456
      %v577 = vpack.c.bf16 %v458, %v458
      %v578 = vpack.c.bf16 %v461, %v461
      %v579 = vpack.c.bf16 %v463, %v463
      %v580 = vpack.c.bf16 %v466, %v466
      %v581 = vpack.c.bf16 %v468, %v468
      %v582 = vpack.c.bf16 %v471, %v471
      %v583 = vpack.c.bf16 %v473, %v473
      %vm584 = vcmask 519168
      %585 = vst.msk [vmem:[%s264] sm:$0xf] %vm584, %v568
      %586 = vst.msk [vmem:[%s264 + $0x4] sm:$0xf] %vm584, %v569
      %587 = vst.msk [vmem:[%s264 + $0x8] sm:$0xf] %vm584, %v570
      %588 = vst.msk [vmem:[%s264 + $0xc] sm:$0xf] %vm584, %v571
      %589 = vst.msk [vmem:[%s264 + $0x10] sm:$0xf] %vm584, %v572
      %590 = vst.msk [vmem:[%s264 + $0x14] sm:$0xf] %vm584, %v573
      %591 = vst.msk [vmem:[%s264 + $0x18] sm:$0xf] %vm584, %v574
      %592 = vst.msk [vmem:[%s264 + $0x1c] sm:$0xf] %vm584, %v575
      %593 = vst.msk [vmem:[%s264 + $0x20] sm:$0xf] %vm584, %v576
      %594 = vst.msk [vmem:[%s264 + $0x24] sm:$0xf] %vm584, %v577
      %595 = vst.msk [vmem:[%s264 + $0x28] sm:$0xf] %vm584, %v578
      %596 = vst.msk [vmem:[%s264 + $0x2c] sm:$0xf] %vm584, %v579
      %597 = vst.msk [vmem:[%s264 + $0x30] sm:$0xf] %vm584, %v580
      %598 = vst.msk [vmem:[%s264 + $0x34] sm:$0xf] %vm584, %v581
      %599 = vst.msk [vmem:[%s264 + $0x38] sm:$0xf] %vm584, %v582
      %600 = vst.msk [vmem:[%s264 + $0x3c] sm:$0xf] %vm584, %v583
      %s601 = smul.u32 16, %s18
      %p602 = scmp.lt.s32.totalorder %s601, 63
      %s603 = scalar_select %p602, %s601, 63
      %s604 = smul.addr %s603, 4
      %s605 = scalar_lea.vmem %s4, %s604
      %p606 = scmp.lt.s32.totalorder %s18, 3
      %s607 = scalar_select %p606, %s18, 3
      %s608 = scalar_lea.vmem %s5, %s607
      %p609 = scmp.lt.s32.totalorder %s18, 3
      %s610 = scalar_select %p609, %s18, 3
      %s611 = scalar_lea.vmem %s6, %s610
      // Predicated region
      $region37: #{base_pointnet_fwd.22} parent=35 // pred_check
        %p612 = pneg %p125
      $region38: #{base_pointnet_fwd.22} parent=35 // pred_check_branch
        %614 = sbr.rel (%p612) target = $region40
      $region39: #{base_pointnet_fwd.22} parent=35 // pred_region
        %s615 = smul.u32 16, %s18
      $region40: #{base_pointnet_fwd.22} parent=35 // pred_fallthru
        _
      // Predicated region
      $region41: #{base_pointnet_fwd.22} parent=35 // pred_check
        %p616 = pneg %p151
      $region42: #{base_pointnet_fwd.22} parent=35 // pred_check_branch
        %618 = sbr.rel (%p616) target = $region44
      $region43: #{base_pointnet_fwd.22} parent=35 // pred_region
        _
      $region44: #{base_pointnet_fwd.22} parent=35 // pred_fallthru
        _
      // Predicated region
      $region45: #{base_pointnet_fwd.22} parent=35 // pred_check
        %p619 = pneg %p177
      $region46: #{base_pointnet_fwd.22} parent=35 // pred_check_branch
        %621 = sbr.rel (%p619) target = $region48
      $region47: #{base_pointnet_fwd.22} parent=35 // pred_region
        _
      $region48: #{base_pointnet_fwd.22} parent=35 // pred_fallthru
        _
    $region36: #{base_pointnet_fwd.22} parent=5 // pred_fallthru
      _
    %p622 = scmp.le.s32.totalorder 2, %s13
    // Predicated region
    $region49: #{base_pointnet_fwd.22} parent=5 // pred_check
      %p623 = pneg %p622
    $region50: #{base_pointnet_fwd.22} parent=5 // pred_check_branch
      %625 = sbr.rel (%p623) target = $region52
    $region51: #{base_pointnet_fwd.22} parent=5 // pred_region
      %s626 = ssub.s32 %s13, 2
      // Predicated region
      $region53: #{base_pointnet_fwd.22} parent=51 // pred_check
        %p627 = pneg %p131
      $region54: #{base_pointnet_fwd.22} parent=51 // pred_check_branch
        %629 = sbr.rel (%p627) target = $region56
      $region55: #{base_pointnet_fwd.22} parent=51 // pred_region
        %s630 = smul.u32 16, %s19
        %p631 = scmp.lt.s32.totalorder %s630, 63
        %s632 = scalar_select %p631, %s630, 63
        %s633 = smul.addr %s632, 4
        %s634 = scalar_lea.vmem %s4, %s633
      $region56: #{base_pointnet_fwd.22} parent=51 // pred_fallthru
        _
      // Predicated region
      $region57: #{base_pointnet_fwd.22} parent=51 // pred_check
        %p635 = pneg %p157
      $region58: #{base_pointnet_fwd.22} parent=51 // pred_check_branch
        %637 = sbr.rel (%p635) target = $region60
      $region59: #{base_pointnet_fwd.22} parent=51 // pred_region
        %p638 = scmp.lt.s32.totalorder %s19, 3
        %s639 = scalar_select %p638, %s19, 3
        %s640 = scalar_lea.vmem %s5, %s639
      $region60: #{base_pointnet_fwd.22} parent=51 // pred_fallthru
        _
      // Predicated region
      $region61: #{base_pointnet_fwd.22} parent=51 // pred_check
        %p641 = pneg %p183
      $region62: #{base_pointnet_fwd.22} parent=51 // pred_check_branch
        %643 = sbr.rel (%p641) target = $region64
      $region63: #{base_pointnet_fwd.22} parent=51 // pred_region
        %p644 = scmp.lt.s32.totalorder %s19, 3
        %s645 = scalar_select %p644, %s19, 3
        %s646 = scalar_lea.vmem %s6, %s645
      $region64: #{base_pointnet_fwd.22} parent=51 // pred_fallthru
        _
    $region52: #{base_pointnet_fwd.22} parent=5 // pred_fallthru
      _
  $region6: #{base_pointnet_fwd.22} parent=0 // loop_footer
    %s17 = sadd.s32 1, %s13
  $region7: #{base_pointnet_fwd.22} parent=0 // loop_footer_branch
    %12 = sbr.rel target = $region3
  $region8: #{base_pointnet_fwd.22} parent=0 // loop_exit
    _

// kernel: base_pointnet_fwd.20
$region0: #{base_pointnet_fwd.20}
  #allocation0 [shape = 'u32[]', space=smem, size = 0x4, offset = 0x4, fixed_abs, tag = 'smem constant byte address 0x4 - core index']
  #allocation1 [shape = 'u32[72,128]{1,0:T(1,128)}', space=vmem, size = 0x9000, scoped, tag = 'internal scratch']
  %s0 = inlined_call_operand.vmem [shape: f32[2,256], index: 0, kind: input, shape index: {}]
  %s1 = inlined_call_operand.vmem [shape: bf16[256,256], index: 1, kind: input, shape index: {}]
  %s2 = inlined_call_operand.vmem [shape: f32[1,256], index: 2, kind: input, shape index: {}]
  %s3 = inlined_call_operand.vmem [shape: f32[1,256], index: 3, kind: input, shape index: {}]
  %s4 = inlined_call_operand.vmem [shape: bf16[256,128], index: 4, kind: input, shape index: {}]
  %s5 = inlined_call_operand.vmem [shape: f32[1,128], index: 5, kind: input, shape index: {}]
  %s6 = inlined_call_operand.vmem [shape: f32[1,128], index: 6, kind: input, shape index: {}]
  %s7 = inlined_call_operand.vmem [shape: bf16[128,16], index: 7, kind: input, shape index: {}]
  %s8 = inlined_call_operand.vmem [shape: f32[1,16], index: 8, kind: input, shape index: {}]
  %s9 = inlined_call_operand.vmem [shape: f32[2,16], index: 9, kind: output, shape index: {}]
  %s10 = sld [smem:[#allocation0]]
  $region46: #{base_pointnet_fwd.20} parent=0
    _
  %s12 = ssub.s32 1, %s10
  %s13 = scalar_select 0, %s12, %s10
  // Predicated region
  $region2: #{base_pointnet_fwd.20} parent=0 // pred_check
    _
  $region3: #{base_pointnet_fwd.20} parent=0 // pred_check_branch
    %15 = sbr.rel (0) target = $region5
  $region4: #{base_pointnet_fwd.20} parent=0 // pred_region
    _
  $region5: #{base_pointnet_fwd.20} parent=0 // pred_fallthru
    _
  // Predicated region
  $region6: #{base_pointnet_fwd.20} parent=0 // pred_check
    _
  $region7: #{base_pointnet_fwd.20} parent=0 // pred_check_branch
    %17 = sbr.rel (0) target = $region9
  $region8: #{base_pointnet_fwd.20} parent=0 // pred_region
    _
  $region9: #{base_pointnet_fwd.20} parent=0 // pred_fallthru
    _
  // Predicated region
  $region10: #{base_pointnet_fwd.20} parent=0 // pred_check
    _
  $region11: #{base_pointnet_fwd.20} parent=0 // pred_check_branch
    %19 = sbr.rel (0) target = $region13
  $region12: #{base_pointnet_fwd.20} parent=0 // pred_region
    _
  $region13: #{base_pointnet_fwd.20} parent=0 // pred_fallthru
    _
  // Predicated region
  $region14: #{base_pointnet_fwd.20} parent=0 // pred_check
    _
  $region15: #{base_pointnet_fwd.20} parent=0 // pred_check_branch
    %21 = sbr.rel (0) target = $region17
  $region16: #{base_pointnet_fwd.20} parent=0 // pred_region
    _
  $region17: #{base_pointnet_fwd.20} parent=0 // pred_fallthru
    _
  // Predicated region
  $region18: #{base_pointnet_fwd.20} parent=0 // pred_check
    _
  $region19: #{base_pointnet_fwd.20} parent=0 // pred_check_branch
    %23 = sbr.rel (0) target = $region21
  $region20: #{base_pointnet_fwd.20} parent=0 // pred_region
    _
  $region21: #{base_pointnet_fwd.20} parent=0 // pred_fallthru
    _
  // Predicated region
  $region22: #{base_pointnet_fwd.20} parent=0 // pred_check
    _
  $region23: #{base_pointnet_fwd.20} parent=0 // pred_check_branch
    %25 = sbr.rel (0) target = $region25
  $region24: #{base_pointnet_fwd.20} parent=0 // pred_region
    _
  $region25: #{base_pointnet_fwd.20} parent=0 // pred_fallthru
    _
  // Predicated region
  $region26: #{base_pointnet_fwd.20} parent=0 // pred_check
    _
  $region27: #{base_pointnet_fwd.20} parent=0 // pred_check_branch
    %27 = sbr.rel (0) target = $region29
  $region28: #{base_pointnet_fwd.20} parent=0 // pred_region
    _
  $region29: #{base_pointnet_fwd.20} parent=0 // pred_fallthru
    _
  // Predicated region
  $region30: #{base_pointnet_fwd.20} parent=0 // pred_check
    _
  $region31: #{base_pointnet_fwd.20} parent=0 // pred_check_branch
    %29 = sbr.rel (0) target = $region33
  $region32: #{base_pointnet_fwd.20} parent=0 // pred_region
    _
  $region33: #{base_pointnet_fwd.20} parent=0 // pred_fallthru
    _
  // Predicated region
  $region34: #{base_pointnet_fwd.20} parent=0 // pred_check
    _
  $region35: #{base_pointnet_fwd.20} parent=0 // pred_check_branch
    %31 = sbr.rel (0) target = $region37
  $region36: #{base_pointnet_fwd.20} parent=0 // pred_region
    _
  $region37: #{base_pointnet_fwd.20} parent=0 // pred_fallthru
    _
  %v32 = vld [vmem:[%s0] sm:$0xf]
  %34 = vst [vmem:[#allocation1] ss:$4 sm:$0xff] %v32
  %v35 = vld.sshfl [vmem:[#allocation1] sm:$0xff pattern:$0x73625140]
  %v36 = vld.sshfl [vmem:[#allocation1 + $0x8] sm:$0xff pattern:$0x73625140]
  %v39 = vpack.c.bf16 %v35, %v35
  %v40 = vpack.c.bf16 %v36, %v36
  %v41 = vld [vmem:[%s1] sm:$0xff]
  %v42 = vld [vmem:[%s1 + $0x8] sm:$0xff]
  %v43 = vld [vmem:[%s1 + $0x10] sm:$0xff]
  %v44 = vld [vmem:[%s1 + $0x18] sm:$0xff]
  %v45 = vld [vmem:[%s1 + $0x20] sm:$0xff]
  %v46 = vld [vmem:[%s1 + $0x28] sm:$0xff]
  %v47 = vld [vmem:[%s1 + $0x30] sm:$0xff]
  %v48 = vld [vmem:[%s1 + $0x38] sm:$0xff]
  %v49 = vld [vmem:[%s1 + $0x40] sm:$0xff]
  %v50 = vld [vmem:[%s1 + $0x48] sm:$0xff]
  %v51 = vld [vmem:[%s1 + $0x50] sm:$0xff]
  %v52 = vld [vmem:[%s1 + $0x58] sm:$0xff]
  %v53 = vld [vmem:[%s1 + $0x60] sm:$0xff]
  %v54 = vld [vmem:[%s1 + $0x68] sm:$0xff]
  %v55 = vld [vmem:[%s1 + $0x70] sm:$0xff]
  %v56 = vld [vmem:[%s1 + $0x78] sm:$0xff]
  %v57 = vld [vmem:[%s1 + $0x80] sm:$0xff]
  %v58 = vld [vmem:[%s1 + $0x88] sm:$0xff]
  %v59 = vld [vmem:[%s1 + $0x90] sm:$0xff]
  %v60 = vld [vmem:[%s1 + $0x98] sm:$0xff]
  %v61 = vld [vmem:[%s1 + $0xa0] sm:$0xff]
  %v62 = vld [vmem:[%s1 + $0xa8] sm:$0xff]
  %v63 = vld [vmem:[%s1 + $0xb0] sm:$0xff]
  %v64 = vld [vmem:[%s1 + $0xb8] sm:$0xff]
  %v65 = vld [vmem:[%s1 + $0xc0] sm:$0xff]
  %v66 = vld [vmem:[%s1 + $0xc8] sm:$0xff]
  %v67 = vld [vmem:[%s1 + $0xd0] sm:$0xff]
  %v68 = vld [vmem:[%s1 + $0xd8] sm:$0xff]
  %v69 = vld [vmem:[%s1 + $0xe0] sm:$0xff]
  %v70 = vld [vmem:[%s1 + $0xe8] sm:$0xff]
  %v71 = vld [vmem:[%s1 + $0xf0] sm:$0xff]
  %v72 = vld [vmem:[%s1 + $0xf8] sm:$0xff]
  %v105 = vunpack.c.l.b16 %v41
  %v106 = vunpack.c.h.b16 %v41
  %v107 = vunpack.c.l.b16 %v42
  %v108 = vunpack.c.h.b16 %v42
  %v109 = vunpack.c.l.b16 %v43
  %v110 = vunpack.c.h.b16 %v43
  %v111 = vunpack.c.l.b16 %v44
  %v112 = vunpack.c.h.b16 %v44
  %v113 = vunpack.c.l.b16 %v45
  %v114 = vunpack.c.h.b16 %v45
  %v115 = vunpack.c.l.b16 %v46
  %v116 = vunpack.c.h.b16 %v46
  %v117 = vunpack.c.l.b16 %v47
  %v118 = vunpack.c.h.b16 %v47
  %v119 = vunpack.c.l.b16 %v48
  %v120 = vunpack.c.h.b16 %v48
  %v121 = vunpack.c.l.b16 %v49
  %v122 = vunpack.c.h.b16 %v49
  %v123 = vunpack.c.l.b16 %v50
  %v124 = vunpack.c.h.b16 %v50
  %v125 = vunpack.c.l.b16 %v51
  %v126 = vunpack.c.h.b16 %v51
  %v127 = vunpack.c.l.b16 %v52
  %v128 = vunpack.c.h.b16 %v52
  %v129 = vunpack.c.l.b16 %v53
  %v130 = vunpack.c.h.b16 %v53
  %v131 = vunpack.c.l.b16 %v54
  %v132 = vunpack.c.h.b16 %v54
  %v133 = vunpack.c.l.b16 %v55
  %v134 = vunpack.c.h.b16 %v55
  %v135 = vunpack.c.l.b16 %v56
  %v136 = vunpack.c.h.b16 %v56
  %v137 = vunpack.c.l.b16 %v57
  %v138 = vunpack.c.h.b16 %v57
  %v139 = vunpack.c.l.b16 %v58
  %v140 = vunpack.c.h.b16 %v58
  %v141 = vunpack.c.l.b16 %v59
  %v142 = vunpack.c.h.b16 %v59
  %v143 = vunpack.c.l.b16 %v60
  %v144 = vunpack.c.h.b16 %v60
  %v145 = vunpack.c.l.b16 %v61
  %v146 = vunpack.c.h.b16 %v61
  %v147 = vunpack.c.l.b16 %v62
  %v148 = vunpack.c.h.b16 %v62
  %v149 = vunpack.c.l.b16 %v63
  %v150 = vunpack.c.h.b16 %v63
  %v151 = vunpack.c.l.b16 %v64
  %v152 = vunpack.c.h.b16 %v64
  %v153 = vunpack.c.l.b16 %v65
  %v154 = vunpack.c.h.b16 %v65
  %v155 = vunpack.c.l.b16 %v66
  %v156 = vunpack.c.h.b16 %v66
  %v157 = vunpack.c.l.b16 %v67
  %v158 = vunpack.c.h.b16 %v67
  %v159 = vunpack.c.l.b16 %v68
  %v160 = vunpack.c.h.b16 %v68
  %v161 = vunpack.c.l.b16 %v69
  %v162 = vunpack.c.h.b16 %v69
  %v163 = vunpack.c.l.b16 %v70
  %v164 = vunpack.c.h.b16 %v70
  %v165 = vunpack.c.l.b16 %v71
  %v166 = vunpack.c.h.b16 %v71
  %v167 = vunpack.c.l.b16 %v72
  %v168 = vunpack.c.h.b16 %v72
  %v169 = vpack.c.b16 %v107, %v105
  %v170 = vpack.c.b16 %v108, %v106
  %v171 = vpack.c.b16 %v111, %v109
  %v172 = vpack.c.b16 %v112, %v110
  %v173 = vpack.c.b16 %v115, %v113
  %v174 = vpack.c.b16 %v116, %v114
  %v175 = vpack.c.b16 %v119, %v117
  %v176 = vpack.c.b16 %v120, %v118
  %v177 = vpack.c.b16 %v123, %v121
  %v178 = vpack.c.b16 %v124, %v122
  %v179 = vpack.c.b16 %v127, %v125
  %v180 = vpack.c.b16 %v128, %v126
  %v181 = vpack.c.b16 %v131, %v129
  %v182 = vpack.c.b16 %v132, %v130
  %v183 = vpack.c.b16 %v135, %v133
  %v184 = vpack.c.b16 %v136, %v134
  %v185 = vpack.c.b16 %v139, %v137
  %v186 = vpack.c.b16 %v140, %v138
  %v187 = vpack.c.b16 %v143, %v141
  %v188 = vpack.c.b16 %v144, %v142
  %v189 = vpack.c.b16 %v147, %v145
  %v190 = vpack.c.b16 %v148, %v146
  %v191 = vpack.c.b16 %v151, %v149
  %v192 = vpack.c.b16 %v152, %v150
  %v193 = vpack.c.b16 %v155, %v153
  %v194 = vpack.c.b16 %v156, %v154
  %v195 = vpack.c.b16 %v159, %v157
  %v196 = vpack.c.b16 %v160, %v158
  %v197 = vpack.c.b16 %v163, %v161
  %v198 = vpack.c.b16 %v164, %v162
  %v199 = vpack.c.b16 %v167, %v165
  %v200 = vpack.c.b16 %v168, %v166
  %233 = vmatpush.bf16.msra.mxu0 %v183
  %234 = vmatpush.bf16.msra.mxu0 %v181
  %235 = vmatpush.bf16.msra.mxu0 %v179
  %236 = vmatpush.bf16.msra.mxu0 %v177
  %237 = vmatpush.bf16.msra.mxu0 %v175
  %238 = vmatpush.bf16.msra.mxu0 %v173
  %239 = vmatpush.bf16.msra.mxu0 %v171
  %240 = vmatpush.bf16.msra.mxu0 %v169
  %241 = vmatmul.bf16.gmra.mxu0 %v39
  %v242 = vpop.f32.mrf.mxu0
  %v243 = vadd.f32 0.0, %v242
  %v244 = vpop.f32.mrf.mxu0
  %245 = vdwg.mxu0
  %246 = vmatpush.bf16.msra.mxu0 %v199
  %247 = vmatpush.bf16.msra.mxu0 %v197
  %248 = vmatpush.bf16.msra.mxu0 %v195
  %249 = vmatpush.bf16.msra.mxu0 %v193
  %250 = vmatpush.bf16.msra.mxu0 %v191
  %251 = vmatpush.bf16.msra.mxu0 %v189
  %252 = vmatpush.bf16.msra.mxu0 %v187
  %253 = vmatpush.bf16.msra.mxu0 %v185
  %254 = vmatmul.bf16.gmra.mxu0 %v40
  %v255 = vpop.f32.mrf.mxu0
  %v256 = vadd.f32 %v243, %v255
  %v257 = vpop.f32.mrf.mxu0
  %258 = vdwg.mxu0
  %259 = vmatpush.bf16.msra.mxu0 %v184
  %260 = vmatpush.bf16.msra.mxu0 %v182
  %261 = vmatpush.bf16.msra.mxu0 %v180
  %262 = vmatpush.bf16.msra.mxu0 %v178
  %263 = vmatpush.bf16.msra.mxu0 %v176
  %264 = vmatpush.bf16.msra.mxu0 %v174
  %265 = vmatpush.bf16.msra.mxu0 %v172
  %266 = vmatpush.bf16.msra.mxu0 %v170
  %267 = vmatmul.bf16.gmra.mxu0 %v39
  %v268 = vpop.f32.mrf.mxu0
  %v269 = vadd.f32 0.0, %v268
  %v270 = vpop.f32.mrf.mxu0
  %271 = vdwg.mxu0
  %272 = vmatpush.bf16.msra.mxu0 %v200
  %273 = vmatpush.bf16.msra.mxu0 %v198
  %274 = vmatpush.bf16.msra.mxu0 %v196
  %275 = vmatpush.bf16.msra.mxu0 %v194
  %276 = vmatpush.bf16.msra.mxu0 %v192
  %277 = vmatpush.bf16.msra.mxu0 %v190
  %278 = vmatpush.bf16.msra.mxu0 %v188
  %279 = vmatpush.bf16.msra.mxu0 %v186
  %280 = vmatmul.bf16.gmra.mxu0 %v40
  %v281 = vpop.f32.mrf.mxu0
  %v282 = vadd.f32 %v269, %v281
  %v283 = vpop.f32.mrf.mxu0
  %284 = vdwg.mxu0
  %v285 = vld [vmem:[%s2] sm:$0x3]
  %v286 = vld [vmem:[%s3] sm:$0x3]
  %vm287 = vcmask 1041408
  %v288 = vsel %vm287, %v256, 0.0
  %v289 = vrot.slane %v288, 4
  %v290 = vadd.f32 %v288, %v289
  %v291 = vrot.slane %v290, 2
  %v292 = vadd.f32 %v290, %v291
  %v293 = vrot.slane %v292, 1
  %v294 = vadd.f32 %v292, %v293
  %v295 = vsel %vm287, %v282, 0.0
  %v296 = vrot.slane %v295, 4
  %v297 = vadd.f32 %v295, %v296
  %v298 = vrot.slane %v297, 2
  %v299 = vadd.f32 %v297, %v298
  %v300 = vrot.slane %v299, 1
  %v301 = vadd.f32 %v299, %v300
  %v302 = vrcp.pop 2.0
  %v303 = vmul.f32 2.0, %v302
  %v304 = vsub.f32 1.0, %v303
  %v305 = vmul.f32 %v302, %v304
  %v306 = vadd.f32 %v302, %v305
  %vm307 = vweird.f32 %v302
  %v308 = vsel %vm307, %v302, %v306
  %v309 = vmul.f32 %v294, %v308
  %v310 = vmul.f32 %v301, %v308
  %v311 = vsub.f32 %v256, %v309
  %v312 = vsub.f32 %v282, %v310
  %v313 = vmul.f32 %v311, %v311
  %v314 = vmul.f32 %v312, %v312
  %v315 = vsel %vm287, %v313, 0.0
  %v316 = vrot.slane %v315, 4
  %v317 = vadd.f32 %v315, %v316
  %v318 = vrot.slane %v317, 2
  %v319 = vadd.f32 %v317, %v318
  %v320 = vrot.slane %v319, 1
  %v321 = vadd.f32 %v319, %v320
  %v322 = vsel %vm287, %v314, 0.0
  %v323 = vrot.slane %v322, 4
  %v324 = vadd.f32 %v322, %v323
  %v325 = vrot.slane %v324, 2
  %v326 = vadd.f32 %v324, %v325
  %v327 = vrot.slane %v326, 1
  %v328 = vadd.f32 %v326, %v327
  %v329 = vmul.f32 %v321, %v308
  %v330 = vmul.f32 %v328, %v308
  %v331 = vadd.f32 %v329, 1e-05
  %v332 = vadd.f32 %v330, 1e-05
  %v333 = vrsqrt.pop %v331
  %v334 = vmul.f32 %v333, %v331
  %v335 = vmul.f32 %v334, %v333
  %v336 = vmul.f32 0.5, %v335
  %v337 = vsub.f32 1.5, %v336
  %v338 = vmul.f32 %v333, %v337
  %vm339 = vweird.f32 %v331
  %vm340 = vweird.f32 %v333
  %vm341 = vmor %vm339, %vm340
  %v342 = vsel %vm341, %v333, %v338
  %v343 = vrsqrt.pop %v332
  %v344 = vmul.f32 %v343, %v332
  %v345 = vmul.f32 %v344, %v343
  %v346 = vmul.f32 0.5, %v345
  %v347 = vsub.f32 1.5, %v346
  %v348 = vmul.f32 %v343, %v347
  %vm349 = vweird.f32 %v332
  %vm350 = vweird.f32 %v343
  %vm351 = vmor %vm349, %vm350
  %v352 = vsel %vm351, %v343, %v348
  %v353 = vmul.f32 %v311, %v342
  %v354 = vmul.f32 %v312, %v352
  %v356 = vperm.slane %v285, 0
  %v357 = vperm.slane %v285, 1
  %v360 = vmul.f32 %v353, %v356
  %v361 = vmul.f32 %v354, %v357
  %v363 = vperm.slane %v286, 0
  %v364 = vperm.slane %v286, 1
  %v367 = vadd.f32 %v360, %v363
  %v368 = vadd.f32 %v361, %v364
  %v369 = vmax.f32 %v367, 0.0
  %v370 = vmax.f32 %v368, 0.0
  %v371 = vpack.c.bf16 %v369, %v369
  %v372 = vpack.c.bf16 %v370, %v370
  %v373 = vld [vmem:[%s4] sm:$0xf]
  %v374 = vld [vmem:[%s4 + $0x4] sm:$0xf]
  %v375 = vld [vmem:[%s4 + $0x8] sm:$0xf]
  %v376 = vld [vmem:[%s4 + $0xc] sm:$0xf]
  %v377 = vld [vmem:[%s4 + $0x10] sm:$0xf]
  %v378 = vld [vmem:[%s4 + $0x14] sm:$0xf]
  %v379 = vld [vmem:[%s4 + $0x18] sm:$0xf]
  %v380 = vld [vmem:[%s4 + $0x1c] sm:$0xf]
  %v381 = vld [vmem:[%s4 + $0x20] sm:$0xf]
  %v382 = vld [vmem:[%s4 + $0x24] sm:$0xf]
  %v383 = vld [vmem:[%s4 + $0x28] sm:$0xf]
  %v384 = vld [vmem:[%s4 + $0x2c] sm:$0xf]
  %v385 = vld [vmem:[%s4 + $0x30] sm:$0xf]
  %v386 = vld [vmem:[%s4 + $0x34] sm:$0xf]
  %v387 = vld [vmem:[%s4 + $0x38] sm:$0xf]
  %v388 = vld [vmem:[%s4 + $0x3c] sm:$0xf]
  %v389 = vld [vmem:[%s4 + $0x40] sm:$0xf]
  %v390 = vld [vmem:[%s4 + $0x44] sm:$0xf]
  %v391 = vld [vmem:[%s4 + $0x48] sm:$0xf]
  %v392 = vld [vmem:[%s4 + $0x4c] sm:$0xf]
  %v393 = vld [vmem:[%s4 + $0x50] sm:$0xf]
  %v394 = vld [vmem:[%s4 + $0x54] sm:$0xf]
  %v395 = vld [vmem:[%s4 + $0x58] sm:$0xf]
  %v396 = vld [vmem:[%s4 + $0x5c] sm:$0xf]
  %v397 = vld [vmem:[%s4 + $0x60] sm:$0xf]
  %v398 = vld [vmem:[%s4 + $0x64] sm:$0xf]
  %v399 = vld [vmem:[%s4 + $0x68] sm:$0xf]
  %v400 = vld [vmem:[%s4 + $0x6c] sm:$0xf]
  %v401 = vld [vmem:[%s4 + $0x70] sm:$0xf]
  %v402 = vld [vmem:[%s4 + $0x74] sm:$0xf]
  %v403 = vld [vmem:[%s4 + $0x78] sm:$0xf]
  %v404 = vld [vmem:[%s4 + $0x7c] sm:$0xf]
  %v437 = vunpack.c.l.b16 %v373
  %v438 = vunpack.c.l.b16 %v374
  %v439 = vunpack.c.l.b16 %v375
  %v440 = vunpack.c.l.b16 %v376
  %v441 = vunpack.c.l.b16 %v377
  %v442 = vunpack.c.l.b16 %v378
  %v443 = vunpack.c.l.b16 %v379
  %v444 = vunpack.c.l.b16 %v380
  %v445 = vunpack.c.l.b16 %v381
  %v446 = vunpack.c.l.b16 %v382
  %v447 = vunpack.c.l.b16 %v383
  %v448 = vunpack.c.l.b16 %v384
  %v449 = vunpack.c.l.b16 %v385
  %v450 = vunpack.c.l.b16 %v386
  %v451 = vunpack.c.l.b16 %v387
  %v452 = vunpack.c.l.b16 %v388
  %v453 = vunpack.c.l.b16 %v389
  %v454 = vunpack.c.l.b16 %v390
  %v455 = vunpack.c.l.b16 %v391
  %v456 = vunpack.c.l.b16 %v392
  %v457 = vunpack.c.l.b16 %v393
  %v458 = vunpack.c.l.b16 %v394
  %v459 = vunpack.c.l.b16 %v395
  %v460 = vunpack.c.l.b16 %v396
  %v461 = vunpack.c.l.b16 %v397
  %v462 = vunpack.c.l.b16 %v398
  %v463 = vunpack.c.l.b16 %v399
  %v464 = vunpack.c.l.b16 %v400
  %v465 = vunpack.c.l.b16 %v401
  %v466 = vunpack.c.l.b16 %v402
  %v467 = vunpack.c.l.b16 %v403
  %v468 = vunpack.c.l.b16 %v404
  %v469 = vpack.c.b16 %v438, %v437
  %v470 = vpack.c.b16 %v440, %v439
  %v471 = vpack.c.b16 %v442, %v441
  %v472 = vpack.c.b16 %v444, %v443
  %v473 = vpack.c.b16 %v446, %v445
  %v474 = vpack.c.b16 %v448, %v447
  %v475 = vpack.c.b16 %v450, %v449
  %v476 = vpack.c.b16 %v452, %v451
  %v477 = vpack.c.b16 %v454, %v453
  %v478 = vpack.c.b16 %v456, %v455
  %v479 = vpack.c.b16 %v458, %v457
  %v480 = vpack.c.b16 %v460, %v459
  %v481 = vpack.c.b16 %v462, %v461
  %v482 = vpack.c.b16 %v464, %v463
  %v483 = vpack.c.b16 %v466, %v465
  %v484 = vpack.c.b16 %v468, %v467
  %501 = vmatpush.bf16.msra.mxu0 %v476
  %502 = vmatpush.bf16.msra.mxu0 %v475
  %503 = vmatpush.bf16.msra.mxu0 %v474
  %504 = vmatpush.bf16.msra.mxu0 %v473
  %505 = vmatpush.bf16.msra.mxu0 %v472
  %506 = vmatpush.bf16.msra.mxu0 %v471
  %507 = vmatpush.bf16.msra.mxu0 %v470
  %508 = vmatpush.bf16.msra.mxu0 %v469
  %509 = vmatmul.bf16.gmra.mxu0 %v371
  %v510 = vpop.f32.mrf.mxu0
  %v511 = vadd.f32 0.0, %v510
  %v512 = vpop.f32.mrf.mxu0
  %513 = vdwg.mxu0
  %514 = vmatpush.bf16.msra.mxu0 %v484
  %515 = vmatpush.bf16.msra.mxu0 %v483
  %516 = vmatpush.bf16.msra.mxu0 %v482
  %517 = vmatpush.bf16.msra.mxu0 %v481
  %518 = vmatpush.bf16.msra.mxu0 %v480
  %519 = vmatpush.bf16.msra.mxu0 %v479
  %520 = vmatpush.bf16.msra.mxu0 %v478
  %521 = vmatpush.bf16.msra.mxu0 %v477
  %522 = vmatmul.bf16.gmra.mxu0 %v372
  %v523 = vpop.f32.mrf.mxu0
  %v524 = vadd.f32 %v511, %v523
  %v525 = vpop.f32.mrf.mxu0
  %526 = vdwg.mxu0
  %v527 = vld [vmem:[%s5] sm:$0x1]
  %v528 = vld [vmem:[%s6] sm:$0x1]
  %v529 = vsel %vm287, %v524, 0.0
  %v530 = vrot.slane %v529, 4
  %v531 = vadd.f32 %v529, %v530
  %v532 = vrot.slane %v531, 2
  %v533 = vadd.f32 %v531, %v532
  %v534 = vrot.slane %v533, 1
  %v535 = vadd.f32 %v533, %v534
  %v536 = vmul.f32 %v535, %v308
  %v537 = vsub.f32 %v524, %v536
  %v538 = vmul.f32 %v537, %v537
  %v539 = vsel %vm287, %v538, 0.0
  %v540 = vrot.slane %v539, 4
  %v541 = vadd.f32 %v539, %v540
  %v542 = vrot.slane %v541, 2
  %v543 = vadd.f32 %v541, %v542
  %v544 = vrot.slane %v543, 1
  %v545 = vadd.f32 %v543, %v544
  %v546 = vmul.f32 %v545, %v308
  %v547 = vadd.f32 %v546, 1e-05
  %v548 = vrsqrt.pop %v547
  %v549 = vmul.f32 %v548, %v547
  %v550 = vmul.f32 %v549, %v548
  %v551 = vmul.f32 0.5, %v550
  %v552 = vsub.f32 1.5, %v551
  %v553 = vmul.f32 %v548, %v552
  %vm554 = vweird.f32 %v547
  %vm555 = vweird.f32 %v548
  %vm556 = vmor %vm554, %vm555
  %v557 = vsel %vm556, %v548, %v553
  %v558 = vmul.f32 %v537, %v557
  %v560 = vperm.slane %v527, 0
  %v562 = vmul.f32 %v558, %v560
  %v564 = vperm.slane %v528, 0
  %v566 = vadd.f32 %v562, %v564
  %v567 = vmax.f32 %v566, 0.0
  %v568 = vpack.c.bf16 %v567, %v567
  %v569 = vld [vmem:[%s7] sm:$0xf]
  %v570 = vld [vmem:[%s7 + $0x4] sm:$0xf]
  %v571 = vld [vmem:[%s7 + $0x8] sm:$0xf]
  %v572 = vld [vmem:[%s7 + $0xc] sm:$0xf]
  %v573 = vld [vmem:[%s7 + $0x10] sm:$0xf]
  %v574 = vld [vmem:[%s7 + $0x14] sm:$0xf]
  %v575 = vld [vmem:[%s7 + $0x18] sm:$0xf]
  %v576 = vld [vmem:[%s7 + $0x1c] sm:$0xf]
  %v577 = vld [vmem:[%s7 + $0x20] sm:$0xf]
  %v578 = vld [vmem:[%s7 + $0x24] sm:$0xf]
  %v579 = vld [vmem:[%s7 + $0x28] sm:$0xf]
  %v580 = vld [vmem:[%s7 + $0x2c] sm:$0xf]
  %v581 = vld [vmem:[%s7 + $0x30] sm:$0xf]
  %v582 = vld [vmem:[%s7 + $0x34] sm:$0xf]
  %v583 = vld [vmem:[%s7 + $0x38] sm:$0xf]
  %v584 = vld [vmem:[%s7 + $0x3c] sm:$0xf]
  %v585 = vld [vmem:[%s8] sm:$0x1]
  %v587 = vperm.slane %v585, 0
  %v605 = vunpack.c.l.b16 %v569
  %v606 = vunpack.c.l.b16 %v570
  %v607 = vunpack.c.l.b16 %v571
  %v608 = vunpack.c.l.b16 %v572
  %v609 = vunpack.c.l.b16 %v573
  %v610 = vunpack.c.l.b16 %v574
  %v611 = vunpack.c.l.b16 %v575
  %v612 = vunpack.c.l.b16 %v576
  %v613 = vunpack.c.l.b16 %v577
  %v614 = vunpack.c.l.b16 %v578
  %v615 = vunpack.c.l.b16 %v579
  %v616 = vunpack.c.l.b16 %v580
  %v617 = vunpack.c.l.b16 %v581
  %v618 = vunpack.c.l.b16 %v582
  %v619 = vunpack.c.l.b16 %v583
  %v620 = vunpack.c.l.b16 %v584
  %v621 = vpack.c.b16 %v606, %v605
  %v622 = vpack.c.b16 %v608, %v607
  %v623 = vpack.c.b16 %v610, %v609
  %v624 = vpack.c.b16 %v612, %v611
  %v625 = vpack.c.b16 %v614, %v613
  %v626 = vpack.c.b16 %v616, %v615
  %v627 = vpack.c.b16 %v618, %v617
  %v628 = vpack.c.b16 %v620, %v619
  %637 = vmatpush.bf16.msra.mxu0 %v628
  %638 = vmatpush.bf16.msra.mxu0 %v627
  %639 = vmatpush.bf16.msra.mxu0 %v626
  %640 = vmatpush.bf16.msra.mxu0 %v625
  %641 = vmatpush.bf16.msra.mxu0 %v624
  %642 = vmatpush.bf16.msra.mxu0 %v623
  %643 = vmatpush.bf16.msra.mxu0 %v622
  %644 = vmatpush.bf16.msra.mxu0 %v621
  %645 = vmatmul.bf16.gmra.mxu0 %v568
  %v646 = vpop.f32.mrf.mxu0
  %v647 = vadd.f32 %v587, %v646
  %v648 = vpop.f32.mrf.mxu0
  %649 = vdwg.mxu0
  %v650 = vlaneseq
  %v651 = vand.u32 %v650, 127
  %vm652 = vcmp.lt.s32.totalorder %v651, 0
  %v653 = vsub.s32 0, %v651
  %v654 = vsel %vm652, %v653, %v651
  %v655 = vand.u32 %v654, 65535
  %v656 = vshrl.u32 %v654, 16
  %v658 = vmul.u32 %v655, 52429
  %v659 = vmul.u32 %v655, 52428
  %v660 = vmul.u32 %v656, 52429
  %v661 = vmul.u32 %v656, 52428
  %v662 = vshll.u32 %v659, 16
  %v663 = vshrl.u32 %v659, 16
  %v664 = vshll.u32 %v660, 16
  %v665 = vshrl.u32 %v660, 16
  %vm666 = vc.u32 %v658, %v662
  %v667 = vsel %vm666, 1, 0
  %v668 = vadd.s32 %v658, %v662
  %v669 = vadd.s32 %v661, %v667
  %vm670 = vc.u32 %v668, %v664
  %v671 = vsel %vm670, 1, 0
  %v672 = vadd.s32 %v668, %v664
  %v673 = vadd.s32 %v669, %v671
  %v674 = vadd.s32 %v673, %v663
  %v675 = vadd.s32 %v674, %v665
  %v676 = vshrl.u32 %v675, 2
  %v677 = vmul.u32 %v676, 5
  %v678 = vsub.s32 %v654, %v677
  %v679 = vsub.s32 0, %v678
  %v680 = vsel %vm652, %v679, %v678
  %vm681 = vcmp.ne.s32.totalorder %v680, 0
  %vm682 = vcmp.lt.s32.totalorder %v680, 0
  %vm683 = vmand %vm682, %vm681
  %v684 = vadd.s32 %v680, 5
  %v685 = vsel %vm683, %v684, %v680
  %vm686 = vcmp.eq.s32.totalorder %v685, 0
  %v687 = vsel %vm686, 1.0, 0.0
  %v688 = vadd.f32 %v647, %v687
  %vm689 = vcmask 123904
  %690 = vst.msk [vmem:[%s9] sm:$0x3] %vm689, %v688
  // Predicated region
  $region38: #{base_pointnet_fwd.20} parent=0 // pred_check
    _
  $region39: #{base_pointnet_fwd.20} parent=0 // pred_check_branch
    %692 = sbr.rel (0) target = $region41
  $region40: #{base_pointnet_fwd.20} parent=0 // pred_region
    _
  $region41: #{base_pointnet_fwd.20} parent=0 // pred_fallthru
    _
  // Predicated region
  $region42: #{base_pointnet_fwd.20} parent=0 // pred_check
    _
  $region43: #{base_pointnet_fwd.20} parent=0 // pred_check_branch
    %694 = sbr.rel (0) target = $region45
  $region44: #{base_pointnet_fwd.20} parent=0 // pred_region
    _
  $region45: #{base_pointnet_fwd.20} parent=0 // pred_fallthru
    _

// kernel: base_pointnet_fwd.31
$region0: #{base_pointnet_fwd.31}
  #allocation0 [shape = 'u32[]', space=smem, size = 0x4, offset = 0x4, fixed_abs, tag = 'smem constant byte address 0x4 - core index']
  #allocation1 [shape = 'u32[72,128]{1,0:T(1,128)}', space=vmem, size = 0x9000, scoped, tag = 'internal scratch']
  %s0 = inlined_call_operand.vmem [shape: bf16[2,256,256], index: 0, kind: input, shape index: {}]
  %s1 = inlined_call_operand.vmem [shape: f32[1,256], index: 1, kind: input, shape index: {}]
  %s2 = inlined_call_operand.vmem [shape: f32[1,256], index: 2, kind: input, shape index: {}]
  %s3 = inlined_call_operand.hbm [shape: f32[2,256,256], index: 3, kind: output, shape index: {}]
  %s4 = sld [smem:[#allocation0]]
  $region45: #{base_pointnet_fwd.31} parent=0
    _
  %s6 = ssub.s32 1, %s4
  %s7 = scalar_select 0, %s6, %s4
  $region1: #{base_pointnet_fwd.31} parent=0
    #allocation2 [shape = 'u8[262144]{0}', space=vmem, size = 0x40000, scoped, tag = 'output window, operand 0']
    #allocation3 [shape = 's32[2]{0}', space=sflag, size = 0x8, scoped, tag = 'scoped memory for base_pointnet_fwd.31']
    %8 = vsyncpa [#allocation3], 0
    %s9 = scalar_lea.sflag [#allocation3], 1
    %10 = vsyncpa %s9, 0
    loop: start=0, step=1, limit=6
    $region2: #{base_pointnet_fwd.31} parent=1 // loop_pre_header
      _
    $region3: #{base_pointnet_fwd.31} parent=1 // loop_header
      %s12 = sphi 0, %s16
      %p13 = scmp.ge.s32.totalorder %s12, 6
      %s19 = sphi 0, %s31
      %s20 = sphi 0, %s27
      %s21 = sphi 0, %s19
      %s22 = sphi 0, %s20
      %s23 = sphi 0, %s21
      %s24 = sphi 0, %s22
      %s36 = sphi 0, %s38
      %s39 = sphi 0, %s36
      %s40 = sphi 0, %s39
      %s56 = sphi 0, %s40
      %s60 = sphi 0, %s60
      %s62 = sphi 0, %s60
      %s63 = sphi 0, %s62
      %s77 = sphi 0, %s63
      %s81 = sphi 0, %s81
      %s83 = sphi 0, %s81
      %s84 = sphi 0, %s83
      %s98 = sphi 0, %s84
      %s106 = sphi 0, %s108
      %s109 = sphi 0, %s106
      %s110 = sphi 0, %s109
      %s126 = sphi 0, %s110
    $region4: #{base_pointnet_fwd.31} parent=1 // loop_header_branch
      %15 = sbr.rel (%p13) target = $region8
    $region5: #{base_pointnet_fwd.31} parent=1 // loop_body
      %s17 = ssub.s32 %s12, 1
      %s18 = ssub.s32 %s12, 2
      %s25 = sadd.s32 1, %s20
      %p26 = scmp.ge.s32.totalorder %s25, 2
      %s27 = scalar_select %p26, 0, %s25
      %s28 = sadd.s32 1, %s19
      %s29 = scalar_select %p26, %s28, %s19
      %p30 = scmp.ge.s32.totalorder %s29, 2
      %s31 = scalar_select %p30, 0, %s29
      %s32 = ssub.s32 %s19, %s31
      %s33 = ssub.s32 %s20, %s27
      %s34 = sor.u32 %s32, %s33
      %p35 = scmp.eq.s32.totalorder %s34, 0
      %s37 = sadd.s32 %s36, 1
      %s38 = scalar_select %p35, %s36, %s37
      %p41 = pneg %p35
      %p42 = scmp.eq.s32.totalorder %s12, 3
      %p43 = por %p41, %p42
      %p44 = scmp.ne.s32.totalorder %s36, %s39
      %p45 = scmp.eq.s32.totalorder %s12, 0
      %p46 = por %p44, %p45
      %p47 = scmp.ne.s32.totalorder %s36, %s39
      %p48 = scmp.eq.s32.totalorder %s17, 3
      %p49 = por %p47, %p48
      %p50 = scmp.ne.s32.totalorder %s39, %s40
      %p51 = scmp.eq.s32.totalorder %s17, 0
      %p52 = por %p50, %p51
      %p53 = scmp.ne.s32.totalorder %s39, %s40
      %p54 = scmp.eq.s32.totalorder %s18, 3
      %p55 = por %p53, %p54
      %p57 = scmp.ne.s32.totalorder %s40, %s56
      %p58 = scmp.eq.s32.totalorder %s18, 0
      %p59 = por %p57, %p58
      %s61 = sadd.s32 %s60, 1
      %p64 = scmp.eq.s32.totalorder %s12, 3
      %p65 = scmp.ne.s32.totalorder %s60, %s62
      %p66 = scmp.eq.s32.totalorder %s12, 0
      %p67 = por %p65, %p66
      %p68 = scmp.ne.s32.totalorder %s60, %s62
      %p69 = scmp.eq.s32.totalorder %s17, 3
      %p70 = por %p68, %p69
      %p71 = scmp.ne.s32.totalorder %s62, %s63
      %p72 = scmp.eq.s32.totalorder %s17, 0
      %p73 = por %p71, %p72
      %p74 = scmp.ne.s32.totalorder %s62, %s63
      %p75 = scmp.eq.s32.totalorder %s18, 3
      %p76 = por %p74, %p75
      %p78 = scmp.ne.s32.totalorder %s63, %s77
      %p79 = scmp.eq.s32.totalorder %s18, 0
      %p80 = por %p78, %p79
      %s82 = sadd.s32 %s81, 1
      %p85 = scmp.eq.s32.totalorder %s12, 3
      %p86 = scmp.ne.s32.totalorder %s81, %s83
      %p87 = scmp.eq.s32.totalorder %s12, 0
      %p88 = por %p86, %p87
      %p89 = scmp.ne.s32.totalorder %s81, %s83
      %p90 = scmp.eq.s32.totalorder %s17, 3
      %p91 = por %p89, %p90
      %p92 = scmp.ne.s32.totalorder %s83, %s84
      %p93 = scmp.eq.s32.totalorder %s17, 0
      %p94 = por %p92, %p93
      %p95 = scmp.ne.s32.totalorder %s83, %s84
      %p96 = scmp.eq.s32.totalorder %s18, 3
      %p97 = por %p95, %p96
      %p99 = scmp.ne.s32.totalorder %s84, %s98
      %p100 = scmp.eq.s32.totalorder %s18, 0
      %p101 = por %p99, %p100
      %s102 = ssub.s32 %s19, %s31
      %s103 = ssub.s32 %s20, %s27
      %s104 = sor.u32 %s102, %s103
      %p105 = scmp.eq.s32.totalorder %s104, 0
      %s107 = sadd.s32 %s106, 1
      %s108 = scalar_select %p105, %s106, %s107
      %p111 = pneg %p105
      %p112 = scmp.eq.s32.totalorder %s12, 3
      %p113 = por %p111, %p112
      %p114 = scmp.ne.s32.totalorder %s106, %s109
      %p115 = scmp.eq.s32.totalorder %s12, 0
      %p116 = por %p114, %p115
      %p117 = scmp.ne.s32.totalorder %s106, %s109
      %p118 = scmp.eq.s32.totalorder %s17, 3
      %p119 = por %p117, %p118
      %p120 = scmp.ne.s32.totalorder %s109, %s110
      %p121 = scmp.eq.s32.totalorder %s17, 0
      %p122 = por %p120, %p121
      %p123 = scmp.ne.s32.totalorder %s109, %s110
      %p124 = scmp.eq.s32.totalorder %s18, 3
      %p125 = por %p123, %p124
      %p127 = scmp.ne.s32.totalorder %s110, %s126
      %p128 = scmp.eq.s32.totalorder %s18, 0
      %p129 = por %p127, %p128
      %p130 = scmp.le.s32.totalorder 1, %s12
      %p131 = scmp.lt.s32.totalorder %s12, 5
      %p132 = pnand %p130, %p131
      %p133 = pneg %p132
      // Predicated region
      $region9: #{base_pointnet_fwd.31} parent=5 // pred_check
        _
      $region10: #{base_pointnet_fwd.31} parent=5 // pred_check_branch
        %135 = sbr.rel (%p132) target = $region12
      $region11: #{base_pointnet_fwd.31} parent=5 // pred_region
        %s136 = ssub.s32 %s12, 1
        // Predicated region
        $region13: #{base_pointnet_fwd.31} parent=11 // pred_check
          %p137 = pneg %p73
        $region14: #{base_pointnet_fwd.31} parent=11 // pred_check_branch
          %139 = sbr.rel (%p137) target = $region16
        $region15: #{base_pointnet_fwd.31} parent=11 // pred_region
          _
        $region16: #{base_pointnet_fwd.31} parent=11 // pred_fallthru
          _
        // Predicated region
        $region17: #{base_pointnet_fwd.31} parent=11 // pred_check
          %p140 = pneg %p94
        $region18: #{base_pointnet_fwd.31} parent=11 // pred_check_branch
          %142 = sbr.rel (%p140) target = $region20
        $region19: #{base_pointnet_fwd.31} parent=11 // pred_region
          _
        $region20: #{base_pointnet_fwd.31} parent=11 // pred_fallthru
          _
      $region12: #{base_pointnet_fwd.31} parent=5 // pred_fallthru
        _
      %p143 = scmp.lt.s32.totalorder %s12, 4
      // Predicated region
      $region21: #{base_pointnet_fwd.31} parent=5 // pred_check
        %p144 = pneg %p143
      $region22: #{base_pointnet_fwd.31} parent=5 // pred_check_branch
        %146 = sbr.rel (%p144) target = $region24
      $region23: #{base_pointnet_fwd.31} parent=5 // pred_region
        // Predicated region
        $region25: #{base_pointnet_fwd.31} parent=23 // pred_check
          %p147 = pneg %p46
        $region26: #{base_pointnet_fwd.31} parent=23 // pred_check_branch
          %149 = sbr.rel (%p147) target = $region28
        $region27: #{base_pointnet_fwd.31} parent=23 // pred_region
          %s150 = smul.u32 16, %s20
          %p151 = scmp.lt.s32.totalorder %s19, 1
          %s152 = scalar_select %p151, %s19, 1
          %p153 = scmp.lt.s32.totalorder %s150, 31
          %s154 = scalar_select %p153, %s150, 31
          %s155 = smul.addr %s154, 2
          %s156 = smul.addr %s152, 64
          %s157 = sadd.s32 %s155, %s156
          %s158 = smul.addr %s157, 4
          %s159 = scalar_lea.vmem %s0, %s158
          %s160 = smul.u32 16, %s20
        $region28: #{base_pointnet_fwd.31} parent=23 // pred_fallthru
          _
      $region24: #{base_pointnet_fwd.31} parent=5 // pred_fallthru
        _
      %p161 = scmp.le.s32.totalorder 1, %s12
      %p162 = scmp.lt.s32.totalorder %s12, 5
      %p163 = pnand %p161, %p162
      %p164 = pneg %p163
      // Predicated region
      $region29: #{base_pointnet_fwd.31} parent=5 // pred_check
        _
      $region30: #{base_pointnet_fwd.31} parent=5 // pred_check_branch
        %166 = sbr.rel (%p163) target = $region32
      $region31: #{base_pointnet_fwd.31} parent=5 // pred_region
        %s167 = ssub.s32 %s12, 1
        %s168 = smul.u32 16, %s22
        %p169 = scmp.lt.s32.totalorder %s21, 1
        %s170 = scalar_select %p169, %s21, 1
        %p171 = scmp.lt.s32.totalorder %s168, 31
        %s172 = scalar_select %p171, %s168, 31
        %s173 = smul.addr %s172, 2
        %s174 = smul.addr %s170, 64
        %s175 = sadd.s32 %s173, %s174
        %s176 = smul.addr %s175, 4
        %s177 = scalar_lea.vmem %s0, %s176
        %p178 = pneg %p52
        %p179 = pneg %p49
        %p180 = pneg %p73
        %p181 = pneg %p70
        %p182 = pneg %p94
        %p183 = pneg %p91
        %p184 = pneg %p122
        %p185 = pneg %p119
        %s186 = sand.u32 %s109, 1
        %s187 = scalar_lea.sflag [#allocation3], %s186
        %s188 = sand.u32 %s109, 1
        %s189 = smul.addr %s188, 256
        %s190 = scalar_lea.vmem [#allocation2], %s189
        %s191 = smul.u32 16, %s22
        %p192 = scmp.lt.s32.totalorder %s21, 1
        %s193 = scalar_select %p192, %s21, 1
        %p194 = scmp.lt.s32.totalorder %s191, 31
        %s195 = scalar_select %p194, %s191, 31
        %s196 = smul.addr %s195, 2
        %s197 = smul.addr %s193, 64
        %s198 = sadd.s32 %s196, %s197
        %s199 = smul.addr %s198, 4
        %s200 = scalar_lea.vmem %s0, %s199
        %s201 = smul.u32 16, %s22
        %v202 = vld [vmem:[%s200] sm:$0xff]
        %v203 = vld [vmem:[%s200 + $0x8] sm:$0xff]
        %v204 = vld [vmem:[%s200 + $0x10] sm:$0xff]
        %v205 = vld [vmem:[%s200 + $0x18] sm:$0xff]
        %v206 = vld [vmem:[%s200 + $0x20] sm:$0xff]
        %v207 = vld [vmem:[%s200 + $0x28] sm:$0xff]
        %v208 = vld [vmem:[%s200 + $0x30] sm:$0xff]
        %v209 = vld [vmem:[%s200 + $0x38] sm:$0xff]
        %v210 = vld [vmem:[%s200 + $0x40] sm:$0xff]
        %v211 = vld [vmem:[%s200 + $0x48] sm:$0xff]
        %v212 = vld [vmem:[%s200 + $0x50] sm:$0xff]
        %v213 = vld [vmem:[%s200 + $0x58] sm:$0xff]
        %v214 = vld [vmem:[%s200 + $0x60] sm:$0xff]
        %v215 = vld [vmem:[%s200 + $0x68] sm:$0xff]
        %v216 = vld [vmem:[%s200 + $0x70] sm:$0xff]
        %v217 = vld [vmem:[%s200 + $0x78] sm:$0xff]
        %v218 = vunpack.c.l.bf16 %v202
        %v219 = vunpack.c.h.bf16 %v202
        %v220 = vunpack.c.l.bf16 %v203
        %v221 = vunpack.c.h.bf16 %v203
        %v222 = vunpack.c.l.bf16 %v204
        %v223 = vunpack.c.h.bf16 %v204
        %v224 = vunpack.c.l.bf16 %v205
        %v225 = vunpack.c.h.bf16 %v205
        %v226 = vunpack.c.l.bf16 %v206
        %v227 = vunpack.c.h.bf16 %v206
        %v228 = vunpack.c.l.bf16 %v207
        %v229 = vunpack.c.h.bf16 %v207
        %v230 = vunpack.c.l.bf16 %v208
        %v231 = vunpack.c.h.bf16 %v208
        %v232 = vunpack.c.l.bf16 %v209
        %v233 = vunpack.c.h.bf16 %v209
        %v234 = vunpack.c.l.bf16 %v210
        %v235 = vunpack.c.h.bf16 %v210
        %v236 = vunpack.c.l.bf16 %v211
        %v237 = vunpack.c.h.bf16 %v211
        %v238 = vunpack.c.l.bf16 %v212
        %v239 = vunpack.c.h.bf16 %v212
        %v240 = vunpack.c.l.bf16 %v213
        %v241 = vunpack.c.h.bf16 %v213
        %v242 = vunpack.c.l.bf16 %v214
        %v243 = vunpack.c.h.bf16 %v214
        %v244 = vunpack.c.l.bf16 %v215
        %v245 = vunpack.c.h.bf16 %v215
        %v246 = vunpack.c.l.bf16 %v216
        %v247 = vunpack.c.h.bf16 %v216
        %v248 = vunpack.c.l.bf16 %v217
        %v249 = vunpack.c.h.bf16 %v217
        %v250 = vld [vmem:[%s1] sm:$0x3]
        %v252 = vperm.slane %v250, 0
        %v253 = vperm.slane %v250, 1
        %v256 = vmul.f32 %v218, %v252
        %v257 = vmul.f32 %v219, %v253
        %v258 = vmul.f32 %v220, %v252
        %v259 = vmul.f32 %v221, %v253
        %v260 = vmul.f32 %v222, %v252
        %v261 = vmul.f32 %v223, %v253
        %v262 = vmul.f32 %v224, %v252
        %v263 = vmul.f32 %v225, %v253
        %v264 = vmul.f32 %v226, %v252
        %v265 = vmul.f32 %v227, %v253
        %v266 = vmul.f32 %v228, %v252
        %v267 = vmul.f32 %v229, %v253
        %v268 = vmul.f32 %v230, %v252
        %v269 = vmul.f32 %v231, %v253
        %v270 = vmul.f32 %v232, %v252
        %v271 = vmul.f32 %v233, %v253
        %v272 = vmul.f32 %v234, %v252
        %v273 = vmul.f32 %v235, %v253
        %v274 = vmul.f32 %v236, %v252
        %v275 = vmul.f32 %v237, %v253
        %v276 = vmul.f32 %v238, %v252
        %v277 = vmul.f32 %v239, %v253
        %v278 = vmul.f32 %v240, %v252
        %v279 = vmul.f32 %v241, %v253
        %v280 = vmul.f32 %v242, %v252
        %v281 = vmul.f32 %v243, %v253
        %v282 = vmul.f32 %v244, %v252
        %v283 = vmul.f32 %v245, %v253
        %v284 = vmul.f32 %v246, %v252
        %v285 = vmul.f32 %v247, %v253
        %v286 = vmul.f32 %v248, %v252
        %v287 = vmul.f32 %v249, %v253
        %v288 = vld [vmem:[%s2] sm:$0x3]
        %v290 = vperm.slane %v288, 0
        %v291 = vperm.slane %v288, 1
        %v294 = vadd.f32 %v256, %v290
        %v295 = vadd.f32 %v257, %v291
        %v296 = vadd.f32 %v258, %v290
        %v297 = vadd.f32 %v259, %v291
        %v298 = vadd.f32 %v260, %v290
        %v299 = vadd.f32 %v261, %v291
        %v300 = vadd.f32 %v262, %v290
        %v301 = vadd.f32 %v263, %v291
        %v302 = vadd.f32 %v264, %v290
        %v303 = vadd.f32 %v265, %v291
        %v304 = vadd.f32 %v266, %v290
        %v305 = vadd.f32 %v267, %v291
        %v306 = vadd.f32 %v268, %v290
        %v307 = vadd.f32 %v269, %v291
        %v308 = vadd.f32 %v270, %v290
        %v309 = vadd.f32 %v271, %v291
        %v310 = vadd.f32 %v272, %v290
        %v311 = vadd.f32 %v273, %v291
        %v312 = vadd.f32 %v274, %v290
        %v313 = vadd.f32 %v275, %v291
        %v314 = vadd.f32 %v276, %v290
        %v315 = vadd.f32 %v277, %v291
        %v316 = vadd.f32 %v278, %v290
        %v317 = vadd.f32 %v279, %v291
        %v318 = vadd.f32 %v280, %v290
        %v319 = vadd.f32 %v281, %v291
        %v320 = vadd.f32 %v282, %v290
        %v321 = vadd.f32 %v283, %v291
        %v322 = vadd.f32 %v284, %v290
        %v323 = vadd.f32 %v285, %v291
        %v324 = vadd.f32 %v286, %v290
        %v325 = vadd.f32 %v287, %v291
        %v326 = vmax.f32 %v294, 0.0
        %v327 = vmax.f32 %v295, 0.0
        %v328 = vmax.f32 %v296, 0.0
        %v329 = vmax.f32 %v297, 0.0
        %v330 = vmax.f32 %v298, 0.0
        %v331 = vmax.f32 %v299, 0.0
        %v332 = vmax.f32 %v300, 0.0
        %v333 = vmax.f32 %v301, 0.0
        %v334 = vmax.f32 %v302, 0.0
        %v335 = vmax.f32 %v303, 0.0
        %v336 = vmax.f32 %v304, 0.0
        %v337 = vmax.f32 %v305, 0.0
        %v338 = vmax.f32 %v306, 0.0
        %v339 = vmax.f32 %v307, 0.0
        %v340 = vmax.f32 %v308, 0.0
        %v341 = vmax.f32 %v309, 0.0
        %v342 = vmax.f32 %v310, 0.0
        %v343 = vmax.f32 %v311, 0.0
        %v344 = vmax.f32 %v312, 0.0
        %v345 = vmax.f32 %v313, 0.0
        %v346 = vmax.f32 %v314, 0.0
        %v347 = vmax.f32 %v315, 0.0
        %v348 = vmax.f32 %v316, 0.0
        %v349 = vmax.f32 %v317, 0.0
        %v350 = vmax.f32 %v318, 0.0
        %v351 = vmax.f32 %v319, 0.0
        %v352 = vmax.f32 %v320, 0.0
        %v353 = vmax.f32 %v321, 0.0
        %v354 = vmax.f32 %v322, 0.0
        %v355 = vmax.f32 %v323, 0.0
        %v356 = vmax.f32 %v324, 0.0
        %v357 = vmax.f32 %v325, 0.0
        %358 = vxpose.xlu0.b32.start [1/16] %v326, 128
        %359 = vxpose.xlu0.b32.cont [2/16] %v328, 128
        %360 = vxpose.xlu0.b32.cont [3/16] %v330, 128
        %361 = vxpose.xlu0.b32.cont [4/16] %v332, 128
        %362 = vxpose.xlu0.b32.cont [5/16] %v334, 128
        %363 = vxpose.xlu0.b32.cont [6/16] %v336, 128
        %364 = vxpose.xlu0.b32.cont [7/16] %v338, 128
        %365 = vxpose.xlu0.b32.cont [8/16] %v340, 128
        %366 = vxpose.xlu0.b32.cont [9/16] %v342, 128
        %367 = vxpose.xlu0.b32.cont [10/16] %v344, 128
        %368 = vxpose.xlu0.b32.cont [11/16] %v346, 128
        %369 = vxpose.xlu0.b32.cont [12/16] %v348, 128
        %370 = vxpose.xlu0.b32.cont [13/16] %v350, 128
        %371 = vxpose.xlu0.b32.cont [14/16] %v352, 128
        %372 = vxpose.xlu0.b32.cont [15/16] %v354, 128
        %373 = vxpose.xlu0.b32.end [16/16] %v356, 128
        %v374 = vpop.trf.xlu0
        %v375 = vpop.trf.xlu0
        %v376 = vpop.trf.xlu0
        %v377 = vpop.trf.xlu0
        %v378 = vpop.trf.xlu0
        %v379 = vpop.trf.xlu0
        %v380 = vpop.trf.xlu0
        %v381 = vpop.trf.xlu0
        %v382 = vpop.trf.xlu0
        %v383 = vpop.trf.xlu0
        %v384 = vpop.trf.xlu0
        %v385 = vpop.trf.xlu0
        %v386 = vpop.trf.xlu0
        %v387 = vpop.trf.xlu0
        %v388 = vpop.trf.xlu0
        %v389 = vpop.trf.xlu0
        %390 = vxpose.xlu0.b32.start [1/16] %v327, 128
        %391 = vxpose.xlu0.b32.cont [2/16] %v329, 128
        %392 = vxpose.xlu0.b32.cont [3/16] %v331, 128
        %393 = vxpose.xlu0.b32.cont [4/16] %v333, 128
        %394 = vxpose.xlu0.b32.cont [5/16] %v335, 128
        %395 = vxpose.xlu0.b32.cont [6/16] %v337, 128
        %396 = vxpose.xlu0.b32.cont [7/16] %v339, 128
        %397 = vxpose.xlu0.b32.cont [8/16] %v341, 128
        %398 = vxpose.xlu0.b32.cont [9/16] %v343, 128
        %399 = vxpose.xlu0.b32.cont [10/16] %v345, 128
        %400 = vxpose.xlu0.b32.cont [11/16] %v347, 128
        %401 = vxpose.xlu0.b32.cont [12/16] %v349, 128
        %402 = vxpose.xlu0.b32.cont [13/16] %v351, 128
        %403 = vxpose.xlu0.b32.cont [14/16] %v353, 128
        %404 = vxpose.xlu0.b32.cont [15/16] %v355, 128
        %405 = vxpose.xlu0.b32.end [16/16] %v357, 128
        %v406 = vpop.trf.xlu0
        %v407 = vpop.trf.xlu0
        %v408 = vpop.trf.xlu0
        %v409 = vpop.trf.xlu0
        %v410 = vpop.trf.xlu0
        %v411 = vpop.trf.xlu0
        %v412 = vpop.trf.xlu0
        %v413 = vpop.trf.xlu0
        %v414 = vpop.trf.xlu0
        %v415 = vpop.trf.xlu0
        %v416 = vpop.trf.xlu0
        %v417 = vpop.trf.xlu0
        %v418 = vpop.trf.xlu0
        %v419 = vpop.trf.xlu0
        %v420 = vpop.trf.xlu0
        %v421 = vpop.trf.xlu0
        %422 = vst [vmem:[%s190] sm:$0xff] %v374
        %423 = vst [vmem:[%s190 + $0x8] sm:$0xff] %v375
        %424 = vst [vmem:[%s190 + $0x10] sm:$0xff] %v376
        %425 = vst [vmem:[%s190 + $0x18] sm:$0xff] %v377
        %426 = vst [vmem:[%s190 + $0x20] sm:$0xff] %v378
        %427 = vst [vmem:[%s190 + $0x28] sm:$0xff] %v379
        %428 = vst [vmem:[%s190 + $0x30] sm:$0xff] %v380
        %429 = vst [vmem:[%s190 + $0x38] sm:$0xff] %v381
        %430 = vst [vmem:[%s190 + $0x40] sm:$0xff] %v382
        %431 = vst [vmem:[%s190 + $0x48] sm:$0xff] %v383
        %432 = vst [vmem:[%s190 + $0x50] sm:$0xff] %v384
        %433 = vst [vmem:[%s190 + $0x58] sm:$0xff] %v385
        %434 = vst [vmem:[%s190 + $0x60] sm:$0xff] %v386
        %435 = vst [vmem:[%s190 + $0x68] sm:$0xff] %v387
        %436 = vst [vmem:[%s190 + $0x70] sm:$0xff] %v388
        %437 = vst [vmem:[%s190 + $0x78] sm:$0xff] %v389
        %438 = vst [vmem:[%s190 + $0x80] sm:$0xff] %v406
        %439 = vst [vmem:[%s190 + $0x88] sm:$0xff] %v407
        %440 = vst [vmem:[%s190 + $0x90] sm:$0xff] %v408
        %441 = vst [vmem:[%s190 + $0x98] sm:$0xff] %v409
        %442 = vst [vmem:[%s190 + $0xa0] sm:$0xff] %v410
        %443 = vst [vmem:[%s190 + $0xa8] sm:$0xff] %v411
        %444 = vst [vmem:[%s190 + $0xb0] sm:$0xff] %v412
        %445 = vst [vmem:[%s190 + $0xb8] sm:$0xff] %v413
        %446 = vst [vmem:[%s190 + $0xc0] sm:$0xff] %v414
        %447 = vst [vmem:[%s190 + $0xc8] sm:$0xff] %v415
        %448 = vst [vmem:[%s190 + $0xd0] sm:$0xff] %v416
        %449 = vst [vmem:[%s190 + $0xd8] sm:$0xff] %v417
        %450 = vst [vmem:[%s190 + $0xe0] sm:$0xff] %v418
        %451 = vst [vmem:[%s190 + $0xe8] sm:$0xff] %v419
        %452 = vst [vmem:[%s190 + $0xf0] sm:$0xff] %v420
        %453 = vst [vmem:[%s190 + $0xf8] sm:$0xff] %v421
        %s454 = sand.u32 %s109, 1
        %s455 = scalar_lea.sflag [#allocation3], %s454
        %s456 = sand.u32 %s109, 1
        %s457 = smul.addr %s456, 256
        %s458 = scalar_lea.vmem [#allocation2], %s457
        // Predicated region
        $region33: #{base_pointnet_fwd.31} parent=31 // pred_check
          %p459 = pneg %p119
        $region34: #{base_pointnet_fwd.31} parent=31 // pred_check_branch
          %461 = sbr.rel (%p459) target = $region36
        $region35: #{base_pointnet_fwd.31} parent=31 // pred_region
          %463 = vsyncadd %s455, 0
          %s464 = smul.addr %s21, 64
          %s465 = sadd.s32 %s22, %s464
          %s466 = smul.addr %s465, 8
          %s467 = scalar_lea.hbm %s3, %s466
          %s468 = sshll.u32 %s458, 4
          %s469 = int_to_ptr.vmem [resolvable:$true] %s468
          %s470 = sshll.u32 %s467, 4
          %s471 = int_to_ptr.hbm [resolvable:$true] %s470
          %476 = dma.vmem_to_hbm [thread:$0]  %s469, 4096, %s471, %s455, 128, 256, 8
        $region36: #{base_pointnet_fwd.31} parent=31 // pred_fallthru
          _
      $region32: #{base_pointnet_fwd.31} parent=5 // pred_fallthru
        _
      %p477 = scmp.le.s32.totalorder 2, %s12
      // Predicated region
      $region37: #{base_pointnet_fwd.31} parent=5 // pred_check
        %p478 = pneg %p477
      $region38: #{base_pointnet_fwd.31} parent=5 // pred_check_branch
        %480 = sbr.rel (%p478) target = $region40
      $region39: #{base_pointnet_fwd.31} parent=5 // pred_region
        %s481 = ssub.s32 %s12, 2
        // Predicated region
        $region41: #{base_pointnet_fwd.31} parent=39 // pred_check
          %p482 = pneg %p125
        $region42: #{base_pointnet_fwd.31} parent=39 // pred_check_branch
          %484 = sbr.rel (%p482) target = $region44
        $region43: #{base_pointnet_fwd.31} parent=39 // pred_region
          %s485 = sand.u32 %s110, 1
          %s486 = scalar_lea.sflag [#allocation3], %s485
          %s487 = sand.u32 %s110, 1
          %s488 = smul.addr %s487, 256
          %s489 = scalar_lea.vmem [#allocation2], %s488
          %491 = dma.done %s486, 4096
        $region44: #{base_pointnet_fwd.31} parent=39 // pred_fallthru
          _
      $region40: #{base_pointnet_fwd.31} parent=5 // pred_fallthru
        _
    $region6: #{base_pointnet_fwd.31} parent=1 // loop_footer
      %s16 = sadd.s32 1, %s12
    $region7: #{base_pointnet_fwd.31} parent=1 // loop_footer_branch
      %11 = sbr.rel target = $region3
    $region8: #{base_pointnet_fwd.31} parent=1 // loop_exit
      _
    %492 = vsyncpa [#allocation3], 1
    %s493 = scalar_lea.sflag [#allocation3], 1
    %494 = vsyncpa %s493, 1

// kernel: base_pointnet_fwd.28
$region0: #{base_pointnet_fwd.28}
  #allocation0 [shape = 'u32[]', space=smem, size = 0x4, offset = 0x4, fixed_abs, tag = 'smem constant byte address 0x4 - core index']
  #allocation1 [shape = 'u32[72,128]{1,0:T(1,128)}', space=vmem, size = 0x9000, scoped, tag = 'internal scratch']
  %s0 = inlined_call_operand.vmem [shape: bf16[2,256,64], index: 0, kind: input, shape index: {}]
  %s1 = inlined_call_operand.vmem [shape: f32[1,64], index: 1, kind: input, shape index: {}]
  %s2 = inlined_call_operand.vmem [shape: f32[1,64], index: 2, kind: input, shape index: {}]
  %s3 = inlined_call_operand.vmem [shape: bf16[2,64,64], index: 3, kind: input, shape index: {}]
  %s4 = inlined_call_operand.vmem [shape: bf16[64,64], index: 4, kind: input, shape index: {}]
  %s5 = inlined_call_operand.vmem [shape: bf16[2,256,64], index: 5, kind: output, shape index: {0}]
  %s6 = inlined_call_operand.vmem [shape: f32[2,2,1,64], index: 6, kind: output, shape index: {1}]
  %s7 = inlined_call_operand.vmem [shape: f32[2,2,1,64], index: 7, kind: output, shape index: {2}]
  %8 = xla_tuple %s5, %s6, %s7
  %s9 = sld [smem:[#allocation0]]
  $region69: #{base_pointnet_fwd.28} parent=0
    _
  %s11 = ssub.s32 1, %s9
  %s12 = scalar_select 0, %s11, %s9
  loop: start=0, step=1, limit=6
  $region2: #{base_pointnet_fwd.28} parent=0 // loop_pre_header
    _
  $region3: #{base_pointnet_fwd.28} parent=0 // loop_header
    %s14 = sphi 0, %s18
    %p15 = scmp.ge.s32.totalorder %s14, 6
    %s21 = sphi 0, %s33
    %s22 = sphi 0, %s29
    %s23 = sphi 0, %s21
    %s24 = sphi 0, %s22
    %s25 = sphi 0, %s23
    %s26 = sphi 0, %s24
    %s38 = sphi 0, %s40
    %s41 = sphi 0, %s38
    %s42 = sphi 0, %s41
    %s58 = sphi 0, %s42
    %s62 = sphi 0, %s62
    %s64 = sphi 0, %s62
    %s65 = sphi 0, %s64
    %s79 = sphi 0, %s65
    %s83 = sphi 0, %s83
    %s85 = sphi 0, %s83
    %s86 = sphi 0, %s85
    %s100 = sphi 0, %s86
    %s106 = sphi 0, %s108
    %s109 = sphi 0, %s106
    %s110 = sphi 0, %s109
    %s126 = sphi 0, %s110
    %s130 = sphi 0, %s130
    %s132 = sphi 0, %s130
    %s133 = sphi 0, %s132
    %s147 = sphi 0, %s133
    %s155 = sphi 0, %s157
    %s158 = sphi 0, %s155
    %s159 = sphi 0, %s158
    %s175 = sphi 0, %s159
    %s183 = sphi 0, %s185
    %s186 = sphi 0, %s183
    %s187 = sphi 0, %s186
    %s203 = sphi 0, %s187
    %s211 = sphi 0, %s213
    %s214 = sphi 0, %s211
    %s215 = sphi 0, %s214
    %s231 = sphi 0, %s215
  $region4: #{base_pointnet_fwd.28} parent=0 // loop_header_branch
    %17 = sbr.rel (%p15) target = $region8
  $region5: #{base_pointnet_fwd.28} parent=0 // loop_body
    %s19 = ssub.s32 %s14, 1
    %s20 = ssub.s32 %s14, 2
    %s27 = sadd.s32 1, %s22
    %p28 = scmp.ge.s32.totalorder %s27, 2
    %s29 = scalar_select %p28, 0, %s27
    %s30 = sadd.s32 1, %s21
    %s31 = scalar_select %p28, %s30, %s21
    %p32 = scmp.ge.s32.totalorder %s31, 2
    %s33 = scalar_select %p32, 0, %s31
    %s34 = ssub.s32 %s21, %s33
    %s35 = ssub.s32 %s22, %s29
    %s36 = sor.u32 %s34, %s35
    %p37 = scmp.eq.s32.totalorder %s36, 0
    %s39 = sadd.s32 %s38, 1
    %s40 = scalar_select %p37, %s38, %s39
    %p43 = pneg %p37
    %p44 = scmp.eq.s32.totalorder %s14, 3
    %p45 = por %p43, %p44
    %p46 = scmp.ne.s32.totalorder %s38, %s41
    %p47 = scmp.eq.s32.totalorder %s14, 0
    %p48 = por %p46, %p47
    %p49 = scmp.ne.s32.totalorder %s38, %s41
    %p50 = scmp.eq.s32.totalorder %s19, 3
    %p51 = por %p49, %p50
    %p52 = scmp.ne.s32.totalorder %s41, %s42
    %p53 = scmp.eq.s32.totalorder %s19, 0
    %p54 = por %p52, %p53
    %p55 = scmp.ne.s32.totalorder %s41, %s42
    %p56 = scmp.eq.s32.totalorder %s20, 3
    %p57 = por %p55, %p56
    %p59 = scmp.ne.s32.totalorder %s42, %s58
    %p60 = scmp.eq.s32.totalorder %s20, 0
    %p61 = por %p59, %p60
    %s63 = sadd.s32 %s62, 1
    %p66 = scmp.eq.s32.totalorder %s14, 3
    %p67 = scmp.ne.s32.totalorder %s62, %s64
    %p68 = scmp.eq.s32.totalorder %s14, 0
    %p69 = por %p67, %p68
    %p70 = scmp.ne.s32.totalorder %s62, %s64
    %p71 = scmp.eq.s32.totalorder %s19, 3
    %p72 = por %p70, %p71
    %p73 = scmp.ne.s32.totalorder %s64, %s65
    %p74 = scmp.eq.s32.totalorder %s19, 0
    %p75 = por %p73, %p74
    %p76 = scmp.ne.s32.totalorder %s64, %s65
    %p77 = scmp.eq.s32.totalorder %s20, 3
    %p78 = por %p76, %p77
    %p80 = scmp.ne.s32.totalorder %s65, %s79
    %p81 = scmp.eq.s32.totalorder %s20, 0
    %p82 = por %p80, %p81
    %s84 = sadd.s32 %s83, 1
    %p87 = scmp.eq.s32.totalorder %s14, 3
    %p88 = scmp.ne.s32.totalorder %s83, %s85
    %p89 = scmp.eq.s32.totalorder %s14, 0
    %p90 = por %p88, %p89
    %p91 = scmp.ne.s32.totalorder %s83, %s85
    %p92 = scmp.eq.s32.totalorder %s19, 3
    %p93 = por %p91, %p92
    %p94 = scmp.ne.s32.totalorder %s85, %s86
    %p95 = scmp.eq.s32.totalorder %s19, 0
    %p96 = por %p94, %p95
    %p97 = scmp.ne.s32.totalorder %s85, %s86
    %p98 = scmp.eq.s32.totalorder %s20, 3
    %p99 = por %p97, %p98
    %p101 = scmp.ne.s32.totalorder %s86, %s100
    %p102 = scmp.eq.s32.totalorder %s20, 0
    %p103 = por %p101, %p102
    %s104 = ssub.s32 %s21, %s33
    %p105 = scmp.eq.s32.totalorder %s104, 0
    %s107 = sadd.s32 %s106, 1
    %s108 = scalar_select %p105, %s106, %s107
    %p111 = pneg %p105
    %p112 = scmp.eq.s32.totalorder %s14, 3
    %p113 = por %p111, %p112
    %p114 = scmp.ne.s32.totalorder %s106, %s109
    %p115 = scmp.eq.s32.totalorder %s14, 0
    %p116 = por %p114, %p115
    %p117 = scmp.ne.s32.totalorder %s106, %s109
    %p118 = scmp.eq.s32.totalorder %s19, 3
    %p119 = por %p117, %p118
    %p120 = scmp.ne.s32.totalorder %s109, %s110
    %p121 = scmp.eq.s32.totalorder %s19, 0
    %p122 = por %p120, %p121
    %p123 = scmp.ne.s32.totalorder %s109, %s110
    %p124 = scmp.eq.s32.totalorder %s20, 3
    %p125 = por %p123, %p124
    %p127 = scmp.ne.s32.totalorder %s110, %s126
    %p128 = scmp.eq.s32.totalorder %s20, 0
    %p129 = por %p127, %p128
    %s131 = sadd.s32 %s130, 1
    %p134 = scmp.eq.s32.totalorder %s14, 3
    %p135 = scmp.ne.s32.totalorder %s130, %s132
    %p136 = scmp.eq.s32.totalorder %s14, 0
    %p137 = por %p135, %p136
    %p138 = scmp.ne.s32.totalorder %s130, %s132
    %p139 = scmp.eq.s32.totalorder %s19, 3
    %p140 = por %p138, %p139
    %p141 = scmp.ne.s32.totalorder %s132, %s133
    %p142 = scmp.eq.s32.totalorder %s19, 0
    %p143 = por %p141, %p142
    %p144 = scmp.ne.s32.totalorder %s132, %s133
    %p145 = scmp.eq.s32.totalorder %s20, 3
    %p146 = por %p144, %p145
    %p148 = scmp.ne.s32.totalorder %s133, %s147
    %p149 = scmp.eq.s32.totalorder %s20, 0
    %p150 = por %p148, %p149
    %s151 = ssub.s32 %s21, %s33
    %s152 = ssub.s32 %s22, %s29
    %s153 = sor.u32 %s151, %s152
    %p154 = scmp.eq.s32.totalorder %s153, 0
    %s156 = sadd.s32 %s155, 1
    %s157 = scalar_select %p154, %s155, %s156
    %p160 = pneg %p154
    %p161 = scmp.eq.s32.totalorder %s14, 3
    %p162 = por %p160, %p161
    %p163 = scmp.ne.s32.totalorder %s155, %s158
    %p164 = scmp.eq.s32.totalorder %s14, 0
    %p165 = por %p163, %p164
    %p166 = scmp.ne.s32.totalorder %s155, %s158
    %p167 = scmp.eq.s32.totalorder %s19, 3
    %p168 = por %p166, %p167
    %p169 = scmp.ne.s32.totalorder %s158, %s159
    %p170 = scmp.eq.s32.totalorder %s19, 0
    %p171 = por %p169, %p170
    %p172 = scmp.ne.s32.totalorder %s158, %s159
    %p173 = scmp.eq.s32.totalorder %s20, 3
    %p174 = por %p172, %p173
    %p176 = scmp.ne.s32.totalorder %s159, %s175
    %p177 = scmp.eq.s32.totalorder %s20, 0
    %p178 = por %p176, %p177
    %s179 = ssub.s32 %s21, %s33
    %s180 = ssub.s32 %s22, %s29
    %s181 = sor.u32 %s179, %s180
    %p182 = scmp.eq.s32.totalorder %s181, 0
    %s184 = sadd.s32 %s183, 1
    %s185 = scalar_select %p182, %s183, %s184
    %p188 = pneg %p182
    %p189 = scmp.eq.s32.totalorder %s14, 3
    %p190 = por %p188, %p189
    %p191 = scmp.ne.s32.totalorder %s183, %s186
    %p192 = scmp.eq.s32.totalorder %s14, 0
    %p193 = por %p191, %p192
    %p194 = scmp.ne.s32.totalorder %s183, %s186
    %p195 = scmp.eq.s32.totalorder %s19, 3
    %p196 = por %p194, %p195
    %p197 = scmp.ne.s32.totalorder %s186, %s187
    %p198 = scmp.eq.s32.totalorder %s19, 0
    %p199 = por %p197, %p198
    %p200 = scmp.ne.s32.totalorder %s186, %s187
    %p201 = scmp.eq.s32.totalorder %s20, 3
    %p202 = por %p200, %p201
    %p204 = scmp.ne.s32.totalorder %s187, %s203
    %p205 = scmp.eq.s32.totalorder %s20, 0
    %p206 = por %p204, %p205
    %s207 = ssub.s32 %s21, %s33
    %s208 = ssub.s32 %s22, %s29
    %s209 = sor.u32 %s207, %s208
    %p210 = scmp.eq.s32.totalorder %s209, 0
    %s212 = sadd.s32 %s211, 1
    %s213 = scalar_select %p210, %s211, %s212
    %p216 = pneg %p210
    %p217 = scmp.eq.s32.totalorder %s14, 3
    %p218 = por %p216, %p217
    %p219 = scmp.ne.s32.totalorder %s211, %s214
    %p220 = scmp.eq.s32.totalorder %s14, 0
    %p221 = por %p219, %p220
    %p222 = scmp.ne.s32.totalorder %s211, %s214
    %p223 = scmp.eq.s32.totalorder %s19, 3
    %p224 = por %p222, %p223
    %p225 = scmp.ne.s32.totalorder %s214, %s215
    %p226 = scmp.eq.s32.totalorder %s19, 0
    %p227 = por %p225, %p226
    %p228 = scmp.ne.s32.totalorder %s214, %s215
    %p229 = scmp.eq.s32.totalorder %s20, 3
    %p230 = por %p228, %p229
    %p232 = scmp.ne.s32.totalorder %s215, %s231
    %p233 = scmp.eq.s32.totalorder %s20, 0
    %p234 = por %p232, %p233
    %p235 = scmp.le.s32.totalorder 1, %s14
    %p236 = scmp.lt.s32.totalorder %s14, 5
    %p237 = pnand %p235, %p236
    %p238 = pneg %p237
    // Predicated region
    $region9: #{base_pointnet_fwd.28} parent=5 // pred_check
      _
    $region10: #{base_pointnet_fwd.28} parent=5 // pred_check_branch
      %240 = sbr.rel (%p237) target = $region12
    $region11: #{base_pointnet_fwd.28} parent=5 // pred_region
      %s241 = ssub.s32 %s14, 1
      // Predicated region
      $region13: #{base_pointnet_fwd.28} parent=11 // pred_check
        %p242 = pneg %p75
      $region14: #{base_pointnet_fwd.28} parent=11 // pred_check_branch
        %244 = sbr.rel (%p242) target = $region16
      $region15: #{base_pointnet_fwd.28} parent=11 // pred_region
        _
      $region16: #{base_pointnet_fwd.28} parent=11 // pred_fallthru
        _
      // Predicated region
      $region17: #{base_pointnet_fwd.28} parent=11 // pred_check
        %p245 = pneg %p96
      $region18: #{base_pointnet_fwd.28} parent=11 // pred_check_branch
        %247 = sbr.rel (%p245) target = $region20
      $region19: #{base_pointnet_fwd.28} parent=11 // pred_region
        _
      $region20: #{base_pointnet_fwd.28} parent=11 // pred_fallthru
        _
      // Predicated region
      $region21: #{base_pointnet_fwd.28} parent=11 // pred_check
        %p248 = pneg %p143
      $region22: #{base_pointnet_fwd.28} parent=11 // pred_check_branch
        %250 = sbr.rel (%p248) target = $region24
      $region23: #{base_pointnet_fwd.28} parent=11 // pred_region
        _
      $region24: #{base_pointnet_fwd.28} parent=11 // pred_fallthru
        _
    $region12: #{base_pointnet_fwd.28} parent=5 // pred_fallthru
      _
    %p251 = scmp.lt.s32.totalorder %s14, 4
    // Predicated region
    $region25: #{base_pointnet_fwd.28} parent=5 // pred_check
      %p252 = pneg %p251
    $region26: #{base_pointnet_fwd.28} parent=5 // pred_check_branch
      %254 = sbr.rel (%p252) target = $region28
    $region27: #{base_pointnet_fwd.28} parent=5 // pred_region
      // Predicated region
      $region29: #{base_pointnet_fwd.28} parent=27 // pred_check
        %p255 = pneg %p48
      $region30: #{base_pointnet_fwd.28} parent=27 // pred_check_branch
        %257 = sbr.rel (%p255) target = $region32
      $region31: #{base_pointnet_fwd.28} parent=27 // pred_region
        %s258 = smul.u32 16, %s22
        %p259 = scmp.lt.s32.totalorder %s21, 1
        %s260 = scalar_select %p259, %s21, 1
        %p261 = scmp.lt.s32.totalorder %s258, 31
        %s262 = scalar_select %p261, %s258, 31
        %s263 = smul.addr %s260, 32
        %s264 = sadd.s32 %s262, %s263
        %s265 = smul.addr %s264, 4
        %s266 = scalar_lea.vmem %s0, %s265
        %s267 = smul.u32 16, %s22
      $region32: #{base_pointnet_fwd.28} parent=27 // pred_fallthru
        _
      // Predicated region
      $region33: #{base_pointnet_fwd.28} parent=27 // pred_check
        %p268 = pneg %p116
      $region34: #{base_pointnet_fwd.28} parent=27 // pred_check_branch
        %270 = sbr.rel (%p268) target = $region36
      $region35: #{base_pointnet_fwd.28} parent=27 // pred_region
        %p271 = scmp.lt.s32.totalorder %s21, 1
        %s272 = scalar_select %p271, %s21, 1
        %s273 = smul.addr %s272, 8
        %s274 = smul.addr %s273, 4
        %s275 = scalar_lea.vmem %s3, %s274
      $region36: #{base_pointnet_fwd.28} parent=27 // pred_fallthru
        _
    $region28: #{base_pointnet_fwd.28} parent=5 // pred_fallthru
      _
    %p276 = scmp.le.s32.totalorder 1, %s14
    %p277 = scmp.lt.s32.totalorder %s14, 5
    %p278 = pnand %p276, %p277
    %p279 = pneg %p278
    // Predicated region
    $region37: #{base_pointnet_fwd.28} parent=5 // pred_check
      _
    $region38: #{base_pointnet_fwd.28} parent=5 // pred_check_branch
      %281 = sbr.rel (%p278) target = $region40
    $region39: #{base_pointnet_fwd.28} parent=5 // pred_region
      %s282 = ssub.s32 %s14, 1
      %s283 = smul.u32 16, %s24
      %p284 = scmp.lt.s32.totalorder %s23, 1
      %s285 = scalar_select %p284, %s23, 1
      %p286 = scmp.lt.s32.totalorder %s283, 31
      %s287 = scalar_select %p286, %s283, 31
      %s288 = smul.addr %s285, 32
      %s289 = sadd.s32 %s287, %s288
      %s290 = smul.addr %s289, 4
      %s291 = scalar_lea.vmem %s0, %s290
      %p292 = pneg %p54
      %p293 = pneg %p51
      %p294 = pneg %p75
      %p295 = pneg %p72
      %p296 = pneg %p96
      %p297 = pneg %p93
      %p298 = scmp.lt.s32.totalorder %s23, 1
      %s299 = scalar_select %p298, %s23, 1
      %s300 = smul.addr %s299, 8
      %s301 = smul.addr %s300, 4
      %s302 = scalar_lea.vmem %s3, %s301
      %p303 = pneg %p122
      %p304 = pneg %p119
      %p305 = pneg %p143
      %p306 = pneg %p140
      %p307 = pneg %p171
      %p308 = pneg %p168
      %s309 = smul.u32 16, %s24
      %p310 = scmp.lt.s32.totalorder %s23, 1
      %s311 = scalar_select %p310, %s23, 1
      %p312 = scmp.lt.s32.totalorder %s309, 31
      %s313 = scalar_select %p312, %s309, 31
      %s314 = smul.addr %s311, 32
      %s315 = sadd.s32 %s313, %s314
      %s316 = smul.addr %s315, 4
      %s317 = scalar_lea.vmem %s5, %s316
      %p318 = pneg %p199
      %p319 = pneg %p196
      %p320 = scmp.lt.s32.totalorder %s23, 1
      %s321 = scalar_select %p320, %s23, 1
      %p322 = scmp.lt.s32.totalorder %s24, 1
      %s323 = scalar_select %p322, %s24, 1
      %s324 = smul.addr %s321, 2
      %s325 = sadd.s32 %s323, %s324
      %s326 = scalar_lea.vmem %s6, %s325
      %p327 = pneg %p227
      %p328 = pneg %p224
      %p329 = scmp.lt.s32.totalorder %s23, 1
      %s330 = scalar_select %p329, %s23, 1
      %p331 = scmp.lt.s32.totalorder %s24, 1
      %s332 = scalar_select %p331, %s24, 1
      %s333 = smul.addr %s330, 2
      %s334 = sadd.s32 %s332, %s333
      %s335 = scalar_lea.vmem %s7, %s334
      %s336 = smul.u32 16, %s24
      %p337 = scmp.lt.s32.totalorder %s23, 1
      %s338 = scalar_select %p337, %s23, 1
      %p339 = scmp.lt.s32.totalorder %s336, 31
      %s340 = scalar_select %p339, %s336, 31
      %s341 = smul.addr %s338, 32
      %s342 = sadd.s32 %s340, %s341
      %s343 = smul.addr %s342, 4
      %s344 = scalar_lea.vmem %s0, %s343
      %s345 = smul.u32 16, %s24
      %p346 = scmp.lt.s32.totalorder %s23, 1
      %s347 = scalar_select %p346, %s23, 1
      %s348 = smul.addr %s347, 8
      %s349 = smul.addr %s348, 4
      %s350 = scalar_lea.vmem %s3, %s349
      %s351 = smul.u32 16, %s24
      %p352 = scmp.lt.s32.totalorder %s23, 1
      %s353 = scalar_select %p352, %s23, 1
      %p354 = scmp.lt.s32.totalorder %s351, 31
      %s355 = scalar_select %p354, %s351, 31
      %s356 = smul.addr %s353, 32
      %s357 = sadd.s32 %s355, %s356
      %s358 = smul.addr %s357, 4
      %s359 = scalar_lea.vmem %s5, %s358
      %s360 = smul.u32 16, %s24
      %p361 = scmp.lt.s32.totalorder %s23, 1
      %s362 = scalar_select %p361, %s23, 1
      %p363 = scmp.lt.s32.totalorder %s24, 1
      %s364 = scalar_select %p363, %s24, 1
      %s365 = smul.addr %s362, 2
      %s366 = sadd.s32 %s364, %s365
      %s367 = scalar_lea.vmem %s6, %s366
      %p368 = scmp.lt.s32.totalorder %s23, 1
      %s369 = scalar_select %p368, %s23, 1
      %p370 = scmp.lt.s32.totalorder %s24, 1
      %s371 = scalar_select %p370, %s24, 1
      %s372 = smul.addr %s369, 2
      %s373 = sadd.s32 %s371, %s372
      %s374 = scalar_lea.vmem %s7, %s373
      %v376 = vld [vmem:[%s344] sm:$0xf]
      %v377 = vld [vmem:[%s344 + $0x4] sm:$0xf]
      %v378 = vld [vmem:[%s344 + $0x8] sm:$0xf]
      %v379 = vld [vmem:[%s344 + $0xc] sm:$0xf]
      %v380 = vld [vmem:[%s344 + $0x10] sm:$0xf]
      %v381 = vld [vmem:[%s344 + $0x14] sm:$0xf]
      %v382 = vld [vmem:[%s344 + $0x18] sm:$0xf]
      %v383 = vld [vmem:[%s344 + $0x1c] sm:$0xf]
      %v384 = vld [vmem:[%s344 + $0x20] sm:$0xf]
      %v385 = vld [vmem:[%s344 + $0x24] sm:$0xf]
      %v386 = vld [vmem:[%s344 + $0x28] sm:$0xf]
      %v387 = vld [vmem:[%s344 + $0x2c] sm:$0xf]
      %v388 = vld [vmem:[%s344 + $0x30] sm:$0xf]
      %v389 = vld [vmem:[%s344 + $0x34] sm:$0xf]
      %v390 = vld [vmem:[%s344 + $0x38] sm:$0xf]
      %v391 = vld [vmem:[%s344 + $0x3c] sm:$0xf]
      %v392 = vunpack.c.l.bf16 %v376
      %v393 = vunpack.c.l.bf16 %v377
      %v394 = vunpack.c.l.bf16 %v378
      %v395 = vunpack.c.l.bf16 %v379
      %v396 = vunpack.c.l.bf16 %v380
      %v397 = vunpack.c.l.bf16 %v381
      %v398 = vunpack.c.l.bf16 %v382
      %v399 = vunpack.c.l.bf16 %v383
      %v400 = vunpack.c.l.bf16 %v384
      %v401 = vunpack.c.l.bf16 %v385
      %v402 = vunpack.c.l.bf16 %v386
      %v403 = vunpack.c.l.bf16 %v387
      %v404 = vunpack.c.l.bf16 %v388
      %v405 = vunpack.c.l.bf16 %v389
      %v406 = vunpack.c.l.bf16 %v390
      %v407 = vunpack.c.l.bf16 %v391
      %v408 = vld [vmem:[%s1] sm:$0x1]
      %v410 = vperm.slane %v408, 0
      %v412 = vmul.f32 %v392, %v410
      %v413 = vmul.f32 %v393, %v410
      %v414 = vmul.f32 %v394, %v410
      %v415 = vmul.f32 %v395, %v410
      %v416 = vmul.f32 %v396, %v410
      %v417 = vmul.f32 %v397, %v410
      %v418 = vmul.f32 %v398, %v410
      %v419 = vmul.f32 %v399, %v410
      %v420 = vmul.f32 %v400, %v410
      %v421 = vmul.f32 %v401, %v410
      %v422 = vmul.f32 %v402, %v410
      %v423 = vmul.f32 %v403, %v410
      %v424 = vmul.f32 %v404, %v410
      %v425 = vmul.f32 %v405, %v410
      %v426 = vmul.f32 %v406, %v410
      %v427 = vmul.f32 %v407, %v410
      %v428 = vld [vmem:[%s2] sm:$0x1]
      %v430 = vperm.slane %v428, 0
      %v432 = vadd.f32 %v412, %v430
      %v433 = vadd.f32 %v413, %v430
      %v434 = vadd.f32 %v414, %v430
      %v435 = vadd.f32 %v415, %v430
      %v436 = vadd.f32 %v416, %v430
      %v437 = vadd.f32 %v417, %v430
      %v438 = vadd.f32 %v418, %v430
      %v439 = vadd.f32 %v419, %v430
      %v440 = vadd.f32 %v420, %v430
      %v441 = vadd.f32 %v421, %v430
      %v442 = vadd.f32 %v422, %v430
      %v443 = vadd.f32 %v423, %v430
      %v444 = vadd.f32 %v424, %v430
      %v445 = vadd.f32 %v425, %v430
      %v446 = vadd.f32 %v426, %v430
      %v447 = vadd.f32 %v427, %v430
      %v448 = vmax.f32 %v432, 0.0
      %v449 = vmax.f32 %v433, 0.0
      %v450 = vmax.f32 %v434, 0.0
      %v451 = vmax.f32 %v435, 0.0
      %v452 = vmax.f32 %v436, 0.0
      %v453 = vmax.f32 %v437, 0.0
      %v454 = vmax.f32 %v438, 0.0
      %v455 = vmax.f32 %v439, 0.0
      %v456 = vmax.f32 %v440, 0.0
      %v457 = vmax.f32 %v441, 0.0
      %v458 = vmax.f32 %v442, 0.0
      %v459 = vmax.f32 %v443, 0.0
      %v460 = vmax.f32 %v444, 0.0
      %v461 = vmax.f32 %v445, 0.0
      %v462 = vmax.f32 %v446, 0.0
      %v463 = vmax.f32 %v447, 0.0
      %v464 = vpack.c.bf16 %v449, %v448
      %v465 = vpack.c.bf16 %v451, %v450
      %v466 = vpack.c.bf16 %v453, %v452
      %v467 = vpack.c.bf16 %v455, %v454
      %v468 = vpack.c.bf16 %v457, %v456
      %v469 = vpack.c.bf16 %v459, %v458
      %v470 = vpack.c.bf16 %v461, %v460
      %v471 = vpack.c.bf16 %v463, %v462
      %v472 = vld [vmem:[%s350] sm:$0xf]
      %v473 = vld [vmem:[%s350 + $0x4] sm:$0xf]
      %v474 = vld [vmem:[%s350 + $0x8] sm:$0xf]
      %v475 = vld [vmem:[%s350 + $0xc] sm:$0xf]
      %v476 = vld [vmem:[%s350 + $0x10] sm:$0xf]
      %v477 = vld [vmem:[%s350 + $0x14] sm:$0xf]
      %v478 = vld [vmem:[%s350 + $0x18] sm:$0xf]
      %v479 = vld [vmem:[%s350 + $0x1c] sm:$0xf]
      %v488 = vunpack.c.l.b16 %v472
      %v489 = vunpack.c.l.b16 %v473
      %v490 = vunpack.c.l.b16 %v474
      %v491 = vunpack.c.l.b16 %v475
      %v492 = vunpack.c.l.b16 %v476
      %v493 = vunpack.c.l.b16 %v477
      %v494 = vunpack.c.l.b16 %v478
      %v495 = vunpack.c.l.b16 %v479
      %v496 = vpack.c.b16 %v489, %v488
      %v497 = vpack.c.b16 %v491, %v490
      %v498 = vpack.c.b16 %v493, %v492
      %v499 = vpack.c.b16 %v495, %v494
      %vm504 = vcmask 523264
      %v506 = vsel %vm504, %v464, 0
      %v509 = vsel %vm504, %v465, 0
      %v512 = vsel %vm504, %v466, 0
      %v515 = vsel %vm504, %v467, 0
      %v518 = vsel %vm504, %v468, 0
      %v521 = vsel %vm504, %v469, 0
      %v524 = vsel %vm504, %v470, 0
      %v527 = vsel %vm504, %v471, 0
      %529 = vmatpush.bf16.msra.mxu0 0
      %530 = vmatpush.bf16.msra.mxu0 0
      %531 = vmatpush.bf16.msra.mxu0 0
      %532 = vmatpush.bf16.msra.mxu0 0
      %533 = vmatpush.bf16.msra.mxu0 %v499
      %534 = vmatpush.bf16.msra.mxu0 %v498
      %535 = vmatpush.bf16.msra.mxu0 %v497
      %536 = vmatpush.bf16.msra.mxu0 %v496
      %537 = vmatmul.bf16.gmra.mxu0 %v506
      %v538 = vpop.f32.mrf.mxu0
      %v539 = vadd.f32 0.0, %v538
      %v540 = vpop.f32.mrf.mxu0
      %v541 = vadd.f32 0.0, %v540
      %542 = vmatmul.bf16.gmra.mxu0 %v509
      %v543 = vpop.f32.mrf.mxu0
      %v544 = vadd.f32 0.0, %v543
      %v545 = vpop.f32.mrf.mxu0
      %v546 = vadd.f32 0.0, %v545
      %547 = vmatmul.bf16.gmra.mxu0 %v512
      %v548 = vpop.f32.mrf.mxu0
      %v549 = vadd.f32 0.0, %v548
      %v550 = vpop.f32.mrf.mxu0
      %v551 = vadd.f32 0.0, %v550
      %552 = vmatmul.bf16.gmra.mxu0 %v515
      %v553 = vpop.f32.mrf.mxu0
      %v554 = vadd.f32 0.0, %v553
      %v555 = vpop.f32.mrf.mxu0
      %v556 = vadd.f32 0.0, %v555
      %557 = vmatmul.bf16.gmra.mxu0 %v518
      %v558 = vpop.f32.mrf.mxu0
      %v559 = vadd.f32 0.0, %v558
      %v560 = vpop.f32.mrf.mxu0
      %v561 = vadd.f32 0.0, %v560
      %562 = vmatmul.bf16.gmra.mxu0 %v521
      %v563 = vpop.f32.mrf.mxu0
      %v564 = vadd.f32 0.0, %v563
      %v565 = vpop.f32.mrf.mxu0
      %v566 = vadd.f32 0.0, %v565
      %567 = vmatmul.bf16.gmra.mxu0 %v524
      %v568 = vpop.f32.mrf.mxu0
      %v569 = vadd.f32 0.0, %v568
      %v570 = vpop.f32.mrf.mxu0
      %v571 = vadd.f32 0.0, %v570
      %572 = vmatmul.bf16.gmra.mxu0 %v527
      %v573 = vpop.f32.mrf.mxu0
      %v574 = vadd.f32 0.0, %v573
      %v575 = vpop.f32.mrf.mxu0
      %v576 = vadd.f32 0.0, %v575
      %577 = vdwg.mxu0
      %v578 = vpack.c.bf16 %v541, %v539
      %v579 = vpack.c.bf16 %v546, %v544
      %v580 = vpack.c.bf16 %v551, %v549
      %v581 = vpack.c.bf16 %v556, %v554
      %v582 = vpack.c.bf16 %v561, %v559
      %v583 = vpack.c.bf16 %v566, %v564
      %v584 = vpack.c.bf16 %v571, %v569
      %v585 = vpack.c.bf16 %v576, %v574
      %v586 = vld [vmem:[%s4] sm:$0xf]
      %v587 = vld [vmem:[%s4 + $0x4] sm:$0xf]
      %v588 = vld [vmem:[%s4 + $0x8] sm:$0xf]
      %v589 = vld [vmem:[%s4 + $0xc] sm:$0xf]
      %v590 = vld [vmem:[%s4 + $0x10] sm:$0xf]
      %v591 = vld [vmem:[%s4 + $0x14] sm:$0xf]
      %v592 = vld [vmem:[%s4 + $0x18] sm:$0xf]
      %v593 = vld [vmem:[%s4 + $0x1c] sm:$0xf]
      %v602 = vunpack.c.l.b16 %v586
      %v603 = vunpack.c.l.b16 %v587
      %v604 = vunpack.c.l.b16 %v588
      %v605 = vunpack.c.l.b16 %v589
      %v606 = vunpack.c.l.b16 %v590
      %v607 = vunpack.c.l.b16 %v591
      %v608 = vunpack.c.l.b16 %v592
      %v609 = vunpack.c.l.b16 %v593
      %v610 = vpack.c.b16 %v603, %v602
      %v611 = vpack.c.b16 %v605, %v604
      %v612 = vpack.c.b16 %v607, %v606
      %v613 = vpack.c.b16 %v609, %v608
      %v619 = vsel %vm504, %v578, 0
      %v622 = vsel %vm504, %v579, 0
      %v625 = vsel %vm504, %v580, 0
      %v628 = vsel %vm504, %v581, 0
      %v631 = vsel %vm504, %v582, 0
      %v634 = vsel %vm504, %v583, 0
      %v637 = vsel %vm504, %v584, 0
      %v640 = vsel %vm504, %v585, 0
      %642 = vmatpush.bf16.msra.mxu0 0
      %643 = vmatpush.bf16.msra.mxu0 0
      %644 = vmatpush.bf16.msra.mxu0 0
      %645 = vmatpush.bf16.msra.mxu0 0
      %646 = vmatpush.bf16.msra.mxu0 %v613
      %647 = vmatpush.bf16.msra.mxu0 %v612
      %648 = vmatpush.bf16.msra.mxu0 %v611
      %649 = vmatpush.bf16.msra.mxu0 %v610
      %650 = vmatmul.bf16.gmra.mxu0 %v619
      %v651 = vpop.f32.mrf.mxu0
      %v652 = vadd.f32 0.0, %v651
      %v653 = vpop.f32.mrf.mxu0
      %v654 = vadd.f32 0.0, %v653
      %655 = vmatmul.bf16.gmra.mxu0 %v622
      %v656 = vpop.f32.mrf.mxu0
      %v657 = vadd.f32 0.0, %v656
      %v658 = vpop.f32.mrf.mxu0
      %v659 = vadd.f32 0.0, %v658
      %660 = vmatmul.bf16.gmra.mxu0 %v625
      %v661 = vpop.f32.mrf.mxu0
      %v662 = vadd.f32 0.0, %v661
      %v663 = vpop.f32.mrf.mxu0
      %v664 = vadd.f32 0.0, %v663
      %665 = vmatmul.bf16.gmra.mxu0 %v628
      %v666 = vpop.f32.mrf.mxu0
      %v667 = vadd.f32 0.0, %v666
      %v668 = vpop.f32.mrf.mxu0
      %v669 = vadd.f32 0.0, %v668
      %670 = vmatmul.bf16.gmra.mxu0 %v631
      %v671 = vpop.f32.mrf.mxu0
      %v672 = vadd.f32 0.0, %v671
      %v673 = vpop.f32.mrf.mxu0
      %v674 = vadd.f32 0.0, %v673
      %675 = vmatmul.bf16.gmra.mxu0 %v634
      %v676 = vpop.f32.mrf.mxu0
      %v677 = vadd.f32 0.0, %v676
      %v678 = vpop.f32.mrf.mxu0
      %v679 = vadd.f32 0.0, %v678
      %680 = vmatmul.bf16.gmra.mxu0 %v637
      %v681 = vpop.f32.mrf.mxu0
      %v682 = vadd.f32 0.0, %v681
      %v683 = vpop.f32.mrf.mxu0
      %v684 = vadd.f32 0.0, %v683
      %685 = vmatmul.bf16.gmra.mxu0 %v640
      %v686 = vpop.f32.mrf.mxu0
      %v687 = vadd.f32 0.0, %v686
      %v688 = vpop.f32.mrf.mxu0
      %v689 = vadd.f32 0.0, %v688
      %690 = vdwg.mxu0
      %v691 = vsel %vm504, %v652, 0.0
      %v692 = vsel %vm504, %v654, 0.0
      %v693 = vadd.f32 %v691, %v692
      %v694 = vsel %vm504, %v657, 0.0
      %v695 = vadd.f32 %v693, %v694
      %v696 = vsel %vm504, %v659, 0.0
      %v697 = vadd.f32 %v695, %v696
      %v698 = vsel %vm504, %v662, 0.0
      %v699 = vadd.f32 %v697, %v698
      %v700 = vsel %vm504, %v664, 0.0
      %v701 = vadd.f32 %v699, %v700
      %v702 = vsel %vm504, %v667, 0.0
      %v703 = vadd.f32 %v701, %v702
      %v704 = vsel %vm504, %v669, 0.0
      %v705 = vadd.f32 %v703, %v704
      %v706 = vsel %vm504, %v672, 0.0
      %v707 = vadd.f32 %v705, %v706
      %v708 = vsel %vm504, %v674, 0.0
      %v709 = vadd.f32 %v707, %v708
      %v710 = vsel %vm504, %v677, 0.0
      %v711 = vadd.f32 %v709, %v710
      %v712 = vsel %vm504, %v679, 0.0
      %v713 = vadd.f32 %v711, %v712
      %v714 = vsel %vm504, %v682, 0.0
      %v715 = vadd.f32 %v713, %v714
      %v716 = vsel %vm504, %v684, 0.0
      %v717 = vadd.f32 %v715, %v716
      %v718 = vsel %vm504, %v687, 0.0
      %v719 = vadd.f32 %v717, %v718
      %v720 = vsel %vm504, %v689, 0.0
      %v721 = vadd.f32 %v719, %v720
      %v722 = vrot.slane %v721, 4
      %v723 = vadd.f32 %v721, %v722
      %v724 = vrot.slane %v723, 2
      %v725 = vadd.f32 %v723, %v724
      %v726 = vrot.slane %v725, 1
      %v727 = vadd.f32 %v725, %v726
      %vm728 = vcmask 516096
      %729 = vst.msk [vmem:[%s367] sm:$0x1] %vm728, %v727
      %v730 = vmul.f32 %v652, %v652
      %v731 = vmul.f32 %v654, %v654
      %v732 = vmul.f32 %v657, %v657
      %v733 = vmul.f32 %v659, %v659
      %v734 = vmul.f32 %v662, %v662
      %v735 = vmul.f32 %v664, %v664
      %v736 = vmul.f32 %v667, %v667
      %v737 = vmul.f32 %v669, %v669
      %v738 = vmul.f32 %v672, %v672
      %v739 = vmul.f32 %v674, %v674
      %v740 = vmul.f32 %v677, %v677
      %v741 = vmul.f32 %v679, %v679
      %v742 = vmul.f32 %v682, %v682
      %v743 = vmul.f32 %v684, %v684
      %v744 = vmul.f32 %v687, %v687
      %v745 = vmul.f32 %v689, %v689
      %v746 = vsel %vm504, %v730, 0.0
      %v747 = vsel %vm504, %v731, 0.0
      %v748 = vadd.f32 %v746, %v747
      %v749 = vsel %vm504, %v732, 0.0
      %v750 = vadd.f32 %v748, %v749
      %v751 = vsel %vm504, %v733, 0.0
      %v752 = vadd.f32 %v750, %v751
      %v753 = vsel %vm504, %v734, 0.0
      %v754 = vadd.f32 %v752, %v753
      %v755 = vsel %vm504, %v735, 0.0
      %v756 = vadd.f32 %v754, %v755
      %v757 = vsel %vm504, %v736, 0.0
      %v758 = vadd.f32 %v756, %v757
      %v759 = vsel %vm504, %v737, 0.0
      %v760 = vadd.f32 %v758, %v759
      %v761 = vsel %vm504, %v738, 0.0
      %v762 = vadd.f32 %v760, %v761
      %v763 = vsel %vm504, %v739, 0.0
      %v764 = vadd.f32 %v762, %v763
      %v765 = vsel %vm504, %v740, 0.0
      %v766 = vadd.f32 %v764, %v765
      %v767 = vsel %vm504, %v741, 0.0
      %v768 = vadd.f32 %v766, %v767
      %v769 = vsel %vm504, %v742, 0.0
      %v770 = vadd.f32 %v768, %v769
      %v771 = vsel %vm504, %v743, 0.0
      %v772 = vadd.f32 %v770, %v771
      %v773 = vsel %vm504, %v744, 0.0
      %v774 = vadd.f32 %v772, %v773
      %v775 = vsel %vm504, %v745, 0.0
      %v776 = vadd.f32 %v774, %v775
      %v777 = vrot.slane %v776, 4
      %v778 = vadd.f32 %v776, %v777
      %v779 = vrot.slane %v778, 2
      %v780 = vadd.f32 %v778, %v779
      %v781 = vrot.slane %v780, 1
      %v782 = vadd.f32 %v780, %v781
      %783 = vst.msk [vmem:[%s374] sm:$0x1] %vm728, %v782
      %v784 = vpack.c.bf16 %v652, %v652
      %v785 = vpack.c.bf16 %v654, %v654
      %v786 = vpack.c.bf16 %v657, %v657
      %v787 = vpack.c.bf16 %v659, %v659
      %v788 = vpack.c.bf16 %v662, %v662
      %v789 = vpack.c.bf16 %v664, %v664
      %v790 = vpack.c.bf16 %v667, %v667
      %v791 = vpack.c.bf16 %v669, %v669
      %v792 = vpack.c.bf16 %v672, %v672
      %v793 = vpack.c.bf16 %v674, %v674
      %v794 = vpack.c.bf16 %v677, %v677
      %v795 = vpack.c.bf16 %v679, %v679
      %v796 = vpack.c.bf16 %v682, %v682
      %v797 = vpack.c.bf16 %v684, %v684
      %v798 = vpack.c.bf16 %v687, %v687
      %v799 = vpack.c.bf16 %v689, %v689
      %vm800 = vcmask 519168
      %801 = vst.msk [vmem:[%s359] sm:$0xf] %vm800, %v784
      %802 = vst.msk [vmem:[%s359 + $0x4] sm:$0xf] %vm800, %v785
      %803 = vst.msk [vmem:[%s359 + $0x8] sm:$0xf] %vm800, %v786
      %804 = vst.msk [vmem:[%s359 + $0xc] sm:$0xf] %vm800, %v787
      %805 = vst.msk [vmem:[%s359 + $0x10] sm:$0xf] %vm800, %v788
      %806 = vst.msk [vmem:[%s359 + $0x14] sm:$0xf] %vm800, %v789
      %807 = vst.msk [vmem:[%s359 + $0x18] sm:$0xf] %vm800, %v790
      %808 = vst.msk [vmem:[%s359 + $0x1c] sm:$0xf] %vm800, %v791
      %809 = vst.msk [vmem:[%s359 + $0x20] sm:$0xf] %vm800, %v792
      %810 = vst.msk [vmem:[%s359 + $0x24] sm:$0xf] %vm800, %v793
      %811 = vst.msk [vmem:[%s359 + $0x28] sm:$0xf] %vm800, %v794
      %812 = vst.msk [vmem:[%s359 + $0x2c] sm:$0xf] %vm800, %v795
      %813 = vst.msk [vmem:[%s359 + $0x30] sm:$0xf] %vm800, %v796
      %814 = vst.msk [vmem:[%s359 + $0x34] sm:$0xf] %vm800, %v797
      %815 = vst.msk [vmem:[%s359 + $0x38] sm:$0xf] %vm800, %v798
      %816 = vst.msk [vmem:[%s359 + $0x3c] sm:$0xf] %vm800, %v799
      %s817 = smul.u32 16, %s24
      %p818 = scmp.lt.s32.totalorder %s23, 1
      %s819 = scalar_select %p818, %s23, 1
      %p820 = scmp.lt.s32.totalorder %s817, 31
      %s821 = scalar_select %p820, %s817, 31
      %s822 = smul.addr %s819, 32
      %s823 = sadd.s32 %s821, %s822
      %s824 = smul.addr %s823, 4
      %s825 = scalar_lea.vmem %s5, %s824
      %p826 = scmp.lt.s32.totalorder %s23, 1
      %s827 = scalar_select %p826, %s23, 1
      %p828 = scmp.lt.s32.totalorder %s24, 1
      %s829 = scalar_select %p828, %s24, 1
      %s830 = smul.addr %s827, 2
      %s831 = sadd.s32 %s829, %s830
      %s832 = scalar_lea.vmem %s6, %s831
      %p833 = scmp.lt.s32.totalorder %s23, 1
      %s834 = scalar_select %p833, %s23, 1
      %p835 = scmp.lt.s32.totalorder %s24, 1
      %s836 = scalar_select %p835, %s24, 1
      %s837 = smul.addr %s834, 2
      %s838 = sadd.s32 %s836, %s837
      %s839 = scalar_lea.vmem %s7, %s838
      // Predicated region
      $region41: #{base_pointnet_fwd.28} parent=39 // pred_check
        %p840 = pneg %p168
      $region42: #{base_pointnet_fwd.28} parent=39 // pred_check_branch
        %842 = sbr.rel (%p840) target = $region44
      $region43: #{base_pointnet_fwd.28} parent=39 // pred_region
        %s843 = smul.u32 16, %s24
      $region44: #{base_pointnet_fwd.28} parent=39 // pred_fallthru
        _
      // Predicated region
      $region45: #{base_pointnet_fwd.28} parent=39 // pred_check
        %p844 = pneg %p196
      $region46: #{base_pointnet_fwd.28} parent=39 // pred_check_branch
        %846 = sbr.rel (%p844) target = $region48
      $region47: #{base_pointnet_fwd.28} parent=39 // pred_region
        _
      $region48: #{base_pointnet_fwd.28} parent=39 // pred_fallthru
        _
      // Predicated region
      $region49: #{base_pointnet_fwd.28} parent=39 // pred_check
        %p847 = pneg %p224
      $region50: #{base_pointnet_fwd.28} parent=39 // pred_check_branch
        %849 = sbr.rel (%p847) target = $region52
      $region51: #{base_pointnet_fwd.28} parent=39 // pred_region
        _
      $region52: #{base_pointnet_fwd.28} parent=39 // pred_fallthru
        _
    $region40: #{base_pointnet_fwd.28} parent=5 // pred_fallthru
      _
    %p850 = scmp.le.s32.totalorder 2, %s14
    // Predicated region
    $region53: #{base_pointnet_fwd.28} parent=5 // pred_check
      %p851 = pneg %p850
    $region54: #{base_pointnet_fwd.28} parent=5 // pred_check_branch
      %853 = sbr.rel (%p851) target = $region56
    $region55: #{base_pointnet_fwd.28} parent=5 // pred_region
      %s854 = ssub.s32 %s14, 2
      // Predicated region
      $region57: #{base_pointnet_fwd.28} parent=55 // pred_check
        %p855 = pneg %p174
      $region58: #{base_pointnet_fwd.28} parent=55 // pred_check_branch
        %857 = sbr.rel (%p855) target = $region60
      $region59: #{base_pointnet_fwd.28} parent=55 // pred_region
        %s858 = smul.u32 16, %s26
        %p859 = scmp.lt.s32.totalorder %s25, 1
        %s860 = scalar_select %p859, %s25, 1
        %p861 = scmp.lt.s32.totalorder %s858, 31
        %s862 = scalar_select %p861, %s858, 31
        %s863 = smul.addr %s860, 32
        %s864 = sadd.s32 %s862, %s863
        %s865 = smul.addr %s864, 4
        %s866 = scalar_lea.vmem %s5, %s865
      $region60: #{base_pointnet_fwd.28} parent=55 // pred_fallthru
        _
      // Predicated region
      $region61: #{base_pointnet_fwd.28} parent=55 // pred_check
        %p867 = pneg %p202
      $region62: #{base_pointnet_fwd.28} parent=55 // pred_check_branch
        %869 = sbr.rel (%p867) target = $region64
      $region63: #{base_pointnet_fwd.28} parent=55 // pred_region
        %p870 = scmp.lt.s32.totalorder %s25, 1
        %s871 = scalar_select %p870, %s25, 1
        %p872 = scmp.lt.s32.totalorder %s26, 1
        %s873 = scalar_select %p872, %s26, 1
        %s874 = smul.addr %s871, 2
        %s875 = sadd.s32 %s873, %s874
        %s876 = scalar_lea.vmem %s6, %s875
      $region64: #{base_pointnet_fwd.28} parent=55 // pred_fallthru
        _
      // Predicated region
      $region65: #{base_pointnet_fwd.28} parent=55 // pred_check
        %p877 = pneg %p230
      $region66: #{base_pointnet_fwd.28} parent=55 // pred_check_branch
        %879 = sbr.rel (%p877) target = $region68
      $region67: #{base_pointnet_fwd.28} parent=55 // pred_region
        %p880 = scmp.lt.s32.totalorder %s25, 1
        %s881 = scalar_select %p880, %s25, 1
        %p882 = scmp.lt.s32.totalorder %s26, 1
        %s883 = scalar_select %p882, %s26, 1
        %s884 = smul.addr %s881, 2
        %s885 = sadd.s32 %s883, %s884
        %s886 = scalar_lea.vmem %s7, %s885
      $region68: #{base_pointnet_fwd.28} parent=55 // pred_fallthru
        _
    $region56: #{base_pointnet_fwd.28} parent=5 // pred_fallthru
      _
  $region6: #{base_pointnet_fwd.28} parent=0 // loop_footer
    %s18 = sadd.s32 1, %s14
  $region7: #{base_pointnet_fwd.28} parent=0 // loop_footer_branch
    %13 = sbr.rel target = $region3
  $region8: #{base_pointnet_fwd.28} parent=0 // loop_exit
    _

// kernel: base_pointnet_fwd.27
$region0: #{base_pointnet_fwd.27}
  #allocation0 [shape = 'u32[]', space=smem, size = 0x4, offset = 0x4, fixed_abs, tag = 'smem constant byte address 0x4 - core index']
  #allocation1 [shape = 'u32[72,128]{1,0:T(1,128)}', space=vmem, size = 0x9000, scoped, tag = 'internal scratch']
  %s0 = inlined_call_operand.vmem [shape: f32[2,256], index: 0, kind: input, shape index: {}]
  %s1 = inlined_call_operand.vmem [shape: bf16[256,256], index: 1, kind: input, shape index: {}]
  %s2 = inlined_call_operand.vmem [shape: f32[1,256], index: 2, kind: input, shape index: {}]
  %s3 = inlined_call_operand.vmem [shape: f32[1,256], index: 3, kind: input, shape index: {}]
  %s4 = inlined_call_operand.vmem [shape: bf16[256,128], index: 4, kind: input, shape index: {}]
  %s5 = inlined_call_operand.vmem [shape: f32[1,128], index: 5, kind: input, shape index: {}]
  %s6 = inlined_call_operand.vmem [shape: f32[1,128], index: 6, kind: input, shape index: {}]
  %s7 = inlined_call_operand.hbm [shape: bf16[128,4096], index: 7, kind: input, shape index: {}]
  %s8 = inlined_call_operand.vmem [shape: f32[1,4096], index: 8, kind: input, shape index: {}]
  %s9 = inlined_call_operand.vmem [shape: f32[2,4096], index: 9, kind: output, shape index: {}]
  %s10 = sld [smem:[#allocation0]]
  $region50: #{base_pointnet_fwd.27} parent=0
    _
  %s12 = ssub.s32 1, %s10
  %s13 = scalar_select 0, %s12, %s10
  $region1: #{base_pointnet_fwd.27} parent=0
    #allocation2 [shape = 'u8[1048576]{0}', space=vmem, size = 0x100000, scoped, tag = 'input window, operand 7, single buffered']
    #allocation3 [shape = 's32[1]{0}', space=sflag, size = 0x4, scoped, tag = 'scoped memory for base_pointnet_fwd.27']
    %14 = vsyncpa [#allocation3], 0
    // Predicated region
    $region2: #{base_pointnet_fwd.27} parent=1 // pred_check
      _
    $region3: #{base_pointnet_fwd.27} parent=1 // pred_check_branch
      %16 = sbr.rel (0) target = $region5
    $region4: #{base_pointnet_fwd.27} parent=1 // pred_region
      _
    $region5: #{base_pointnet_fwd.27} parent=1 // pred_fallthru
      _
    // Predicated region
    $region6: #{base_pointnet_fwd.27} parent=1 // pred_check
      _
    $region7: #{base_pointnet_fwd.27} parent=1 // pred_check_branch
      %18 = sbr.rel (0) target = $region9
    $region8: #{base_pointnet_fwd.27} parent=1 // pred_region
      _
    $region9: #{base_pointnet_fwd.27} parent=1 // pred_fallthru
      _
    // Predicated region
    $region10: #{base_pointnet_fwd.27} parent=1 // pred_check
      _
    $region11: #{base_pointnet_fwd.27} parent=1 // pred_check_branch
      %20 = sbr.rel (0) target = $region13
    $region12: #{base_pointnet_fwd.27} parent=1 // pred_region
      _
    $region13: #{base_pointnet_fwd.27} parent=1 // pred_fallthru
      _
    // Predicated region
    $region14: #{base_pointnet_fwd.27} parent=1 // pred_check
      _
    $region15: #{base_pointnet_fwd.27} parent=1 // pred_check_branch
      %22 = sbr.rel (0) target = $region17
    $region16: #{base_pointnet_fwd.27} parent=1 // pred_region
      _
    $region17: #{base_pointnet_fwd.27} parent=1 // pred_fallthru
      _
    // Predicated region
    $region18: #{base_pointnet_fwd.27} parent=1 // pred_check
      _
    $region19: #{base_pointnet_fwd.27} parent=1 // pred_check_branch
      %24 = sbr.rel (0) target = $region21
    $region20: #{base_pointnet_fwd.27} parent=1 // pred_region
      _
    $region21: #{base_pointnet_fwd.27} parent=1 // pred_fallthru
      _
    // Predicated region
    $region22: #{base_pointnet_fwd.27} parent=1 // pred_check
      _
    $region23: #{base_pointnet_fwd.27} parent=1 // pred_check_branch
      %26 = sbr.rel (0) target = $region25
    $region24: #{base_pointnet_fwd.27} parent=1 // pred_region
      _
    $region25: #{base_pointnet_fwd.27} parent=1 // pred_fallthru
      _
    // Predicated region
    $region26: #{base_pointnet_fwd.27} parent=1 // pred_check
      _
    $region27: #{base_pointnet_fwd.27} parent=1 // pred_check_branch
      %28 = sbr.rel (0) target = $region29
    $region28: #{base_pointnet_fwd.27} parent=1 // pred_region
      _
    $region29: #{base_pointnet_fwd.27} parent=1 // pred_fallthru
      _
    // Predicated region
    $region30: #{base_pointnet_fwd.27} parent=1 // pred_check
      _
    $region31: #{base_pointnet_fwd.27} parent=1 // pred_check_branch
      %30 = sbr.rel (0) target = $region33
    $region32: #{base_pointnet_fwd.27} parent=1 // pred_region
      %32 = vsyncadd [#allocation3], 0
      %s33 = sshll.u32 %s7, 4
      %s34 = int_to_ptr.hbm [resolvable:$true] %s33
      %s35 = sshll.u32 [#allocation2], 4
      %s36 = int_to_ptr.vmem [resolvable:$true] %s35
      %41 = dma.hbm_to_vmem [thread:$0]  %s34, 32768, %s36, [#allocation3], 2048, 2048, 128
    $region33: #{base_pointnet_fwd.27} parent=1 // pred_fallthru
      _
    // Predicated region
    $region34: #{base_pointnet_fwd.27} parent=1 // pred_check
      _
    $region35: #{base_pointnet_fwd.27} parent=1 // pred_check_branch
      %43 = sbr.rel (0) target = $region37
    $region36: #{base_pointnet_fwd.27} parent=1 // pred_region
      _
    $region37: #{base_pointnet_fwd.27} parent=1 // pred_fallthru
      _
    // Predicated region
    $region38: #{base_pointnet_fwd.27} parent=1 // pred_check
      _
    $region39: #{base_pointnet_fwd.27} parent=1 // pred_check_branch
      %45 = sbr.rel (0) target = $region41
    $region40: #{base_pointnet_fwd.27} parent=1 // pred_region
      %47 = dma.done [#allocation3], 32768
    $region41: #{base_pointnet_fwd.27} parent=1 // pred_fallthru
      _
    %v48 = vld [vmem:[%s0] sm:$0xf]
    %50 = vst [vmem:[#allocation1] ss:$4 sm:$0xff] %v48
    %v51 = vld.sshfl [vmem:[#allocation1] sm:$0xff pattern:$0x73625140]
    %v52 = vld.sshfl [vmem:[#allocation1 + $0x8] sm:$0xff pattern:$0x73625140]
    %v55 = vpack.c.bf16 %v51, %v51
    %v56 = vpack.c.bf16 %v52, %v52
    %v57 = vld [vmem:[%s1] sm:$0xff]
    %v58 = vld [vmem:[%s1 + $0x8] sm:$0xff]
    %v59 = vld [vmem:[%s1 + $0x10] sm:$0xff]
    %v60 = vld [vmem:[%s1 + $0x18] sm:$0xff]
    %v61 = vld [vmem:[%s1 + $0x20] sm:$0xff]
    %v62 = vld [vmem:[%s1 + $0x28] sm:$0xff]
    %v63 = vld [vmem:[%s1 + $0x30] sm:$0xff]
    %v64 = vld [vmem:[%s1 + $0x38] sm:$0xff]
    %v65 = vld [vmem:[%s1 + $0x40] sm:$0xff]
    %v66 = vld [vmem:[%s1 + $0x48] sm:$0xff]
    %v67 = vld [vmem:[%s1 + $0x50] sm:$0xff]
    %v68 = vld [vmem:[%s1 + $0x58] sm:$0xff]
    %v69 = vld [vmem:[%s1 + $0x60] sm:$0xff]
    %v70 = vld [vmem:[%s1 + $0x68] sm:$0xff]
    %v71 = vld [vmem:[%s1 + $0x70] sm:$0xff]
    %v72 = vld [vmem:[%s1 + $0x78] sm:$0xff]
    %v73 = vld [vmem:[%s1 + $0x80] sm:$0xff]
    %v74 = vld [vmem:[%s1 + $0x88] sm:$0xff]
    %v75 = vld [vmem:[%s1 + $0x90] sm:$0xff]
    %v76 = vld [vmem:[%s1 + $0x98] sm:$0xff]
    %v77 = vld [vmem:[%s1 + $0xa0] sm:$0xff]
    %v78 = vld [vmem:[%s1 + $0xa8] sm:$0xff]
    %v79 = vld [vmem:[%s1 + $0xb0] sm:$0xff]
    %v80 = vld [vmem:[%s1 + $0xb8] sm:$0xff]
    %v81 = vld [vmem:[%s1 + $0xc0] sm:$0xff]
    %v82 = vld [vmem:[%s1 + $0xc8] sm:$0xff]
    %v83 = vld [vmem:[%s1 + $0xd0] sm:$0xff]
    %v84 = vld [vmem:[%s1 + $0xd8] sm:$0xff]
    %v85 = vld [vmem:[%s1 + $0xe0] sm:$0xff]
    %v86 = vld [vmem:[%s1 + $0xe8] sm:$0xff]
    %v87 = vld [vmem:[%s1 + $0xf0] sm:$0xff]
    %v88 = vld [vmem:[%s1 + $0xf8] sm:$0xff]
    %v121 = vunpack.c.l.b16 %v57
    %v122 = vunpack.c.h.b16 %v57
    %v123 = vunpack.c.l.b16 %v58
    %v124 = vunpack.c.h.b16 %v58
    %v125 = vunpack.c.l.b16 %v59
    %v126 = vunpack.c.h.b16 %v59
    %v127 = vunpack.c.l.b16 %v60
    %v128 = vunpack.c.h.b16 %v60
    %v129 = vunpack.c.l.b16 %v61
    %v130 = vunpack.c.h.b16 %v61
    %v131 = vunpack.c.l.b16 %v62
    %v132 = vunpack.c.h.b16 %v62
    %v133 = vunpack.c.l.b16 %v63
    %v134 = vunpack.c.h.b16 %v63
    %v135 = vunpack.c.l.b16 %v64
    %v136 = vunpack.c.h.b16 %v64
    %v137 = vunpack.c.l.b16 %v65
    %v138 = vunpack.c.h.b16 %v65
    %v139 = vunpack.c.l.b16 %v66
    %v140 = vunpack.c.h.b16 %v66
    %v141 = vunpack.c.l.b16 %v67
    %v142 = vunpack.c.h.b16 %v67
    %v143 = vunpack.c.l.b16 %v68
    %v144 = vunpack.c.h.b16 %v68
    %v145 = vunpack.c.l.b16 %v69
    %v146 = vunpack.c.h.b16 %v69
    %v147 = vunpack.c.l.b16 %v70
    %v148 = vunpack.c.h.b16 %v70
    %v149 = vunpack.c.l.b16 %v71
    %v150 = vunpack.c.h.b16 %v71
    %v151 = vunpack.c.l.b16 %v72
    %v152 = vunpack.c.h.b16 %v72
    %v153 = vunpack.c.l.b16 %v73
    %v154 = vunpack.c.h.b16 %v73
    %v155 = vunpack.c.l.b16 %v74
    %v156 = vunpack.c.h.b16 %v74
    %v157 = vunpack.c.l.b16 %v75
    %v158 = vunpack.c.h.b16 %v75
    %v159 = vunpack.c.l.b16 %v76
    %v160 = vunpack.c.h.b16 %v76
    %v161 = vunpack.c.l.b16 %v77
    %v162 = vunpack.c.h.b16 %v77
    %v163 = vunpack.c.l.b16 %v78
    %v164 = vunpack.c.h.b16 %v78
    %v165 = vunpack.c.l.b16 %v79
    %v166 = vunpack.c.h.b16 %v79
    %v167 = vunpack.c.l.b16 %v80
    %v168 = vunpack.c.h.b16 %v80
    %v169 = vunpack.c.l.b16 %v81
    %v170 = vunpack.c.h.b16 %v81
    %v171 = vunpack.c.l.b16 %v82
    %v172 = vunpack.c.h.b16 %v82
    %v173 = vunpack.c.l.b16 %v83
    %v174 = vunpack.c.h.b16 %v83
    %v175 = vunpack.c.l.b16 %v84
    %v176 = vunpack.c.h.b16 %v84
    %v177 = vunpack.c.l.b16 %v85
    %v178 = vunpack.c.h.b16 %v85
    %v179 = vunpack.c.l.b16 %v86
    %v180 = vunpack.c.h.b16 %v86
    %v181 = vunpack.c.l.b16 %v87
    %v182 = vunpack.c.h.b16 %v87
    %v183 = vunpack.c.l.b16 %v88
    %v184 = vunpack.c.h.b16 %v88
    %v185 = vpack.c.b16 %v123, %v121
    %v186 = vpack.c.b16 %v124, %v122
    %v187 = vpack.c.b16 %v127, %v125
    %v188 = vpack.c.b16 %v128, %v126
    %v189 = vpack.c.b16 %v131, %v129
    %v190 = vpack.c.b16 %v132, %v130
    %v191 = vpack.c.b16 %v135, %v133
    %v192 = vpack.c.b16 %v136, %v134
    %v193 = vpack.c.b16 %v139, %v137
    %v194 = vpack.c.b16 %v140, %v138
    %v195 = vpack.c.b16 %v143, %v141
    %v196 = vpack.c.b16 %v144, %v142
    %v197 = vpack.c.b16 %v147, %v145
    %v198 = vpack.c.b16 %v148, %v146
    %v199 = vpack.c.b16 %v151, %v149
    %v200 = vpack.c.b16 %v152, %v150
    %v201 = vpack.c.b16 %v155, %v153
    %v202 = vpack.c.b16 %v156, %v154
    %v203 = vpack.c.b16 %v159, %v157
    %v204 = vpack.c.b16 %v160, %v158
    %v205 = vpack.c.b16 %v163, %v161
    %v206 = vpack.c.b16 %v164, %v162
    %v207 = vpack.c.b16 %v167, %v165
    %v208 = vpack.c.b16 %v168, %v166
    %v209 = vpack.c.b16 %v171, %v169
    %v210 = vpack.c.b16 %v172, %v170
    %v211 = vpack.c.b16 %v175, %v173
    %v212 = vpack.c.b16 %v176, %v174
    %v213 = vpack.c.b16 %v179, %v177
    %v214 = vpack.c.b16 %v180, %v178
    %v215 = vpack.c.b16 %v183, %v181
    %v216 = vpack.c.b16 %v184, %v182
    %249 = vmatpush.bf16.msra.mxu0 %v199
    %250 = vmatpush.bf16.msra.mxu0 %v197
    %251 = vmatpush.bf16.msra.mxu0 %v195
    %252 = vmatpush.bf16.msra.mxu0 %v193
    %253 = vmatpush.bf16.msra.mxu0 %v191
    %254 = vmatpush.bf16.msra.mxu0 %v189
    %255 = vmatpush.bf16.msra.mxu0 %v187
    %256 = vmatpush.bf16.msra.mxu0 %v185
    %257 = vmatmul.bf16.gmra.mxu0 %v55
    %v258 = vpop.f32.mrf.mxu0
    %v259 = vadd.f32 0.0, %v258
    %v260 = vpop.f32.mrf.mxu0
    %261 = vdwg.mxu0
    %262 = vmatpush.bf16.msra.mxu0 %v215
    %263 = vmatpush.bf16.msra.mxu0 %v213
    %264 = vmatpush.bf16.msra.mxu0 %v211
    %265 = vmatpush.bf16.msra.mxu0 %v209
    %266 = vmatpush.bf16.msra.mxu0 %v207
    %267 = vmatpush.bf16.msra.mxu0 %v205
    %268 = vmatpush.bf16.msra.mxu0 %v203
    %269 = vmatpush.bf16.msra.mxu0 %v201
    %270 = vmatmul.bf16.gmra.mxu0 %v56
    %v271 = vpop.f32.mrf.mxu0
    %v272 = vadd.f32 %v259, %v271
    %v273 = vpop.f32.mrf.mxu0
    %274 = vdwg.mxu0
    %275 = vmatpush.bf16.msra.mxu0 %v200
    %276 = vmatpush.bf16.msra.mxu0 %v198
    %277 = vmatpush.bf16.msra.mxu0 %v196
    %278 = vmatpush.bf16.msra.mxu0 %v194
    %279 = vmatpush.bf16.msra.mxu0 %v192
    %280 = vmatpush.bf16.msra.mxu0 %v190
    %281 = vmatpush.bf16.msra.mxu0 %v188
    %282 = vmatpush.bf16.msra.mxu0 %v186
    %283 = vmatmul.bf16.gmra.mxu0 %v55
    %v284 = vpop.f32.mrf.mxu0
    %v285 = vadd.f32 0.0, %v284
    %v286 = vpop.f32.mrf.mxu0
    %287 = vdwg.mxu0
    %288 = vmatpush.bf16.msra.mxu0 %v216
    %289 = vmatpush.bf16.msra.mxu0 %v214
    %290 = vmatpush.bf16.msra.mxu0 %v212
    %291 = vmatpush.bf16.msra.mxu0 %v210
    %292 = vmatpush.bf16.msra.mxu0 %v208
    %293 = vmatpush.bf16.msra.mxu0 %v206
    %294 = vmatpush.bf16.msra.mxu0 %v204
    %295 = vmatpush.bf16.msra.mxu0 %v202
    %296 = vmatmul.bf16.gmra.mxu0 %v56
    %v297 = vpop.f32.mrf.mxu0
    %v298 = vadd.f32 %v285, %v297
    %v299 = vpop.f32.mrf.mxu0
    %300 = vdwg.mxu0
    %v301 = vld [vmem:[%s2] sm:$0x3]
    %v302 = vld [vmem:[%s3] sm:$0x3]
    %vm303 = vcmask 1041408
    %v304 = vsel %vm303, %v272, 0.0
    %v305 = vrot.slane %v304, 4
    %v306 = vadd.f32 %v304, %v305
    %v307 = vrot.slane %v306, 2
    %v308 = vadd.f32 %v306, %v307
    %v309 = vrot.slane %v308, 1
    %v310 = vadd.f32 %v308, %v309
    %v311 = vsel %vm303, %v298, 0.0
    %v312 = vrot.slane %v311, 4
    %v313 = vadd.f32 %v311, %v312
    %v314 = vrot.slane %v313, 2
    %v315 = vadd.f32 %v313, %v314
    %v316 = vrot.slane %v315, 1
    %v317 = vadd.f32 %v315, %v316
    %v318 = vrcp.pop 2.0
    %v319 = vmul.f32 2.0, %v318
    %v320 = vsub.f32 1.0, %v319
    %v321 = vmul.f32 %v318, %v320
    %v322 = vadd.f32 %v318, %v321
    %vm323 = vweird.f32 %v318
    %v324 = vsel %vm323, %v318, %v322
    %v325 = vmul.f32 %v310, %v324
    %v326 = vmul.f32 %v317, %v324
    %v327 = vsub.f32 %v272, %v325
    %v328 = vsub.f32 %v298, %v326
    %v329 = vmul.f32 %v327, %v327
    %v330 = vmul.f32 %v328, %v328
    %v331 = vsel %vm303, %v329, 0.0
    %v332 = vrot.slane %v331, 4
    %v333 = vadd.f32 %v331, %v332
    %v334 = vrot.slane %v333, 2
    %v335 = vadd.f32 %v333, %v334
    %v336 = vrot.slane %v335, 1
    %v337 = vadd.f32 %v335, %v336
    %v338 = vsel %vm303, %v330, 0.0
    %v339 = vrot.slane %v338, 4
    %v340 = vadd.f32 %v338, %v339
    %v341 = vrot.slane %v340, 2
    %v342 = vadd.f32 %v340, %v341
    %v343 = vrot.slane %v342, 1
    %v344 = vadd.f32 %v342, %v343
    %v345 = vmul.f32 %v337, %v324
    %v346 = vmul.f32 %v344, %v324
    %v347 = vadd.f32 %v345, 1e-05
    %v348 = vadd.f32 %v346, 1e-05
    %v349 = vrsqrt.pop %v347
    %v350 = vmul.f32 %v349, %v347
    %v351 = vmul.f32 %v350, %v349
    %v352 = vmul.f32 0.5, %v351
    %v353 = vsub.f32 1.5, %v352
    %v354 = vmul.f32 %v349, %v353
    %vm355 = vweird.f32 %v347
    %vm356 = vweird.f32 %v349
    %vm357 = vmor %vm355, %vm356
    %v358 = vsel %vm357, %v349, %v354
    %v359 = vrsqrt.pop %v348
    %v360 = vmul.f32 %v359, %v348
    %v361 = vmul.f32 %v360, %v359
    %v362 = vmul.f32 0.5, %v361
    %v363 = vsub.f32 1.5, %v362
    %v364 = vmul.f32 %v359, %v363
    %vm365 = vweird.f32 %v348
    %vm366 = vweird.f32 %v359
    %vm367 = vmor %vm365, %vm366
    %v368 = vsel %vm367, %v359, %v364
    %v369 = vmul.f32 %v327, %v358
    %v370 = vmul.f32 %v328, %v368
    %v372 = vperm.slane %v301, 0
    %v373 = vperm.slane %v301, 1
    %v376 = vmul.f32 %v369, %v372
    %v377 = vmul.f32 %v370, %v373
    %v379 = vperm.slane %v302, 0
    %v380 = vperm.slane %v302, 1
    %v383 = vadd.f32 %v376, %v379
    %v384 = vadd.f32 %v377, %v380
    %v385 = vmax.f32 %v383, 0.0
    %v386 = vmax.f32 %v384, 0.0
    %v387 = vpack.c.bf16 %v385, %v385
    %v388 = vpack.c.bf16 %v386, %v386
    %v389 = vld [vmem:[%s4] sm:$0xf]
    %v390 = vld [vmem:[%s4 + $0x4] sm:$0xf]
    %v391 = vld [vmem:[%s4 + $0x8] sm:$0xf]
    %v392 = vld [vmem:[%s4 + $0xc] sm:$0xf]
    %v393 = vld [vmem:[%s4 + $0x10] sm:$0xf]
    %v394 = vld [vmem:[%s4 + $0x14] sm:$0xf]
    %v395 = vld [vmem:[%s4 + $0x18] sm:$0xf]
    %v396 = vld [vmem:[%s4 + $0x1c] sm:$0xf]
    %v397 = vld [vmem:[%s4 + $0x20] sm:$0xf]
    %v398 = vld [vmem:[%s4 + $0x24] sm:$0xf]
    %v399 = vld [vmem:[%s4 + $0x28] sm:$0xf]
    %v400 = vld [vmem:[%s4 + $0x2c] sm:$0xf]
    %v401 = vld [vmem:[%s4 + $0x30] sm:$0xf]
    %v402 = vld [vmem:[%s4 + $0x34] sm:$0xf]
    %v403 = vld [vmem:[%s4 + $0x38] sm:$0xf]
    %v404 = vld [vmem:[%s4 + $0x3c] sm:$0xf]
    %v405 = vld [vmem:[%s4 + $0x40] sm:$0xf]
    %v406 = vld [vmem:[%s4 + $0x44] sm:$0xf]
    %v407 = vld [vmem:[%s4 + $0x48] sm:$0xf]
    %v408 = vld [vmem:[%s4 + $0x4c] sm:$0xf]
    %v409 = vld [vmem:[%s4 + $0x50] sm:$0xf]
    %v410 = vld [vmem:[%s4 + $0x54] sm:$0xf]
    %v411 = vld [vmem:[%s4 + $0x58] sm:$0xf]
    %v412 = vld [vmem:[%s4 + $0x5c] sm:$0xf]
    %v413 = vld [vmem:[%s4 + $0x60] sm:$0xf]
    %v414 = vld [vmem:[%s4 + $0x64] sm:$0xf]
    %v415 = vld [vmem:[%s4 + $0x68] sm:$0xf]
    %v416 = vld [vmem:[%s4 + $0x6c] sm:$0xf]
    %v417 = vld [vmem:[%s4 + $0x70] sm:$0xf]
    %v418 = vld [vmem:[%s4 + $0x74] sm:$0xf]
    %v419 = vld [vmem:[%s4 + $0x78] sm:$0xf]
    %v420 = vld [vmem:[%s4 + $0x7c] sm:$0xf]
    %v453 = vunpack.c.l.b16 %v389
    %v454 = vunpack.c.l.b16 %v390
    %v455 = vunpack.c.l.b16 %v391
    %v456 = vunpack.c.l.b16 %v392
    %v457 = vunpack.c.l.b16 %v393
    %v458 = vunpack.c.l.b16 %v394
    %v459 = vunpack.c.l.b16 %v395
    %v460 = vunpack.c.l.b16 %v396
    %v461 = vunpack.c.l.b16 %v397
    %v462 = vunpack.c.l.b16 %v398
    %v463 = vunpack.c.l.b16 %v399
    %v464 = vunpack.c.l.b16 %v400
    %v465 = vunpack.c.l.b16 %v401
    %v466 = vunpack.c.l.b16 %v402
    %v467 = vunpack.c.l.b16 %v403
    %v468 = vunpack.c.l.b16 %v404
    %v469 = vunpack.c.l.b16 %v405
    %v470 = vunpack.c.l.b16 %v406
    %v471 = vunpack.c.l.b16 %v407
    %v472 = vunpack.c.l.b16 %v408
    %v473 = vunpack.c.l.b16 %v409
    %v474 = vunpack.c.l.b16 %v410
    %v475 = vunpack.c.l.b16 %v411
    %v476 = vunpack.c.l.b16 %v412
    %v477 = vunpack.c.l.b16 %v413
    %v478 = vunpack.c.l.b16 %v414
    %v479 = vunpack.c.l.b16 %v415
    %v480 = vunpack.c.l.b16 %v416
    %v481 = vunpack.c.l.b16 %v417
    %v482 = vunpack.c.l.b16 %v418
    %v483 = vunpack.c.l.b16 %v419
    %v484 = vunpack.c.l.b16 %v420
    %v485 = vpack.c.b16 %v454, %v453
    %v486 = vpack.c.b16 %v456, %v455
    %v487 = vpack.c.b16 %v458, %v457
    %v488 = vpack.c.b16 %v460, %v459
    %v489 = vpack.c.b16 %v462, %v461
    %v490 = vpack.c.b16 %v464, %v463
    %v491 = vpack.c.b16 %v466, %v465
    %v492 = vpack.c.b16 %v468, %v467
    %v493 = vpack.c.b16 %v470, %v469
    %v494 = vpack.c.b16 %v472, %v471
    %v495 = vpack.c.b16 %v474, %v473
    %v496 = vpack.c.b16 %v476, %v475
    %v497 = vpack.c.b16 %v478, %v477
    %v498 = vpack.c.b16 %v480, %v479
    %v499 = vpack.c.b16 %v482, %v481
    %v500 = vpack.c.b16 %v484, %v483
    %517 = vmatpush.bf16.msra.mxu0 %v492
    %518 = vmatpush.bf16.msra.mxu0 %v491
    %519 = vmatpush.bf16.msra.mxu0 %v490
    %520 = vmatpush.bf16.msra.mxu0 %v489
    %521 = vmatpush.bf16.msra.mxu0 %v488
    %522 = vmatpush.bf16.msra.mxu0 %v487
    %523 = vmatpush.bf16.msra.mxu0 %v486
    %524 = vmatpush.bf16.msra.mxu0 %v485
    %525 = vmatmul.bf16.gmra.mxu0 %v387
    %v526 = vpop.f32.mrf.mxu0
    %v527 = vadd.f32 0.0, %v526
    %v528 = vpop.f32.mrf.mxu0
    %529 = vdwg.mxu0
    %530 = vmatpush.bf16.msra.mxu0 %v500
    %531 = vmatpush.bf16.msra.mxu0 %v499
    %532 = vmatpush.bf16.msra.mxu0 %v498
    %533 = vmatpush.bf16.msra.mxu0 %v497
    %534 = vmatpush.bf16.msra.mxu0 %v496
    %535 = vmatpush.bf16.msra.mxu0 %v495
    %536 = vmatpush.bf16.msra.mxu0 %v494
    %537 = vmatpush.bf16.msra.mxu0 %v493
    %538 = vmatmul.bf16.gmra.mxu0 %v388
    %v539 = vpop.f32.mrf.mxu0
    %v540 = vadd.f32 %v527, %v539
    %v541 = vpop.f32.mrf.mxu0
    %542 = vdwg.mxu0
    %v543 = vld [vmem:[%s5] sm:$0x1]
    %v544 = vld [vmem:[%s6] sm:$0x1]
    %v545 = vsel %vm303, %v540, 0.0
    %v546 = vrot.slane %v545, 4
    %v547 = vadd.f32 %v545, %v546
    %v548 = vrot.slane %v547, 2
    %v549 = vadd.f32 %v547, %v548
    %v550 = vrot.slane %v549, 1
    %v551 = vadd.f32 %v549, %v550
    %v552 = vmul.f32 %v551, %v324
    %v553 = vsub.f32 %v540, %v552
    %v554 = vmul.f32 %v553, %v553
    %v555 = vsel %vm303, %v554, 0.0
    %v556 = vrot.slane %v555, 4
    %v557 = vadd.f32 %v555, %v556
    %v558 = vrot.slane %v557, 2
    %v559 = vadd.f32 %v557, %v558
    %v560 = vrot.slane %v559, 1
    %v561 = vadd.f32 %v559, %v560
    %v562 = vmul.f32 %v561, %v324
    %v563 = vadd.f32 %v562, 1e-05
    %v564 = vrsqrt.pop %v563
    %v565 = vmul.f32 %v564, %v563
    %v566 = vmul.f32 %v565, %v564
    %v567 = vmul.f32 0.5, %v566
    %v568 = vsub.f32 1.5, %v567
    %v569 = vmul.f32 %v564, %v568
    %vm570 = vweird.f32 %v563
    %vm571 = vweird.f32 %v564
    %vm572 = vmor %vm570, %vm571
    %v573 = vsel %vm572, %v564, %v569
    %v574 = vmul.f32 %v553, %v573
    %v576 = vperm.slane %v543, 0
    %v578 = vmul.f32 %v574, %v576
    %v580 = vperm.slane %v544, 0
    %v582 = vadd.f32 %v578, %v580
    %v583 = vmax.f32 %v582, 0.0
    %v584 = vpack.c.bf16 %v583, %v583
    %v585 = vld [vmem:[#allocation2] sm:$0xff]
    %v586 = vld [vmem:[#allocation2 + $0x8] sm:$0xff]
    %v587 = vld [vmem:[#allocation2 + $0x10] sm:$0xff]
    %v588 = vld [vmem:[#allocation2 + $0x18] sm:$0xff]
    %v589 = vld [vmem:[#allocation2 + $0x20] sm:$0xff]
    %v590 = vld [vmem:[#allocation2 + $0x28] sm:$0xff]
    %v591 = vld [vmem:[#allocation2 + $0x30] sm:$0xff]
    %v592 = vld [vmem:[#allocation2 + $0x38] sm:$0xff]
    %v593 = vld [vmem:[#allocation2 + $0x40] sm:$0xff]
    %v594 = vld [vmem:[#allocation2 + $0x48] sm:$0xff]
    %v595 = vld [vmem:[#allocation2 + $0x50] sm:$0xff]
    %v596 = vld [vmem:[#allocation2 + $0x58] sm:$0xff]
    %v597 = vld [vmem:[#allocation2 + $0x60] sm:$0xff]
    %v598 = vld [vmem:[#allocation2 + $0x68] sm:$0xff]
    %v599 = vld [vmem:[#allocation2 + $0x70] sm:$0xff]
    %v600 = vld [vmem:[#allocation2 + $0x78] sm:$0xff]
    %v601 = vld [vmem:[#allocation2 + $0x80] sm:$0xff]
    %v602 = vld [vmem:[#allocation2 + $0x88] sm:$0xff]
    %v603 = vld [vmem:[#allocation2 + $0x90] sm:$0xff]
    %v604 = vld [vmem:[#allocation2 + $0x98] sm:$0xff]
    %v605 = vld [vmem:[#allocation2 + $0xa0] sm:$0xff]
    %v606 = vld [vmem:[#allocation2 + $0xa8] sm:$0xff]
    %v607 = vld [vmem:[#allocation2 + $0xb0] sm:$0xff]
    %v608 = vld [vmem:[#allocation2 + $0xb8] sm:$0xff]
    %v609 = vld [vmem:[#allocation2 + $0xc0] sm:$0xff]
    %v610 = vld [vmem:[#allocation2 + $0xc8] sm:$0xff]
    %v611 = vld [vmem:[#allocation2 + $0xd0] sm:$0xff]
    %v612 = vld [vmem:[#allocation2 + $0xd8] sm:$0xff]
    %v613 = vld [vmem:[#allocation2 + $0xe0] sm:$0xff]
    %v614 = vld [vmem:[#allocation2 + $0xe8] sm:$0xff]
    %v615 = vld [vmem:[#allocation2 + $0xf0] sm:$0xff]
    %v616 = vld [vmem:[#allocation2 + $0xf8] sm:$0xff]
    %v617 = vld [vmem:[#allocation2 + $0x100] sm:$0xff]
    %v618 = vld [vmem:[#allocation2 + $0x108] sm:$0xff]
    %v619 = vld [vmem:[#allocation2 + $0x110] sm:$0xff]
    %v620 = vld [vmem:[#allocation2 + $0x118] sm:$0xff]
    %v621 = vld [vmem:[#allocation2 + $0x120] sm:$0xff]
    %v622 = vld [vmem:[#allocation2 + $0x128] sm:$0xff]
    %v623 = vld [vmem:[#allocation2 + $0x130] sm:$0xff]
    %v624 = vld [vmem:[#allocation2 + $0x138] sm:$0xff]
    %v625 = vld [vmem:[#allocation2 + $0x140] sm:$0xff]
    %v626 = vld [vmem:[#allocation2 + $0x148] sm:$0xff]
    %v627 = vld [vmem:[#allocation2 + $0x150] sm:$0xff]
    %v628 = vld [vmem:[#allocation2 + $0x158] sm:$0xff]
    %v629 = vld [vmem:[#allocation2 + $0x160] sm:$0xff]
    %v630 = vld [vmem:[#allocation2 + $0x168] sm:$0xff]
    %v631 = vld [vmem:[#allocation2 + $0x170] sm:$0xff]
    %v632 = vld [vmem:[#allocation2 + $0x178] sm:$0xff]
    %v633 = vld [vmem:[#allocation2 + $0x180] sm:$0xff]
    %v634 = vld [vmem:[#allocation2 + $0x188] sm:$0xff]
    %v635 = vld [vmem:[#allocation2 + $0x190] sm:$0xff]
    %v636 = vld [vmem:[#allocation2 + $0x198] sm:$0xff]
    %v637 = vld [vmem:[#allocation2 + $0x1a0] sm:$0xff]
    %v638 = vld [vmem:[#allocation2 + $0x1a8] sm:$0xff]
    %v639 = vld [vmem:[#allocation2 + $0x1b0] sm:$0xff]
    %v640 = vld [vmem:[#allocation2 + $0x1b8] sm:$0xff]
    %v641 = vld [vmem:[#allocation2 + $0x1c0] sm:$0xff]
    %v642 = vld [vmem:[#allocation2 + $0x1c8] sm:$0xff]
    %v643 = vld [vmem:[#allocation2 + $0x1d0] sm:$0xff]
    %v644 = vld [vmem:[#allocation2 + $0x1d8] sm:$0xff]
    %v645 = vld [vmem:[#allocation2 + $0x1e0] sm:$0xff]
    %v646 = vld [vmem:[#allocation2 + $0x1e8] sm:$0xff]
    %v647 = vld [vmem:[#allocation2 + $0x1f0] sm:$0xff]
    %v648 = vld [vmem:[#allocation2 + $0x1f8] sm:$0xff]
    %v649 = vld [vmem:[#allocation2 + $0x200] sm:$0xff]
    %v650 = vld [vmem:[#allocation2 + $0x208] sm:$0xff]
    %v651 = vld [vmem:[#allocation2 + $0x210] sm:$0xff]
    %v652 = vld [vmem:[#allocation2 + $0x218] sm:$0xff]
    %v653 = vld [vmem:[#allocation2 + $0x220] sm:$0xff]
    %v654 = vld [vmem:[#allocation2 + $0x228] sm:$0xff]
    %v655 = vld [vmem:[#allocation2 + $0x230] sm:$0xff]
    %v656 = vld [vmem:[#allocation2 + $0x238] sm:$0xff]
    %v657 = vld [vmem:[#allocation2 + $0x240] sm:$0xff]
    %v658 = vld [vmem:[#allocation2 + $0x248] sm:$0xff]
    %v659 = vld [vmem:[#allocation2 + $0x250] sm:$0xff]
    %v660 = vld [vmem:[#allocation2 + $0x258] sm:$0xff]
    %v661 = vld [vmem:[#allocation2 + $0x260] sm:$0xff]
    %v662 = vld [vmem:[#allocation2 + $0x268] sm:$0xff]
    %v663 = vld [vmem:[#allocation2 + $0x270] sm:$0xff]
    %v664 = vld [vmem:[#allocation2 + $0x278] sm:$0xff]
    %v665 = vld [vmem:[#allocation2 + $0x280] sm:$0xff]
    %v666 = vld [vmem:[#allocation2 + $0x288] sm:$0xff]
    %v667 = vld [vmem:[#allocation2 + $0x290] sm:$0xff]
    %v668 = vld [vmem:[#allocation2 + $0x298] sm:$0xff]
    %v669 = vld [vmem:[#allocation2 + $0x2a0] sm:$0xff]
    %v670 = vld [vmem:[#allocation2 + $0x2a8] sm:$0xff]
    %v671 = vld [vmem:[#allocation2 + $0x2b0] sm:$0xff]
    %v672 = vld [vmem:[#allocation2 + $0x2b8] sm:$0xff]
    %v673 = vld [vmem:[#allocation2 + $0x2c0] sm:$0xff]
    %v674 = vld [vmem:[#allocation2 + $0x2c8] sm:$0xff]
    %v675 = vld [vmem:[#allocation2 + $0x2d0] sm:$0xff]
    %v676 = vld [vmem:[#allocation2 + $0x2d8] sm:$0xff]
    %v677 = vld [vmem:[#allocation2 + $0x2e0] sm:$0xff]
    %v678 = vld [vmem:[#allocation2 + $0x2e8] sm:$0xff]
    %v679 = vld [vmem:[#allocation2 + $0x2f0] sm:$0xff]
    %v680 = vld [vmem:[#allocation2 + $0x2f8] sm:$0xff]
    %v681 = vld [vmem:[#allocation2 + $0x300] sm:$0xff]
    %v682 = vld [vmem:[#allocation2 + $0x308] sm:$0xff]
    %v683 = vld [vmem:[#allocation2 + $0x310] sm:$0xff]
    %v684 = vld [vmem:[#allocation2 + $0x318] sm:$0xff]
    %v685 = vld [vmem:[#allocation2 + $0x320] sm:$0xff]
    %v686 = vld [vmem:[#allocation2 + $0x328] sm:$0xff]
    %v687 = vld [vmem:[#allocation2 + $0x330] sm:$0xff]
    %v688 = vld [vmem:[#allocation2 + $0x338] sm:$0xff]
    %v689 = vld [vmem:[#allocation2 + $0x340] sm:$0xff]
    %v690 = vld [vmem:[#allocation2 + $0x348] sm:$0xff]
    %v691 = vld [vmem:[#allocation2 + $0x350] sm:$0xff]
    %v692 = vld [vmem:[#allocation2 + $0x358] sm:$0xff]
    %v693 = vld [vmem:[#allocation2 + $0x360] sm:$0xff]
    %v694 = vld [vmem:[#allocation2 + $0x368] sm:$0xff]
    %v695 = vld [vmem:[#allocation2 + $0x370] sm:$0xff]
    %v696 = vld [vmem:[#allocation2 + $0x378] sm:$0xff]
    %v697 = vld [vmem:[#allocation2 + $0x380] sm:$0xff]
    %v698 = vld [vmem:[#allocation2 + $0x388] sm:$0xff]
    %v699 = vld [vmem:[#allocation2 + $0x390] sm:$0xff]
    %v700 = vld [vmem:[#allocation2 + $0x398] sm:$0xff]
    %v701 = vld [vmem:[#allocation2 + $0x3a0] sm:$0xff]
    %v702 = vld [vmem:[#allocation2 + $0x3a8] sm:$0xff]
    %v703 = vld [vmem:[#allocation2 + $0x3b0] sm:$0xff]
    %v704 = vld [vmem:[#allocation2 + $0x3b8] sm:$0xff]
    %v705 = vld [vmem:[#allocation2 + $0x3c0] sm:$0xff]
    %v706 = vld [vmem:[#allocation2 + $0x3c8] sm:$0xff]
    %v707 = vld [vmem:[#allocation2 + $0x3d0] sm:$0xff]
    %v708 = vld [vmem:[#allocation2 + $0x3d8] sm:$0xff]
    %v709 = vld [vmem:[#allocation2 + $0x3e0] sm:$0xff]
    %v710 = vld [vmem:[#allocation2 + $0x3e8] sm:$0xff]
    %v711 = vld [vmem:[#allocation2 + $0x3f0] sm:$0xff]
    %v712 = vld [vmem:[#allocation2 + $0x3f8] sm:$0xff]
    %v713 = vld [vmem:[#allocation2 + $0x400] sm:$0xff]
    %v714 = vld [vmem:[#allocation2 + $0x408] sm:$0xff]
    %v715 = vld [vmem:[#allocation2 + $0x410] sm:$0xff]
    %v716 = vld [vmem:[#allocation2 + $0x418] sm:$0xff]
    %v717 = vld [vmem:[#allocation2 + $0x420] sm:$0xff]
    %v718 = vld [vmem:[#allocation2 + $0x428] sm:$0xff]
    %v719 = vld [vmem:[#allocation2 + $0x430] sm:$0xff]
    %v720 = vld [vmem:[#allocation2 + $0x438] sm:$0xff]
    %v721 = vld [vmem:[#allocation2 + $0x440] sm:$0xff]
    %v722 = vld [vmem:[#allocation2 + $0x448] sm:$0xff]
    %v723 = vld [vmem:[#allocation2 + $0x450] sm:$0xff]
    %v724 = vld [vmem:[#allocation2 + $0x458] sm:$0xff]
    %v725 = vld [vmem:[#allocation2 + $0x460] sm:$0xff]
    %v726 = vld [vmem:[#allocation2 + $0x468] sm:$0xff]
    %v727 = vld [vmem:[#allocation2 + $0x470] sm:$0xff]
    %v728 = vld [vmem:[#allocation2 + $0x478] sm:$0xff]
    %v729 = vld [vmem:[#allocation2 + $0x480] sm:$0xff]
    %v730 = vld [vmem:[#allocation2 + $0x488] sm:$0xff]
    %v731 = vld [vmem:[#allocation2 + $0x490] sm:$0xff]
    %v732 = vld [vmem:[#allocation2 + $0x498] sm:$0xff]
    %v733 = vld [vmem:[#allocation2 + $0x4a0] sm:$0xff]
    %v734 = vld [vmem:[#allocation2 + $0x4a8] sm:$0xff]
    %v735 = vld [vmem:[#allocation2 + $0x4b0] sm:$0xff]
    %v736 = vld [vmem:[#allocation2 + $0x4b8] sm:$0xff]
    %v737 = vld [vmem:[#allocation2 + $0x4c0] sm:$0xff]
    %v738 = vld [vmem:[#allocation2 + $0x4c8] sm:$0xff]
    %v739 = vld [vmem:[#allocation2 + $0x4d0] sm:$0xff]
    %v740 = vld [vmem:[#allocation2 + $0x4d8] sm:$0xff]
    %v741 = vld [vmem:[#allocation2 + $0x4e0] sm:$0xff]
    %v742 = vld [vmem:[#allocation2 + $0x4e8] sm:$0xff]
    %v743 = vld [vmem:[#allocation2 + $0x4f0] sm:$0xff]
    %v744 = vld [vmem:[#allocation2 + $0x4f8] sm:$0xff]
    %v745 = vld [vmem:[#allocation2 + $0x500] sm:$0xff]
    %v746 = vld [vmem:[#allocation2 + $0x508] sm:$0xff]
    %v747 = vld [vmem:[#allocation2 + $0x510] sm:$0xff]
    %v748 = vld [vmem:[#allocation2 + $0x518] sm:$0xff]
    %v749 = vld [vmem:[#allocation2 + $0x520] sm:$0xff]
    %v750 = vld [vmem:[#allocation2 + $0x528] sm:$0xff]
    %v751 = vld [vmem:[#allocation2 + $0x530] sm:$0xff]
    %v752 = vld [vmem:[#allocation2 + $0x538] sm:$0xff]
    %v753 = vld [vmem:[#allocation2 + $0x540] sm:$0xff]
    %v754 = vld [vmem:[#allocation2 + $0x548] sm:$0xff]
    %v755 = vld [vmem:[#allocation2 + $0x550] sm:$0xff]
    %v756 = vld [vmem:[#allocation2 + $0x558] sm:$0xff]
    %v757 = vld [vmem:[#allocation2 + $0x560] sm:$0xff]
    %v758 = vld [vmem:[#allocation2 + $0x568] sm:$0xff]
    %v759 = vld [vmem:[#allocation2 + $0x570] sm:$0xff]
    %v760 = vld [vmem:[#allocation2 + $0x578] sm:$0xff]
    %v761 = vld [vmem:[#allocation2 + $0x580] sm:$0xff]
    %v762 = vld [vmem:[#allocation2 + $0x588] sm:$0xff]
    %v763 = vld [vmem:[#allocation2 + $0x590] sm:$0xff]
    %v764 = vld [vmem:[#allocation2 + $0x598] sm:$0xff]
    %v765 = vld [vmem:[#allocation2 + $0x5a0] sm:$0xff]
    %v766 = vld [vmem:[#allocation2 + $0x5a8] sm:$0xff]
    %v767 = vld [vmem:[#allocation2 + $0x5b0] sm:$0xff]
    %v768 = vld [vmem:[#allocation2 + $0x5b8] sm:$0xff]
    %v769 = vld [vmem:[#allocation2 + $0x5c0] sm:$0xff]
    %v770 = vld [vmem:[#allocation2 + $0x5c8] sm:$0xff]
    %v771 = vld [vmem:[#allocation2 + $0x5d0] sm:$0xff]
    %v772 = vld [vmem:[#allocation2 + $0x5d8] sm:$0xff]
    %v773 = vld [vmem:[#allocation2 + $0x5e0] sm:$0xff]
    %v774 = vld [vmem:[#allocation2 + $0x5e8] sm:$0xff]
    %v775 = vld [vmem:[#allocation2 + $0x5f0] sm:$0xff]
    %v776 = vld [vmem:[#allocation2 + $0x5f8] sm:$0xff]
    %v777 = vld [vmem:[#allocation2 + $0x600] sm:$0xff]
    %v778 = vld [vmem:[#allocation2 + $0x608] sm:$0xff]
    %v779 = vld [vmem:[#allocation2 + $0x610] sm:$0xff]
    %v780 = vld [vmem:[#allocation2 + $0x618] sm:$0xff]
    %v781 = vld [vmem:[#allocation2 + $0x620] sm:$0xff]
    %v782 = vld [vmem:[#allocation2 + $0x628] sm:$0xff]
    %v783 = vld [vmem:[#allocation2 + $0x630] sm:$0xff]
    %v784 = vld [vmem:[#allocation2 + $0x638] sm:$0xff]
    %v785 = vld [vmem:[#allocation2 + $0x640] sm:$0xff]
    %v786 = vld [vmem:[#allocation2 + $0x648] sm:$0xff]
    %v787 = vld [vmem:[#allocation2 + $0x650] sm:$0xff]
    %v788 = vld [vmem:[#allocation2 + $0x658] sm:$0xff]
    %v789 = vld [vmem:[#allocation2 + $0x660] sm:$0xff]
    %v790 = vld [vmem:[#allocation2 + $0x668] sm:$0xff]
    %v791 = vld [vmem:[#allocation2 + $0x670] sm:$0xff]
    %v792 = vld [vmem:[#allocation2 + $0x678] sm:$0xff]
    %v793 = vld [vmem:[#allocation2 + $0x680] sm:$0xff]
    %v794 = vld [vmem:[#allocation2 + $0x688] sm:$0xff]
    %v795 = vld [vmem:[#allocation2 + $0x690] sm:$0xff]
    %v796 = vld [vmem:[#allocation2 + $0x698] sm:$0xff]
    %v797 = vld [vmem:[#allocation2 + $0x6a0] sm:$0xff]
    %v798 = vld [vmem:[#allocation2 + $0x6a8] sm:$0xff]
    %v799 = vld [vmem:[#allocation2 + $0x6b0] sm:$0xff]
    %v800 = vld [vmem:[#allocation2 + $0x6b8] sm:$0xff]
    %v801 = vld [vmem:[#allocation2 + $0x6c0] sm:$0xff]
    %v802 = vld [vmem:[#allocation2 + $0x6c8] sm:$0xff]
    %v803 = vld [vmem:[#allocation2 + $0x6d0] sm:$0xff]
    %v804 = vld [vmem:[#allocation2 + $0x6d8] sm:$0xff]
    %v805 = vld [vmem:[#allocation2 + $0x6e0] sm:$0xff]
    %v806 = vld [vmem:[#allocation2 + $0x6e8] sm:$0xff]
    %v807 = vld [vmem:[#allocation2 + $0x6f0] sm:$0xff]
    %v808 = vld [vmem:[#allocation2 + $0x6f8] sm:$0xff]
    %v809 = vld [vmem:[#allocation2 + $0x700] sm:$0xff]
    %v810 = vld [vmem:[#allocation2 + $0x708] sm:$0xff]
    %v811 = vld [vmem:[#allocation2 + $0x710] sm:$0xff]
    %v812 = vld [vmem:[#allocation2 + $0x718] sm:$0xff]
    %v813 = vld [vmem:[#allocation2 + $0x720] sm:$0xff]
    %v814 = vld [vmem:[#allocation2 + $0x728] sm:$0xff]
    %v815 = vld [vmem:[#allocation2 + $0x730] sm:$0xff]
    %v816 = vld [vmem:[#allocation2 + $0x738] sm:$0xff]
    %v817 = vld [vmem:[#allocation2 + $0x740] sm:$0xff]
    %v818 = vld [vmem:[#allocation2 + $0x748] sm:$0xff]
    %v819 = vld [vmem:[#allocation2 + $0x750] sm:$0xff]
    %v820 = vld [vmem:[#allocation2 + $0x758] sm:$0xff]
    %v821 = vld [vmem:[#allocation2 + $0x760] sm:$0xff]
    %v822 = vld [vmem:[#allocation2 + $0x768] sm:$0xff]
    %v823 = vld [vmem:[#allocation2 + $0x770] sm:$0xff]
    %v824 = vld [vmem:[#allocation2 + $0x778] sm:$0xff]
    %v825 = vld [vmem:[#allocation2 + $0x780] sm:$0xff]
    %v826 = vld [vmem:[#allocation2 + $0x788] sm:$0xff]
    %v827 = vld [vmem:[#allocation2 + $0x790] sm:$0xff]
    %v828 = vld [vmem:[#allocation2 + $0x798] sm:$0xff]
    %v829 = vld [vmem:[#allocation2 + $0x7a0] sm:$0xff]
    %v830 = vld [vmem:[#allocation2 + $0x7a8] sm:$0xff]
    %v831 = vld [vmem:[#allocation2 + $0x7b0] sm:$0xff]
    %v832 = vld [vmem:[#allocation2 + $0x7b8] sm:$0xff]
    %v833 = vld [vmem:[#allocation2 + $0x7c0] sm:$0xff]
    %v834 = vld [vmem:[#allocation2 + $0x7c8] sm:$0xff]
    %v835 = vld [vmem:[#allocation2 + $0x7d0] sm:$0xff]
    %v836 = vld [vmem:[#allocation2 + $0x7d8] sm:$0xff]
    %v837 = vld [vmem:[#allocation2 + $0x7e0] sm:$0xff]
    %v838 = vld [vmem:[#allocation2 + $0x7e8] sm:$0xff]
    %v839 = vld [vmem:[#allocation2 + $0x7f0] sm:$0xff]
    %v840 = vld [vmem:[#allocation2 + $0x7f8] sm:$0xff]
    %v841 = vld [vmem:[%s8] sm:$0xff]
    %v842 = vld [vmem:[%s8 + $0x8] sm:$0xff]
    %v843 = vld [vmem:[%s8 + $0x10] sm:$0xff]
    %v844 = vld [vmem:[%s8 + $0x18] sm:$0xff]
    %v849 = vperm.slane %v841, 0
    %v850 = vperm.slane %v841, 1
    %v851 = vperm.slane %v841, 2
    %v852 = vperm.slane %v841, 3
    %v853 = vperm.slane %v841, 4
    %v854 = vperm.slane %v841, 5
    %v855 = vperm.slane %v841, 6
    %v856 = vperm.slane %v841, 7
    %v857 = vperm.slane %v842, 0
    %v858 = vperm.slane %v842, 1
    %v859 = vperm.slane %v842, 2
    %v860 = vperm.slane %v842, 3
    %v861 = vperm.slane %v842, 4
    %v862 = vperm.slane %v842, 5
    %v863 = vperm.slane %v842, 6
    %v864 = vperm.slane %v842, 7
    %v865 = vperm.slane %v843, 0
    %v866 = vperm.slane %v843, 1
    %v867 = vperm.slane %v843, 2
    %v868 = vperm.slane %v843, 3
    %v869 = vperm.slane %v843, 4
    %v870 = vperm.slane %v843, 5
    %v871 = vperm.slane %v843, 6
    %v872 = vperm.slane %v843, 7
    %v873 = vperm.slane %v844, 0
    %v874 = vperm.slane %v844, 1
    %v875 = vperm.slane %v844, 2
    %v876 = vperm.slane %v844, 3
    %v877 = vperm.slane %v844, 4
    %v878 = vperm.slane %v844, 5
    %v879 = vperm.slane %v844, 6
    %v880 = vperm.slane %v844, 7
    %v1169 = vunpack.c.l.b16 %v585
    %v1170 = vunpack.c.h.b16 %v585
    %v1171 = vunpack.c.l.b16 %v586
    %v1172 = vunpack.c.h.b16 %v586
    %v1173 = vunpack.c.l.b16 %v587
    %v1174 = vunpack.c.h.b16 %v587
    %v1175 = vunpack.c.l.b16 %v588
    %v1176 = vunpack.c.h.b16 %v588
    %v1177 = vunpack.c.l.b16 %v589
    %v1178 = vunpack.c.h.b16 %v589
    %v1179 = vunpack.c.l.b16 %v590
    %v1180 = vunpack.c.h.b16 %v590
    %v1181 = vunpack.c.l.b16 %v591
    %v1182 = vunpack.c.h.b16 %v591
    %v1183 = vunpack.c.l.b16 %v592
    %v1184 = vunpack.c.h.b16 %v592
    %v1185 = vunpack.c.l.b16 %v593
    %v1186 = vunpack.c.h.b16 %v593
    %v1187 = vunpack.c.l.b16 %v594
    %v1188 = vunpack.c.h.b16 %v594
    %v1189 = vunpack.c.l.b16 %v595
    %v1190 = vunpack.c.h.b16 %v595
    %v1191 = vunpack.c.l.b16 %v596
    %v1192 = vunpack.c.h.b16 %v596
    %v1193 = vunpack.c.l.b16 %v597
    %v1194 = vunpack.c.h.b16 %v597
    %v1195 = vunpack.c.l.b16 %v598
    %v1196 = vunpack.c.h.b16 %v598
    %v1197 = vunpack.c.l.b16 %v599
    %v1198 = vunpack.c.h.b16 %v599
    %v1199 = vunpack.c.l.b16 %v600
    %v1200 = vunpack.c.h.b16 %v600
    %v1201 = vunpack.c.l.b16 %v601
    %v1202 = vunpack.c.h.b16 %v601
    %v1203 = vunpack.c.l.b16 %v602
    %v1204 = vunpack.c.h.b16 %v602
    %v1205 = vunpack.c.l.b16 %v603
    %v1206 = vunpack.c.h.b16 %v603
    %v1207 = vunpack.c.l.b16 %v604
    %v1208 = vunpack.c.h.b16 %v604
    %v1209 = vunpack.c.l.b16 %v605
    %v1210 = vunpack.c.h.b16 %v605
    %v1211 = vunpack.c.l.b16 %v606
    %v1212 = vunpack.c.h.b16 %v606
    %v1213 = vunpack.c.l.b16 %v607
    %v1214 = vunpack.c.h.b16 %v607
    %v1215 = vunpack.c.l.b16 %v608
    %v1216 = vunpack.c.h.b16 %v608
    %v1217 = vunpack.c.l.b16 %v609
    %v1218 = vunpack.c.h.b16 %v609
    %v1219 = vunpack.c.l.b16 %v610
    %v1220 = vunpack.c.h.b16 %v610
    %v1221 = vunpack.c.l.b16 %v611
    %v1222 = vunpack.c.h.b16 %v611
    %v1223 = vunpack.c.l.b16 %v612
    %v1224 = vunpack.c.h.b16 %v612
    %v1225 = vunpack.c.l.b16 %v613
    %v1226 = vunpack.c.h.b16 %v613
    %v1227 = vunpack.c.l.b16 %v614
    %v1228 = vunpack.c.h.b16 %v614
    %v1229 = vunpack.c.l.b16 %v615
    %v1230 = vunpack.c.h.b16 %v615
    %v1231 = vunpack.c.l.b16 %v616
    %v1232 = vunpack.c.h.b16 %v616
    %v1233 = vunpack.c.l.b16 %v617
    %v1234 = vunpack.c.h.b16 %v617
    %v1235 = vunpack.c.l.b16 %v618
    %v1236 = vunpack.c.h.b16 %v618
    %v1237 = vunpack.c.l.b16 %v619
    %v1238 = vunpack.c.h.b16 %v619
    %v1239 = vunpack.c.l.b16 %v620
    %v1240 = vunpack.c.h.b16 %v620
    %v1241 = vunpack.c.l.b16 %v621
    %v1242 = vunpack.c.h.b16 %v621
    %v1243 = vunpack.c.l.b16 %v622
    %v1244 = vunpack.c.h.b16 %v622
    %v1245 = vunpack.c.l.b16 %v623
    %v1246 = vunpack.c.h.b16 %v623
    %v1247 = vunpack.c.l.b16 %v624
    %v1248 = vunpack.c.h.b16 %v624
    %v1249 = vunpack.c.l.b16 %v625
    %v1250 = vunpack.c.h.b16 %v625
    %v1251 = vunpack.c.l.b16 %v626
    %v1252 = vunpack.c.h.b16 %v626
    %v1253 = vunpack.c.l.b16 %v627
    %v1254 = vunpack.c.h.b16 %v627
    %v1255 = vunpack.c.l.b16 %v628
    %v1256 = vunpack.c.h.b16 %v628
    %v1257 = vunpack.c.l.b16 %v629
    %v1258 = vunpack.c.h.b16 %v629
    %v1259 = vunpack.c.l.b16 %v630
    %v1260 = vunpack.c.h.b16 %v630
    %v1261 = vunpack.c.l.b16 %v631
    %v1262 = vunpack.c.h.b16 %v631
    %v1263 = vunpack.c.l.b16 %v632
    %v1264 = vunpack.c.h.b16 %v632
    %v1265 = vunpack.c.l.b16 %v633
    %v1266 = vunpack.c.h.b16 %v633
    %v1267 = vunpack.c.l.b16 %v634
    %v1268 = vunpack.c.h.b16 %v634
    %v1269 = vunpack.c.l.b16 %v635
    %v1270 = vunpack.c.h.b16 %v635
    %v1271 = vunpack.c.l.b16 %v636
    %v1272 = vunpack.c.h.b16 %v636
    %v1273 = vunpack.c.l.b16 %v637
    %v1274 = vunpack.c.h.b16 %v637
    %v1275 = vunpack.c.l.b16 %v638
    %v1276 = vunpack.c.h.b16 %v638
    %v1277 = vunpack.c.l.b16 %v639
    %v1278 = vunpack.c.h.b16 %v639
    %v1279 = vunpack.c.l.b16 %v640
    %v1280 = vunpack.c.h.b16 %v640
    %v1281 = vunpack.c.l.b16 %v641
    %v1282 = vunpack.c.h.b16 %v641
    %v1283 = vunpack.c.l.b16 %v642
    %v1284 = vunpack.c.h.b16 %v642
    %v1285 = vunpack.c.l.b16 %v643
    %v1286 = vunpack.c.h.b16 %v643
    %v1287 = vunpack.c.l.b16 %v644
    %v1288 = vunpack.c.h.b16 %v644
    %v1289 = vunpack.c.l.b16 %v645
    %v1290 = vunpack.c.h.b16 %v645
    %v1291 = vunpack.c.l.b16 %v646
    %v1292 = vunpack.c.h.b16 %v646
    %v1293 = vunpack.c.l.b16 %v647
    %v1294 = vunpack.c.h.b16 %v647
    %v1295 = vunpack.c.l.b16 %v648
    %v1296 = vunpack.c.h.b16 %v648
    %v1297 = vunpack.c.l.b16 %v649
    %v1298 = vunpack.c.h.b16 %v649
    %v1299 = vunpack.c.l.b16 %v650
    %v1300 = vunpack.c.h.b16 %v650
    %v1301 = vunpack.c.l.b16 %v651
    %v1302 = vunpack.c.h.b16 %v651
    %v1303 = vunpack.c.l.b16 %v652
    %v1304 = vunpack.c.h.b16 %v652
    %v1305 = vunpack.c.l.b16 %v653
    %v1306 = vunpack.c.h.b16 %v653
    %v1307 = vunpack.c.l.b16 %v654
    %v1308 = vunpack.c.h.b16 %v654
    %v1309 = vunpack.c.l.b16 %v655
    %v1310 = vunpack.c.h.b16 %v655
    %v1311 = vunpack.c.l.b16 %v656
    %v1312 = vunpack.c.h.b16 %v656
    %v1313 = vunpack.c.l.b16 %v657
    %v1314 = vunpack.c.h.b16 %v657
    %v1315 = vunpack.c.l.b16 %v658
    %v1316 = vunpack.c.h.b16 %v658
    %v1317 = vunpack.c.l.b16 %v659
    %v1318 = vunpack.c.h.b16 %v659
    %v1319 = vunpack.c.l.b16 %v660
    %v1320 = vunpack.c.h.b16 %v660
    %v1321 = vunpack.c.l.b16 %v661
    %v1322 = vunpack.c.h.b16 %v661
    %v1323 = vunpack.c.l.b16 %v662
    %v1324 = vunpack.c.h.b16 %v662
    %v1325 = vunpack.c.l.b16 %v663
    %v1326 = vunpack.c.h.b16 %v663
    %v1327 = vunpack.c.l.b16 %v664
    %v1328 = vunpack.c.h.b16 %v664
    %v1329 = vunpack.c.l.b16 %v665
    %v1330 = vunpack.c.h.b16 %v665
    %v1331 = vunpack.c.l.b16 %v666
    %v1332 = vunpack.c.h.b16 %v666
    %v1333 = vunpack.c.l.b16 %v667
    %v1334 = vunpack.c.h.b16 %v667
    %v1335 = vunpack.c.l.b16 %v668
    %v1336 = vunpack.c.h.b16 %v668
    %v1337 = vunpack.c.l.b16 %v669
    %v1338 = vunpack.c.h.b16 %v669
    %v1339 = vunpack.c.l.b16 %v670
    %v1340 = vunpack.c.h.b16 %v670
    %v1341 = vunpack.c.l.b16 %v671
    %v1342 = vunpack.c.h.b16 %v671
    %v1343 = vunpack.c.l.b16 %v672
    %v1344 = vunpack.c.h.b16 %v672
    %v1345 = vunpack.c.l.b16 %v673
    %v1346 = vunpack.c.h.b16 %v673
    %v1347 = vunpack.c.l.b16 %v674
    %v1348 = vunpack.c.h.b16 %v674
    %v1349 = vunpack.c.l.b16 %v675
    %v1350 = vunpack.c.h.b16 %v675
    %v1351 = vunpack.c.l.b16 %v676
    %v1352 = vunpack.c.h.b16 %v676
    %v1353 = vunpack.c.l.b16 %v677
    %v1354 = vunpack.c.h.b16 %v677
    %v1355 = vunpack.c.l.b16 %v678
    %v1356 = vunpack.c.h.b16 %v678
    %v1357 = vunpack.c.l.b16 %v679
    %v1358 = vunpack.c.h.b16 %v679
    %v1359 = vunpack.c.l.b16 %v680
    %v1360 = vunpack.c.h.b16 %v680
    %v1361 = vunpack.c.l.b16 %v681
    %v1362 = vunpack.c.h.b16 %v681
    %v1363 = vunpack.c.l.b16 %v682
    %v1364 = vunpack.c.h.b16 %v682
    %v1365 = vunpack.c.l.b16 %v683
    %v1366 = vunpack.c.h.b16 %v683
    %v1367 = vunpack.c.l.b16 %v684
    %v1368 = vunpack.c.h.b16 %v684
    %v1369 = vunpack.c.l.b16 %v685
    %v1370 = vunpack.c.h.b16 %v685
    %v1371 = vunpack.c.l.b16 %v686
    %v1372 = vunpack.c.h.b16 %v686
    %v1373 = vunpack.c.l.b16 %v687
    %v1374 = vunpack.c.h.b16 %v687
    %v1375 = vunpack.c.l.b16 %v688
    %v1376 = vunpack.c.h.b16 %v688
    %v1377 = vunpack.c.l.b16 %v689
    %v1378 = vunpack.c.h.b16 %v689
    %v1379 = vunpack.c.l.b16 %v690
    %v1380 = vunpack.c.h.b16 %v690
    %v1381 = vunpack.c.l.b16 %v691
    %v1382 = vunpack.c.h.b16 %v691
    %v1383 = vunpack.c.l.b16 %v692
    %v1384 = vunpack.c.h.b16 %v692
    %v1385 = vunpack.c.l.b16 %v693
    %v1386 = vunpack.c.h.b16 %v693
    %v1387 = vunpack.c.l.b16 %v694
    %v1388 = vunpack.c.h.b16 %v694
    %v1389 = vunpack.c.l.b16 %v695
    %v1390 = vunpack.c.h.b16 %v695
    %v1391 = vunpack.c.l.b16 %v696
    %v1392 = vunpack.c.h.b16 %v696
    %v1393 = vunpack.c.l.b16 %v697
    %v1394 = vunpack.c.h.b16 %v697
    %v1395 = vunpack.c.l.b16 %v698
    %v1396 = vunpack.c.h.b16 %v698
    %v1397 = vunpack.c.l.b16 %v699
    %v1398 = vunpack.c.h.b16 %v699
    %v1399 = vunpack.c.l.b16 %v700
    %v1400 = vunpack.c.h.b16 %v700
    %v1401 = vunpack.c.l.b16 %v701
    %v1402 = vunpack.c.h.b16 %v701
    %v1403 = vunpack.c.l.b16 %v702
    %v1404 = vunpack.c.h.b16 %v702
    %v1405 = vunpack.c.l.b16 %v703
    %v1406 = vunpack.c.h.b16 %v703
    %v1407 = vunpack.c.l.b16 %v704
    %v1408 = vunpack.c.h.b16 %v704
    %v1409 = vunpack.c.l.b16 %v705
    %v1410 = vunpack.c.h.b16 %v705
    %v1411 = vunpack.c.l.b16 %v706
    %v1412 = vunpack.c.h.b16 %v706
    %v1413 = vunpack.c.l.b16 %v707
    %v1414 = vunpack.c.h.b16 %v707
    %v1415 = vunpack.c.l.b16 %v708
    %v1416 = vunpack.c.h.b16 %v708
    %v1417 = vunpack.c.l.b16 %v709
    %v1418 = vunpack.c.h.b16 %v709
    %v1419 = vunpack.c.l.b16 %v710
    %v1420 = vunpack.c.h.b16 %v710
    %v1421 = vunpack.c.l.b16 %v711
    %v1422 = vunpack.c.h.b16 %v711
    %v1423 = vunpack.c.l.b16 %v712
    %v1424 = vunpack.c.h.b16 %v712
    %v1425 = vunpack.c.l.b16 %v713
    %v1426 = vunpack.c.h.b16 %v713
    %v1427 = vunpack.c.l.b16 %v714
    %v1428 = vunpack.c.h.b16 %v714
    %v1429 = vunpack.c.l.b16 %v715
    %v1430 = vunpack.c.h.b16 %v715
    %v1431 = vunpack.c.l.b16 %v716
    %v1432 = vunpack.c.h.b16 %v716
    %v1433 = vunpack.c.l.b16 %v717
    %v1434 = vunpack.c.h.b16 %v717
    %v1435 = vunpack.c.l.b16 %v718
    %v1436 = vunpack.c.h.b16 %v718
    %v1437 = vunpack.c.l.b16 %v719
    %v1438 = vunpack.c.h.b16 %v719
    %v1439 = vunpack.c.l.b16 %v720
    %v1440 = vunpack.c.h.b16 %v720
    %v1441 = vunpack.c.l.b16 %v721
    %v1442 = vunpack.c.h.b16 %v721
    %v1443 = vunpack.c.l.b16 %v722
    %v1444 = vunpack.c.h.b16 %v722
    %v1445 = vunpack.c.l.b16 %v723
    %v1446 = vunpack.c.h.b16 %v723
    %v1447 = vunpack.c.l.b16 %v724
    %v1448 = vunpack.c.h.b16 %v724
    %v1449 = vunpack.c.l.b16 %v725
    %v1450 = vunpack.c.h.b16 %v725
    %v1451 = vunpack.c.l.b16 %v726
    %v1452 = vunpack.c.h.b16 %v726
    %v1453 = vunpack.c.l.b16 %v727
    %v1454 = vunpack.c.h.b16 %v727
    %v1455 = vunpack.c.l.b16 %v728
    %v1456 = vunpack.c.h.b16 %v728
    %v1457 = vunpack.c.l.b16 %v729
    %v1458 = vunpack.c.h.b16 %v729
    %v1459 = vunpack.c.l.b16 %v730
    %v1460 = vunpack.c.h.b16 %v730
    %v1461 = vunpack.c.l.b16 %v731
    %v1462 = vunpack.c.h.b16 %v731
    %v1463 = vunpack.c.l.b16 %v732
    %v1464 = vunpack.c.h.b16 %v732
    %v1465 = vunpack.c.l.b16 %v733
    %v1466 = vunpack.c.h.b16 %v733
    %v1467 = vunpack.c.l.b16 %v734
    %v1468 = vunpack.c.h.b16 %v734
    %v1469 = vunpack.c.l.b16 %v735
    %v1470 = vunpack.c.h.b16 %v735
    %v1471 = vunpack.c.l.b16 %v736
    %v1472 = vunpack.c.h.b16 %v736
    %v1473 = vunpack.c.l.b16 %v737
    %v1474 = vunpack.c.h.b16 %v737
    %v1475 = vunpack.c.l.b16 %v738
    %v1476 = vunpack.c.h.b16 %v738
    %v1477 = vunpack.c.l.b16 %v739
    %v1478 = vunpack.c.h.b16 %v739
    %v1479 = vunpack.c.l.b16 %v740
    %v1480 = vunpack.c.h.b16 %v740
    %v1481 = vunpack.c.l.b16 %v741
    %v1482 = vunpack.c.h.b16 %v741
    %v1483 = vunpack.c.l.b16 %v742
    %v1484 = vunpack.c.h.b16 %v742
    %v1485 = vunpack.c.l.b16 %v743
    %v1486 = vunpack.c.h.b16 %v743
    %v1487 = vunpack.c.l.b16 %v744
    %v1488 = vunpack.c.h.b16 %v744
    %v1489 = vunpack.c.l.b16 %v745
    %v1490 = vunpack.c.h.b16 %v745
    %v1491 = vunpack.c.l.b16 %v746
    %v1492 = vunpack.c.h.b16 %v746
    %v1493 = vunpack.c.l.b16 %v747
    %v1494 = vunpack.c.h.b16 %v747
    %v1495 = vunpack.c.l.b16 %v748
    %v1496 = vunpack.c.h.b16 %v748
    %v1497 = vunpack.c.l.b16 %v749
    %v1498 = vunpack.c.h.b16 %v749
    %v1499 = vunpack.c.l.b16 %v750
    %v1500 = vunpack.c.h.b16 %v750
    %v1501 = vunpack.c.l.b16 %v751
    %v1502 = vunpack.c.h.b16 %v751
    %v1503 = vunpack.c.l.b16 %v752
    %v1504 = vunpack.c.h.b16 %v752
    %v1505 = vunpack.c.l.b16 %v753
    %v1506 = vunpack.c.h.b16 %v753
    %v1507 = vunpack.c.l.b16 %v754
    %v1508 = vunpack.c.h.b16 %v754
    %v1509 = vunpack.c.l.b16 %v755
    %v1510 = vunpack.c.h.b16 %v755
    %v1511 = vunpack.c.l.b16 %v756
    %v1512 = vunpack.c.h.b16 %v756
    %v1513 = vunpack.c.l.b16 %v757
    %v1514 = vunpack.c.h.b16 %v757
    %v1515 = vunpack.c.l.b16 %v758
    %v1516 = vunpack.c.h.b16 %v758
    %v1517 = vunpack.c.l.b16 %v759
    %v1518 = vunpack.c.h.b16 %v759
    %v1519 = vunpack.c.l.b16 %v760
    %v1520 = vunpack.c.h.b16 %v760
    %v1521 = vunpack.c.l.b16 %v761
    %v1522 = vunpack.c.h.b16 %v761
    %v1523 = vunpack.c.l.b16 %v762
    %v1524 = vunpack.c.h.b16 %v762
    %v1525 = vunpack.c.l.b16 %v763
    %v1526 = vunpack.c.h.b16 %v763
    %v1527 = vunpack.c.l.b16 %v764
    %v1528 = vunpack.c.h.b16 %v764
    %v1529 = vunpack.c.l.b16 %v765
    %v1530 = vunpack.c.h.b16 %v765
    %v1531 = vunpack.c.l.b16 %v766
    %v1532 = vunpack.c.h.b16 %v766
    %v1533 = vunpack.c.l.b16 %v767
    %v1534 = vunpack.c.h.b16 %v767
    %v1535 = vunpack.c.l.b16 %v768
    %v1536 = vunpack.c.h.b16 %v768
    %v1537 = vunpack.c.l.b16 %v769
    %v1538 = vunpack.c.h.b16 %v769
    %v1539 = vunpack.c.l.b16 %v770
    %v1540 = vunpack.c.h.b16 %v770
    %v1541 = vunpack.c.l.b16 %v771
    %v1542 = vunpack.c.h.b16 %v771
    %v1543 = vunpack.c.l.b16 %v772
    %v1544 = vunpack.c.h.b16 %v772
    %v1545 = vunpack.c.l.b16 %v773
    %v1546 = vunpack.c.h.b16 %v773
    %v1547 = vunpack.c.l.b16 %v774
    %v1548 = vunpack.c.h.b16 %v774
    %v1549 = vunpack.c.l.b16 %v775
    %v1550 = vunpack.c.h.b16 %v775
    %v1551 = vunpack.c.l.b16 %v776
    %v1552 = vunpack.c.h.b16 %v776
    %v1553 = vunpack.c.l.b16 %v777
    %v1554 = vunpack.c.h.b16 %v777
    %v1555 = vunpack.c.l.b16 %v778
    %v1556 = vunpack.c.h.b16 %v778
    %v1557 = vunpack.c.l.b16 %v779
    %v1558 = vunpack.c.h.b16 %v779
    %v1559 = vunpack.c.l.b16 %v780
    %v1560 = vunpack.c.h.b16 %v780
    %v1561 = vunpack.c.l.b16 %v781
    %v1562 = vunpack.c.h.b16 %v781
    %v1563 = vunpack.c.l.b16 %v782
    %v1564 = vunpack.c.h.b16 %v782
    %v1565 = vunpack.c.l.b16 %v783
    %v1566 = vunpack.c.h.b16 %v783
    %v1567 = vunpack.c.l.b16 %v784
    %v1568 = vunpack.c.h.b16 %v784
    %v1569 = vunpack.c.l.b16 %v785
    %v1570 = vunpack.c.h.b16 %v785
    %v1571 = vunpack.c.l.b16 %v786
    %v1572 = vunpack.c.h.b16 %v786
    %v1573 = vunpack.c.l.b16 %v787
    %v1574 = vunpack.c.h.b16 %v787
    %v1575 = vunpack.c.l.b16 %v788
    %v1576 = vunpack.c.h.b16 %v788
    %v1577 = vunpack.c.l.b16 %v789
    %v1578 = vunpack.c.h.b16 %v789
    %v1579 = vunpack.c.l.b16 %v790
    %v1580 = vunpack.c.h.b16 %v790
    %v1581 = vunpack.c.l.b16 %v791
    %v1582 = vunpack.c.h.b16 %v791
    %v1583 = vunpack.c.l.b16 %v792
    %v1584 = vunpack.c.h.b16 %v792
    %v1585 = vunpack.c.l.b16 %v793
    %v1586 = vunpack.c.h.b16 %v793
    %v1587 = vunpack.c.l.b16 %v794
    %v1588 = vunpack.c.h.b16 %v794
    %v1589 = vunpack.c.l.b16 %v795
    %v1590 = vunpack.c.h.b16 %v795
    %v1591 = vunpack.c.l.b16 %v796
    %v1592 = vunpack.c.h.b16 %v796
    %v1593 = vunpack.c.l.b16 %v797
    %v1594 = vunpack.c.h.b16 %v797
    %v1595 = vunpack.c.l.b16 %v798
    %v1596 = vunpack.c.h.b16 %v798
    %v1597 = vunpack.c.l.b16 %v799
    %v1598 = vunpack.c.h.b16 %v799
    %v1599 = vunpack.c.l.b16 %v800
    %v1600 = vunpack.c.h.b16 %v800
    %v1601 = vunpack.c.l.b16 %v801
    %v1602 = vunpack.c.h.b16 %v801
    %v1603 = vunpack.c.l.b16 %v802
    %v1604 = vunpack.c.h.b16 %v802
    %v1605 = vunpack.c.l.b16 %v803
    %v1606 = vunpack.c.h.b16 %v803
    %v1607 = vunpack.c.l.b16 %v804
    %v1608 = vunpack.c.h.b16 %v804
    %v1609 = vunpack.c.l.b16 %v805
    %v1610 = vunpack.c.h.b16 %v805
    %v1611 = vunpack.c.l.b16 %v806
    %v1612 = vunpack.c.h.b16 %v806
    %v1613 = vunpack.c.l.b16 %v807
    %v1614 = vunpack.c.h.b16 %v807
    %v1615 = vunpack.c.l.b16 %v808
    %v1616 = vunpack.c.h.b16 %v808
    %v1617 = vunpack.c.l.b16 %v809
    %v1618 = vunpack.c.h.b16 %v809
    %v1619 = vunpack.c.l.b16 %v810
    %v1620 = vunpack.c.h.b16 %v810
    %v1621 = vunpack.c.l.b16 %v811
    %v1622 = vunpack.c.h.b16 %v811
    %v1623 = vunpack.c.l.b16 %v812
    %v1624 = vunpack.c.h.b16 %v812
    %v1625 = vunpack.c.l.b16 %v813
    %v1626 = vunpack.c.h.b16 %v813
    %v1627 = vunpack.c.l.b16 %v814
    %v1628 = vunpack.c.h.b16 %v814
    %v1629 = vunpack.c.l.b16 %v815
    %v1630 = vunpack.c.h.b16 %v815
    %v1631 = vunpack.c.l.b16 %v816
    %v1632 = vunpack.c.h.b16 %v816
    %v1633 = vunpack.c.l.b16 %v817
    %v1634 = vunpack.c.h.b16 %v817
    %v1635 = vunpack.c.l.b16 %v818
    %v1636 = vunpack.c.h.b16 %v818
    %v1637 = vunpack.c.l.b16 %v819
    %v1638 = vunpack.c.h.b16 %v819
    %v1639 = vunpack.c.l.b16 %v820
    %v1640 = vunpack.c.h.b16 %v820
    %v1641 = vunpack.c.l.b16 %v821
    %v1642 = vunpack.c.h.b16 %v821
    %v1643 = vunpack.c.l.b16 %v822
    %v1644 = vunpack.c.h.b16 %v822
    %v1645 = vunpack.c.l.b16 %v823
    %v1646 = vunpack.c.h.b16 %v823
    %v1647 = vunpack.c.l.b16 %v824
    %v1648 = vunpack.c.h.b16 %v824
    %v1649 = vunpack.c.l.b16 %v825
    %v1650 = vunpack.c.h.b16 %v825
    %v1651 = vunpack.c.l.b16 %v826
    %v1652 = vunpack.c.h.b16 %v826
    %v1653 = vunpack.c.l.b16 %v827
    %v1654 = vunpack.c.h.b16 %v827
    %v1655 = vunpack.c.l.b16 %v828
    %v1656 = vunpack.c.h.b16 %v828
    %v1657 = vunpack.c.l.b16 %v829
    %v1658 = vunpack.c.h.b16 %v829
    %v1659 = vunpack.c.l.b16 %v830
    %v1660 = vunpack.c.h.b16 %v830
    %v1661 = vunpack.c.l.b16 %v831
    %v1662 = vunpack.c.h.b16 %v831
    %v1663 = vunpack.c.l.b16 %v832
    %v1664 = vunpack.c.h.b16 %v832
    %v1665 = vunpack.c.l.b16 %v833
    %v1666 = vunpack.c.h.b16 %v833
    %v1667 = vunpack.c.l.b16 %v834
    %v1668 = vunpack.c.h.b16 %v834
    %v1669 = vunpack.c.l.b16 %v835
    %v1670 = vunpack.c.h.b16 %v835
    %v1671 = vunpack.c.l.b16 %v836
    %v1672 = vunpack.c.h.b16 %v836
    %v1673 = vunpack.c.l.b16 %v837
    %v1674 = vunpack.c.h.b16 %v837
    %v1675 = vunpack.c.l.b16 %v838
    %v1676 = vunpack.c.h.b16 %v838
    %v1677 = vunpack.c.l.b16 %v839
    %v1678 = vunpack.c.h.b16 %v839
    %v1679 = vunpack.c.l.b16 %v840
    %v1680 = vunpack.c.h.b16 %v840
    %v1681 = vpack.c.b16 %v1201, %v1169
    %v1682 = vpack.c.b16 %v1202, %v1170
    %v1683 = vpack.c.b16 %v1203, %v1171
    %v1684 = vpack.c.b16 %v1204, %v1172
    %v1685 = vpack.c.b16 %v1205, %v1173
    %v1686 = vpack.c.b16 %v1206, %v1174
    %v1687 = vpack.c.b16 %v1207, %v1175
    %v1688 = vpack.c.b16 %v1208, %v1176
    %v1689 = vpack.c.b16 %v1209, %v1177
    %v1690 = vpack.c.b16 %v1210, %v1178
    %v1691 = vpack.c.b16 %v1211, %v1179
    %v1692 = vpack.c.b16 %v1212, %v1180
    %v1693 = vpack.c.b16 %v1213, %v1181
    %v1694 = vpack.c.b16 %v1214, %v1182
    %v1695 = vpack.c.b16 %v1215, %v1183
    %v1696 = vpack.c.b16 %v1216, %v1184
    %v1697 = vpack.c.b16 %v1217, %v1185
    %v1698 = vpack.c.b16 %v1218, %v1186
    %v1699 = vpack.c.b16 %v1219, %v1187
    %v1700 = vpack.c.b16 %v1220, %v1188
    %v1701 = vpack.c.b16 %v1221, %v1189
    %v1702 = vpack.c.b16 %v1222, %v1190
    %v1703 = vpack.c.b16 %v1223, %v1191
    %v1704 = vpack.c.b16 %v1224, %v1192
    %v1705 = vpack.c.b16 %v1225, %v1193
    %v1706 = vpack.c.b16 %v1226, %v1194
    %v1707 = vpack.c.b16 %v1227, %v1195
    %v1708 = vpack.c.b16 %v1228, %v1196
    %v1709 = vpack.c.b16 %v1229, %v1197
    %v1710 = vpack.c.b16 %v1230, %v1198
    %v1711 = vpack.c.b16 %v1231, %v1199
    %v1712 = vpack.c.b16 %v1232, %v1200
    %v1713 = vpack.c.b16 %v1265, %v1233
    %v1714 = vpack.c.b16 %v1266, %v1234
    %v1715 = vpack.c.b16 %v1267, %v1235
    %v1716 = vpack.c.b16 %v1268, %v1236
    %v1717 = vpack.c.b16 %v1269, %v1237
    %v1718 = vpack.c.b16 %v1270, %v1238
    %v1719 = vpack.c.b16 %v1271, %v1239
    %v1720 = vpack.c.b16 %v1272, %v1240
    %v1721 = vpack.c.b16 %v1273, %v1241
    %v1722 = vpack.c.b16 %v1274, %v1242
    %v1723 = vpack.c.b16 %v1275, %v1243
    %v1724 = vpack.c.b16 %v1276, %v1244
    %v1725 = vpack.c.b16 %v1277, %v1245
    %v1726 = vpack.c.b16 %v1278, %v1246
    %v1727 = vpack.c.b16 %v1279, %v1247
    %v1728 = vpack.c.b16 %v1280, %v1248
    %v1729 = vpack.c.b16 %v1281, %v1249
    %v1730 = vpack.c.b16 %v1282, %v1250
    %v1731 = vpack.c.b16 %v1283, %v1251
    %v1732 = vpack.c.b16 %v1284, %v1252
    %v1733 = vpack.c.b16 %v1285, %v1253
    %v1734 = vpack.c.b16 %v1286, %v1254
    %v1735 = vpack.c.b16 %v1287, %v1255
    %v1736 = vpack.c.b16 %v1288, %v1256
    %v1737 = vpack.c.b16 %v1289, %v1257
    %v1738 = vpack.c.b16 %v1290, %v1258
    %v1739 = vpack.c.b16 %v1291, %v1259
    %v1740 = vpack.c.b16 %v1292, %v1260
    %v1741 = vpack.c.b16 %v1293, %v1261
    %v1742 = vpack.c.b16 %v1294, %v1262
    %v1743 = vpack.c.b16 %v1295, %v1263
    %v1744 = vpack.c.b16 %v1296, %v1264
    %v1745 = vpack.c.b16 %v1329, %v1297
    %v1746 = vpack.c.b16 %v1330, %v1298
    %v1747 = vpack.c.b16 %v1331, %v1299
    %v1748 = vpack.c.b16 %v1332, %v1300
    %v1749 = vpack.c.b16 %v1333, %v1301
    %v1750 = vpack.c.b16 %v1334, %v1302
    %v1751 = vpack.c.b16 %v1335, %v1303
    %v1752 = vpack.c.b16 %v1336, %v1304
    %v1753 = vpack.c.b16 %v1337, %v1305
    %v1754 = vpack.c.b16 %v1338, %v1306
    %v1755 = vpack.c.b16 %v1339, %v1307
    %v1756 = vpack.c.b16 %v1340, %v1308
    %v1757 = vpack.c.b16 %v1341, %v1309
    %v1758 = vpack.c.b16 %v1342, %v1310
    %v1759 = vpack.c.b16 %v1343, %v1311
    %v1760 = vpack.c.b16 %v1344, %v1312
    %v1761 = vpack.c.b16 %v1345, %v1313
    %v1762 = vpack.c.b16 %v1346, %v1314
    %v1763 = vpack.c.b16 %v1347, %v1315
    %v1764 = vpack.c.b16 %v1348, %v1316
    %v1765 = vpack.c.b16 %v1349, %v1317
    %v1766 = vpack.c.b16 %v1350, %v1318
    %v1767 = vpack.c.b16 %v1351, %v1319
    %v1768 = vpack.c.b16 %v1352, %v1320
    %v1769 = vpack.c.b16 %v1353, %v1321
    %v1770 = vpack.c.b16 %v1354, %v1322
    %v1771 = vpack.c.b16 %v1355, %v1323
    %v1772 = vpack.c.b16 %v1356, %v1324
    %v1773 = vpack.c.b16 %v1357, %v1325
    %v1774 = vpack.c.b16 %v1358, %v1326
    %v1775 = vpack.c.b16 %v1359, %v1327
    %v1776 = vpack.c.b16 %v1360, %v1328
    %v1777 = vpack.c.b16 %v1393, %v1361
    %v1778 = vpack.c.b16 %v1394, %v1362
    %v1779 = vpack.c.b16 %v1395, %v1363
    %v1780 = vpack.c.b16 %v1396, %v1364
    %v1781 = vpack.c.b16 %v1397, %v1365
    %v1782 = vpack.c.b16 %v1398, %v1366
    %v1783 = vpack.c.b16 %v1399, %v1367
    %v1784 = vpack.c.b16 %v1400, %v1368
    %v1785 = vpack.c.b16 %v1401, %v1369
    %v1786 = vpack.c.b16 %v1402, %v1370
    %v1787 = vpack.c.b16 %v1403, %v1371
    %v1788 = vpack.c.b16 %v1404, %v1372
    %v1789 = vpack.c.b16 %v1405, %v1373
    %v1790 = vpack.c.b16 %v1406, %v1374
    %v1791 = vpack.c.b16 %v1407, %v1375
    %v1792 = vpack.c.b16 %v1408, %v1376
    %v1793 = vpack.c.b16 %v1409, %v1377
    %v1794 = vpack.c.b16 %v1410, %v1378
    %v1795 = vpack.c.b16 %v1411, %v1379
    %v1796 = vpack.c.b16 %v1412, %v1380
    %v1797 = vpack.c.b16 %v1413, %v1381
    %v1798 = vpack.c.b16 %v1414, %v1382
    %v1799 = vpack.c.b16 %v1415, %v1383
    %v1800 = vpack.c.b16 %v1416, %v1384
    %v1801 = vpack.c.b16 %v1417, %v1385
    %v1802 = vpack.c.b16 %v1418, %v1386
    %v1803 = vpack.c.b16 %v1419, %v1387
    %v1804 = vpack.c.b16 %v1420, %v1388
    %v1805 = vpack.c.b16 %v1421, %v1389
    %v1806 = vpack.c.b16 %v1422, %v1390
    %v1807 = vpack.c.b16 %v1423, %v1391
    %v1808 = vpack.c.b16 %v1424, %v1392
    %v1809 = vpack.c.b16 %v1457, %v1425
    %v1810 = vpack.c.b16 %v1458, %v1426
    %v1811 = vpack.c.b16 %v1459, %v1427
    %v1812 = vpack.c.b16 %v1460, %v1428
    %v1813 = vpack.c.b16 %v1461, %v1429
    %v1814 = vpack.c.b16 %v1462, %v1430
    %v1815 = vpack.c.b16 %v1463, %v1431
    %v1816 = vpack.c.b16 %v1464, %v1432
    %v1817 = vpack.c.b16 %v1465, %v1433
    %v1818 = vpack.c.b16 %v1466, %v1434
    %v1819 = vpack.c.b16 %v1467, %v1435
    %v1820 = vpack.c.b16 %v1468, %v1436
    %v1821 = vpack.c.b16 %v1469, %v1437
    %v1822 = vpack.c.b16 %v1470, %v1438
    %v1823 = vpack.c.b16 %v1471, %v1439
    %v1824 = vpack.c.b16 %v1472, %v1440
    %v1825 = vpack.c.b16 %v1473, %v1441
    %v1826 = vpack.c.b16 %v1474, %v1442
    %v1827 = vpack.c.b16 %v1475, %v1443
    %v1828 = vpack.c.b16 %v1476, %v1444
    %v1829 = vpack.c.b16 %v1477, %v1445
    %v1830 = vpack.c.b16 %v1478, %v1446
    %v1831 = vpack.c.b16 %v1479, %v1447
    %v1832 = vpack.c.b16 %v1480, %v1448
    %v1833 = vpack.c.b16 %v1481, %v1449
    %v1834 = vpack.c.b16 %v1482, %v1450
    %v1835 = vpack.c.b16 %v1483, %v1451
    %v1836 = vpack.c.b16 %v1484, %v1452
    %v1837 = vpack.c.b16 %v1485, %v1453
    %v1838 = vpack.c.b16 %v1486, %v1454
    %v1839 = vpack.c.b16 %v1487, %v1455
    %v1840 = vpack.c.b16 %v1488, %v1456
    %v1841 = vpack.c.b16 %v1521, %v1489
    %v1842 = vpack.c.b16 %v1522, %v1490
    %v1843 = vpack.c.b16 %v1523, %v1491
    %v1844 = vpack.c.b16 %v1524, %v1492
    %v1845 = vpack.c.b16 %v1525, %v1493
    %v1846 = vpack.c.b16 %v1526, %v1494
    %v1847 = vpack.c.b16 %v1527, %v1495
    %v1848 = vpack.c.b16 %v1528, %v1496
    %v1849 = vpack.c.b16 %v1529, %v1497
    %v1850 = vpack.c.b16 %v1530, %v1498
    %v1851 = vpack.c.b16 %v1531, %v1499
    %v1852 = vpack.c.b16 %v1532, %v1500
    %v1853 = vpack.c.b16 %v1533, %v1501
    %v1854 = vpack.c.b16 %v1534, %v1502
    %v1855 = vpack.c.b16 %v1535, %v1503
    %v1856 = vpack.c.b16 %v1536, %v1504
    %v1857 = vpack.c.b16 %v1537, %v1505
    %v1858 = vpack.c.b16 %v1538, %v1506
    %v1859 = vpack.c.b16 %v1539, %v1507
    %v1860 = vpack.c.b16 %v1540, %v1508
    %v1861 = vpack.c.b16 %v1541, %v1509
    %v1862 = vpack.c.b16 %v1542, %v1510
    %v1863 = vpack.c.b16 %v1543, %v1511
    %v1864 = vpack.c.b16 %v1544, %v1512
    %v1865 = vpack.c.b16 %v1545, %v1513
    %v1866 = vpack.c.b16 %v1546, %v1514
    %v1867 = vpack.c.b16 %v1547, %v1515
    %v1868 = vpack.c.b16 %v1548, %v1516
    %v1869 = vpack.c.b16 %v1549, %v1517
    %v1870 = vpack.c.b16 %v1550, %v1518
    %v1871 = vpack.c.b16 %v1551, %v1519
    %v1872 = vpack.c.b16 %v1552, %v1520
    %v1873 = vpack.c.b16 %v1585, %v1553
    %v1874 = vpack.c.b16 %v1586, %v1554
    %v1875 = vpack.c.b16 %v1587, %v1555
    %v1876 = vpack.c.b16 %v1588, %v1556
    %v1877 = vpack.c.b16 %v1589, %v1557
    %v1878 = vpack.c.b16 %v1590, %v1558
    %v1879 = vpack.c.b16 %v1591, %v1559
    %v1880 = vpack.c.b16 %v1592, %v1560
    %v1881 = vpack.c.b16 %v1593, %v1561
    %v1882 = vpack.c.b16 %v1594, %v1562
    %v1883 = vpack.c.b16 %v1595, %v1563
    %v1884 = vpack.c.b16 %v1596, %v1564
    %v1885 = vpack.c.b16 %v1597, %v1565
    %v1886 = vpack.c.b16 %v1598, %v1566
    %v1887 = vpack.c.b16 %v1599, %v1567
    %v1888 = vpack.c.b16 %v1600, %v1568
    %v1889 = vpack.c.b16 %v1601, %v1569
    %v1890 = vpack.c.b16 %v1602, %v1570
    %v1891 = vpack.c.b16 %v1603, %v1571
    %v1892 = vpack.c.b16 %v1604, %v1572
    %v1893 = vpack.c.b16 %v1605, %v1573
    %v1894 = vpack.c.b16 %v1606, %v1574
    %v1895 = vpack.c.b16 %v1607, %v1575
    %v1896 = vpack.c.b16 %v1608, %v1576
    %v1897 = vpack.c.b16 %v1609, %v1577
    %v1898 = vpack.c.b16 %v1610, %v1578
    %v1899 = vpack.c.b16 %v1611, %v1579
    %v1900 = vpack.c.b16 %v1612, %v1580
    %v1901 = vpack.c.b16 %v1613, %v1581
    %v1902 = vpack.c.b16 %v1614, %v1582
    %v1903 = vpack.c.b16 %v1615, %v1583
    %v1904 = vpack.c.b16 %v1616, %v1584
    %v1905 = vpack.c.b16 %v1649, %v1617
    %v1906 = vpack.c.b16 %v1650, %v1618
    %v1907 = vpack.c.b16 %v1651, %v1619
    %v1908 = vpack.c.b16 %v1652, %v1620
    %v1909 = vpack.c.b16 %v1653, %v1621
    %v1910 = vpack.c.b16 %v1654, %v1622
    %v1911 = vpack.c.b16 %v1655, %v1623
    %v1912 = vpack.c.b16 %v1656, %v1624
    %v1913 = vpack.c.b16 %v1657, %v1625
    %v1914 = vpack.c.b16 %v1658, %v1626
    %v1915 = vpack.c.b16 %v1659, %v1627
    %v1916 = vpack.c.b16 %v1660, %v1628
    %v1917 = vpack.c.b16 %v1661, %v1629
    %v1918 = vpack.c.b16 %v1662, %v1630
    %v1919 = vpack.c.b16 %v1663, %v1631
    %v1920 = vpack.c.b16 %v1664, %v1632
    %v1921 = vpack.c.b16 %v1665, %v1633
    %v1922 = vpack.c.b16 %v1666, %v1634
    %v1923 = vpack.c.b16 %v1667, %v1635
    %v1924 = vpack.c.b16 %v1668, %v1636
    %v1925 = vpack.c.b16 %v1669, %v1637
    %v1926 = vpack.c.b16 %v1670, %v1638
    %v1927 = vpack.c.b16 %v1671, %v1639
    %v1928 = vpack.c.b16 %v1672, %v1640
    %v1929 = vpack.c.b16 %v1673, %v1641
    %v1930 = vpack.c.b16 %v1674, %v1642
    %v1931 = vpack.c.b16 %v1675, %v1643
    %v1932 = vpack.c.b16 %v1676, %v1644
    %v1933 = vpack.c.b16 %v1677, %v1645
    %v1934 = vpack.c.b16 %v1678, %v1646
    %v1935 = vpack.c.b16 %v1679, %v1647
    %v1936 = vpack.c.b16 %v1680, %v1648
    %2193 = vmatpush.bf16.msra.mxu0 %v1905
    %2194 = vmatpush.bf16.msra.mxu0 %v1873
    %2195 = vmatpush.bf16.msra.mxu0 %v1841
    %2196 = vmatpush.bf16.msra.mxu0 %v1809
    %2197 = vmatpush.bf16.msra.mxu0 %v1777
    %2198 = vmatpush.bf16.msra.mxu0 %v1745
    %2199 = vmatpush.bf16.msra.mxu0 %v1713
    %2200 = vmatpush.bf16.msra.mxu0 %v1681
    %2201 = vmatmul.bf16.gmra.mxu0 %v584
    %v2202 = vpop.f32.mrf.mxu0
    %v2203 = vadd.f32 %v849, %v2202
    %v2204 = vpop.f32.mrf.mxu0
    %2205 = vdwg.mxu0
    %2206 = vmatpush.bf16.msra.mxu0 %v1906
    %2207 = vmatpush.bf16.msra.mxu0 %v1874
    %2208 = vmatpush.bf16.msra.mxu0 %v1842
    %2209 = vmatpush.bf16.msra.mxu0 %v1810
    %2210 = vmatpush.bf16.msra.mxu0 %v1778
    %2211 = vmatpush.bf16.msra.mxu0 %v1746
    %2212 = vmatpush.bf16.msra.mxu0 %v1714
    %2213 = vmatpush.bf16.msra.mxu0 %v1682
    %2214 = vmatmul.bf16.gmra.mxu0 %v584
    %v2215 = vpop.f32.mrf.mxu0
    %v2216 = vadd.f32 %v850, %v2215
    %v2217 = vpop.f32.mrf.mxu0
    %2218 = vdwg.mxu0
    %2219 = vmatpush.bf16.msra.mxu0 %v1907
    %2220 = vmatpush.bf16.msra.mxu0 %v1875
    %2221 = vmatpush.bf16.msra.mxu0 %v1843
    %2222 = vmatpush.bf16.msra.mxu0 %v1811
    %2223 = vmatpush.bf16.msra.mxu0 %v1779
    %2224 = vmatpush.bf16.msra.mxu0 %v1747
    %2225 = vmatpush.bf16.msra.mxu0 %v1715
    %2226 = vmatpush.bf16.msra.mxu0 %v1683
    %2227 = vmatmul.bf16.gmra.mxu0 %v584
    %v2228 = vpop.f32.mrf.mxu0
    %v2229 = vadd.f32 %v851, %v2228
    %v2230 = vpop.f32.mrf.mxu0
    %2231 = vdwg.mxu0
    %2232 = vmatpush.bf16.msra.mxu0 %v1908
    %2233 = vmatpush.bf16.msra.mxu0 %v1876
    %2234 = vmatpush.bf16.msra.mxu0 %v1844
    %2235 = vmatpush.bf16.msra.mxu0 %v1812
    %2236 = vmatpush.bf16.msra.mxu0 %v1780
    %2237 = vmatpush.bf16.msra.mxu0 %v1748
    %2238 = vmatpush.bf16.msra.mxu0 %v1716
    %2239 = vmatpush.bf16.msra.mxu0 %v1684
    %2240 = vmatmul.bf16.gmra.mxu0 %v584
    %v2241 = vpop.f32.mrf.mxu0
    %v2242 = vadd.f32 %v852, %v2241
    %v2243 = vpop.f32.mrf.mxu0
    %2244 = vdwg.mxu0
    %2245 = vmatpush.bf16.msra.mxu0 %v1909
    %2246 = vmatpush.bf16.msra.mxu0 %v1877
    %2247 = vmatpush.bf16.msra.mxu0 %v1845
    %2248 = vmatpush.bf16.msra.mxu0 %v1813
    %2249 = vmatpush.bf16.msra.mxu0 %v1781
    %2250 = vmatpush.bf16.msra.mxu0 %v1749
    %2251 = vmatpush.bf16.msra.mxu0 %v1717
    %2252 = vmatpush.bf16.msra.mxu0 %v1685
    %2253 = vmatmul.bf16.gmra.mxu0 %v584
    %v2254 = vpop.f32.mrf.mxu0
    %v2255 = vadd.f32 %v853, %v2254
    %v2256 = vpop.f32.mrf.mxu0
    %2257 = vdwg.mxu0
    %2258 = vmatpush.bf16.msra.mxu0 %v1910
    %2259 = vmatpush.bf16.msra.mxu0 %v1878
    %2260 = vmatpush.bf16.msra.mxu0 %v1846
    %2261 = vmatpush.bf16.msra.mxu0 %v1814
    %2262 = vmatpush.bf16.msra.mxu0 %v1782
    %2263 = vmatpush.bf16.msra.mxu0 %v1750
    %2264 = vmatpush.bf16.msra.mxu0 %v1718
    %2265 = vmatpush.bf16.msra.mxu0 %v1686
    %2266 = vmatmul.bf16.gmra.mxu0 %v584
    %v2267 = vpop.f32.mrf.mxu0
    %v2268 = vadd.f32 %v854, %v2267
    %v2269 = vpop.f32.mrf.mxu0
    %2270 = vdwg.mxu0
    %2271 = vmatpush.bf16.msra.mxu0 %v1911
    %2272 = vmatpush.bf16.msra.mxu0 %v1879
    %2273 = vmatpush.bf16.msra.mxu0 %v1847
    %2274 = vmatpush.bf16.msra.mxu0 %v1815
    %2275 = vmatpush.bf16.msra.mxu0 %v1783
    %2276 = vmatpush.bf16.msra.mxu0 %v1751
    %2277 = vmatpush.bf16.msra.mxu0 %v1719
    %2278 = vmatpush.bf16.msra.mxu0 %v1687
    %2279 = vmatmul.bf16.gmra.mxu0 %v584
    %v2280 = vpop.f32.mrf.mxu0
    %v2281 = vadd.f32 %v855, %v2280
    %v2282 = vpop.f32.mrf.mxu0
    %2283 = vdwg.mxu0
    %2284 = vmatpush.bf16.msra.mxu0 %v1912
    %2285 = vmatpush.bf16.msra.mxu0 %v1880
    %2286 = vmatpush.bf16.msra.mxu0 %v1848
    %2287 = vmatpush.bf16.msra.mxu0 %v1816
    %2288 = vmatpush.bf16.msra.mxu0 %v1784
    %2289 = vmatpush.bf16.msra.mxu0 %v1752
    %2290 = vmatpush.bf16.msra.mxu0 %v1720
    %2291 = vmatpush.bf16.msra.mxu0 %v1688
    %2292 = vmatmul.bf16.gmra.mxu0 %v584
    %v2293 = vpop.f32.mrf.mxu0
    %v2294 = vadd.f32 %v856, %v2293
    %v2295 = vpop.f32.mrf.mxu0
    %2296 = vdwg.mxu0
    %2297 = vmatpush.bf16.msra.mxu0 %v1913
    %2298 = vmatpush.bf16.msra.mxu0 %v1881
    %2299 = vmatpush.bf16.msra.mxu0 %v1849
    %2300 = vmatpush.bf16.msra.mxu0 %v1817
    %2301 = vmatpush.bf16.msra.mxu0 %v1785
    %2302 = vmatpush.bf16.msra.mxu0 %v1753
    %2303 = vmatpush.bf16.msra.mxu0 %v1721
    %2304 = vmatpush.bf16.msra.mxu0 %v1689
    %2305 = vmatmul.bf16.gmra.mxu0 %v584
    %v2306 = vpop.f32.mrf.mxu0
    %v2307 = vadd.f32 %v857, %v2306
    %v2308 = vpop.f32.mrf.mxu0
    %2309 = vdwg.mxu0
    %2310 = vmatpush.bf16.msra.mxu0 %v1914
    %2311 = vmatpush.bf16.msra.mxu0 %v1882
    %2312 = vmatpush.bf16.msra.mxu0 %v1850
    %2313 = vmatpush.bf16.msra.mxu0 %v1818
    %2314 = vmatpush.bf16.msra.mxu0 %v1786
    %2315 = vmatpush.bf16.msra.mxu0 %v1754
    %2316 = vmatpush.bf16.msra.mxu0 %v1722
    %2317 = vmatpush.bf16.msra.mxu0 %v1690
    %2318 = vmatmul.bf16.gmra.mxu0 %v584
    %v2319 = vpop.f32.mrf.mxu0
    %v2320 = vadd.f32 %v858, %v2319
    %v2321 = vpop.f32.mrf.mxu0
    %2322 = vdwg.mxu0
    %2323 = vmatpush.bf16.msra.mxu0 %v1915
    %2324 = vmatpush.bf16.msra.mxu0 %v1883
    %2325 = vmatpush.bf16.msra.mxu0 %v1851
    %2326 = vmatpush.bf16.msra.mxu0 %v1819
    %2327 = vmatpush.bf16.msra.mxu0 %v1787
    %2328 = vmatpush.bf16.msra.mxu0 %v1755
    %2329 = vmatpush.bf16.msra.mxu0 %v1723
    %2330 = vmatpush.bf16.msra.mxu0 %v1691
    %2331 = vmatmul.bf16.gmra.mxu0 %v584
    %v2332 = vpop.f32.mrf.mxu0
    %v2333 = vadd.f32 %v859, %v2332
    %v2334 = vpop.f32.mrf.mxu0
    %2335 = vdwg.mxu0
    %2336 = vmatpush.bf16.msra.mxu0 %v1916
    %2337 = vmatpush.bf16.msra.mxu0 %v1884
    %2338 = vmatpush.bf16.msra.mxu0 %v1852
    %2339 = vmatpush.bf16.msra.mxu0 %v1820
    %2340 = vmatpush.bf16.msra.mxu0 %v1788
    %2341 = vmatpush.bf16.msra.mxu0 %v1756
    %2342 = vmatpush.bf16.msra.mxu0 %v1724
    %2343 = vmatpush.bf16.msra.mxu0 %v1692
    %2344 = vmatmul.bf16.gmra.mxu0 %v584
    %v2345 = vpop.f32.mrf.mxu0
    %v2346 = vadd.f32 %v860, %v2345
    %v2347 = vpop.f32.mrf.mxu0
    %2348 = vdwg.mxu0
    %2349 = vmatpush.bf16.msra.mxu0 %v1917
    %2350 = vmatpush.bf16.msra.mxu0 %v1885
    %2351 = vmatpush.bf16.msra.mxu0 %v1853
    %2352 = vmatpush.bf16.msra.mxu0 %v1821
    %2353 = vmatpush.bf16.msra.mxu0 %v1789
    %2354 = vmatpush.bf16.msra.mxu0 %v1757
    %2355 = vmatpush.bf16.msra.mxu0 %v1725
    %2356 = vmatpush.bf16.msra.mxu0 %v1693
    %2357 = vmatmul.bf16.gmra.mxu0 %v584
    %v2358 = vpop.f32.mrf.mxu0
    %v2359 = vadd.f32 %v861, %v2358
    %v2360 = vpop.f32.mrf.mxu0
    %2361 = vdwg.mxu0
    %2362 = vmatpush.bf16.msra.mxu0 %v1918
    %2363 = vmatpush.bf16.msra.mxu0 %v1886
    %2364 = vmatpush.bf16.msra.mxu0 %v1854
    %2365 = vmatpush.bf16.msra.mxu0 %v1822
    %2366 = vmatpush.bf16.msra.mxu0 %v1790
    %2367 = vmatpush.bf16.msra.mxu0 %v1758
    %2368 = vmatpush.bf16.msra.mxu0 %v1726
    %2369 = vmatpush.bf16.msra.mxu0 %v1694
    %2370 = vmatmul.bf16.gmra.mxu0 %v584
    %v2371 = vpop.f32.mrf.mxu0
    %v2372 = vadd.f32 %v862, %v2371
    %v2373 = vpop.f32.mrf.mxu0
    %2374 = vdwg.mxu0
    %2375 = vmatpush.bf16.msra.mxu0 %v1919
    %2376 = vmatpush.bf16.msra.mxu0 %v1887
    %2377 = vmatpush.bf16.msra.mxu0 %v1855
    %2378 = vmatpush.bf16.msra.mxu0 %v1823
    %2379 = vmatpush.bf16.msra.mxu0 %v1791
    %2380 = vmatpush.bf16.msra.mxu0 %v1759
    %2381 = vmatpush.bf16.msra.mxu0 %v1727
    %2382 = vmatpush.bf16.msra.mxu0 %v1695
    %2383 = vmatmul.bf16.gmra.mxu0 %v584
    %v2384 = vpop.f32.mrf.mxu0
    %v2385 = vadd.f32 %v863, %v2384
    %v2386 = vpop.f32.mrf.mxu0
    %2387 = vdwg.mxu0
    %2388 = vmatpush.bf16.msra.mxu0 %v1920
    %2389 = vmatpush.bf16.msra.mxu0 %v1888
    %2390 = vmatpush.bf16.msra.mxu0 %v1856
    %2391 = vmatpush.bf16.msra.mxu0 %v1824
    %2392 = vmatpush.bf16.msra.mxu0 %v1792
    %2393 = vmatpush.bf16.msra.mxu0 %v1760
    %2394 = vmatpush.bf16.msra.mxu0 %v1728
    %2395 = vmatpush.bf16.msra.mxu0 %v1696
    %2396 = vmatmul.bf16.gmra.mxu0 %v584
    %v2397 = vpop.f32.mrf.mxu0
    %v2398 = vadd.f32 %v864, %v2397
    %v2399 = vpop.f32.mrf.mxu0
    %2400 = vdwg.mxu0
    %2401 = vmatpush.bf16.msra.mxu0 %v1921
    %2402 = vmatpush.bf16.msra.mxu0 %v1889
    %2403 = vmatpush.bf16.msra.mxu0 %v1857
    %2404 = vmatpush.bf16.msra.mxu0 %v1825
    %2405 = vmatpush.bf16.msra.mxu0 %v1793
    %2406 = vmatpush.bf16.msra.mxu0 %v1761
    %2407 = vmatpush.bf16.msra.mxu0 %v1729
    %2408 = vmatpush.bf16.msra.mxu0 %v1697
    %2409 = vmatmul.bf16.gmra.mxu0 %v584
    %v2410 = vpop.f32.mrf.mxu0
    %v2411 = vadd.f32 %v865, %v2410
    %v2412 = vpop.f32.mrf.mxu0
    %2413 = vdwg.mxu0
    %2414 = vmatpush.bf16.msra.mxu0 %v1922
    %2415 = vmatpush.bf16.msra.mxu0 %v1890
    %2416 = vmatpush.bf16.msra.mxu0 %v1858
    %2417 = vmatpush.bf16.msra.mxu0 %v1826
    %2418 = vmatpush.bf16.msra.mxu0 %v1794
    %2419 = vmatpush.bf16.msra.mxu0 %v1762
    %2420 = vmatpush.bf16.msra.mxu0 %v1730
    %2421 = vmatpush.bf16.msra.mxu0 %v1698
    %2422 = vmatmul.bf16.gmra.mxu0 %v584
    %v2423 = vpop.f32.mrf.mxu0
    %v2424 = vadd.f32 %v866, %v2423
    %v2425 = vpop.f32.mrf.mxu0
    %2426 = vdwg.mxu0
    %2427 = vmatpush.bf16.msra.mxu0 %v1923
    %2428 = vmatpush.bf16.msra.mxu0 %v1891
    %2429 = vmatpush.bf16.msra.mxu0 %v1859
    %2430 = vmatpush.bf16.msra.mxu0 %v1827
    %2431 = vmatpush.bf16.msra.mxu0 %v1795
    %2432 = vmatpush.bf16.msra.mxu0 %v1763
    %2433 = vmatpush.bf16.msra.mxu0 %v1731
    %2434 = vmatpush.bf16.msra.mxu0 %v1699
    %2435 = vmatmul.bf16.gmra.mxu0 %v584
    %v2436 = vpop.f32.mrf.mxu0
    %v2437 = vadd.f32 %v867, %v2436
    %v2438 = vpop.f32.mrf.mxu0
    %2439 = vdwg.mxu0
    %2440 = vmatpush.bf16.msra.mxu0 %v1924
    %2441 = vmatpush.bf16.msra.mxu0 %v1892
    %2442 = vmatpush.bf16.msra.mxu0 %v1860
    %2443 = vmatpush.bf16.msra.mxu0 %v1828
    %2444 = vmatpush.bf16.msra.mxu0 %v1796
    %2445 = vmatpush.bf16.msra.mxu0 %v1764
    %2446 = vmatpush.bf16.msra.mxu0 %v1732
    %2447 = vmatpush.bf16.msra.mxu0 %v1700
    %2448 = vmatmul.bf16.gmra.mxu0 %v584
    %v2449 = vpop.f32.mrf.mxu0
    %v2450 = vadd.f32 %v868, %v2449
    %v2451 = vpop.f32.mrf.mxu0
    %2452 = vdwg.mxu0
    %2453 = vmatpush.bf16.msra.mxu0 %v1925
    %2454 = vmatpush.bf16.msra.mxu0 %v1893
    %2455 = vmatpush.bf16.msra.mxu0 %v1861
    %2456 = vmatpush.bf16.msra.mxu0 %v1829
    %2457 = vmatpush.bf16.msra.mxu0 %v1797
    %2458 = vmatpush.bf16.msra.mxu0 %v1765
    %2459 = vmatpush.bf16.msra.mxu0 %v1733
    %2460 = vmatpush.bf16.msra.mxu0 %v1701
    %2461 = vmatmul.bf16.gmra.mxu0 %v584
    %v2462 = vpop.f32.mrf.mxu0
    %v2463 = vadd.f32 %v869, %v2462
    %v2464 = vpop.f32.mrf.mxu0
    %2465 = vdwg.mxu0
    %2466 = vmatpush.bf16.msra.mxu0 %v1926
    %2467 = vmatpush.bf16.msra.mxu0 %v1894
    %2468 = vmatpush.bf16.msra.mxu0 %v1862
    %2469 = vmatpush.bf16.msra.mxu0 %v1830
    %2470 = vmatpush.bf16.msra.mxu0 %v1798
    %2471 = vmatpush.bf16.msra.mxu0 %v1766
    %2472 = vmatpush.bf16.msra.mxu0 %v1734
    %2473 = vmatpush.bf16.msra.mxu0 %v1702
    %2474 = vmatmul.bf16.gmra.mxu0 %v584
    %v2475 = vpop.f32.mrf.mxu0
    %v2476 = vadd.f32 %v870, %v2475
    %v2477 = vpop.f32.mrf.mxu0
    %2478 = vdwg.mxu0
    %2479 = vmatpush.bf16.msra.mxu0 %v1927
    %2480 = vmatpush.bf16.msra.mxu0 %v1895
    %2481 = vmatpush.bf16.msra.mxu0 %v1863
    %2482 = vmatpush.bf16.msra.mxu0 %v1831
    %2483 = vmatpush.bf16.msra.mxu0 %v1799
    %2484 = vmatpush.bf16.msra.mxu0 %v1767
    %2485 = vmatpush.bf16.msra.mxu0 %v1735
    %2486 = vmatpush.bf16.msra.mxu0 %v1703
    %2487 = vmatmul.bf16.gmra.mxu0 %v584
    %v2488 = vpop.f32.mrf.mxu0
    %v2489 = vadd.f32 %v871, %v2488
    %v2490 = vpop.f32.mrf.mxu0
    %2491 = vdwg.mxu0
    %2492 = vmatpush.bf16.msra.mxu0 %v1928
    %2493 = vmatpush.bf16.msra.mxu0 %v1896
    %2494 = vmatpush.bf16.msra.mxu0 %v1864
    %2495 = vmatpush.bf16.msra.mxu0 %v1832
    %2496 = vmatpush.bf16.msra.mxu0 %v1800
    %2497 = vmatpush.bf16.msra.mxu0 %v1768
    %2498 = vmatpush.bf16.msra.mxu0 %v1736
    %2499 = vmatpush.bf16.msra.mxu0 %v1704
    %2500 = vmatmul.bf16.gmra.mxu0 %v584
    %v2501 = vpop.f32.mrf.mxu0
    %v2502 = vadd.f32 %v872, %v2501
    %v2503 = vpop.f32.mrf.mxu0
    %2504 = vdwg.mxu0
    %2505 = vmatpush.bf16.msra.mxu0 %v1929
    %2506 = vmatpush.bf16.msra.mxu0 %v1897
    %2507 = vmatpush.bf16.msra.mxu0 %v1865
    %2508 = vmatpush.bf16.msra.mxu0 %v1833
    %2509 = vmatpush.bf16.msra.mxu0 %v1801
    %2510 = vmatpush.bf16.msra.mxu0 %v1769
    %2511 = vmatpush.bf16.msra.mxu0 %v1737
    %2512 = vmatpush.bf16.msra.mxu0 %v1705
    %2513 = vmatmul.bf16.gmra.mxu0 %v584
    %v2514 = vpop.f32.mrf.mxu0
    %v2515 = vadd.f32 %v873, %v2514
    %v2516 = vpop.f32.mrf.mxu0
    %2517 = vdwg.mxu0
    %2518 = vmatpush.bf16.msra.mxu0 %v1930
    %2519 = vmatpush.bf16.msra.mxu0 %v1898
    %2520 = vmatpush.bf16.msra.mxu0 %v1866
    %2521 = vmatpush.bf16.msra.mxu0 %v1834
    %2522 = vmatpush.bf16.msra.mxu0 %v1802
    %2523 = vmatpush.bf16.msra.mxu0 %v1770
    %2524 = vmatpush.bf16.msra.mxu0 %v1738
    %2525 = vmatpush.bf16.msra.mxu0 %v1706
    %2526 = vmatmul.bf16.gmra.mxu0 %v584
    %v2527 = vpop.f32.mrf.mxu0
    %v2528 = vadd.f32 %v874, %v2527
    %v2529 = vpop.f32.mrf.mxu0
    %2530 = vdwg.mxu0
    %2531 = vmatpush.bf16.msra.mxu0 %v1931
    %2532 = vmatpush.bf16.msra.mxu0 %v1899
    %2533 = vmatpush.bf16.msra.mxu0 %v1867
    %2534 = vmatpush.bf16.msra.mxu0 %v1835
    %2535 = vmatpush.bf16.msra.mxu0 %v1803
    %2536 = vmatpush.bf16.msra.mxu0 %v1771
    %2537 = vmatpush.bf16.msra.mxu0 %v1739
    %2538 = vmatpush.bf16.msra.mxu0 %v1707
    %2539 = vmatmul.bf16.gmra.mxu0 %v584
    %v2540 = vpop.f32.mrf.mxu0
    %v2541 = vadd.f32 %v875, %v2540
    %v2542 = vpop.f32.mrf.mxu0
    %2543 = vdwg.mxu0
    %2544 = vmatpush.bf16.msra.mxu0 %v1932
    %2545 = vmatpush.bf16.msra.mxu0 %v1900
    %2546 = vmatpush.bf16.msra.mxu0 %v1868
    %2547 = vmatpush.bf16.msra.mxu0 %v1836
    %2548 = vmatpush.bf16.msra.mxu0 %v1804
    %2549 = vmatpush.bf16.msra.mxu0 %v1772
    %2550 = vmatpush.bf16.msra.mxu0 %v1740
    %2551 = vmatpush.bf16.msra.mxu0 %v1708
    %2552 = vmatmul.bf16.gmra.mxu0 %v584
    %v2553 = vpop.f32.mrf.mxu0
    %v2554 = vadd.f32 %v876, %v2553
    %v2555 = vpop.f32.mrf.mxu0
    %2556 = vdwg.mxu0
    %2557 = vmatpush.bf16.msra.mxu0 %v1933
    %2558 = vmatpush.bf16.msra.mxu0 %v1901
    %2559 = vmatpush.bf16.msra.mxu0 %v1869
    %2560 = vmatpush.bf16.msra.mxu0 %v1837
    %2561 = vmatpush.bf16.msra.mxu0 %v1805
    %2562 = vmatpush.bf16.msra.mxu0 %v1773
    %2563 = vmatpush.bf16.msra.mxu0 %v1741
    %2564 = vmatpush.bf16.msra.mxu0 %v1709
    %2565 = vmatmul.bf16.gmra.mxu0 %v584
    %v2566 = vpop.f32.mrf.mxu0
    %v2567 = vadd.f32 %v877, %v2566
    %v2568 = vpop.f32.mrf.mxu0
    %2569 = vdwg.mxu0
    %2570 = vmatpush.bf16.msra.mxu0 %v1934
    %2571 = vmatpush.bf16.msra.mxu0 %v1902
    %2572 = vmatpush.bf16.msra.mxu0 %v1870
    %2573 = vmatpush.bf16.msra.mxu0 %v1838
    %2574 = vmatpush.bf16.msra.mxu0 %v1806
    %2575 = vmatpush.bf16.msra.mxu0 %v1774
    %2576 = vmatpush.bf16.msra.mxu0 %v1742
    %2577 = vmatpush.bf16.msra.mxu0 %v1710
    %2578 = vmatmul.bf16.gmra.mxu0 %v584
    %v2579 = vpop.f32.mrf.mxu0
    %v2580 = vadd.f32 %v878, %v2579
    %v2581 = vpop.f32.mrf.mxu0
    %2582 = vdwg.mxu0
    %2583 = vmatpush.bf16.msra.mxu0 %v1935
    %2584 = vmatpush.bf16.msra.mxu0 %v1903
    %2585 = vmatpush.bf16.msra.mxu0 %v1871
    %2586 = vmatpush.bf16.msra.mxu0 %v1839
    %2587 = vmatpush.bf16.msra.mxu0 %v1807
    %2588 = vmatpush.bf16.msra.mxu0 %v1775
    %2589 = vmatpush.bf16.msra.mxu0 %v1743
    %2590 = vmatpush.bf16.msra.mxu0 %v1711
    %2591 = vmatmul.bf16.gmra.mxu0 %v584
    %v2592 = vpop.f32.mrf.mxu0
    %v2593 = vadd.f32 %v879, %v2592
    %v2594 = vpop.f32.mrf.mxu0
    %2595 = vdwg.mxu0
    %2596 = vmatpush.bf16.msra.mxu0 %v1936
    %2597 = vmatpush.bf16.msra.mxu0 %v1904
    %2598 = vmatpush.bf16.msra.mxu0 %v1872
    %2599 = vmatpush.bf16.msra.mxu0 %v1840
    %2600 = vmatpush.bf16.msra.mxu0 %v1808
    %2601 = vmatpush.bf16.msra.mxu0 %v1776
    %2602 = vmatpush.bf16.msra.mxu0 %v1744
    %2603 = vmatpush.bf16.msra.mxu0 %v1712
    %2604 = vmatmul.bf16.gmra.mxu0 %v584
    %v2605 = vpop.f32.mrf.mxu0
    %v2606 = vadd.f32 %v880, %v2605
    %v2607 = vpop.f32.mrf.mxu0
    %2608 = vdwg.mxu0
    %v2609 = vlaneseq
    %v2610 = vand.u32 %v2609, 127
    %v2611 = vadd.s32 %v2610, 128
    %v2612 = vadd.s32 %v2610, 256
    %v2613 = vadd.s32 %v2610, 384
    %v2614 = vadd.s32 %v2610, 512
    %v2615 = vadd.s32 %v2610, 640
    %v2616 = vadd.s32 %v2610, 768
    %v2617 = vadd.s32 %v2610, 896
    %v2618 = vadd.s32 %v2610, 1024
    %v2619 = vadd.s32 %v2610, 1152
    %v2620 = vadd.s32 %v2610, 1280
    %v2621 = vadd.s32 %v2610, 1408
    %v2622 = vadd.s32 %v2610, 1536
    %v2623 = vadd.s32 %v2610, 1664
    %v2624 = vadd.s32 %v2610, 1792
    %v2625 = vadd.s32 %v2610, 1920
    %v2626 = vadd.s32 %v2610, 2048
    %v2627 = vadd.s32 %v2610, 2176
    %v2628 = vadd.s32 %v2610, 2304
    %v2629 = vadd.s32 %v2610, 2432
    %v2630 = vadd.s32 %v2610, 2560
    %v2631 = vadd.s32 %v2610, 2688
    %v2632 = vadd.s32 %v2610, 2816
    %v2633 = vadd.s32 %v2610, 2944
    %v2634 = vadd.s32 %v2610, 3072
    %v2635 = vadd.s32 %v2610, 3200
    %v2636 = vadd.s32 %v2610, 3328
    %v2637 = vadd.s32 %v2610, 3456
    %v2638 = vadd.s32 %v2610, 3584
    %v2639 = vadd.s32 %v2610, 3712
    %v2640 = vadd.s32 %v2610, 3840
    %v2641 = vadd.s32 %v2610, 3968
    %vm2642 = vcmp.lt.s32.totalorder %v2610, 0
    %v2643 = vsub.s32 0, %v2610
    %v2644 = vsel %vm2642, %v2643, %v2610
    %v2645 = vand.u32 %v2644, 65535
    %v2646 = vshrl.u32 %v2644, 16
    %v2648 = vmul.u32 %v2645, 49405
    %v2649 = vmul.u32 %v2645, 64527
    %v2650 = vmul.u32 %v2646, 49405
    %v2651 = vmul.u32 %v2646, 64527
    %v2652 = vshll.u32 %v2649, 16
    %v2653 = vshrl.u32 %v2649, 16
    %v2654 = vshll.u32 %v2650, 16
    %v2655 = vshrl.u32 %v2650, 16
    %vm2656 = vc.u32 %v2648, %v2652
    %v2657 = vsel %vm2656, 1, 0
    %v2658 = vadd.s32 %v2648, %v2652
    %v2659 = vadd.s32 %v2651, %v2657
    %vm2660 = vc.u32 %v2658, %v2654
    %v2661 = vsel %vm2660, 1, 0
    %v2662 = vadd.s32 %v2658, %v2654
    %v2663 = vadd.s32 %v2659, %v2661
    %v2664 = vadd.s32 %v2663, %v2653
    %v2665 = vadd.s32 %v2664, %v2655
    %v2666 = vshrl.u32 %v2665, 6
    %v2667 = vmul.u32 %v2666, 65
    %v2668 = vsub.s32 %v2644, %v2667
    %v2669 = vsub.s32 0, %v2668
    %v2670 = vsel %vm2642, %v2669, %v2668
    %vm2671 = vcmp.lt.s32.totalorder %v2611, 0
    %v2672 = vsub.s32 0, %v2611
    %v2673 = vsel %vm2671, %v2672, %v2611
    %v2674 = vand.u32 %v2673, 65535
    %v2675 = vshrl.u32 %v2673, 16
    %v2677 = vmul.u32 %v2674, 49405
    %v2678 = vmul.u32 %v2674, 64527
    %v2679 = vmul.u32 %v2675, 49405
    %v2680 = vmul.u32 %v2675, 64527
    %v2681 = vshll.u32 %v2678, 16
    %v2682 = vshrl.u32 %v2678, 16
    %v2683 = vshll.u32 %v2679, 16
    %v2684 = vshrl.u32 %v2679, 16
    %vm2685 = vc.u32 %v2677, %v2681
    %v2686 = vsel %vm2685, 1, 0
    %v2687 = vadd.s32 %v2677, %v2681
    %v2688 = vadd.s32 %v2680, %v2686
    %vm2689 = vc.u32 %v2687, %v2683
    %v2690 = vsel %vm2689, 1, 0
    %v2691 = vadd.s32 %v2687, %v2683
    %v2692 = vadd.s32 %v2688, %v2690
    %v2693 = vadd.s32 %v2692, %v2682
    %v2694 = vadd.s32 %v2693, %v2684
    %v2695 = vshrl.u32 %v2694, 6
    %v2696 = vmul.u32 %v2695, 65
    %v2697 = vsub.s32 %v2673, %v2696
    %v2698 = vsub.s32 0, %v2697
    %v2699 = vsel %vm2671, %v2698, %v2697
    %vm2700 = vcmp.lt.s32.totalorder %v2612, 0
    %v2701 = vsub.s32 0, %v2612
    %v2702 = vsel %vm2700, %v2701, %v2612
    %v2703 = vand.u32 %v2702, 65535
    %v2704 = vshrl.u32 %v2702, 16
    %v2706 = vmul.u32 %v2703, 49405
    %v2707 = vmul.u32 %v2703, 64527
    %v2708 = vmul.u32 %v2704, 49405
    %v2709 = vmul.u32 %v2704, 64527
    %v2710 = vshll.u32 %v2707, 16
    %v2711 = vshrl.u32 %v2707, 16
    %v2712 = vshll.u32 %v2708, 16
    %v2713 = vshrl.u32 %v2708, 16
    %vm2714 = vc.u32 %v2706, %v2710
    %v2715 = vsel %vm2714, 1, 0
    %v2716 = vadd.s32 %v2706, %v2710
    %v2717 = vadd.s32 %v2709, %v2715
    %vm2718 = vc.u32 %v2716, %v2712
    %v2719 = vsel %vm2718, 1, 0
    %v2720 = vadd.s32 %v2716, %v2712
    %v2721 = vadd.s32 %v2717, %v2719
    %v2722 = vadd.s32 %v2721, %v2711
    %v2723 = vadd.s32 %v2722, %v2713
    %v2724 = vshrl.u32 %v2723, 6
    %v2725 = vmul.u32 %v2724, 65
    %v2726 = vsub.s32 %v2702, %v2725
    %v2727 = vsub.s32 0, %v2726
    %v2728 = vsel %vm2700, %v2727, %v2726
    %vm2729 = vcmp.lt.s32.totalorder %v2613, 0
    %v2730 = vsub.s32 0, %v2613
    %v2731 = vsel %vm2729, %v2730, %v2613
    %v2732 = vand.u32 %v2731, 65535
    %v2733 = vshrl.u32 %v2731, 16
    %v2735 = vmul.u32 %v2732, 49405
    %v2736 = vmul.u32 %v2732, 64527
    %v2737 = vmul.u32 %v2733, 49405
    %v2738 = vmul.u32 %v2733, 64527
    %v2739 = vshll.u32 %v2736, 16
    %v2740 = vshrl.u32 %v2736, 16
    %v2741 = vshll.u32 %v2737, 16
    %v2742 = vshrl.u32 %v2737, 16
    %vm2743 = vc.u32 %v2735, %v2739
    %v2744 = vsel %vm2743, 1, 0
    %v2745 = vadd.s32 %v2735, %v2739
    %v2746 = vadd.s32 %v2738, %v2744
    %vm2747 = vc.u32 %v2745, %v2741
    %v2748 = vsel %vm2747, 1, 0
    %v2749 = vadd.s32 %v2745, %v2741
    %v2750 = vadd.s32 %v2746, %v2748
    %v2751 = vadd.s32 %v2750, %v2740
    %v2752 = vadd.s32 %v2751, %v2742
    %v2753 = vshrl.u32 %v2752, 6
    %v2754 = vmul.u32 %v2753, 65
    %v2755 = vsub.s32 %v2731, %v2754
    %v2756 = vsub.s32 0, %v2755
    %v2757 = vsel %vm2729, %v2756, %v2755
    %vm2758 = vcmp.lt.s32.totalorder %v2614, 0
    %v2759 = vsub.s32 0, %v2614
    %v2760 = vsel %vm2758, %v2759, %v2614
    %v2761 = vand.u32 %v2760, 65535
    %v2762 = vshrl.u32 %v2760, 16
    %v2764 = vmul.u32 %v2761, 49405
    %v2765 = vmul.u32 %v2761, 64527
    %v2766 = vmul.u32 %v2762, 49405
    %v2767 = vmul.u32 %v2762, 64527
    %v2768 = vshll.u32 %v2765, 16
    %v2769 = vshrl.u32 %v2765, 16
    %v2770 = vshll.u32 %v2766, 16
    %v2771 = vshrl.u32 %v2766, 16
    %vm2772 = vc.u32 %v2764, %v2768
    %v2773 = vsel %vm2772, 1, 0
    %v2774 = vadd.s32 %v2764, %v2768
    %v2775 = vadd.s32 %v2767, %v2773
    %vm2776 = vc.u32 %v2774, %v2770
    %v2777 = vsel %vm2776, 1, 0
    %v2778 = vadd.s32 %v2774, %v2770
    %v2779 = vadd.s32 %v2775, %v2777
    %v2780 = vadd.s32 %v2779, %v2769
    %v2781 = vadd.s32 %v2780, %v2771
    %v2782 = vshrl.u32 %v2781, 6
    %v2783 = vmul.u32 %v2782, 65
    %v2784 = vsub.s32 %v2760, %v2783
    %v2785 = vsub.s32 0, %v2784
    %v2786 = vsel %vm2758, %v2785, %v2784
    %vm2787 = vcmp.lt.s32.totalorder %v2615, 0
    %v2788 = vsub.s32 0, %v2615
    %v2789 = vsel %vm2787, %v2788, %v2615
    %v2790 = vand.u32 %v2789, 65535
    %v2791 = vshrl.u32 %v2789, 16
    %v2793 = vmul.u32 %v2790, 49405
    %v2794 = vmul.u32 %v2790, 64527
    %v2795 = vmul.u32 %v2791, 49405
    %v2796 = vmul.u32 %v2791, 64527
    %v2797 = vshll.u32 %v2794, 16
    %v2798 = vshrl.u32 %v2794, 16
    %v2799 = vshll.u32 %v2795, 16
    %v2800 = vshrl.u32 %v2795, 16
    %vm2801 = vc.u32 %v2793, %v2797
    %v2802 = vsel %vm2801, 1, 0
    %v2803 = vadd.s32 %v2793, %v2797
    %v2804 = vadd.s32 %v2796, %v2802
    %vm2805 = vc.u32 %v2803, %v2799
    %v2806 = vsel %vm2805, 1, 0
    %v2807 = vadd.s32 %v2803, %v2799
    %v2808 = vadd.s32 %v2804, %v2806
    %v2809 = vadd.s32 %v2808, %v2798
    %v2810 = vadd.s32 %v2809, %v2800
    %v2811 = vshrl.u32 %v2810, 6
    %v2812 = vmul.u32 %v2811, 65
    %v2813 = vsub.s32 %v2789, %v2812
    %v2814 = vsub.s32 0, %v2813
    %v2815 = vsel %vm2787, %v2814, %v2813
    %vm2816 = vcmp.lt.s32.totalorder %v2616, 0
    %v2817 = vsub.s32 0, %v2616
    %v2818 = vsel %vm2816, %v2817, %v2616
    %v2819 = vand.u32 %v2818, 65535
    %v2820 = vshrl.u32 %v2818, 16
    %v2822 = vmul.u32 %v2819, 49405
    %v2823 = vmul.u32 %v2819, 64527
    %v2824 = vmul.u32 %v2820, 49405
    %v2825 = vmul.u32 %v2820, 64527
    %v2826 = vshll.u32 %v2823, 16
    %v2827 = vshrl.u32 %v2823, 16
    %v2828 = vshll.u32 %v2824, 16
    %v2829 = vshrl.u32 %v2824, 16
    %vm2830 = vc.u32 %v2822, %v2826
    %v2831 = vsel %vm2830, 1, 0
    %v2832 = vadd.s32 %v2822, %v2826
    %v2833 = vadd.s32 %v2825, %v2831
    %vm2834 = vc.u32 %v2832, %v2828
    %v2835 = vsel %vm2834, 1, 0
    %v2836 = vadd.s32 %v2832, %v2828
    %v2837 = vadd.s32 %v2833, %v2835
    %v2838 = vadd.s32 %v2837, %v2827
    %v2839 = vadd.s32 %v2838, %v2829
    %v2840 = vshrl.u32 %v2839, 6
    %v2841 = vmul.u32 %v2840, 65
    %v2842 = vsub.s32 %v2818, %v2841
    %v2843 = vsub.s32 0, %v2842
    %v2844 = vsel %vm2816, %v2843, %v2842
    %vm2845 = vcmp.lt.s32.totalorder %v2617, 0
    %v2846 = vsub.s32 0, %v2617
    %v2847 = vsel %vm2845, %v2846, %v2617
    %v2848 = vand.u32 %v2847, 65535
    %v2849 = vshrl.u32 %v2847, 16
    %v2851 = vmul.u32 %v2848, 49405
    %v2852 = vmul.u32 %v2848, 64527
    %v2853 = vmul.u32 %v2849, 49405
    %v2854 = vmul.u32 %v2849, 64527
    %v2855 = vshll.u32 %v2852, 16
    %v2856 = vshrl.u32 %v2852, 16
    %v2857 = vshll.u32 %v2853, 16
    %v2858 = vshrl.u32 %v2853, 16
    %vm2859 = vc.u32 %v2851, %v2855
    %v2860 = vsel %vm2859, 1, 0
    %v2861 = vadd.s32 %v2851, %v2855
    %v2862 = vadd.s32 %v2854, %v2860
    %vm2863 = vc.u32 %v2861, %v2857
    %v2864 = vsel %vm2863, 1, 0
    %v2865 = vadd.s32 %v2861, %v2857
    %v2866 = vadd.s32 %v2862, %v2864
    %v2867 = vadd.s32 %v2866, %v2856
    %v2868 = vadd.s32 %v2867, %v2858
    %v2869 = vshrl.u32 %v2868, 6
    %v2870 = vmul.u32 %v2869, 65
    %v2871 = vsub.s32 %v2847, %v2870
    %v2872 = vsub.s32 0, %v2871
    %v2873 = vsel %vm2845, %v2872, %v2871
    %vm2874 = vcmp.lt.s32.totalorder %v2618, 0
    %v2875 = vsub.s32 0, %v2618
    %v2876 = vsel %vm2874, %v2875, %v2618
    %v2877 = vand.u32 %v2876, 65535
    %v2878 = vshrl.u32 %v2876, 16
    %v2880 = vmul.u32 %v2877, 49405
    %v2881 = vmul.u32 %v2877, 64527
    %v2882 = vmul.u32 %v2878, 49405
    %v2883 = vmul.u32 %v2878, 64527
    %v2884 = vshll.u32 %v2881, 16
    %v2885 = vshrl.u32 %v2881, 16
    %v2886 = vshll.u32 %v2882, 16
    %v2887 = vshrl.u32 %v2882, 16
    %vm2888 = vc.u32 %v2880, %v2884
    %v2889 = vsel %vm2888, 1, 0
    %v2890 = vadd.s32 %v2880, %v2884
    %v2891 = vadd.s32 %v2883, %v2889
    %vm2892 = vc.u32 %v2890, %v2886
    %v2893 = vsel %vm2892, 1, 0
    %v2894 = vadd.s32 %v2890, %v2886
    %v2895 = vadd.s32 %v2891, %v2893
    %v2896 = vadd.s32 %v2895, %v2885
    %v2897 = vadd.s32 %v2896, %v2887
    %v2898 = vshrl.u32 %v2897, 6
    %v2899 = vmul.u32 %v2898, 65
    %v2900 = vsub.s32 %v2876, %v2899
    %v2901 = vsub.s32 0, %v2900
    %v2902 = vsel %vm2874, %v2901, %v2900
    %vm2903 = vcmp.lt.s32.totalorder %v2619, 0
    %v2904 = vsub.s32 0, %v2619
    %v2905 = vsel %vm2903, %v2904, %v2619
    %v2906 = vand.u32 %v2905, 65535
    %v2907 = vshrl.u32 %v2905, 16
    %v2909 = vmul.u32 %v2906, 49405
    %v2910 = vmul.u32 %v2906, 64527
    %v2911 = vmul.u32 %v2907, 49405
    %v2912 = vmul.u32 %v2907, 64527
    %v2913 = vshll.u32 %v2910, 16
    %v2914 = vshrl.u32 %v2910, 16
    %v2915 = vshll.u32 %v2911, 16
    %v2916 = vshrl.u32 %v2911, 16
    %vm2917 = vc.u32 %v2909, %v2913
    %v2918 = vsel %vm2917, 1, 0
    %v2919 = vadd.s32 %v2909, %v2913
    %v2920 = vadd.s32 %v2912, %v2918
    %vm2921 = vc.u32 %v2919, %v2915
    %v2922 = vsel %vm2921, 1, 0
    %v2923 = vadd.s32 %v2919, %v2915
    %v2924 = vadd.s32 %v2920, %v2922
    %v2925 = vadd.s32 %v2924, %v2914
    %v2926 = vadd.s32 %v2925, %v2916
    %v2927 = vshrl.u32 %v2926, 6
    %v2928 = vmul.u32 %v2927, 65
    %v2929 = vsub.s32 %v2905, %v2928
    %v2930 = vsub.s32 0, %v2929
    %v2931 = vsel %vm2903, %v2930, %v2929
    %vm2932 = vcmp.lt.s32.totalorder %v2620, 0
    %v2933 = vsub.s32 0, %v2620
    %v2934 = vsel %vm2932, %v2933, %v2620
    %v2935 = vand.u32 %v2934, 65535
    %v2936 = vshrl.u32 %v2934, 16
    %v2938 = vmul.u32 %v2935, 49405
    %v2939 = vmul.u32 %v2935, 64527
    %v2940 = vmul.u32 %v2936, 49405
    %v2941 = vmul.u32 %v2936, 64527
    %v2942 = vshll.u32 %v2939, 16
    %v2943 = vshrl.u32 %v2939, 16
    %v2944 = vshll.u32 %v2940, 16
    %v2945 = vshrl.u32 %v2940, 16
    %vm2946 = vc.u32 %v2938, %v2942
    %v2947 = vsel %vm2946, 1, 0
    %v2948 = vadd.s32 %v2938, %v2942
    %v2949 = vadd.s32 %v2941, %v2947
    %vm2950 = vc.u32 %v2948, %v2944
    %v2951 = vsel %vm2950, 1, 0
    %v2952 = vadd.s32 %v2948, %v2944
    %v2953 = vadd.s32 %v2949, %v2951
    %v2954 = vadd.s32 %v2953, %v2943
    %v2955 = vadd.s32 %v2954, %v2945
    %v2956 = vshrl.u32 %v2955, 6
    %v2957 = vmul.u32 %v2956, 65
    %v2958 = vsub.s32 %v2934, %v2957
    %v2959 = vsub.s32 0, %v2958
    %v2960 = vsel %vm2932, %v2959, %v2958
    %vm2961 = vcmp.lt.s32.totalorder %v2621, 0
    %v2962 = vsub.s32 0, %v2621
    %v2963 = vsel %vm2961, %v2962, %v2621
    %v2964 = vand.u32 %v2963, 65535
    %v2965 = vshrl.u32 %v2963, 16
    %v2967 = vmul.u32 %v2964, 49405
    %v2968 = vmul.u32 %v2964, 64527
    %v2969 = vmul.u32 %v2965, 49405
    %v2970 = vmul.u32 %v2965, 64527
    %v2971 = vshll.u32 %v2968, 16
    %v2972 = vshrl.u32 %v2968, 16
    %v2973 = vshll.u32 %v2969, 16
    %v2974 = vshrl.u32 %v2969, 16
    %vm2975 = vc.u32 %v2967, %v2971
    %v2976 = vsel %vm2975, 1, 0
    %v2977 = vadd.s32 %v2967, %v2971
    %v2978 = vadd.s32 %v2970, %v2976
    %vm2979 = vc.u32 %v2977, %v2973
    %v2980 = vsel %vm2979, 1, 0
    %v2981 = vadd.s32 %v2977, %v2973
    %v2982 = vadd.s32 %v2978, %v2980
    %v2983 = vadd.s32 %v2982, %v2972
    %v2984 = vadd.s32 %v2983, %v2974
    %v2985 = vshrl.u32 %v2984, 6
    %v2986 = vmul.u32 %v2985, 65
    %v2987 = vsub.s32 %v2963, %v2986
    %v2988 = vsub.s32 0, %v2987
    %v2989 = vsel %vm2961, %v2988, %v2987
    %vm2990 = vcmp.lt.s32.totalorder %v2622, 0
    %v2991 = vsub.s32 0, %v2622
    %v2992 = vsel %vm2990, %v2991, %v2622
    %v2993 = vand.u32 %v2992, 65535
    %v2994 = vshrl.u32 %v2992, 16
    %v2996 = vmul.u32 %v2993, 49405
    %v2997 = vmul.u32 %v2993, 64527
    %v2998 = vmul.u32 %v2994, 49405
    %v2999 = vmul.u32 %v2994, 64527
    %v3000 = vshll.u32 %v2997, 16
    %v3001 = vshrl.u32 %v2997, 16
    %v3002 = vshll.u32 %v2998, 16
    %v3003 = vshrl.u32 %v2998, 16
    %vm3004 = vc.u32 %v2996, %v3000
    %v3005 = vsel %vm3004, 1, 0
    %v3006 = vadd.s32 %v2996, %v3000
    %v3007 = vadd.s32 %v2999, %v3005
    %vm3008 = vc.u32 %v3006, %v3002
    %v3009 = vsel %vm3008, 1, 0
    %v3010 = vadd.s32 %v3006, %v3002
    %v3011 = vadd.s32 %v3007, %v3009
    %v3012 = vadd.s32 %v3011, %v3001
    %v3013 = vadd.s32 %v3012, %v3003
    %v3014 = vshrl.u32 %v3013, 6
    %v3015 = vmul.u32 %v3014, 65
    %v3016 = vsub.s32 %v2992, %v3015
    %v3017 = vsub.s32 0, %v3016
    %v3018 = vsel %vm2990, %v3017, %v3016
    %vm3019 = vcmp.lt.s32.totalorder %v2623, 0
    %v3020 = vsub.s32 0, %v2623
    %v3021 = vsel %vm3019, %v3020, %v2623
    %v3022 = vand.u32 %v3021, 65535
    %v3023 = vshrl.u32 %v3021, 16
    %v3025 = vmul.u32 %v3022, 49405
    %v3026 = vmul.u32 %v3022, 64527
    %v3027 = vmul.u32 %v3023, 49405
    %v3028 = vmul.u32 %v3023, 64527
    %v3029 = vshll.u32 %v3026, 16
    %v3030 = vshrl.u32 %v3026, 16
    %v3031 = vshll.u32 %v3027, 16
    %v3032 = vshrl.u32 %v3027, 16
    %vm3033 = vc.u32 %v3025, %v3029
    %v3034 = vsel %vm3033, 1, 0
    %v3035 = vadd.s32 %v3025, %v3029
    %v3036 = vadd.s32 %v3028, %v3034
    %vm3037 = vc.u32 %v3035, %v3031
    %v3038 = vsel %vm3037, 1, 0
    %v3039 = vadd.s32 %v3035, %v3031
    %v3040 = vadd.s32 %v3036, %v3038
    %v3041 = vadd.s32 %v3040, %v3030
    %v3042 = vadd.s32 %v3041, %v3032
    %v3043 = vshrl.u32 %v3042, 6
    %v3044 = vmul.u32 %v3043, 65
    %v3045 = vsub.s32 %v3021, %v3044
    %v3046 = vsub.s32 0, %v3045
    %v3047 = vsel %vm3019, %v3046, %v3045
    %vm3048 = vcmp.lt.s32.totalorder %v2624, 0
    %v3049 = vsub.s32 0, %v2624
    %v3050 = vsel %vm3048, %v3049, %v2624
    %v3051 = vand.u32 %v3050, 65535
    %v3052 = vshrl.u32 %v3050, 16
    %v3054 = vmul.u32 %v3051, 49405
    %v3055 = vmul.u32 %v3051, 64527
    %v3056 = vmul.u32 %v3052, 49405
    %v3057 = vmul.u32 %v3052, 64527
    %v3058 = vshll.u32 %v3055, 16
    %v3059 = vshrl.u32 %v3055, 16
    %v3060 = vshll.u32 %v3056, 16
    %v3061 = vshrl.u32 %v3056, 16
    %vm3062 = vc.u32 %v3054, %v3058
    %v3063 = vsel %vm3062, 1, 0
    %v3064 = vadd.s32 %v3054, %v3058
    %v3065 = vadd.s32 %v3057, %v3063
    %vm3066 = vc.u32 %v3064, %v3060
    %v3067 = vsel %vm3066, 1, 0
    %v3068 = vadd.s32 %v3064, %v3060
    %v3069 = vadd.s32 %v3065, %v3067
    %v3070 = vadd.s32 %v3069, %v3059
    %v3071 = vadd.s32 %v3070, %v3061
    %v3072 = vshrl.u32 %v3071, 6
    %v3073 = vmul.u32 %v3072, 65
    %v3074 = vsub.s32 %v3050, %v3073
    %v3075 = vsub.s32 0, %v3074
    %v3076 = vsel %vm3048, %v3075, %v3074
    %vm3077 = vcmp.lt.s32.totalorder %v2625, 0
    %v3078 = vsub.s32 0, %v2625
    %v3079 = vsel %vm3077, %v3078, %v2625
    %v3080 = vand.u32 %v3079, 65535
    %v3081 = vshrl.u32 %v3079, 16
    %v3083 = vmul.u32 %v3080, 49405
    %v3084 = vmul.u32 %v3080, 64527
    %v3085 = vmul.u32 %v3081, 49405
    %v3086 = vmul.u32 %v3081, 64527
    %v3087 = vshll.u32 %v3084, 16
    %v3088 = vshrl.u32 %v3084, 16
    %v3089 = vshll.u32 %v3085, 16
    %v3090 = vshrl.u32 %v3085, 16
    %vm3091 = vc.u32 %v3083, %v3087
    %v3092 = vsel %vm3091, 1, 0
    %v3093 = vadd.s32 %v3083, %v3087
    %v3094 = vadd.s32 %v3086, %v3092
    %vm3095 = vc.u32 %v3093, %v3089
    %v3096 = vsel %vm3095, 1, 0
    %v3097 = vadd.s32 %v3093, %v3089
    %v3098 = vadd.s32 %v3094, %v3096
    %v3099 = vadd.s32 %v3098, %v3088
    %v3100 = vadd.s32 %v3099, %v3090
    %v3101 = vshrl.u32 %v3100, 6
    %v3102 = vmul.u32 %v3101, 65
    %v3103 = vsub.s32 %v3079, %v3102
    %v3104 = vsub.s32 0, %v3103
    %v3105 = vsel %vm3077, %v3104, %v3103
    %vm3106 = vcmp.lt.s32.totalorder %v2626, 0
    %v3107 = vsub.s32 0, %v2626
    %v3108 = vsel %vm3106, %v3107, %v2626
    %v3109 = vand.u32 %v3108, 65535
    %v3110 = vshrl.u32 %v3108, 16
    %v3112 = vmul.u32 %v3109, 49405
    %v3113 = vmul.u32 %v3109, 64527
    %v3114 = vmul.u32 %v3110, 49405
    %v3115 = vmul.u32 %v3110, 64527
    %v3116 = vshll.u32 %v3113, 16
    %v3117 = vshrl.u32 %v3113, 16
    %v3118 = vshll.u32 %v3114, 16
    %v3119 = vshrl.u32 %v3114, 16
    %vm3120 = vc.u32 %v3112, %v3116
    %v3121 = vsel %vm3120, 1, 0
    %v3122 = vadd.s32 %v3112, %v3116
    %v3123 = vadd.s32 %v3115, %v3121
    %vm3124 = vc.u32 %v3122, %v3118
    %v3125 = vsel %vm3124, 1, 0
    %v3126 = vadd.s32 %v3122, %v3118
    %v3127 = vadd.s32 %v3123, %v3125
    %v3128 = vadd.s32 %v3127, %v3117
    %v3129 = vadd.s32 %v3128, %v3119
    %v3130 = vshrl.u32 %v3129, 6
    %v3131 = vmul.u32 %v3130, 65
    %v3132 = vsub.s32 %v3108, %v3131
    %v3133 = vsub.s32 0, %v3132
    %v3134 = vsel %vm3106, %v3133, %v3132
    %vm3135 = vcmp.lt.s32.totalorder %v2627, 0
    %v3136 = vsub.s32 0, %v2627
    %v3137 = vsel %vm3135, %v3136, %v2627
    %v3138 = vand.u32 %v3137, 65535
    %v3139 = vshrl.u32 %v3137, 16
    %v3141 = vmul.u32 %v3138, 49405
    %v3142 = vmul.u32 %v3138, 64527
    %v3143 = vmul.u32 %v3139, 49405
    %v3144 = vmul.u32 %v3139, 64527
    %v3145 = vshll.u32 %v3142, 16
    %v3146 = vshrl.u32 %v3142, 16
    %v3147 = vshll.u32 %v3143, 16
    %v3148 = vshrl.u32 %v3143, 16
    %vm3149 = vc.u32 %v3141, %v3145
    %v3150 = vsel %vm3149, 1, 0
    %v3151 = vadd.s32 %v3141, %v3145
    %v3152 = vadd.s32 %v3144, %v3150
    %vm3153 = vc.u32 %v3151, %v3147
    %v3154 = vsel %vm3153, 1, 0
    %v3155 = vadd.s32 %v3151, %v3147
    %v3156 = vadd.s32 %v3152, %v3154
    %v3157 = vadd.s32 %v3156, %v3146
    %v3158 = vadd.s32 %v3157, %v3148
    %v3159 = vshrl.u32 %v3158, 6
    %v3160 = vmul.u32 %v3159, 65
    %v3161 = vsub.s32 %v3137, %v3160
    %v3162 = vsub.s32 0, %v3161
    %v3163 = vsel %vm3135, %v3162, %v3161
    %vm3164 = vcmp.lt.s32.totalorder %v2628, 0
    %v3165 = vsub.s32 0, %v2628
    %v3166 = vsel %vm3164, %v3165, %v2628
    %v3167 = vand.u32 %v3166, 65535
    %v3168 = vshrl.u32 %v3166, 16
    %v3170 = vmul.u32 %v3167, 49405
    %v3171 = vmul.u32 %v3167, 64527
    %v3172 = vmul.u32 %v3168, 49405
    %v3173 = vmul.u32 %v3168, 64527
    %v3174 = vshll.u32 %v3171, 16
    %v3175 = vshrl.u32 %v3171, 16
    %v3176 = vshll.u32 %v3172, 16
    %v3177 = vshrl.u32 %v3172, 16
    %vm3178 = vc.u32 %v3170, %v3174
    %v3179 = vsel %vm3178, 1, 0
    %v3180 = vadd.s32 %v3170, %v3174
    %v3181 = vadd.s32 %v3173, %v3179
    %vm3182 = vc.u32 %v3180, %v3176
    %v3183 = vsel %vm3182, 1, 0
    %v3184 = vadd.s32 %v3180, %v3176
    %v3185 = vadd.s32 %v3181, %v3183
    %v3186 = vadd.s32 %v3185, %v3175
    %v3187 = vadd.s32 %v3186, %v3177
    %v3188 = vshrl.u32 %v3187, 6
    %v3189 = vmul.u32 %v3188, 65
    %v3190 = vsub.s32 %v3166, %v3189
    %v3191 = vsub.s32 0, %v3190
    %v3192 = vsel %vm3164, %v3191, %v3190
    %vm3193 = vcmp.lt.s32.totalorder %v2629, 0
    %v3194 = vsub.s32 0, %v2629
    %v3195 = vsel %vm3193, %v3194, %v2629
    %v3196 = vand.u32 %v3195, 65535
    %v3197 = vshrl.u32 %v3195, 16
    %v3199 = vmul.u32 %v3196, 49405
    %v3200 = vmul.u32 %v3196, 64527
    %v3201 = vmul.u32 %v3197, 49405
    %v3202 = vmul.u32 %v3197, 64527
    %v3203 = vshll.u32 %v3200, 16
    %v3204 = vshrl.u32 %v3200, 16
    %v3205 = vshll.u32 %v3201, 16
    %v3206 = vshrl.u32 %v3201, 16
    %vm3207 = vc.u32 %v3199, %v3203
    %v3208 = vsel %vm3207, 1, 0
    %v3209 = vadd.s32 %v3199, %v3203
    %v3210 = vadd.s32 %v3202, %v3208
    %vm3211 = vc.u32 %v3209, %v3205
    %v3212 = vsel %vm3211, 1, 0
    %v3213 = vadd.s32 %v3209, %v3205
    %v3214 = vadd.s32 %v3210, %v3212
    %v3215 = vadd.s32 %v3214, %v3204
    %v3216 = vadd.s32 %v3215, %v3206
    %v3217 = vshrl.u32 %v3216, 6
    %v3218 = vmul.u32 %v3217, 65
    %v3219 = vsub.s32 %v3195, %v3218
    %v3220 = vsub.s32 0, %v3219
    %v3221 = vsel %vm3193, %v3220, %v3219
    %vm3222 = vcmp.lt.s32.totalorder %v2630, 0
    %v3223 = vsub.s32 0, %v2630
    %v3224 = vsel %vm3222, %v3223, %v2630
    %v3225 = vand.u32 %v3224, 65535
    %v3226 = vshrl.u32 %v3224, 16
    %v3228 = vmul.u32 %v3225, 49405
    %v3229 = vmul.u32 %v3225, 64527
    %v3230 = vmul.u32 %v3226, 49405
    %v3231 = vmul.u32 %v3226, 64527
    %v3232 = vshll.u32 %v3229, 16
    %v3233 = vshrl.u32 %v3229, 16
    %v3234 = vshll.u32 %v3230, 16
    %v3235 = vshrl.u32 %v3230, 16
    %vm3236 = vc.u32 %v3228, %v3232
    %v3237 = vsel %vm3236, 1, 0
    %v3238 = vadd.s32 %v3228, %v3232
    %v3239 = vadd.s32 %v3231, %v3237
    %vm3240 = vc.u32 %v3238, %v3234
    %v3241 = vsel %vm3240, 1, 0
    %v3242 = vadd.s32 %v3238, %v3234
    %v3243 = vadd.s32 %v3239, %v3241
    %v3244 = vadd.s32 %v3243, %v3233
    %v3245 = vadd.s32 %v3244, %v3235
    %v3246 = vshrl.u32 %v3245, 6
    %v3247 = vmul.u32 %v3246, 65
    %v3248 = vsub.s32 %v3224, %v3247
    %v3249 = vsub.s32 0, %v3248
    %v3250 = vsel %vm3222, %v3249, %v3248
    %vm3251 = vcmp.lt.s32.totalorder %v2631, 0
    %v3252 = vsub.s32 0, %v2631
    %v3253 = vsel %vm3251, %v3252, %v2631
    %v3254 = vand.u32 %v3253, 65535
    %v3255 = vshrl.u32 %v3253, 16
    %v3257 = vmul.u32 %v3254, 49405
    %v3258 = vmul.u32 %v3254, 64527
    %v3259 = vmul.u32 %v3255, 49405
    %v3260 = vmul.u32 %v3255, 64527
    %v3261 = vshll.u32 %v3258, 16
    %v3262 = vshrl.u32 %v3258, 16
    %v3263 = vshll.u32 %v3259, 16
    %v3264 = vshrl.u32 %v3259, 16
    %vm3265 = vc.u32 %v3257, %v3261
    %v3266 = vsel %vm3265, 1, 0
    %v3267 = vadd.s32 %v3257, %v3261
    %v3268 = vadd.s32 %v3260, %v3266
    %vm3269 = vc.u32 %v3267, %v3263
    %v3270 = vsel %vm3269, 1, 0
    %v3271 = vadd.s32 %v3267, %v3263
    %v3272 = vadd.s32 %v3268, %v3270
    %v3273 = vadd.s32 %v3272, %v3262
    %v3274 = vadd.s32 %v3273, %v3264
    %v3275 = vshrl.u32 %v3274, 6
    %v3276 = vmul.u32 %v3275, 65
    %v3277 = vsub.s32 %v3253, %v3276
    %v3278 = vsub.s32 0, %v3277
    %v3279 = vsel %vm3251, %v3278, %v3277
    %vm3280 = vcmp.lt.s32.totalorder %v2632, 0
    %v3281 = vsub.s32 0, %v2632
    %v3282 = vsel %vm3280, %v3281, %v2632
    %v3283 = vand.u32 %v3282, 65535
    %v3284 = vshrl.u32 %v3282, 16
    %v3286 = vmul.u32 %v3283, 49405
    %v3287 = vmul.u32 %v3283, 64527
    %v3288 = vmul.u32 %v3284, 49405
    %v3289 = vmul.u32 %v3284, 64527
    %v3290 = vshll.u32 %v3287, 16
    %v3291 = vshrl.u32 %v3287, 16
    %v3292 = vshll.u32 %v3288, 16
    %v3293 = vshrl.u32 %v3288, 16
    %vm3294 = vc.u32 %v3286, %v3290
    %v3295 = vsel %vm3294, 1, 0
    %v3296 = vadd.s32 %v3286, %v3290
    %v3297 = vadd.s32 %v3289, %v3295
    %vm3298 = vc.u32 %v3296, %v3292
    %v3299 = vsel %vm3298, 1, 0
    %v3300 = vadd.s32 %v3296, %v3292
    %v3301 = vadd.s32 %v3297, %v3299
    %v3302 = vadd.s32 %v3301, %v3291
    %v3303 = vadd.s32 %v3302, %v3293
    %v3304 = vshrl.u32 %v3303, 6
    %v3305 = vmul.u32 %v3304, 65
    %v3306 = vsub.s32 %v3282, %v3305
    %v3307 = vsub.s32 0, %v3306
    %v3308 = vsel %vm3280, %v3307, %v3306
    %vm3309 = vcmp.lt.s32.totalorder %v2633, 0
    %v3310 = vsub.s32 0, %v2633
    %v3311 = vsel %vm3309, %v3310, %v2633
    %v3312 = vand.u32 %v3311, 65535
    %v3313 = vshrl.u32 %v3311, 16
    %v3315 = vmul.u32 %v3312, 49405
    %v3316 = vmul.u32 %v3312, 64527
    %v3317 = vmul.u32 %v3313, 49405
    %v3318 = vmul.u32 %v3313, 64527
    %v3319 = vshll.u32 %v3316, 16
    %v3320 = vshrl.u32 %v3316, 16
    %v3321 = vshll.u32 %v3317, 16
    %v3322 = vshrl.u32 %v3317, 16
    %vm3323 = vc.u32 %v3315, %v3319
    %v3324 = vsel %vm3323, 1, 0
    %v3325 = vadd.s32 %v3315, %v3319
    %v3326 = vadd.s32 %v3318, %v3324
    %vm3327 = vc.u32 %v3325, %v3321
    %v3328 = vsel %vm3327, 1, 0
    %v3329 = vadd.s32 %v3325, %v3321
    %v3330 = vadd.s32 %v3326, %v3328
    %v3331 = vadd.s32 %v3330, %v3320
    %v3332 = vadd.s32 %v3331, %v3322
    %v3333 = vshrl.u32 %v3332, 6
    %v3334 = vmul.u32 %v3333, 65
    %v3335 = vsub.s32 %v3311, %v3334
    %v3336 = vsub.s32 0, %v3335
    %v3337 = vsel %vm3309, %v3336, %v3335
    %vm3338 = vcmp.lt.s32.totalorder %v2634, 0
    %v3339 = vsub.s32 0, %v2634
    %v3340 = vsel %vm3338, %v3339, %v2634
    %v3341 = vand.u32 %v3340, 65535
    %v3342 = vshrl.u32 %v3340, 16
    %v3344 = vmul.u32 %v3341, 49405
    %v3345 = vmul.u32 %v3341, 64527
    %v3346 = vmul.u32 %v3342, 49405
    %v3347 = vmul.u32 %v3342, 64527
    %v3348 = vshll.u32 %v3345, 16
    %v3349 = vshrl.u32 %v3345, 16
    %v3350 = vshll.u32 %v3346, 16
    %v3351 = vshrl.u32 %v3346, 16
    %vm3352 = vc.u32 %v3344, %v3348
    %v3353 = vsel %vm3352, 1, 0
    %v3354 = vadd.s32 %v3344, %v3348
    %v3355 = vadd.s32 %v3347, %v3353
    %vm3356 = vc.u32 %v3354, %v3350
    %v3357 = vsel %vm3356, 1, 0
    %v3358 = vadd.s32 %v3354, %v3350
    %v3359 = vadd.s32 %v3355, %v3357
    %v3360 = vadd.s32 %v3359, %v3349
    %v3361 = vadd.s32 %v3360, %v3351
    %v3362 = vshrl.u32 %v3361, 6
    %v3363 = vmul.u32 %v3362, 65
    %v3364 = vsub.s32 %v3340, %v3363
    %v3365 = vsub.s32 0, %v3364
    %v3366 = vsel %vm3338, %v3365, %v3364
    %vm3367 = vcmp.lt.s32.totalorder %v2635, 0
    %v3368 = vsub.s32 0, %v2635
    %v3369 = vsel %vm3367, %v3368, %v2635
    %v3370 = vand.u32 %v3369, 65535
    %v3371 = vshrl.u32 %v3369, 16
    %v3373 = vmul.u32 %v3370, 49405
    %v3374 = vmul.u32 %v3370, 64527
    %v3375 = vmul.u32 %v3371, 49405
    %v3376 = vmul.u32 %v3371, 64527
    %v3377 = vshll.u32 %v3374, 16
    %v3378 = vshrl.u32 %v3374, 16
    %v3379 = vshll.u32 %v3375, 16
    %v3380 = vshrl.u32 %v3375, 16
    %vm3381 = vc.u32 %v3373, %v3377
    %v3382 = vsel %vm3381, 1, 0
    %v3383 = vadd.s32 %v3373, %v3377
    %v3384 = vadd.s32 %v3376, %v3382
    %vm3385 = vc.u32 %v3383, %v3379
    %v3386 = vsel %vm3385, 1, 0
    %v3387 = vadd.s32 %v3383, %v3379
    %v3388 = vadd.s32 %v3384, %v3386
    %v3389 = vadd.s32 %v3388, %v3378
    %v3390 = vadd.s32 %v3389, %v3380
    %v3391 = vshrl.u32 %v3390, 6
    %v3392 = vmul.u32 %v3391, 65
    %v3393 = vsub.s32 %v3369, %v3392
    %v3394 = vsub.s32 0, %v3393
    %v3395 = vsel %vm3367, %v3394, %v3393
    %vm3396 = vcmp.lt.s32.totalorder %v2636, 0
    %v3397 = vsub.s32 0, %v2636
    %v3398 = vsel %vm3396, %v3397, %v2636
    %v3399 = vand.u32 %v3398, 65535
    %v3400 = vshrl.u32 %v3398, 16
    %v3402 = vmul.u32 %v3399, 49405
    %v3403 = vmul.u32 %v3399, 64527
    %v3404 = vmul.u32 %v3400, 49405
    %v3405 = vmul.u32 %v3400, 64527
    %v3406 = vshll.u32 %v3403, 16
    %v3407 = vshrl.u32 %v3403, 16
    %v3408 = vshll.u32 %v3404, 16
    %v3409 = vshrl.u32 %v3404, 16
    %vm3410 = vc.u32 %v3402, %v3406
    %v3411 = vsel %vm3410, 1, 0
    %v3412 = vadd.s32 %v3402, %v3406
    %v3413 = vadd.s32 %v3405, %v3411
    %vm3414 = vc.u32 %v3412, %v3408
    %v3415 = vsel %vm3414, 1, 0
    %v3416 = vadd.s32 %v3412, %v3408
    %v3417 = vadd.s32 %v3413, %v3415
    %v3418 = vadd.s32 %v3417, %v3407
    %v3419 = vadd.s32 %v3418, %v3409
    %v3420 = vshrl.u32 %v3419, 6
    %v3421 = vmul.u32 %v3420, 65
    %v3422 = vsub.s32 %v3398, %v3421
    %v3423 = vsub.s32 0, %v3422
    %v3424 = vsel %vm3396, %v3423, %v3422
    %vm3425 = vcmp.lt.s32.totalorder %v2637, 0
    %v3426 = vsub.s32 0, %v2637
    %v3427 = vsel %vm3425, %v3426, %v2637
    %v3428 = vand.u32 %v3427, 65535
    %v3429 = vshrl.u32 %v3427, 16
    %v3431 = vmul.u32 %v3428, 49405
    %v3432 = vmul.u32 %v3428, 64527
    %v3433 = vmul.u32 %v3429, 49405
    %v3434 = vmul.u32 %v3429, 64527
    %v3435 = vshll.u32 %v3432, 16
    %v3436 = vshrl.u32 %v3432, 16
    %v3437 = vshll.u32 %v3433, 16
    %v3438 = vshrl.u32 %v3433, 16
    %vm3439 = vc.u32 %v3431, %v3435
    %v3440 = vsel %vm3439, 1, 0
    %v3441 = vadd.s32 %v3431, %v3435
    %v3442 = vadd.s32 %v3434, %v3440
    %vm3443 = vc.u32 %v3441, %v3437
    %v3444 = vsel %vm3443, 1, 0
    %v3445 = vadd.s32 %v3441, %v3437
    %v3446 = vadd.s32 %v3442, %v3444
    %v3447 = vadd.s32 %v3446, %v3436
    %v3448 = vadd.s32 %v3447, %v3438
    %v3449 = vshrl.u32 %v3448, 6
    %v3450 = vmul.u32 %v3449, 65
    %v3451 = vsub.s32 %v3427, %v3450
    %v3452 = vsub.s32 0, %v3451
    %v3453 = vsel %vm3425, %v3452, %v3451
    %vm3454 = vcmp.lt.s32.totalorder %v2638, 0
    %v3455 = vsub.s32 0, %v2638
    %v3456 = vsel %vm3454, %v3455, %v2638
    %v3457 = vand.u32 %v3456, 65535
    %v3458 = vshrl.u32 %v3456, 16
    %v3460 = vmul.u32 %v3457, 49405
    %v3461 = vmul.u32 %v3457, 64527
    %v3462 = vmul.u32 %v3458, 49405
    %v3463 = vmul.u32 %v3458, 64527
    %v3464 = vshll.u32 %v3461, 16
    %v3465 = vshrl.u32 %v3461, 16
    %v3466 = vshll.u32 %v3462, 16
    %v3467 = vshrl.u32 %v3462, 16
    %vm3468 = vc.u32 %v3460, %v3464
    %v3469 = vsel %vm3468, 1, 0
    %v3470 = vadd.s32 %v3460, %v3464
    %v3471 = vadd.s32 %v3463, %v3469
    %vm3472 = vc.u32 %v3470, %v3466
    %v3473 = vsel %vm3472, 1, 0
    %v3474 = vadd.s32 %v3470, %v3466
    %v3475 = vadd.s32 %v3471, %v3473
    %v3476 = vadd.s32 %v3475, %v3465
    %v3477 = vadd.s32 %v3476, %v3467
    %v3478 = vshrl.u32 %v3477, 6
    %v3479 = vmul.u32 %v3478, 65
    %v3480 = vsub.s32 %v3456, %v3479
    %v3481 = vsub.s32 0, %v3480
    %v3482 = vsel %vm3454, %v3481, %v3480
    %vm3483 = vcmp.lt.s32.totalorder %v2639, 0
    %v3484 = vsub.s32 0, %v2639
    %v3485 = vsel %vm3483, %v3484, %v2639
    %v3486 = vand.u32 %v3485, 65535
    %v3487 = vshrl.u32 %v3485, 16
    %v3489 = vmul.u32 %v3486, 49405
    %v3490 = vmul.u32 %v3486, 64527
    %v3491 = vmul.u32 %v3487, 49405
    %v3492 = vmul.u32 %v3487, 64527
    %v3493 = vshll.u32 %v3490, 16
    %v3494 = vshrl.u32 %v3490, 16
    %v3495 = vshll.u32 %v3491, 16
    %v3496 = vshrl.u32 %v3491, 16
    %vm3497 = vc.u32 %v3489, %v3493
    %v3498 = vsel %vm3497, 1, 0
    %v3499 = vadd.s32 %v3489, %v3493
    %v3500 = vadd.s32 %v3492, %v3498
    %vm3501 = vc.u32 %v3499, %v3495
    %v3502 = vsel %vm3501, 1, 0
    %v3503 = vadd.s32 %v3499, %v3495
    %v3504 = vadd.s32 %v3500, %v3502
    %v3505 = vadd.s32 %v3504, %v3494
    %v3506 = vadd.s32 %v3505, %v3496
    %v3507 = vshrl.u32 %v3506, 6
    %v3508 = vmul.u32 %v3507, 65
    %v3509 = vsub.s32 %v3485, %v3508
    %v3510 = vsub.s32 0, %v3509
    %v3511 = vsel %vm3483, %v3510, %v3509
    %vm3512 = vcmp.lt.s32.totalorder %v2640, 0
    %v3513 = vsub.s32 0, %v2640
    %v3514 = vsel %vm3512, %v3513, %v2640
    %v3515 = vand.u32 %v3514, 65535
    %v3516 = vshrl.u32 %v3514, 16
    %v3518 = vmul.u32 %v3515, 49405
    %v3519 = vmul.u32 %v3515, 64527
    %v3520 = vmul.u32 %v3516, 49405
    %v3521 = vmul.u32 %v3516, 64527
    %v3522 = vshll.u32 %v3519, 16
    %v3523 = vshrl.u32 %v3519, 16
    %v3524 = vshll.u32 %v3520, 16
    %v3525 = vshrl.u32 %v3520, 16
    %vm3526 = vc.u32 %v3518, %v3522
    %v3527 = vsel %vm3526, 1, 0
    %v3528 = vadd.s32 %v3518, %v3522
    %v3529 = vadd.s32 %v3521, %v3527
    %vm3530 = vc.u32 %v3528, %v3524
    %v3531 = vsel %vm3530, 1, 0
    %v3532 = vadd.s32 %v3528, %v3524
    %v3533 = vadd.s32 %v3529, %v3531
    %v3534 = vadd.s32 %v3533, %v3523
    %v3535 = vadd.s32 %v3534, %v3525
    %v3536 = vshrl.u32 %v3535, 6
    %v3537 = vmul.u32 %v3536, 65
    %v3538 = vsub.s32 %v3514, %v3537
    %v3539 = vsub.s32 0, %v3538
    %v3540 = vsel %vm3512, %v3539, %v3538
    %vm3541 = vcmp.lt.s32.totalorder %v2641, 0
    %v3542 = vsub.s32 0, %v2641
    %v3543 = vsel %vm3541, %v3542, %v2641
    %v3544 = vand.u32 %v3543, 65535
    %v3545 = vshrl.u32 %v3543, 16
    %v3547 = vmul.u32 %v3544, 49405
    %v3548 = vmul.u32 %v3544, 64527
    %v3549 = vmul.u32 %v3545, 49405
    %v3550 = vmul.u32 %v3545, 64527
    %v3551 = vshll.u32 %v3548, 16
    %v3552 = vshrl.u32 %v3548, 16
    %v3553 = vshll.u32 %v3549, 16
    %v3554 = vshrl.u32 %v3549, 16
    %vm3555 = vc.u32 %v3547, %v3551
    %v3556 = vsel %vm3555, 1, 0
    %v3557 = vadd.s32 %v3547, %v3551
    %v3558 = vadd.s32 %v3550, %v3556
    %vm3559 = vc.u32 %v3557, %v3553
    %v3560 = vsel %vm3559, 1, 0
    %v3561 = vadd.s32 %v3557, %v3553
    %v3562 = vadd.s32 %v3558, %v3560
    %v3563 = vadd.s32 %v3562, %v3552
    %v3564 = vadd.s32 %v3563, %v3554
    %v3565 = vshrl.u32 %v3564, 6
    %v3566 = vmul.u32 %v3565, 65
    %v3567 = vsub.s32 %v3543, %v3566
    %v3568 = vsub.s32 0, %v3567
    %v3569 = vsel %vm3541, %v3568, %v3567
    %vm3570 = vcmp.ne.s32.totalorder %v2670, 0
    %vm3571 = vcmp.ne.s32.totalorder %v2699, 0
    %vm3572 = vcmp.ne.s32.totalorder %v2728, 0
    %vm3573 = vcmp.ne.s32.totalorder %v2757, 0
    %vm3574 = vcmp.ne.s32.totalorder %v2786, 0
    %vm3575 = vcmp.ne.s32.totalorder %v2815, 0
    %vm3576 = vcmp.ne.s32.totalorder %v2844, 0
    %vm3577 = vcmp.ne.s32.totalorder %v2873, 0
    %vm3578 = vcmp.ne.s32.totalorder %v2902, 0
    %vm3579 = vcmp.ne.s32.totalorder %v2931, 0
    %vm3580 = vcmp.ne.s32.totalorder %v2960, 0
    %vm3581 = vcmp.ne.s32.totalorder %v2989, 0
    %vm3582 = vcmp.ne.s32.totalorder %v3018, 0
    %vm3583 = vcmp.ne.s32.totalorder %v3047, 0
    %vm3584 = vcmp.ne.s32.totalorder %v3076, 0
    %vm3585 = vcmp.ne.s32.totalorder %v3105, 0
    %vm3586 = vcmp.ne.s32.totalorder %v3134, 0
    %vm3587 = vcmp.ne.s32.totalorder %v3163, 0
    %vm3588 = vcmp.ne.s32.totalorder %v3192, 0
    %vm3589 = vcmp.ne.s32.totalorder %v3221, 0
    %vm3590 = vcmp.ne.s32.totalorder %v3250, 0
    %vm3591 = vcmp.ne.s32.totalorder %v3279, 0
    %vm3592 = vcmp.ne.s32.totalorder %v3308, 0
    %vm3593 = vcmp.ne.s32.totalorder %v3337, 0
    %vm3594 = vcmp.ne.s32.totalorder %v3366, 0
    %vm3595 = vcmp.ne.s32.totalorder %v3395, 0
    %vm3596 = vcmp.ne.s32.totalorder %v3424, 0
    %vm3597 = vcmp.ne.s32.totalorder %v3453, 0
    %vm3598 = vcmp.ne.s32.totalorder %v3482, 0
    %vm3599 = vcmp.ne.s32.totalorder %v3511, 0
    %vm3600 = vcmp.ne.s32.totalorder %v3540, 0
    %vm3601 = vcmp.ne.s32.totalorder %v3569, 0
    %vm3602 = vcmp.lt.s32.totalorder %v2670, 0
    %vm3603 = vcmp.lt.s32.totalorder %v2699, 0
    %vm3604 = vcmp.lt.s32.totalorder %v2728, 0
    %vm3605 = vcmp.lt.s32.totalorder %v2757, 0
    %vm3606 = vcmp.lt.s32.totalorder %v2786, 0
    %vm3607 = vcmp.lt.s32.totalorder %v2815, 0
    %vm3608 = vcmp.lt.s32.totalorder %v2844, 0
    %vm3609 = vcmp.lt.s32.totalorder %v2873, 0
    %vm3610 = vcmp.lt.s32.totalorder %v2902, 0
    %vm3611 = vcmp.lt.s32.totalorder %v2931, 0
    %vm3612 = vcmp.lt.s32.totalorder %v2960, 0
    %vm3613 = vcmp.lt.s32.totalorder %v2989, 0
    %vm3614 = vcmp.lt.s32.totalorder %v3018, 0
    %vm3615 = vcmp.lt.s32.totalorder %v3047, 0
    %vm3616 = vcmp.lt.s32.totalorder %v3076, 0
    %vm3617 = vcmp.lt.s32.totalorder %v3105, 0
    %vm3618 = vcmp.lt.s32.totalorder %v3134, 0
    %vm3619 = vcmp.lt.s32.totalorder %v3163, 0
    %vm3620 = vcmp.lt.s32.totalorder %v3192, 0
    %vm3621 = vcmp.lt.s32.totalorder %v3221, 0
    %vm3622 = vcmp.lt.s32.totalorder %v3250, 0
    %vm3623 = vcmp.lt.s32.totalorder %v3279, 0
    %vm3624 = vcmp.lt.s32.totalorder %v3308, 0
    %vm3625 = vcmp.lt.s32.totalorder %v3337, 0
    %vm3626 = vcmp.lt.s32.totalorder %v3366, 0
    %vm3627 = vcmp.lt.s32.totalorder %v3395, 0
    %vm3628 = vcmp.lt.s32.totalorder %v3424, 0
    %vm3629 = vcmp.lt.s32.totalorder %v3453, 0
    %vm3630 = vcmp.lt.s32.totalorder %v3482, 0
    %vm3631 = vcmp.lt.s32.totalorder %v3511, 0
    %vm3632 = vcmp.lt.s32.totalorder %v3540, 0
    %vm3633 = vcmp.lt.s32.totalorder %v3569, 0
    %vm3634 = vmand %vm3602, %vm3570
    %vm3635 = vmand %vm3603, %vm3571
    %vm3636 = vmand %vm3604, %vm3572
    %vm3637 = vmand %vm3605, %vm3573
    %vm3638 = vmand %vm3606, %vm3574
    %vm3639 = vmand %vm3607, %vm3575
    %vm3640 = vmand %vm3608, %vm3576
    %vm3641 = vmand %vm3609, %vm3577
    %vm3642 = vmand %vm3610, %vm3578
    %vm3643 = vmand %vm3611, %vm3579
    %vm3644 = vmand %vm3612, %vm3580
    %vm3645 = vmand %vm3613, %vm3581
    %vm3646 = vmand %vm3614, %vm3582
    %vm3647 = vmand %vm3615, %vm3583
    %vm3648 = vmand %vm3616, %vm3584
    %vm3649 = vmand %vm3617, %vm3585
    %vm3650 = vmand %vm3618, %vm3586
    %vm3651 = vmand %vm3619, %vm3587
    %vm3652 = vmand %vm3620, %vm3588
    %vm3653 = vmand %vm3621, %vm3589
    %vm3654 = vmand %vm3622, %vm3590
    %vm3655 = vmand %vm3623, %vm3591
    %vm3656 = vmand %vm3624, %vm3592
    %vm3657 = vmand %vm3625, %vm3593
    %vm3658 = vmand %vm3626, %vm3594
    %vm3659 = vmand %vm3627, %vm3595
    %vm3660 = vmand %vm3628, %vm3596
    %vm3661 = vmand %vm3629, %vm3597
    %vm3662 = vmand %vm3630, %vm3598
    %vm3663 = vmand %vm3631, %vm3599
    %vm3664 = vmand %vm3632, %vm3600
    %vm3665 = vmand %vm3633, %vm3601
    %v3666 = vadd.s32 %v2670, 65
    %v3667 = vadd.s32 %v2699, 65
    %v3668 = vadd.s32 %v2728, 65
    %v3669 = vadd.s32 %v2757, 65
    %v3670 = vadd.s32 %v2786, 65
    %v3671 = vadd.s32 %v2815, 65
    %v3672 = vadd.s32 %v2844, 65
    %v3673 = vadd.s32 %v2873, 65
    %v3674 = vadd.s32 %v2902, 65
    %v3675 = vadd.s32 %v2931, 65
    %v3676 = vadd.s32 %v2960, 65
    %v3677 = vadd.s32 %v2989, 65
    %v3678 = vadd.s32 %v3018, 65
    %v3679 = vadd.s32 %v3047, 65
    %v3680 = vadd.s32 %v3076, 65
    %v3681 = vadd.s32 %v3105, 65
    %v3682 = vadd.s32 %v3134, 65
    %v3683 = vadd.s32 %v3163, 65
    %v3684 = vadd.s32 %v3192, 65
    %v3685 = vadd.s32 %v3221, 65
    %v3686 = vadd.s32 %v3250, 65
    %v3687 = vadd.s32 %v3279, 65
    %v3688 = vadd.s32 %v3308, 65
    %v3689 = vadd.s32 %v3337, 65
    %v3690 = vadd.s32 %v3366, 65
    %v3691 = vadd.s32 %v3395, 65
    %v3692 = vadd.s32 %v3424, 65
    %v3693 = vadd.s32 %v3453, 65
    %v3694 = vadd.s32 %v3482, 65
    %v3695 = vadd.s32 %v3511, 65
    %v3696 = vadd.s32 %v3540, 65
    %v3697 = vadd.s32 %v3569, 65
    %v3698 = vsel %vm3634, %v3666, %v2670
    %v3699 = vsel %vm3635, %v3667, %v2699
    %v3700 = vsel %vm3636, %v3668, %v2728
    %v3701 = vsel %vm3637, %v3669, %v2757
    %v3702 = vsel %vm3638, %v3670, %v2786
    %v3703 = vsel %vm3639, %v3671, %v2815
    %v3704 = vsel %vm3640, %v3672, %v2844
    %v3705 = vsel %vm3641, %v3673, %v2873
    %v3706 = vsel %vm3642, %v3674, %v2902
    %v3707 = vsel %vm3643, %v3675, %v2931
    %v3708 = vsel %vm3644, %v3676, %v2960
    %v3709 = vsel %vm3645, %v3677, %v2989
    %v3710 = vsel %vm3646, %v3678, %v3018
    %v3711 = vsel %vm3647, %v3679, %v3047
    %v3712 = vsel %vm3648, %v3680, %v3076
    %v3713 = vsel %vm3649, %v3681, %v3105
    %v3714 = vsel %vm3650, %v3682, %v3134
    %v3715 = vsel %vm3651, %v3683, %v3163
    %v3716 = vsel %vm3652, %v3684, %v3192
    %v3717 = vsel %vm3653, %v3685, %v3221
    %v3718 = vsel %vm3654, %v3686, %v3250
    %v3719 = vsel %vm3655, %v3687, %v3279
    %v3720 = vsel %vm3656, %v3688, %v3308
    %v3721 = vsel %vm3657, %v3689, %v3337
    %v3722 = vsel %vm3658, %v3690, %v3366
    %v3723 = vsel %vm3659, %v3691, %v3395
    %v3724 = vsel %vm3660, %v3692, %v3424
    %v3725 = vsel %vm3661, %v3693, %v3453
    %v3726 = vsel %vm3662, %v3694, %v3482
    %v3727 = vsel %vm3663, %v3695, %v3511
    %v3728 = vsel %vm3664, %v3696, %v3540
    %v3729 = vsel %vm3665, %v3697, %v3569
    %vm3730 = vcmp.eq.s32.totalorder %v3698, 0
    %vm3731 = vcmp.eq.s32.totalorder %v3699, 0
    %vm3732 = vcmp.eq.s32.totalorder %v3700, 0
    %vm3733 = vcmp.eq.s32.totalorder %v3701, 0
    %vm3734 = vcmp.eq.s32.totalorder %v3702, 0
    %vm3735 = vcmp.eq.s32.totalorder %v3703, 0
    %vm3736 = vcmp.eq.s32.totalorder %v3704, 0
    %vm3737 = vcmp.eq.s32.totalorder %v3705, 0
    %vm3738 = vcmp.eq.s32.totalorder %v3706, 0
    %vm3739 = vcmp.eq.s32.totalorder %v3707, 0
    %vm3740 = vcmp.eq.s32.totalorder %v3708, 0
    %vm3741 = vcmp.eq.s32.totalorder %v3709, 0
    %vm3742 = vcmp.eq.s32.totalorder %v3710, 0
    %vm3743 = vcmp.eq.s32.totalorder %v3711, 0
    %vm3744 = vcmp.eq.s32.totalorder %v3712, 0
    %vm3745 = vcmp.eq.s32.totalorder %v3713, 0
    %vm3746 = vcmp.eq.s32.totalorder %v3714, 0
    %vm3747 = vcmp.eq.s32.totalorder %v3715, 0
    %vm3748 = vcmp.eq.s32.totalorder %v3716, 0
    %vm3749 = vcmp.eq.s32.totalorder %v3717, 0
    %vm3750 = vcmp.eq.s32.totalorder %v3718, 0
    %vm3751 = vcmp.eq.s32.totalorder %v3719, 0
    %vm3752 = vcmp.eq.s32.totalorder %v3720, 0
    %vm3753 = vcmp.eq.s32.totalorder %v3721, 0
    %vm3754 = vcmp.eq.s32.totalorder %v3722, 0
    %vm3755 = vcmp.eq.s32.totalorder %v3723, 0
    %vm3756 = vcmp.eq.s32.totalorder %v3724, 0
    %vm3757 = vcmp.eq.s32.totalorder %v3725, 0
    %vm3758 = vcmp.eq.s32.totalorder %v3726, 0
    %vm3759 = vcmp.eq.s32.totalorder %v3727, 0
    %vm3760 = vcmp.eq.s32.totalorder %v3728, 0
    %vm3761 = vcmp.eq.s32.totalorder %v3729, 0
    %v3762 = vsel %vm3730, 1.0, 0.0
    %v3763 = vsel %vm3731, 1.0, 0.0
    %v3764 = vsel %vm3732, 1.0, 0.0
    %v3765 = vsel %vm3733, 1.0, 0.0
    %v3766 = vsel %vm3734, 1.0, 0.0
    %v3767 = vsel %vm3735, 1.0, 0.0
    %v3768 = vsel %vm3736, 1.0, 0.0
    %v3769 = vsel %vm3737, 1.0, 0.0
    %v3770 = vsel %vm3738, 1.0, 0.0
    %v3771 = vsel %vm3739, 1.0, 0.0
    %v3772 = vsel %vm3740, 1.0, 0.0
    %v3773 = vsel %vm3741, 1.0, 0.0
    %v3774 = vsel %vm3742, 1.0, 0.0
    %v3775 = vsel %vm3743, 1.0, 0.0
    %v3776 = vsel %vm3744, 1.0, 0.0
    %v3777 = vsel %vm3745, 1.0, 0.0
    %v3778 = vsel %vm3746, 1.0, 0.0
    %v3779 = vsel %vm3747, 1.0, 0.0
    %v3780 = vsel %vm3748, 1.0, 0.0
    %v3781 = vsel %vm3749, 1.0, 0.0
    %v3782 = vsel %vm3750, 1.0, 0.0
    %v3783 = vsel %vm3751, 1.0, 0.0
    %v3784 = vsel %vm3752, 1.0, 0.0
    %v3785 = vsel %vm3753, 1.0, 0.0
    %v3786 = vsel %vm3754, 1.0, 0.0
    %v3787 = vsel %vm3755, 1.0, 0.0
    %v3788 = vsel %vm3756, 1.0, 0.0
    %v3789 = vsel %vm3757, 1.0, 0.0
    %v3790 = vsel %vm3758, 1.0, 0.0
    %v3791 = vsel %vm3759, 1.0, 0.0
    %v3792 = vsel %vm3760, 1.0, 0.0
    %v3793 = vsel %vm3761, 1.0, 0.0
    %v3794 = vadd.f32 %v2203, %v3762
    %v3795 = vadd.f32 %v2216, %v3763
    %v3796 = vadd.f32 %v2229, %v3764
    %v3797 = vadd.f32 %v2242, %v3765
    %v3798 = vadd.f32 %v2255, %v3766
    %v3799 = vadd.f32 %v2268, %v3767
    %v3800 = vadd.f32 %v2281, %v3768
    %v3801 = vadd.f32 %v2294, %v3769
    %v3802 = vadd.f32 %v2307, %v3770
    %v3803 = vadd.f32 %v2320, %v3771
    %v3804 = vadd.f32 %v2333, %v3772
    %v3805 = vadd.f32 %v2346, %v3773
    %v3806 = vadd.f32 %v2359, %v3774
    %v3807 = vadd.f32 %v2372, %v3775
    %v3808 = vadd.f32 %v2385, %v3776
    %v3809 = vadd.f32 %v2398, %v3777
    %v3810 = vadd.f32 %v2411, %v3778
    %v3811 = vadd.f32 %v2424, %v3779
    %v3812 = vadd.f32 %v2437, %v3780
    %v3813 = vadd.f32 %v2450, %v3781
    %v3814 = vadd.f32 %v2463, %v3782
    %v3815 = vadd.f32 %v2476, %v3783
    %v3816 = vadd.f32 %v2489, %v3784
    %v3817 = vadd.f32 %v2502, %v3785
    %v3818 = vadd.f32 %v2515, %v3786
    %v3819 = vadd.f32 %v2528, %v3787
    %v3820 = vadd.f32 %v2541, %v3788
    %v3821 = vadd.f32 %v2554, %v3789
    %v3822 = vadd.f32 %v2567, %v3790
    %v3823 = vadd.f32 %v2580, %v3791
    %v3824 = vadd.f32 %v2593, %v3792
    %v3825 = vadd.f32 %v2606, %v3793
    %v3858 = vrot.slane %v3795, 6
    %v3859 = vrot.slane %v3796, 4
    %v3860 = vrot.slane %v3797, 2
    %v3861 = vrot.slane %v3799, 6
    %v3862 = vrot.slane %v3800, 4
    %v3863 = vrot.slane %v3801, 2
    %v3864 = vrot.slane %v3803, 6
    %v3865 = vrot.slane %v3804, 4
    %v3866 = vrot.slane %v3805, 2
    %v3867 = vrot.slane %v3807, 6
    %v3868 = vrot.slane %v3808, 4
    %v3869 = vrot.slane %v3809, 2
    %v3870 = vrot.slane %v3811, 6
    %v3871 = vrot.slane %v3812, 4
    %v3872 = vrot.slane %v3813, 2
    %v3873 = vrot.slane %v3815, 6
    %v3874 = vrot.slane %v3816, 4
    %v3875 = vrot.slane %v3817, 2
    %v3876 = vrot.slane %v3819, 6
    %v3877 = vrot.slane %v3820, 4
    %v3878 = vrot.slane %v3821, 2
    %v3879 = vrot.slane %v3823, 6
    %v3880 = vrot.slane %v3824, 4
    %v3881 = vrot.slane %v3825, 2
    %v3882 = vsel %vm303, %v3794, %v3858
    %vm3883 = vcmask 1045508
    %v3884 = vsel %vm3883, %v3859, %v3860
    %vm3885 = vcmask 1043456
    %v3886 = vsel %vm3885, %v3882, %v3884
    %v3887 = vsel %vm303, %v3798, %v3861
    %v3888 = vsel %vm3883, %v3862, %v3863
    %v3889 = vsel %vm3885, %v3887, %v3888
    %v3890 = vsel %vm303, %v3802, %v3864
    %v3891 = vsel %vm3883, %v3865, %v3866
    %v3892 = vsel %vm3885, %v3890, %v3891
    %v3893 = vsel %vm303, %v3806, %v3867
    %v3894 = vsel %vm3883, %v3868, %v3869
    %v3895 = vsel %vm3885, %v3893, %v3894
    %v3896 = vsel %vm303, %v3810, %v3870
    %v3897 = vsel %vm3883, %v3871, %v3872
    %v3898 = vsel %vm3885, %v3896, %v3897
    %v3899 = vsel %vm303, %v3814, %v3873
    %v3900 = vsel %vm3883, %v3874, %v3875
    %v3901 = vsel %vm3885, %v3899, %v3900
    %v3902 = vsel %vm303, %v3818, %v3876
    %v3903 = vsel %vm3883, %v3877, %v3878
    %v3904 = vsel %vm3885, %v3902, %v3903
    %v3905 = vsel %vm303, %v3822, %v3879
    %v3906 = vsel %vm3883, %v3880, %v3881
    %v3907 = vsel %vm3885, %v3905, %v3906
    %3916 = vst [vmem:[%s9] sm:$0xff] %v3886
    %3917 = vst [vmem:[%s9 + $0x8] sm:$0xff] %v3889
    %3918 = vst [vmem:[%s9 + $0x10] sm:$0xff] %v3892
    %3919 = vst [vmem:[%s9 + $0x18] sm:$0xff] %v3895
    %3920 = vst [vmem:[%s9 + $0x20] sm:$0xff] %v3898
    %3921 = vst [vmem:[%s9 + $0x28] sm:$0xff] %v3901
    %3922 = vst [vmem:[%s9 + $0x30] sm:$0xff] %v3904
    %3923 = vst [vmem:[%s9 + $0x38] sm:$0xff] %v3907
    // Predicated region
    $region42: #{base_pointnet_fwd.27} parent=1 // pred_check
      _
    $region43: #{base_pointnet_fwd.27} parent=1 // pred_check_branch
      %3925 = sbr.rel (0) target = $region45
    $region44: #{base_pointnet_fwd.27} parent=1 // pred_region
      _
    $region45: #{base_pointnet_fwd.27} parent=1 // pred_fallthru
      _
    // Predicated region
    $region46: #{base_pointnet_fwd.27} parent=1 // pred_check
      _
    $region47: #{base_pointnet_fwd.27} parent=1 // pred_check_branch
      %3927 = sbr.rel (0) target = $region49
    $region48: #{base_pointnet_fwd.27} parent=1 // pred_region
      _
    $region49: #{base_pointnet_fwd.27} parent=1 // pred_fallthru
      _
    %3928 = vsyncpa [#allocation3], 1

</llo_original>
